<compile_context>
chip_gen: v6e
topology: v6e:2x2x1
jax: 0.10.0
libtpu: 0.0.40
codegen_flags: <defaults>
</compile_context>

<pallas_src>
import jax
import jax.numpy as jnp
from jax.experimental import pallas as pl
from jax.experimental.pallas import tpu as pltpu

X_DIM = 10000            # module hardcodes self.x_dim = 10000
H1 = 400
H2 = 200
Z_DIM = 2

H1P = 512                # 400 -> 512  (lane aligned, zero-padded)
H2P = 256                # 200 -> 256  (lane aligned, zero-padded)
TH1 = 256                # W1 output-column block
NBLK = H1P // TH1        # 2 column blocks


# ---------------------------------------------------------------------------
# Single fused kernel, grid=(NBLK,) over W1's output-column blocks.
#
# Per step j:
#   h1_j  = relu(x @ W1[:, j-block] + b1[j-block])          (bf16 x bf16 -> f32)
#   acc  += h1_j @ W2[j-block, :]                            (f32)
# Last step epilogue:
#   h2     = relu(acc + b2)
#   mean   = h2 @ W3m + b3m ; logvar = h2 @ W3v + b3v
#   z      = mean + eps * exp(0.5 * logvar)
# ---------------------------------------------------------------------------
def encoder_kernel(x_ref, w1_ref, b1_ref, w2_ref, b2_ref,
                   w3m_ref, b3m_ref, w3v_ref, b3v_ref, eps_ref,
                   z_ref, acc_ref):
    j = pl.program_id(0)

    @pl.when(j == 0)
    def _():
        acc_ref[...] = jnp.zeros_like(acc_ref)

    # fc1 for this column block: full-K contraction on the MXU, f32 accumulate.
    h1 = jnp.dot(x_ref[...], w1_ref[...], preferred_element_type=jnp.float32)
    h1 = jnp.maximum(h1 + b1_ref[...], 0.0)                       # bias + ReLU

    # Partial fc2 contraction over this h1 column block (linear, so summing
    # per-block partials is exact).
    acc_ref[...] += jnp.dot(h1, w2_ref[...], preferred_element_type=jnp.float32)

    # Epilogue on the last column block: fc2 bias/ReLU, fc3_mean/logvar, reparam.
    @pl.when(j == pl.num_programs(0) - 1)
    def _():
        h2 = jnp.maximum(acc_ref[...] + b2_ref[...], 0.0)
        mean = jnp.dot(h2, w3m_ref[...],
                       preferred_element_type=jnp.float32) + b3m_ref[...]
        logvar = jnp.dot(h2, w3v_ref[...],
                         preferred_element_type=jnp.float32) + b3v_ref[...]
        z_ref[...] = mean + eps_ref[...] * jnp.exp(0.5 * logvar)


@jax.jit
def encoder_z_forward(x, packed_params, epsilon):
    (w1_p, b1_p, w2_p, b2_p, w3m_p, b3m_p, w3v_p, b3v_p) = packed_params
    B = x.shape[0]

    # Only x is cast (80 KB, negligible vs the ~10 MB bf16 W1 stream).
    x_bf16 = x.astype(jnp.bfloat16)

    const = lambda j: (0, 0)
    z = pl.pallas_call(
        encoder_kernel,
        out_shape=jax.ShapeDtypeStruct((B, Z_DIM), jnp.float32),
        grid_spec=pltpu.PrefetchScalarGridSpec(
            num_scalar_prefetch=0,
            grid=(NBLK,),                                     # 2 column blocks
            in_specs=[
                pl.BlockSpec((B, X_DIM), const),              # x   (bf16, fetched once)
                pl.BlockSpec((None, X_DIM, TH1),              # W1  (bf16, contiguous block)
                             lambda j: (j, 0, 0)),
                pl.BlockSpec((1, TH1), lambda j: (0, j)),     # b1 slice
                pl.BlockSpec((TH1, H2P), lambda j: (j, 0)),   # W2 row block
                pl.BlockSpec((1, H2P), const),                # b2
                pl.BlockSpec((H2P, Z_DIM), const),            # W3_mean
                pl.BlockSpec((1, Z_DIM), const),              # b3_mean
                pl.BlockSpec((H2P, Z_DIM), const),            # W3_logvar
                pl.BlockSpec((1, Z_DIM), const),              # b3_logvar
                pl.BlockSpec((B, Z_DIM), const),              # epsilon
            ],
            out_specs=pl.BlockSpec((B, Z_DIM), const),        # z
            scratch_shapes=[pltpu.VMEM((B, H2P), jnp.float32)],  # fc2 accumulator
        ),
        compiler_params=pltpu.CompilerParams(
            dimension_semantics=("arbitrary",),
            vmem_limit_bytes=32 << 20),
    )(x_bf16, w1_p, b1_p, w2_p, b2_p, w3m_p, b3m_p, w3v_p, b3v_p, epsilon)
    return z


def prepare_params(w1, b1, w2, b2, w3m, b3m, w3v, b3v):
    """One-time packing: pad to TPU-friendly shapes, bf16 W1, column-block-major W1.

    Zero padding is mathematically neutral:
      * W1/b1 extra output columns give h1 == relu(0) == 0,
      * W2 extra input rows are zero, so padded h1 lanes contribute nothing,
      * W2/b2 extra output columns give h2 == 0, killed by zero W3 rows.
    """
    # (X_DIM, H1P) -> (NBLK, X_DIM, TH1): each TH1-wide column block is one
    # fully contiguous HBM region (single large DMA descriptor per grid step).
    w1_pad = jnp.pad(w1, ((0, 0), (0, H1P - H1))).astype(jnp.bfloat16)
    w1_p = jnp.transpose(w1_pad.reshape(X_DIM, NBLK, TH1), (1, 0, 2))

    b1_p = jnp.pad(b1, (0, H1P - H1)).reshape(1, H1P).astype(jnp.float32)
    w2_p = jnp.pad(w2, ((0, H1P - H1), (0, H2P - H2))).astype(jnp.float32)
    b2_p = jnp.pad(b2, (0, H2P - H2)).reshape(1, H2P).astype(jnp.float32)
    w3m_p = jnp.pad(w3m, ((0, H2P - H2), (0, 0))).astype(jnp.float32)
    w3v_p = jnp.pad(w3v, ((0, H2P - H2), (0, 0))).astype(jnp.float32)
    return (w1_p, b1_p, w2_p, b2_p,
            w3m_p, b3m.reshape(1, Z_DIM).astype(jnp.float32),
            w3v_p, b3v.reshape(1, Z_DIM).astype(jnp.float32))


def init_params(key):
    """Deterministic synthetic parameters (shapes from encoder_z.__init__)."""
    ks = jax.random.split(key, 8)

    def lin(kw, kb, fan_in, fan_out):
        bound = 1.0 / jnp.sqrt(fan_in)
        w = jax.random.uniform(kw, (fan_in, fan_out), jnp.float32, -bound, bound)
        b = jax.random.uniform(kb, (fan_out,), jnp.float32, -bound, bound)
        return w, b

    w1, b1 = lin(ks[0], ks[1], X_DIM, H1)
    w2, b2 = lin(ks[2], ks[3], H1, H2)
    w3m, b3m = lin(ks[4], ks[5], H2, Z_DIM)
    w3v, b3v = lin(ks[6], ks[7], H2, Z_DIM)
    return w1, b1, w2, b2, w3m, b3m, w3v, b3v


def reference_forward(x, w1, b1, w2, b2, w3m, b3m, w3v, b3v, epsilon):
    """Pure-f32 reference (exact semantics of the PyTorch module)."""
    h1 = jax.nn.relu(x @ w1 + b1)
    h2 = jax.nn.relu(h1 @ w2 + b2)
    mean = h2 @ w3m + b3m
    logvar = h2 @ w3v + b3v
    return mean + epsilon * jnp.exp(0.5 * logvar)


def reference_forward_quantized(x, w1, b1, w2, b2, w3m, b3m, w3v, b3v, epsilon):
    """Same quantization as the kernel path: bf16 fc1 inputs, f32 accumulation."""
    h1 = jnp.dot(x.astype(jnp.bfloat16), w1.astype(jnp.bfloat16),
                 preferred_element_type=jnp.float32) + b1
    h1 = jax.nn.relu(h1)
    h2 = jax.nn.relu(h1 @ w2 + b2)
    mean = h2 @ w3m + b3m
    logvar = h2 @ w3v + b3v
    return mean + epsilon * jnp.exp(0.5 * logvar)


if __name__ == "__main__":
    key = jax.random.PRNGKey(0)
    k_params, k_x, k_eps = jax.random.split(key, 3)

    B = 2  # small batch
    raw_params = init_params(k_params)
    packed = prepare_params(*raw_params)        # one-time: pad + bf16 + pack W1
    x = jax.random.normal(k_x, (B, X_DIM), jnp.float32)
    # torch.randn in sample_z is host RNG; we pass equivalent JAX noise in.
    epsilon = jax.random.normal(k_eps, (B, Z_DIM), jnp.float32)

    z = encoder_z_forward(x, packed, epsilon)
    z = jax.block_until_ready(z)
    assert z.shape == (B, Z_DIM)

    # Check against a reference using the same bf16 fc1 inputs.
    z_q = reference_forward_quantized(x, *raw_params, epsilon)
    assert jnp.allclose(z, z_q, atol=2e-3, rtol=2e-3), (z, z_q)

    # Loose check against the exact f32 module semantics (bf16 W1 quantization
    # introduces ~1e-2-level differences, well within VAE-encoder tolerance).
    z_f32 = reference_forward(x, *raw_params, epsilon)
    assert jnp.allclose(z, z_f32, atol=1e-1, rtol=1e-1), (z, z_f32)

    print("KERNEL_OK")
</pallas_src>

<mosaic_0001>
module attributes {stable_mosaic.version = 11 : i64} {
  func.func @encoder_kernel(%arg0: i32, %arg1: memref<2x10000xbf16, #tpu.memory_space<vmem>>, %arg2: memref<1x10000x256xbf16, #tpu.memory_space<vmem>>, %arg3: memref<1x256xf32, #tpu.memory_space<vmem>>, %arg4: memref<256x256xf32, #tpu.memory_space<vmem>>, %arg5: memref<1x256xf32, #tpu.memory_space<vmem>>, %arg6: memref<256x2xf32, #tpu.memory_space<vmem>>, %arg7: memref<1x2xf32, #tpu.memory_space<vmem>>, %arg8: memref<256x2xf32, #tpu.memory_space<vmem>>, %arg9: memref<1x2xf32, #tpu.memory_space<vmem>>, %arg10: memref<2x2xf32, #tpu.memory_space<vmem>>, %arg11: memref<2x2xf32, #tpu.memory_space<vmem>>, %arg12: memref<2x256xf32, #tpu.memory_space<vmem>>) attributes {dimension_semantics = [#tpu.dimension_semantics<arbitrary>], iteration_bounds = array<i64: 2>, scalar_prefetch = 0 : i64, scratch_operands = 1 : i64, tpu.core_type = #tpu.core_type<tc>, window_params = [{pipeline_mode = #tpu.pipeline_mode<synchronous>, transform_indices = @transform_0, window_bounds = array<i64: 2, 10000>}, {transform_indices = @transform_1, window_bounds = array<i64: 1, 10000, 256>}, {transform_indices = @transform_2, window_bounds = array<i64: 1, 256>}, {transform_indices = @transform_3, window_bounds = array<i64: 256, 256>}, {pipeline_mode = #tpu.pipeline_mode<synchronous>, transform_indices = @transform_4, window_bounds = array<i64: 1, 256>}, {pipeline_mode = #tpu.pipeline_mode<synchronous>, transform_indices = @transform_5, window_bounds = array<i64: 256, 2>}, {pipeline_mode = #tpu.pipeline_mode<synchronous>, transform_indices = @transform_6, window_bounds = array<i64: 1, 2>}, {pipeline_mode = #tpu.pipeline_mode<synchronous>, transform_indices = @transform_7, window_bounds = array<i64: 256, 2>}, {pipeline_mode = #tpu.pipeline_mode<synchronous>, transform_indices = @transform_8, window_bounds = array<i64: 1, 2>}, {pipeline_mode = #tpu.pipeline_mode<synchronous>, transform_indices = @transform_9, window_bounds = array<i64: 2, 2>}, {pipeline_mode = #tpu.pipeline_mode<synchronous>, transform_indices = @transform_10, window_bounds = array<i64: 2, 2>}]} {
    %c0_i32 = arith.constant 0 : i32
    %0 = arith.cmpi eq, %arg0, %c0_i32 : i32
    %1 = arith.extui %0 : i1 to i32
    %c0_i32_0 = arith.constant 0 : i32
    %2 = arith.cmpi ne, %1, %c0_i32_0 : i32
    scf.if %2 {
      %cst_16 = arith.constant 0.000000e+00 : f32
      %20 = vector.broadcast %cst_16 : f32 to vector<2x256xf32>
      %c0_17 = arith.constant 0 : index
      %c0_18 = arith.constant 0 : index
      %21 = vector.load %arg12[%c0_17, %c0_18] : memref<2x256xf32, #tpu.memory_space<vmem>>, vector<2x256xf32>
      tpu.vector_store %arg12[%c0_17, %c0_18], %20 {strides = array<i32>} : memref<2x256xf32, #tpu.memory_space<vmem>>, vector<2x256xf32>,
    } else {
    }
    %c0 = arith.constant 0 : index
    %c0_1 = arith.constant 0 : index
    %3 = vector.load %arg1[%c0, %c0_1] : memref<2x10000xbf16, #tpu.memory_space<vmem>>, vector<2x10000xbf16>
    %c0_2 = arith.constant 0 : index
    %c0_3 = arith.constant 0 : index
    %c0_4 = arith.constant 0 : index
    %4 = vector.load %arg2[%c0_2, %c0_3, %c0_4] : memref<1x10000x256xbf16, #tpu.memory_space<vmem>>, vector<1x10000x256xbf16>
    %5 = vector.shape_cast %4 : vector<1x10000x256xbf16> to vector<10000x256xbf16>
    %cst = arith.constant dense<0.000000e+00> : vector<2x256xf32>
    %6 = tpu.matmul %3, %5, %cst {dimension_numbers = #tpu.dot_dimension_numbers<[1], [0], [0], [1], [0, 0, 1, 1], [], []>} : vector<2x10000xbf16>, vector<10000x256xbf16>, vector<2x256xf32> -> vector<2x256xf32>
    %c0_5 = arith.constant 0 : index
    %c0_6 = arith.constant 0 : index
    %7 = vector.load %arg3[%c0_5, %c0_6] : memref<1x256xf32, #tpu.memory_space<vmem>>, vector<1x256xf32>
    %8 = vector.broadcast %7 : vector<1x256xf32> to vector<2x256xf32>
    %9 = arith.addf %6, %8 : vector<2x256xf32>
    %cst_7 = arith.constant 0.000000e+00 : f32
    %10 = vector.broadcast %cst_7 : f32 to vector<2x256xf32>
    %11 = arith.maximumf %9, %10 : vector<2x256xf32>
    %c0_8 = arith.constant 0 : index
    %c0_9 = arith.constant 0 : index
    %12 = vector.load %arg12[%c0_8, %c0_9] : memref<2x256xf32, #tpu.memory_space<vmem>>, vector<2x256xf32>
    %c0_10 = arith.constant 0 : index
    %c0_11 = arith.constant 0 : index
    %13 = vector.load %arg4[%c0_10, %c0_11] : memref<256x256xf32, #tpu.memory_space<vmem>>, vector<256x256xf32>
    %cst_12 = arith.constant dense<0.000000e+00> : vector<2x256xf32>
    %14 = tpu.matmul %11, %13, %cst_12 {dimension_numbers = #tpu.dot_dimension_numbers<[1], [0], [0], [1], [0, 0, 1, 1], [], []>} : vector<2x256xf32>, vector<256x256xf32>, vector<2x256xf32> -> vector<2x256xf32>
    %15 = arith.addf %12, %14 : vector<2x256xf32>
    %c0_13 = arith.constant 0 : index
    %c0_14 = arith.constant 0 : index
    %16 = vector.load %arg12[%c0_13, %c0_14] : memref<2x256xf32, #tpu.memory_space<vmem>>, vector<2x256xf32>
    tpu.vector_store %arg12[%c0_13, %c0_14], %15 {strides = array<i32>} : memref<2x256xf32, #tpu.memory_space<vmem>>, vector<2x256xf32>,
    %c1_i32 = arith.constant 1 : i32
    %17 = arith.cmpi eq, %arg0, %c1_i32 : i32
    %18 = arith.extui %17 : i1 to i32
    %c0_i32_15 = arith.constant 0 : i32
    %19 = arith.cmpi ne, %18, %c0_i32_15 : i32
    scf.if %19 {
      %c0_16 = arith.constant 0 : index
      %c0_17 = arith.constant 0 : index
      %20 = vector.load %arg12[%c0_16, %c0_17] : memref<2x256xf32, #tpu.memory_space<vmem>>, vector<2x256xf32>
      %c0_18 = arith.constant 0 : index
      %c0_19 = arith.constant 0 : index
      %21 = vector.load %arg5[%c0_18, %c0_19] : memref<1x256xf32, #tpu.memory_space<vmem>>, vector<1x256xf32>
      %22 = vector.broadcast %21 : vector<1x256xf32> to vector<2x256xf32>
      %23 = arith.addf %20, %22 : vector<2x256xf32>
      %cst_20 = arith.constant 0.000000e+00 : f32
      %24 = vector.broadcast %cst_20 : f32 to vector<2x256xf32>
      %25 = arith.maximumf %23, %24 : vector<2x256xf32>
      %c0_21 = arith.constant 0 : index
      %c0_22 = arith.constant 0 : index
      %26 = vector.load %arg6[%c0_21, %c0_22] : memref<256x2xf32, #tpu.memory_space<vmem>>, vector<256x2xf32>
      %cst_23 = arith.constant dense<0.000000e+00> : vector<2x2xf32>
      %27 = tpu.matmul %25, %26, %cst_23 {dimension_numbers = #tpu.dot_dimension_numbers<[1], [0], [0], [1], [0, 0, 1, 1], [], []>} : vector<2x256xf32>, vector<256x2xf32>, vector<2x2xf32> -> vector<2x2xf32>
      %c0_24 = arith.constant 0 : index
      %c0_25 = arith.constant 0 : index
      %28 = vector.load %arg7[%c0_24, %c0_25] : memref<1x2xf32, #tpu.memory_space<vmem>>, vector<1x2xf32>
      %29 = vector.broadcast %28 : vector<1x2xf32> to vector<2x2xf32>
      %30 = arith.addf %27, %29 : vector<2x2xf32>
      %c0_26 = arith.constant 0 : index
      %c0_27 = arith.constant 0 : index
      %31 = vector.load %arg8[%c0_26, %c0_27] : memref<256x2xf32, #tpu.memory_space<vmem>>, vector<256x2xf32>
      %cst_28 = arith.constant dense<0.000000e+00> : vector<2x2xf32>
      %32 = tpu.matmul %25, %31, %cst_28 {dimension_numbers = #tpu.dot_dimension_numbers<[1], [0], [0], [1], [0, 0, 1, 1], [], []>} : vector<2x256xf32>, vector<256x2xf32>, vector<2x2xf32> -> vector<2x2xf32>
      %c0_29 = arith.constant 0 : index
      %c0_30 = arith.constant 0 : index
      %33 = vector.load %arg9[%c0_29, %c0_30] : memref<1x2xf32, #tpu.memory_space<vmem>>, vector<1x2xf32>
      %34 = vector.broadcast %33 : vector<1x2xf32> to vector<2x2xf32>
      %35 = arith.addf %32, %34 : vector<2x2xf32>
      %c0_31 = arith.constant 0 : index
      %c0_32 = arith.constant 0 : index
      %36 = vector.load %arg10[%c0_31, %c0_32] : memref<2x2xf32, #tpu.memory_space<vmem>>, vector<2x2xf32>
      %cst_33 = arith.constant 5.000000e-01 : f32
      %37 = vector.broadcast %cst_33 : f32 to vector<2x2xf32>
      %38 = arith.mulf %37, %35 : vector<2x2xf32>
      %39 = math.exp %38 : vector<2x2xf32>
      %40 = arith.mulf %36, %39 : vector<2x2xf32>
      %41 = arith.addf %30, %40 : vector<2x2xf32>
      %c0_34 = arith.constant 0 : index
      %c0_35 = arith.constant 0 : index
      %42 = vector.load %arg11[%c0_34, %c0_35] : memref<2x2xf32, #tpu.memory_space<vmem>>, vector<2x2xf32>
      tpu.vector_store %arg11[%c0_34, %c0_35], %41 {strides = array<i32>} : memref<2x2xf32, #tpu.memory_space<vmem>>, vector<2x2xf32>,
    } else {
    }
    return
  }
  func.func @transform_0(%arg0: i32) -> (i32, i32) {
    %c0_i32 = arith.constant 0 : i32
    %c0_i32_0 = arith.constant 0 : i32
    %c0_i32_1 = arith.constant 0 : i32
    return %c0_i32, %c0_i32_0 : i32, i32
  }
  func.func @transform_1(%arg0: i32) -> (i32, i32, i32) {
    %c0_i32 = arith.constant 0 : i32
    %c0_i32_0 = arith.constant 0 : i32
    %c0_i32_1 = arith.constant 0 : i32
    return %arg0, %c0_i32, %c0_i32_0 : i32, i32, i32
  }
  func.func @transform_2(%arg0: i32) -> (i32, i32) {
    %c0_i32 = arith.constant 0 : i32
    %c0_i32_0 = arith.constant 0 : i32
    return %c0_i32, %arg0 : i32, i32
  }
  func.func @transform_3(%arg0: i32) -> (i32, i32) {
    %c0_i32 = arith.constant 0 : i32
    %c0_i32_0 = arith.constant 0 : i32
    return %arg0, %c0_i32 : i32, i32
  }
  func.func @transform_4(%arg0: i32) -> (i32, i32) {
    %c0_i32 = arith.constant 0 : i32
    %c0_i32_0 = arith.constant 0 : i32
    %c0_i32_1 = arith.constant 0 : i32
    return %c0_i32, %c0_i32_0 : i32, i32
  }
  func.func @transform_5(%arg0: i32) -> (i32, i32) {
    %c0_i32 = arith.constant 0 : i32
    %c0_i32_0 = arith.constant 0 : i32
    %c0_i32_1 = arith.constant 0 : i32
    return %c0_i32, %c0_i32_0 : i32, i32
  }
  func.func @transform_6(%arg0: i32) -> (i32, i32) {
    %c0_i32 = arith.constant 0 : i32
    %c0_i32_0 = arith.constant 0 : i32
    %c0_i32_1 = arith.constant 0 : i32
    return %c0_i32, %c0_i32_0 : i32, i32
  }
  func.func @transform_7(%arg0: i32) -> (i32, i32) {
    %c0_i32 = arith.constant 0 : i32
    %c0_i32_0 = arith.constant 0 : i32
    %c0_i32_1 = arith.constant 0 : i32
    return %c0_i32, %c0_i32_0 : i32, i32
  }
  func.func @transform_8(%arg0: i32) -> (i32, i32) {
    %c0_i32 = arith.constant 0 : i32
    %c0_i32_0 = arith.constant 0 : i32
    %c0_i32_1 = arith.constant 0 : i32
    return %c0_i32, %c0_i32_0 : i32, i32
  }
  func.func @transform_9(%arg0: i32) -> (i32, i32) {
    %c0_i32 = arith.constant 0 : i32
    %c0_i32_0 = arith.constant 0 : i32
    %c0_i32_1 = arith.constant 0 : i32
    return %c0_i32, %c0_i32_0 : i32, i32
  }
  func.func @transform_10(%arg0: i32) -> (i32, i32) {
    %c0_i32 = arith.constant 0 : i32
    %c0_i32_0 = arith.constant 0 : i32
    %c0_i32_1 = arith.constant 0 : i32
    return %c0_i32, %c0_i32_0 : i32, i32
  }
}

</mosaic_0001>

<llo_original>
// kernel: encoder_z_forward.1
$region0: #{encoder_z_forward.1}
  #allocation0 [shape = 'u32[]', space=smem, size = 0x4, offset = 0x4, fixed_abs, tag = 'smem constant byte address 0x4 - core index']
  #allocation1 [shape = 'u32[144,128]{1,0:T(1,128)}', space=vmem, size = 0x12000, scoped, tag = 'internal scratch']
  #allocation2 [shape = 'f32[2,256]{1,0:T(2,128)}', space=vmem, size = 0x800, scoped, tag = 'scratch operand']
  %s0 = inlined_call_operand.vmem [shape: bf16[2,10000], index: 0, kind: input, shape index: {}]
  %s1 = inlined_call_operand.hbm [shape: bf16[2,10000,256], index: 1, kind: input, shape index: {}]
  %s2 = inlined_call_operand.hbm [shape: f32[1,512], index: 2, kind: input, shape index: {}]
  %s3 = inlined_call_operand.hbm [shape: f32[512,256], index: 3, kind: input, shape index: {}]
  %s4 = inlined_call_operand.hbm [shape: f32[1,256], index: 4, kind: input, shape index: {}]
  %s5 = inlined_call_operand.vmem [shape: f32[256,2], index: 5, kind: input, shape index: {}]
  %s6 = inlined_call_operand.hbm [shape: f32[1,2], index: 6, kind: input, shape index: {}]
  %s7 = inlined_call_operand.vmem [shape: f32[256,2], index: 7, kind: input, shape index: {}]
  %s8 = inlined_call_operand.hbm [shape: f32[1,2], index: 8, kind: input, shape index: {}]
  %s9 = inlined_call_operand.hbm [shape: f32[2,2], index: 9, kind: input, shape index: {}]
  %s10 = inlined_call_operand.hbm [shape: f32[2,2], index: 10, kind: output, shape index: {}]
  %s11 = sld [smem:[#allocation0]]
  $region109: #{encoder_z_forward.1} parent=0
    _
  %s13 = ssub.s32 1, %s11
  %s14 = scalar_select 0, %s13, %s11
  $region1: #{encoder_z_forward.1} parent=0
    #allocation3 [shape = 'u8[10240000]{0}', space=vmem, size = 0x9c4000, scoped, tag = 'input window, operand 1']
    #allocation4 [shape = 's32[2]{0}', space=sflag, size = 0x8, scoped, tag = 'scoped memory for encoder_z_forward.1']
    #allocation5 [shape = 's32[2]{0}', space=sflag, size = 0x8, scoped, tag = 'scoped memory for encoder_z_forward.1']
    #allocation6 [shape = 'u8[2048]{0}', space=vmem, size = 0x800, scoped, tag = 'input window, operand 2']
    #allocation7 [shape = 's32[2]{0}', space=sflag, size = 0x8, scoped, tag = 'scoped memory for encoder_z_forward.1']
    #allocation8 [shape = 'u8[524288]{0}', space=vmem, size = 0x80000, scoped, tag = 'input window, operand 3']
    #allocation9 [shape = 'u8[1024]{0}', space=vmem, size = 0x400, scoped, tag = 'input window, operand 4, single buffered']
    #allocation10 [shape = 's32[1]{0}', space=sflag, size = 0x4, scoped, tag = 'scoped memory for encoder_z_forward.1']
    #allocation11 [shape = 'u8[512]{0}', space=vmem, size = 0x400, scoped, tag = 'input window, operand 6, single buffered']
    #allocation12 [shape = 'u8[512]{0}', space=vmem, size = 0x400, scoped, tag = 'input window, operand 8, single buffered']
    #allocation13 [shape = 's32[1]{0}', space=sflag, size = 0x4, scoped, tag = 'scoped memory for encoder_z_forward.1']
    #allocation14 [shape = 'u8[1024]{0}', space=vmem, size = 0x400, scoped, tag = 'input window, operand 9, single buffered']
    #allocation15 [shape = 'u8[1024]{0}', space=vmem, size = 0x400, scoped, tag = 'output window, operand 0, single buffered']
    %15 = vsyncpa [#allocation4], 0
    %s16 = scalar_lea.sflag [#allocation4], 1
    %17 = vsyncpa %s16, 0
    %18 = vsyncpa [#allocation7], 0
    %s19 = scalar_lea.sflag [#allocation7], 1
    %20 = vsyncpa %s19, 0
    %21 = vsyncpa [#allocation10], 0
    %22 = vsyncpa [#allocation13], 0
    %23 = vsyncpa [#allocation5], 0
    loop: start=0, step=1, limit=4
    $region2: #{encoder_z_forward.1} parent=1 // loop_pre_header
      _
    $region3: #{encoder_z_forward.1} parent=1 // loop_header
      %s25 = sphi 0, %s29
      %p26 = scmp.ge.s32.totalorder %s25, 4
      %s33 = sphi 0, %s33
      %s35 = sphi 0, %s33
      %s36 = sphi 0, %s35
      %s50 = sphi 0, %s36
      %s56 = sphi 0, %s58
      %s59 = sphi 0, %s56
      %s60 = sphi 0, %s59
      %s76 = sphi 0, %s60
      %s82 = sphi 0, %s84
      %s85 = sphi 0, %s82
      %s86 = sphi 0, %s85
      %s102 = sphi 0, %s86
      %s108 = sphi 0, %s110
      %s111 = sphi 0, %s108
      %s112 = sphi 0, %s111
      %s128 = sphi 0, %s112
      %s132 = sphi 0, %s132
      %s134 = sphi 0, %s132
      %s135 = sphi 0, %s134
      %s149 = sphi 0, %s135
      %s153 = sphi 0, %s153
      %s155 = sphi 0, %s153
      %s156 = sphi 0, %s155
      %s170 = sphi 0, %s156
      %s174 = sphi 0, %s174
      %s176 = sphi 0, %s174
      %s177 = sphi 0, %s176
      %s191 = sphi 0, %s177
      %s195 = sphi 0, %s195
      %s197 = sphi 0, %s195
      %s198 = sphi 0, %s197
      %s212 = sphi 0, %s198
      %s216 = sphi 0, %s216
      %s218 = sphi 0, %s216
      %s219 = sphi 0, %s218
      %s233 = sphi 0, %s219
      %s237 = sphi 0, %s237
      %s239 = sphi 0, %s237
      %s240 = sphi 0, %s239
      %s254 = sphi 0, %s240
      %s258 = sphi 0, %s258
      %s260 = sphi 0, %s258
      %s261 = sphi 0, %s260
      %s275 = sphi 0, %s261
    $region4: #{encoder_z_forward.1} parent=1 // loop_header_branch
      %28 = sbr.rel (%p26) target = $region8
    $region5: #{encoder_z_forward.1} parent=1 // loop_body
      %s30 = ssub.s32 %s25, 1
      %s31 = ssub.s32 %s25, 2
      %s32 = sadd.s32 %s25, 1
      %s34 = sadd.s32 %s33, 1
      %p37 = scmp.eq.s32.totalorder %s25, 1
      %p38 = scmp.ne.s32.totalorder %s33, %s35
      %p39 = scmp.eq.s32.totalorder %s25, 0
      %p40 = por %p38, %p39
      %p41 = scmp.ne.s32.totalorder %s33, %s35
      %p42 = scmp.eq.s32.totalorder %s30, 1
      %p43 = por %p41, %p42
      %p44 = scmp.ne.s32.totalorder %s35, %s36
      %p45 = scmp.eq.s32.totalorder %s30, 0
      %p46 = por %p44, %p45
      %p47 = scmp.ne.s32.totalorder %s35, %s36
      %p48 = scmp.eq.s32.totalorder %s31, 1
      %p49 = por %p47, %p48
      %p51 = scmp.ne.s32.totalorder %s36, %s50
      %p52 = scmp.eq.s32.totalorder %s31, 0
      %p53 = por %p51, %p52
      %s54 = ssub.s32 %s25, %s32
      %p55 = scmp.eq.s32.totalorder %s54, 0
      %s57 = sadd.s32 %s56, 1
      %s58 = scalar_select %p55, %s56, %s57
      %p61 = pneg %p55
      %p62 = scmp.eq.s32.totalorder %s25, 1
      %p63 = por %p61, %p62
      %p64 = scmp.ne.s32.totalorder %s56, %s59
      %p65 = scmp.eq.s32.totalorder %s25, 0
      %p66 = por %p64, %p65
      %p67 = scmp.ne.s32.totalorder %s56, %s59
      %p68 = scmp.eq.s32.totalorder %s30, 1
      %p69 = por %p67, %p68
      %p70 = scmp.ne.s32.totalorder %s59, %s60
      %p71 = scmp.eq.s32.totalorder %s30, 0
      %p72 = por %p70, %p71
      %p73 = scmp.ne.s32.totalorder %s59, %s60
      %p74 = scmp.eq.s32.totalorder %s31, 1
      %p75 = por %p73, %p74
      %p77 = scmp.ne.s32.totalorder %s60, %s76
      %p78 = scmp.eq.s32.totalorder %s31, 0
      %p79 = por %p77, %p78
      %s80 = ssub.s32 %s25, %s32
      %p81 = scmp.eq.s32.totalorder %s80, 0
      %s83 = sadd.s32 %s82, 1
      %s84 = scalar_select %p81, %s82, %s83
      %p87 = pneg %p81
      %p88 = scmp.eq.s32.totalorder %s25, 1
      %p89 = por %p87, %p88
      %p90 = scmp.ne.s32.totalorder %s82, %s85
      %p91 = scmp.eq.s32.totalorder %s25, 0
      %p92 = por %p90, %p91
      %p93 = scmp.ne.s32.totalorder %s82, %s85
      %p94 = scmp.eq.s32.totalorder %s30, 1
      %p95 = por %p93, %p94
      %p96 = scmp.ne.s32.totalorder %s85, %s86
      %p97 = scmp.eq.s32.totalorder %s30, 0
      %p98 = por %p96, %p97
      %p99 = scmp.ne.s32.totalorder %s85, %s86
      %p100 = scmp.eq.s32.totalorder %s31, 1
      %p101 = por %p99, %p100
      %p103 = scmp.ne.s32.totalorder %s86, %s102
      %p104 = scmp.eq.s32.totalorder %s31, 0
      %p105 = por %p103, %p104
      %s106 = ssub.s32 %s25, %s32
      %p107 = scmp.eq.s32.totalorder %s106, 0
      %s109 = sadd.s32 %s108, 1
      %s110 = scalar_select %p107, %s108, %s109
      %p113 = pneg %p107
      %p114 = scmp.eq.s32.totalorder %s25, 1
      %p115 = por %p113, %p114
      %p116 = scmp.ne.s32.totalorder %s108, %s111
      %p117 = scmp.eq.s32.totalorder %s25, 0
      %p118 = por %p116, %p117
      %p119 = scmp.ne.s32.totalorder %s108, %s111
      %p120 = scmp.eq.s32.totalorder %s30, 1
      %p121 = por %p119, %p120
      %p122 = scmp.ne.s32.totalorder %s111, %s112
      %p123 = scmp.eq.s32.totalorder %s30, 0
      %p124 = por %p122, %p123
      %p125 = scmp.ne.s32.totalorder %s111, %s112
      %p126 = scmp.eq.s32.totalorder %s31, 1
      %p127 = por %p125, %p126
      %p129 = scmp.ne.s32.totalorder %s112, %s128
      %p130 = scmp.eq.s32.totalorder %s31, 0
      %p131 = por %p129, %p130
      %s133 = sadd.s32 %s132, 1
      %p136 = scmp.eq.s32.totalorder %s25, 1
      %p137 = scmp.ne.s32.totalorder %s132, %s134
      %p138 = scmp.eq.s32.totalorder %s25, 0
      %p139 = por %p137, %p138
      %p140 = scmp.ne.s32.totalorder %s132, %s134
      %p141 = scmp.eq.s32.totalorder %s30, 1
      %p142 = por %p140, %p141
      %p143 = scmp.ne.s32.totalorder %s134, %s135
      %p144 = scmp.eq.s32.totalorder %s30, 0
      %p145 = por %p143, %p144
      %p146 = scmp.ne.s32.totalorder %s134, %s135
      %p147 = scmp.eq.s32.totalorder %s31, 1
      %p148 = por %p146, %p147
      %p150 = scmp.ne.s32.totalorder %s135, %s149
      %p151 = scmp.eq.s32.totalorder %s31, 0
      %p152 = por %p150, %p151
      %s154 = sadd.s32 %s153, 1
      %p157 = scmp.eq.s32.totalorder %s25, 1
      %p158 = scmp.ne.s32.totalorder %s153, %s155
      %p159 = scmp.eq.s32.totalorder %s25, 0
      %p160 = por %p158, %p159
      %p161 = scmp.ne.s32.totalorder %s153, %s155
      %p162 = scmp.eq.s32.totalorder %s30, 1
      %p163 = por %p161, %p162
      %p164 = scmp.ne.s32.totalorder %s155, %s156
      %p165 = scmp.eq.s32.totalorder %s30, 0
      %p166 = por %p164, %p165
      %p167 = scmp.ne.s32.totalorder %s155, %s156
      %p168 = scmp.eq.s32.totalorder %s31, 1
      %p169 = por %p167, %p168
      %p171 = scmp.ne.s32.totalorder %s156, %s170
      %p172 = scmp.eq.s32.totalorder %s31, 0
      %p173 = por %p171, %p172
      %s175 = sadd.s32 %s174, 1
      %p178 = scmp.eq.s32.totalorder %s25, 1
      %p179 = scmp.ne.s32.totalorder %s174, %s176
      %p180 = scmp.eq.s32.totalorder %s25, 0
      %p181 = por %p179, %p180
      %p182 = scmp.ne.s32.totalorder %s174, %s176
      %p183 = scmp.eq.s32.totalorder %s30, 1
      %p184 = por %p182, %p183
      %p185 = scmp.ne.s32.totalorder %s176, %s177
      %p186 = scmp.eq.s32.totalorder %s30, 0
      %p187 = por %p185, %p186
      %p188 = scmp.ne.s32.totalorder %s176, %s177
      %p189 = scmp.eq.s32.totalorder %s31, 1
      %p190 = por %p188, %p189
      %p192 = scmp.ne.s32.totalorder %s177, %s191
      %p193 = scmp.eq.s32.totalorder %s31, 0
      %p194 = por %p192, %p193
      %s196 = sadd.s32 %s195, 1
      %p199 = scmp.eq.s32.totalorder %s25, 1
      %p200 = scmp.ne.s32.totalorder %s195, %s197
      %p201 = scmp.eq.s32.totalorder %s25, 0
      %p202 = por %p200, %p201
      %p203 = scmp.ne.s32.totalorder %s195, %s197
      %p204 = scmp.eq.s32.totalorder %s30, 1
      %p205 = por %p203, %p204
      %p206 = scmp.ne.s32.totalorder %s197, %s198
      %p207 = scmp.eq.s32.totalorder %s30, 0
      %p208 = por %p206, %p207
      %p209 = scmp.ne.s32.totalorder %s197, %s198
      %p210 = scmp.eq.s32.totalorder %s31, 1
      %p211 = por %p209, %p210
      %p213 = scmp.ne.s32.totalorder %s198, %s212
      %p214 = scmp.eq.s32.totalorder %s31, 0
      %p215 = por %p213, %p214
      %s217 = sadd.s32 %s216, 1
      %p220 = scmp.eq.s32.totalorder %s25, 1
      %p221 = scmp.ne.s32.totalorder %s216, %s218
      %p222 = scmp.eq.s32.totalorder %s25, 0
      %p223 = por %p221, %p222
      %p224 = scmp.ne.s32.totalorder %s216, %s218
      %p225 = scmp.eq.s32.totalorder %s30, 1
      %p226 = por %p224, %p225
      %p227 = scmp.ne.s32.totalorder %s218, %s219
      %p228 = scmp.eq.s32.totalorder %s30, 0
      %p229 = por %p227, %p228
      %p230 = scmp.ne.s32.totalorder %s218, %s219
      %p231 = scmp.eq.s32.totalorder %s31, 1
      %p232 = por %p230, %p231
      %p234 = scmp.ne.s32.totalorder %s219, %s233
      %p235 = scmp.eq.s32.totalorder %s31, 0
      %p236 = por %p234, %p235
      %s238 = sadd.s32 %s237, 1
      %p241 = scmp.eq.s32.totalorder %s25, 1
      %p242 = scmp.ne.s32.totalorder %s237, %s239
      %p243 = scmp.eq.s32.totalorder %s25, 0
      %p244 = por %p242, %p243
      %p245 = scmp.ne.s32.totalorder %s237, %s239
      %p246 = scmp.eq.s32.totalorder %s30, 1
      %p247 = por %p245, %p246
      %p248 = scmp.ne.s32.totalorder %s239, %s240
      %p249 = scmp.eq.s32.totalorder %s30, 0
      %p250 = por %p248, %p249
      %p251 = scmp.ne.s32.totalorder %s239, %s240
      %p252 = scmp.eq.s32.totalorder %s31, 1
      %p253 = por %p251, %p252
      %p255 = scmp.ne.s32.totalorder %s240, %s254
      %p256 = scmp.eq.s32.totalorder %s31, 0
      %p257 = por %p255, %p256
      %s259 = sadd.s32 %s258, 1
      %p262 = scmp.eq.s32.totalorder %s25, 1
      %p263 = scmp.ne.s32.totalorder %s258, %s260
      %p264 = scmp.eq.s32.totalorder %s25, 0
      %p265 = por %p263, %p264
      %p266 = scmp.ne.s32.totalorder %s258, %s260
      %p267 = scmp.eq.s32.totalorder %s30, 1
      %p268 = por %p266, %p267
      %p269 = scmp.ne.s32.totalorder %s260, %s261
      %p270 = scmp.eq.s32.totalorder %s30, 0
      %p271 = por %p269, %p270
      %p272 = scmp.ne.s32.totalorder %s260, %s261
      %p273 = scmp.eq.s32.totalorder %s31, 1
      %p274 = por %p272, %p273
      %p276 = scmp.ne.s32.totalorder %s261, %s275
      %p277 = scmp.eq.s32.totalorder %s31, 0
      %p278 = por %p276, %p277
      %p279 = scmp.le.s32.totalorder 1, %s25
      %p280 = scmp.lt.s32.totalorder %s25, 3
      %p281 = pnand %p279, %p280
      %p282 = pneg %p281
      // Predicated region
      $region9: #{encoder_z_forward.1} parent=5 // pred_check
        _
      $region10: #{encoder_z_forward.1} parent=5 // pred_check_branch
        %284 = sbr.rel (%p281) target = $region12
      $region11: #{encoder_z_forward.1} parent=5 // pred_region
        %s285 = ssub.s32 %s25, 1
        // Predicated region
        $region13: #{encoder_z_forward.1} parent=11 // pred_check
          %p286 = pneg %p46
        $region14: #{encoder_z_forward.1} parent=11 // pred_check_branch
          %288 = sbr.rel (%p286) target = $region16
        $region15: #{encoder_z_forward.1} parent=11 // pred_region
          _
        $region16: #{encoder_z_forward.1} parent=11 // pred_fallthru
          _
        // Predicated region
        $region17: #{encoder_z_forward.1} parent=11 // pred_check
          %p289 = pneg %p145
        $region18: #{encoder_z_forward.1} parent=11 // pred_check_branch
          %291 = sbr.rel (%p289) target = $region20
        $region19: #{encoder_z_forward.1} parent=11 // pred_region
          %s293 = ssub.s32 32, 32
          %294 = vsyncadd [#allocation10], %s293
          %s296 = sshll.u32 [#allocation9], 4
          %s297 = int_to_ptr.vmem [resolvable:$true] %s296
          %299 = dma.hbm_to_vmem [thread:$0]  %s4, 32, %s297, [#allocation10]
        $region20: #{encoder_z_forward.1} parent=11 // pred_fallthru
          _
        // Predicated region
        $region21: #{encoder_z_forward.1} parent=11 // pred_check
          %p300 = pneg %p166
        $region22: #{encoder_z_forward.1} parent=11 // pred_check_branch
          %302 = sbr.rel (%p300) target = $region24
        $region23: #{encoder_z_forward.1} parent=11 // pred_region
          _
        $region24: #{encoder_z_forward.1} parent=11 // pred_fallthru
          _
        // Predicated region
        $region25: #{encoder_z_forward.1} parent=11 // pred_check
          %p303 = pneg %p187
        $region26: #{encoder_z_forward.1} parent=11 // pred_check_branch
          %305 = sbr.rel (%p303) target = $region28
        $region27: #{encoder_z_forward.1} parent=11 // pred_region
          %s307 = ssub.s32 16, 16
          %308 = vsyncadd [#allocation10], %s307
          %s310 = sshll.u32 [#allocation11], 4
          %s311 = int_to_ptr.vmem [resolvable:$true] %s310
          %313 = dma.hbm_to_vmem [thread:$0]  %s6, 16, %s311, [#allocation10]
        $region28: #{encoder_z_forward.1} parent=11 // pred_fallthru
          _
        // Predicated region
        $region29: #{encoder_z_forward.1} parent=11 // pred_check
          %p314 = pneg %p208
        $region30: #{encoder_z_forward.1} parent=11 // pred_check_branch
          %316 = sbr.rel (%p314) target = $region32
        $region31: #{encoder_z_forward.1} parent=11 // pred_region
          _
        $region32: #{encoder_z_forward.1} parent=11 // pred_fallthru
          _
        // Predicated region
        $region33: #{encoder_z_forward.1} parent=11 // pred_check
          %p317 = pneg %p229
        $region34: #{encoder_z_forward.1} parent=11 // pred_check_branch
          %319 = sbr.rel (%p317) target = $region36
        $region35: #{encoder_z_forward.1} parent=11 // pred_region
          %s321 = ssub.s32 16, 16
          %322 = vsyncadd [#allocation13], %s321
          %s324 = sshll.u32 [#allocation12], 4
          %s325 = int_to_ptr.vmem [resolvable:$true] %s324
          %327 = dma.hbm_to_vmem [thread:$0]  %s8, 16, %s325, [#allocation13]
        $region36: #{encoder_z_forward.1} parent=11 // pred_fallthru
          _
        // Predicated region
        $region37: #{encoder_z_forward.1} parent=11 // pred_check
          %p328 = pneg %p250
        $region38: #{encoder_z_forward.1} parent=11 // pred_check_branch
          %330 = sbr.rel (%p328) target = $region40
        $region39: #{encoder_z_forward.1} parent=11 // pred_region
          %s332 = ssub.s32 32, 32
          %333 = vsyncadd [#allocation13], %s332
          %s335 = sshll.u32 [#allocation14], 4
          %s336 = int_to_ptr.vmem [resolvable:$true] %s335
          %338 = dma.hbm_to_vmem [thread:$0]  %s9, 32, %s336, [#allocation13]
        $region40: #{encoder_z_forward.1} parent=11 // pred_fallthru
          _
      $region12: #{encoder_z_forward.1} parent=5 // pred_fallthru
        _
      %p339 = scmp.lt.s32.totalorder %s25, 2
      // Predicated region
      $region41: #{encoder_z_forward.1} parent=5 // pred_check
        %p340 = pneg %p339
      $region42: #{encoder_z_forward.1} parent=5 // pred_check_branch
        %342 = sbr.rel (%p340) target = $region44
      $region43: #{encoder_z_forward.1} parent=5 // pred_region
        // Predicated region
        $region45: #{encoder_z_forward.1} parent=43 // pred_check
          %p343 = pneg %p66
        $region46: #{encoder_z_forward.1} parent=43 // pred_check_branch
          %345 = sbr.rel (%p343) target = $region48
        $region47: #{encoder_z_forward.1} parent=43 // pred_region
          %s346 = sand.u32 %s56, 1
          %s347 = scalar_lea.sflag [#allocation4], %s346
          %s348 = sand.u32 %s56, 1
          %s349 = smul.addr %s348, 10000
          %s350 = scalar_lea.vmem [#allocation3], %s349
          %s352 = ssub.s32 160000, 160000
          %353 = vsyncadd %s347, %s352
          %s354 = smul.addr %s25, 2500
          %s355 = smul.addr %s354, 64
          %s356 = scalar_lea.hbm %s1, %s355
          %s357 = sshll.u32 %s350, 4
          %s358 = int_to_ptr.vmem [resolvable:$true] %s357
          %363 = dma.hbm_to_vmem [thread:$0]  %s356, 160000, %s358, %s347, 128, 128, 8
        $region48: #{encoder_z_forward.1} parent=43 // pred_fallthru
          _
        // Predicated region
        $region49: #{encoder_z_forward.1} parent=43 // pred_check
          %p364 = pneg %p92
        $region50: #{encoder_z_forward.1} parent=43 // pred_check_branch
          %366 = sbr.rel (%p364) target = $region52
        $region51: #{encoder_z_forward.1} parent=43 // pred_region
          %s367 = sand.u32 %s25, 1
          %s368 = scalar_lea.sflag [#allocation7], %s367
          %s369 = sand.u32 %s82, 1
          %s370 = smul.addr %s369, 2
          %s371 = scalar_lea.vmem [#allocation6], %s370
          %s372 = smul.u32 2, %s25
          %s374 = ssub.s32 32, 32
          %375 = vsyncadd %s368, %s374
          %s376 = smul.addr %s372, 16
          %s377 = scalar_lea.hbm %s2, %s376
          %s379 = sshll.u32 %s371, 4
          %s380 = int_to_ptr.vmem [resolvable:$true] %s379
          %382 = dma.hbm_to_vmem [thread:$0]  %s377, 32, %s380, %s368
        $region52: #{encoder_z_forward.1} parent=43 // pred_fallthru
          _
        // Predicated region
        $region53: #{encoder_z_forward.1} parent=43 // pred_check
          %p383 = pneg %p118
        $region54: #{encoder_z_forward.1} parent=43 // pred_check_branch
          %385 = sbr.rel (%p383) target = $region56
        $region55: #{encoder_z_forward.1} parent=43 // pred_region
          %s386 = sand.u32 %s25, 1
          %s387 = scalar_lea.sflag [#allocation7], %s386
          %s388 = sand.u32 %s108, 1
          %s389 = smul.addr %s388, 512
          %s390 = scalar_lea.vmem [#allocation8], %s389
          %s391 = smul.u32 32, %s25
          %s393 = ssub.s32 8192, 8192
          %394 = vsyncadd %s387, %s393
          %s395 = smul.addr %s391, 2
          %s396 = smul.addr %s395, 128
          %s397 = scalar_lea.hbm %s3, %s396
          %s398 = sshll.u32 %s390, 4
          %s399 = int_to_ptr.vmem [resolvable:$true] %s398
          %404 = dma.hbm_to_vmem [thread:$0]  %s397, 8192, %s399, %s387, 256, 256, 16
        $region56: #{encoder_z_forward.1} parent=43 // pred_fallthru
          _
      $region44: #{encoder_z_forward.1} parent=5 // pred_fallthru
        _
      %p405 = scmp.le.s32.totalorder 1, %s25
      %p406 = scmp.lt.s32.totalorder %s25, 3
      %p407 = pnand %p405, %p406
      %p408 = pneg %p407
      // Predicated region
      $region57: #{encoder_z_forward.1} parent=5 // pred_check
        _
      $region58: #{encoder_z_forward.1} parent=5 // pred_check_branch
        %410 = sbr.rel (%p407) target = $region60
      $region59: #{encoder_z_forward.1} parent=5 // pred_region
        %s411 = ssub.s32 %s25, 1
        %s412 = sand.u32 %s59, 1
        %s413 = scalar_lea.sflag [#allocation4], %s412
        %s414 = sand.u32 %s59, 1
        %s415 = smul.addr %s414, 10000
        %s416 = scalar_lea.vmem [#allocation3], %s415
        // Predicated region
        $region61: #{encoder_z_forward.1} parent=59 // pred_check
          %p417 = pneg %p72
        $region62: #{encoder_z_forward.1} parent=59 // pred_check_branch
          %419 = sbr.rel (%p417) target = $region64
        $region63: #{encoder_z_forward.1} parent=59 // pred_region
          %420 = dma.done %s413, 160000
        $region64: #{encoder_z_forward.1} parent=59 // pred_fallthru
          _
        %s421 = sand.u32 %s30, 1
        %s422 = scalar_lea.sflag [#allocation7], %s421
        %s423 = sand.u32 %s85, 1
        %s424 = smul.addr %s423, 2
        %s425 = scalar_lea.vmem [#allocation6], %s424
        // Predicated region
        $region65: #{encoder_z_forward.1} parent=59 // pred_check
          %p426 = pneg %p98
        $region66: #{encoder_z_forward.1} parent=59 // pred_check_branch
          %428 = sbr.rel (%p426) target = $region68
        $region67: #{encoder_z_forward.1} parent=59 // pred_region
          %429 = dma.done %s422, 32
        $region68: #{encoder_z_forward.1} parent=59 // pred_fallthru
          _
        %s430 = sand.u32 %s30, 1
        %s431 = scalar_lea.sflag [#allocation7], %s430
        %s432 = sand.u32 %s111, 1
        %s433 = smul.addr %s432, 512
        %s434 = scalar_lea.vmem [#allocation8], %s433
        // Predicated region
        $region69: #{encoder_z_forward.1} parent=59 // pred_check
          %p435 = pneg %p124
        $region70: #{encoder_z_forward.1} parent=59 // pred_check_branch
          %437 = sbr.rel (%p435) target = $region72
        $region71: #{encoder_z_forward.1} parent=59 // pred_region
          %438 = dma.done %s431, 8192
        $region72: #{encoder_z_forward.1} parent=59 // pred_fallthru
          _
        // Predicated region
        $region73: #{encoder_z_forward.1} parent=59 // pred_check
          %p439 = pneg %p145
        $region74: #{encoder_z_forward.1} parent=59 // pred_check_branch
          %441 = sbr.rel (%p439) target = $region76
        $region75: #{encoder_z_forward.1} parent=59 // pred_region
          %442 = dma.done [#allocation10], 32
        $region76: #{encoder_z_forward.1} parent=59 // pred_fallthru
          _
        // Predicated region
        $region77: #{encoder_z_forward.1} parent=59 // pred_check
          %p443 = pneg %p187
        $region78: #{encoder_z_forward.1} parent=59 // pred_check_branch
          %445 = sbr.rel (%p443) target = $region80
        $region79: #{encoder_z_forward.1} parent=59 // pred_region
          %446 = dma.done [#allocation10], 16
        $region80: #{encoder_z_forward.1} parent=59 // pred_fallthru
          _
        // Predicated region
        $region81: #{encoder_z_forward.1} parent=59 // pred_check
          %p447 = pneg %p229
        $region82: #{encoder_z_forward.1} parent=59 // pred_check_branch
          %449 = sbr.rel (%p447) target = $region84
        $region83: #{encoder_z_forward.1} parent=59 // pred_region
          %450 = dma.done [#allocation13], 16
        $region84: #{encoder_z_forward.1} parent=59 // pred_fallthru
          _
        // Predicated region
        $region85: #{encoder_z_forward.1} parent=59 // pred_check
          %p451 = pneg %p250
        $region86: #{encoder_z_forward.1} parent=59 // pred_check_branch
          %453 = sbr.rel (%p451) target = $region88
        $region87: #{encoder_z_forward.1} parent=59 // pred_region
          %454 = dma.done [#allocation13], 32
        $region88: #{encoder_z_forward.1} parent=59 // pred_fallthru
          _
        %p455 = pneg %p46
        %p456 = pneg %p43
        %s457 = sand.u32 %s59, 1
        %s458 = scalar_lea.sflag [#allocation4], %s457
        %s459 = sand.u32 %s59, 1
        %s460 = smul.addr %s459, 10000
        %s461 = scalar_lea.vmem [#allocation3], %s460
        %p462 = pneg %p72
        %p463 = pneg %p69
        %s464 = sand.u32 %s30, 1
        %s465 = scalar_lea.sflag [#allocation7], %s464
        %s466 = sand.u32 %s85, 1
        %s467 = smul.addr %s466, 2
        %s468 = scalar_lea.vmem [#allocation6], %s467
        %p469 = pneg %p98
        %p470 = pneg %p95
        %s471 = sand.u32 %s30, 1
        %s472 = scalar_lea.sflag [#allocation7], %s471
        %s473 = sand.u32 %s111, 1
        %s474 = smul.addr %s473, 512
        %s475 = scalar_lea.vmem [#allocation8], %s474
        %p476 = pneg %p124
        %p477 = pneg %p121
        %p478 = pneg %p145
        %p479 = pneg %p142
        %p480 = pneg %p166
        %p481 = pneg %p163
        %p482 = pneg %p187
        %p483 = pneg %p184
        %p484 = pneg %p208
        %p485 = pneg %p205
        %p486 = pneg %p229
        %p487 = pneg %p226
        %p488 = pneg %p250
        %p489 = pneg %p247
        %p490 = pneg %p271
        %p491 = pneg %p268
        %s492 = smul.u32 2, %s30
        %s493 = smul.u32 32, %s30
        %p495 = scmp.eq.s32.totalorder %s30, 0
        // Predicated region
        $region89: #{encoder_z_forward.1} parent=59 // pred_check
          %p496 = pneg %p495
        $region90: #{encoder_z_forward.1} parent=59 // pred_check_branch
          %498 = sbr.rel (%p496) target = $region92
        $region91: #{encoder_z_forward.1} parent=59 // pred_region
          %499 = vst [vmem:[#allocation2] sm:$0xf] 0.0
        $region92: #{encoder_z_forward.1} parent=59 // pred_fallthru
          _
        %v500 = vld [vmem:[%s0] sm:$0xff]
        %v501 = vld [vmem:[%s0 + $0x8] sm:$0xff]
        %v502 = vld [vmem:[%s0 + $0x10] sm:$0xff]
        %v503 = vld [vmem:[%s0 + $0x18] sm:$0xff]
        %v504 = vld [vmem:[%s0 + $0x20] sm:$0xff]
        %v505 = vld [vmem:[%s0 + $0x28] sm:$0xff]
        %v506 = vld [vmem:[%s0 + $0x30] sm:$0xff]
        %v507 = vld [vmem:[%s0 + $0x38] sm:$0xff]
        %v508 = vld [vmem:[%s0 + $0x40] sm:$0xff]
        %v509 = vld [vmem:[%s0 + $0x48] sm:$0x7f]
        %v510 = vld [vmem:[%s416] sm:$0xff]
        %v511 = vld [vmem:[%s416 + $0x8] sm:$0xff]
        %v512 = vld [vmem:[%s416 + $0x10] sm:$0xff]
        %v513 = vld [vmem:[%s416 + $0x18] sm:$0xff]
        %v514 = vld [vmem:[%s416 + $0x20] sm:$0xff]
        %v515 = vld [vmem:[%s416 + $0x28] sm:$0xff]
        %v516 = vld [vmem:[%s416 + $0x30] sm:$0xff]
        %v517 = vld [vmem:[%s416 + $0x38] sm:$0xff]
        %v518 = vld [vmem:[%s416 + $0x40] sm:$0xff]
        %v519 = vld [vmem:[%s416 + $0x48] sm:$0xff]
        %v520 = vld [vmem:[%s416 + $0x50] sm:$0xff]
        %v521 = vld [vmem:[%s416 + $0x58] sm:$0xff]
        %v522 = vld [vmem:[%s416 + $0x60] sm:$0xff]
        %v523 = vld [vmem:[%s416 + $0x68] sm:$0xff]
        %v524 = vld [vmem:[%s416 + $0x70] sm:$0xff]
        %v525 = vld [vmem:[%s416 + $0x78] sm:$0xff]
        %v526 = vld [vmem:[%s416 + $0x80] sm:$0xff]
        %v527 = vld [vmem:[%s416 + $0x88] sm:$0xff]
        %v528 = vld [vmem:[%s416 + $0x90] sm:$0xff]
        %v529 = vld [vmem:[%s416 + $0x98] sm:$0xff]
        %v530 = vld [vmem:[%s416 + $0xa0] sm:$0xff]
        %v531 = vld [vmem:[%s416 + $0xa8] sm:$0xff]
        %v532 = vld [vmem:[%s416 + $0xb0] sm:$0xff]
        %v533 = vld [vmem:[%s416 + $0xb8] sm:$0xff]
        %v534 = vld [vmem:[%s416 + $0xc0] sm:$0xff]
        %v535 = vld [vmem:[%s416 + $0xc8] sm:$0xff]
        %v536 = vld [vmem:[%s416 + $0xd0] sm:$0xff]
        %v537 = vld [vmem:[%s416 + $0xd8] sm:$0xff]
        %v538 = vld [vmem:[%s416 + $0xe0] sm:$0xff]
        %v539 = vld [vmem:[%s416 + $0xe8] sm:$0xff]
        %v540 = vld [vmem:[%s416 + $0xf0] sm:$0xff]
        %v541 = vld [vmem:[%s416 + $0xf8] sm:$0xff]
        %v542 = vld [vmem:[%s416 + $0x100] sm:$0xff]
        %v543 = vld [vmem:[%s416 + $0x108] sm:$0xff]
        %v544 = vld [vmem:[%s416 + $0x110] sm:$0xff]
        %v545 = vld [vmem:[%s416 + $0x118] sm:$0xff]
        %v546 = vld [vmem:[%s416 + $0x120] sm:$0xff]
        %v547 = vld [vmem:[%s416 + $0x128] sm:$0xff]
        %v548 = vld [vmem:[%s416 + $0x130] sm:$0xff]
        %v549 = vld [vmem:[%s416 + $0x138] sm:$0xff]
        %v550 = vld [vmem:[%s416 + $0x140] sm:$0xff]
        %v551 = vld [vmem:[%s416 + $0x148] sm:$0xff]
        %v552 = vld [vmem:[%s416 + $0x150] sm:$0xff]
        %v553 = vld [vmem:[%s416 + $0x158] sm:$0xff]
        %v554 = vld [vmem:[%s416 + $0x160] sm:$0xff]
        %v555 = vld [vmem:[%s416 + $0x168] sm:$0xff]
        %v556 = vld [vmem:[%s416 + $0x170] sm:$0xff]
        %v557 = vld [vmem:[%s416 + $0x178] sm:$0xff]
        %v558 = vld [vmem:[%s416 + $0x180] sm:$0xff]
        %v559 = vld [vmem:[%s416 + $0x188] sm:$0xff]
        %v560 = vld [vmem:[%s416 + $0x190] sm:$0xff]
        %v561 = vld [vmem:[%s416 + $0x198] sm:$0xff]
        %v562 = vld [vmem:[%s416 + $0x1a0] sm:$0xff]
        %v563 = vld [vmem:[%s416 + $0x1a8] sm:$0xff]
        %v564 = vld [vmem:[%s416 + $0x1b0] sm:$0xff]
        %v565 = vld [vmem:[%s416 + $0x1b8] sm:$0xff]
        %v566 = vld [vmem:[%s416 + $0x1c0] sm:$0xff]
        %v567 = vld [vmem:[%s416 + $0x1c8] sm:$0xff]
        %v568 = vld [vmem:[%s416 + $0x1d0] sm:$0xff]
        %v569 = vld [vmem:[%s416 + $0x1d8] sm:$0xff]
        %v570 = vld [vmem:[%s416 + $0x1e0] sm:$0xff]
        %v571 = vld [vmem:[%s416 + $0x1e8] sm:$0xff]
        %v572 = vld [vmem:[%s416 + $0x1f0] sm:$0xff]
        %v573 = vld [vmem:[%s416 + $0x1f8] sm:$0xff]
        %v574 = vld [vmem:[%s416 + $0x200] sm:$0xff]
        %v575 = vld [vmem:[%s416 + $0x208] sm:$0xff]
        %v576 = vld [vmem:[%s416 + $0x210] sm:$0xff]
        %v577 = vld [vmem:[%s416 + $0x218] sm:$0xff]
        %v578 = vld [vmem:[%s416 + $0x220] sm:$0xff]
        %v579 = vld [vmem:[%s416 + $0x228] sm:$0xff]
        %v580 = vld [vmem:[%s416 + $0x230] sm:$0xff]
        %v581 = vld [vmem:[%s416 + $0x238] sm:$0xff]
        %v582 = vld [vmem:[%s416 + $0x240] sm:$0xff]
        %v583 = vld [vmem:[%s416 + $0x248] sm:$0xff]
        %v584 = vld [vmem:[%s416 + $0x250] sm:$0xff]
        %v585 = vld [vmem:[%s416 + $0x258] sm:$0xff]
        %v586 = vld [vmem:[%s416 + $0x260] sm:$0xff]
        %v587 = vld [vmem:[%s416 + $0x268] sm:$0xff]
        %v588 = vld [vmem:[%s416 + $0x270] sm:$0xff]
        %v589 = vld [vmem:[%s416 + $0x278] sm:$0xff]
        %v590 = vld [vmem:[%s416 + $0x280] sm:$0xff]
        %v591 = vld [vmem:[%s416 + $0x288] sm:$0xff]
        %v592 = vld [vmem:[%s416 + $0x290] sm:$0xff]
        %v593 = vld [vmem:[%s416 + $0x298] sm:$0xff]
        %v594 = vld [vmem:[%s416 + $0x2a0] sm:$0xff]
        %v595 = vld [vmem:[%s416 + $0x2a8] sm:$0xff]
        %v596 = vld [vmem:[%s416 + $0x2b0] sm:$0xff]
        %v597 = vld [vmem:[%s416 + $0x2b8] sm:$0xff]
        %v598 = vld [vmem:[%s416 + $0x2c0] sm:$0xff]
        %v599 = vld [vmem:[%s416 + $0x2c8] sm:$0xff]
        %v600 = vld [vmem:[%s416 + $0x2d0] sm:$0xff]
        %v601 = vld [vmem:[%s416 + $0x2d8] sm:$0xff]
        %v602 = vld [vmem:[%s416 + $0x2e0] sm:$0xff]
        %v603 = vld [vmem:[%s416 + $0x2e8] sm:$0xff]
        %v604 = vld [vmem:[%s416 + $0x2f0] sm:$0xff]
        %v605 = vld [vmem:[%s416 + $0x2f8] sm:$0xff]
        %v606 = vld [vmem:[%s416 + $0x300] sm:$0xff]
        %v607 = vld [vmem:[%s416 + $0x308] sm:$0xff]
        %v608 = vld [vmem:[%s416 + $0x310] sm:$0xff]
        %v609 = vld [vmem:[%s416 + $0x318] sm:$0xff]
        %v610 = vld [vmem:[%s416 + $0x320] sm:$0xff]
        %v611 = vld [vmem:[%s416 + $0x328] sm:$0xff]
        %v612 = vld [vmem:[%s416 + $0x330] sm:$0xff]
        %v613 = vld [vmem:[%s416 + $0x338] sm:$0xff]
        %v614 = vld [vmem:[%s416 + $0x340] sm:$0xff]
        %v615 = vld [vmem:[%s416 + $0x348] sm:$0xff]
        %v616 = vld [vmem:[%s416 + $0x350] sm:$0xff]
        %v617 = vld [vmem:[%s416 + $0x358] sm:$0xff]
        %v618 = vld [vmem:[%s416 + $0x360] sm:$0xff]
        %v619 = vld [vmem:[%s416 + $0x368] sm:$0xff]
        %v620 = vld [vmem:[%s416 + $0x370] sm:$0xff]
        %v621 = vld [vmem:[%s416 + $0x378] sm:$0xff]
        %v622 = vld [vmem:[%s416 + $0x380] sm:$0xff]
        %v623 = vld [vmem:[%s416 + $0x388] sm:$0xff]
        %v624 = vld [vmem:[%s416 + $0x390] sm:$0xff]
        %v625 = vld [vmem:[%s416 + $0x398] sm:$0xff]
        %v626 = vld [vmem:[%s416 + $0x3a0] sm:$0xff]
        %v627 = vld [vmem:[%s416 + $0x3a8] sm:$0xff]
        %v628 = vld [vmem:[%s416 + $0x3b0] sm:$0xff]
        %v629 = vld [vmem:[%s416 + $0x3b8] sm:$0xff]
        %v630 = vld [vmem:[%s416 + $0x3c0] sm:$0xff]
        %v631 = vld [vmem:[%s416 + $0x3c8] sm:$0xff]
        %v632 = vld [vmem:[%s416 + $0x3d0] sm:$0xff]
        %v633 = vld [vmem:[%s416 + $0x3d8] sm:$0xff]
        %v634 = vld [vmem:[%s416 + $0x3e0] sm:$0xff]
        %v635 = vld [vmem:[%s416 + $0x3e8] sm:$0xff]
        %v636 = vld [vmem:[%s416 + $0x3f0] sm:$0xff]
        %v637 = vld [vmem:[%s416 + $0x3f8] sm:$0xff]
        %v638 = vld [vmem:[%s416 + $0x400] sm:$0xff]
        %v639 = vld [vmem:[%s416 + $0x408] sm:$0xff]
        %v640 = vld [vmem:[%s416 + $0x410] sm:$0xff]
        %v641 = vld [vmem:[%s416 + $0x418] sm:$0xff]
        %v642 = vld [vmem:[%s416 + $0x420] sm:$0xff]
        %v643 = vld [vmem:[%s416 + $0x428] sm:$0xff]
        %v644 = vld [vmem:[%s416 + $0x430] sm:$0xff]
        %v645 = vld [vmem:[%s416 + $0x438] sm:$0xff]
        %v646 = vld [vmem:[%s416 + $0x440] sm:$0xff]
        %v647 = vld [vmem:[%s416 + $0x448] sm:$0xff]
        %v648 = vld [vmem:[%s416 + $0x450] sm:$0xff]
        %v649 = vld [vmem:[%s416 + $0x458] sm:$0xff]
        %v650 = vld [vmem:[%s416 + $0x460] sm:$0xff]
        %v651 = vld [vmem:[%s416 + $0x468] sm:$0xff]
        %v652 = vld [vmem:[%s416 + $0x470] sm:$0xff]
        %v653 = vld [vmem:[%s416 + $0x478] sm:$0xff]
        %v654 = vld [vmem:[%s416 + $0x480] sm:$0xff]
        %v655 = vld [vmem:[%s416 + $0x488] sm:$0xff]
        %v656 = vld [vmem:[%s416 + $0x490] sm:$0xff]
        %v657 = vld [vmem:[%s416 + $0x498] sm:$0xff]
        %v658 = vld [vmem:[%s416 + $0x4a0] sm:$0xff]
        %v659 = vld [vmem:[%s416 + $0x4a8] sm:$0xff]
        %v660 = vld [vmem:[%s416 + $0x4b0] sm:$0xff]
        %v661 = vld [vmem:[%s416 + $0x4b8] sm:$0xff]
        %v662 = vld [vmem:[%s416 + $0x4c0] sm:$0xff]
        %v663 = vld [vmem:[%s416 + $0x4c8] sm:$0xff]
        %v664 = vld [vmem:[%s416 + $0x4d0] sm:$0xff]
        %v665 = vld [vmem:[%s416 + $0x4d8] sm:$0xff]
        %v666 = vld [vmem:[%s416 + $0x4e0] sm:$0xff]
        %v667 = vld [vmem:[%s416 + $0x4e8] sm:$0xff]
        %v668 = vld [vmem:[%s416 + $0x4f0] sm:$0xff]
        %v669 = vld [vmem:[%s416 + $0x4f8] sm:$0xff]
        %v670 = vld [vmem:[%s416 + $0x500] sm:$0xff]
        %v671 = vld [vmem:[%s416 + $0x508] sm:$0xff]
        %v672 = vld [vmem:[%s416 + $0x510] sm:$0xff]
        %v673 = vld [vmem:[%s416 + $0x518] sm:$0xff]
        %v674 = vld [vmem:[%s416 + $0x520] sm:$0xff]
        %v675 = vld [vmem:[%s416 + $0x528] sm:$0xff]
        %v676 = vld [vmem:[%s416 + $0x530] sm:$0xff]
        %v677 = vld [vmem:[%s416 + $0x538] sm:$0xff]
        %v678 = vld [vmem:[%s416 + $0x540] sm:$0xff]
        %v679 = vld [vmem:[%s416 + $0x548] sm:$0xff]
        %v680 = vld [vmem:[%s416 + $0x550] sm:$0xff]
        %v681 = vld [vmem:[%s416 + $0x558] sm:$0xff]
        %v682 = vld [vmem:[%s416 + $0x560] sm:$0xff]
        %v683 = vld [vmem:[%s416 + $0x568] sm:$0xff]
        %v684 = vld [vmem:[%s416 + $0x570] sm:$0xff]
        %v685 = vld [vmem:[%s416 + $0x578] sm:$0xff]
        %v686 = vld [vmem:[%s416 + $0x580] sm:$0xff]
        %v687 = vld [vmem:[%s416 + $0x588] sm:$0xff]
        %v688 = vld [vmem:[%s416 + $0x590] sm:$0xff]
        %v689 = vld [vmem:[%s416 + $0x598] sm:$0xff]
        %v690 = vld [vmem:[%s416 + $0x5a0] sm:$0xff]
        %v691 = vld [vmem:[%s416 + $0x5a8] sm:$0xff]
        %v692 = vld [vmem:[%s416 + $0x5b0] sm:$0xff]
        %v693 = vld [vmem:[%s416 + $0x5b8] sm:$0xff]
        %v694 = vld [vmem:[%s416 + $0x5c0] sm:$0xff]
        %v695 = vld [vmem:[%s416 + $0x5c8] sm:$0xff]
        %v696 = vld [vmem:[%s416 + $0x5d0] sm:$0xff]
        %v697 = vld [vmem:[%s416 + $0x5d8] sm:$0xff]
        %v698 = vld [vmem:[%s416 + $0x5e0] sm:$0xff]
        %v699 = vld [vmem:[%s416 + $0x5e8] sm:$0xff]
        %v700 = vld [vmem:[%s416 + $0x5f0] sm:$0xff]
        %v701 = vld [vmem:[%s416 + $0x5f8] sm:$0xff]
        %v702 = vld [vmem:[%s416 + $0x600] sm:$0xff]
        %v703 = vld [vmem:[%s416 + $0x608] sm:$0xff]
        %v704 = vld [vmem:[%s416 + $0x610] sm:$0xff]
        %v705 = vld [vmem:[%s416 + $0x618] sm:$0xff]
        %v706 = vld [vmem:[%s416 + $0x620] sm:$0xff]
        %v707 = vld [vmem:[%s416 + $0x628] sm:$0xff]
        %v708 = vld [vmem:[%s416 + $0x630] sm:$0xff]
        %v709 = vld [vmem:[%s416 + $0x638] sm:$0xff]
        %v710 = vld [vmem:[%s416 + $0x640] sm:$0xff]
        %v711 = vld [vmem:[%s416 + $0x648] sm:$0xff]
        %v712 = vld [vmem:[%s416 + $0x650] sm:$0xff]
        %v713 = vld [vmem:[%s416 + $0x658] sm:$0xff]
        %v714 = vld [vmem:[%s416 + $0x660] sm:$0xff]
        %v715 = vld [vmem:[%s416 + $0x668] sm:$0xff]
        %v716 = vld [vmem:[%s416 + $0x670] sm:$0xff]
        %v717 = vld [vmem:[%s416 + $0x678] sm:$0xff]
        %v718 = vld [vmem:[%s416 + $0x680] sm:$0xff]
        %v719 = vld [vmem:[%s416 + $0x688] sm:$0xff]
        %v720 = vld [vmem:[%s416 + $0x690] sm:$0xff]
        %v721 = vld [vmem:[%s416 + $0x698] sm:$0xff]
        %v722 = vld [vmem:[%s416 + $0x6a0] sm:$0xff]
        %v723 = vld [vmem:[%s416 + $0x6a8] sm:$0xff]
        %v724 = vld [vmem:[%s416 + $0x6b0] sm:$0xff]
        %v725 = vld [vmem:[%s416 + $0x6b8] sm:$0xff]
        %v726 = vld [vmem:[%s416 + $0x6c0] sm:$0xff]
        %v727 = vld [vmem:[%s416 + $0x6c8] sm:$0xff]
        %v728 = vld [vmem:[%s416 + $0x6d0] sm:$0xff]
        %v729 = vld [vmem:[%s416 + $0x6d8] sm:$0xff]
        %v730 = vld [vmem:[%s416 + $0x6e0] sm:$0xff]
        %v731 = vld [vmem:[%s416 + $0x6e8] sm:$0xff]
        %v732 = vld [vmem:[%s416 + $0x6f0] sm:$0xff]
        %v733 = vld [vmem:[%s416 + $0x6f8] sm:$0xff]
        %v734 = vld [vmem:[%s416 + $0x700] sm:$0xff]
        %v735 = vld [vmem:[%s416 + $0x708] sm:$0xff]
        %v736 = vld [vmem:[%s416 + $0x710] sm:$0xff]
        %v737 = vld [vmem:[%s416 + $0x718] sm:$0xff]
        %v738 = vld [vmem:[%s416 + $0x720] sm:$0xff]
        %v739 = vld [vmem:[%s416 + $0x728] sm:$0xff]
        %v740 = vld [vmem:[%s416 + $0x730] sm:$0xff]
        %v741 = vld [vmem:[%s416 + $0x738] sm:$0xff]
        %v742 = vld [vmem:[%s416 + $0x740] sm:$0xff]
        %v743 = vld [vmem:[%s416 + $0x748] sm:$0xff]
        %v744 = vld [vmem:[%s416 + $0x750] sm:$0xff]
        %v745 = vld [vmem:[%s416 + $0x758] sm:$0xff]
        %v746 = vld [vmem:[%s416 + $0x760] sm:$0xff]
        %v747 = vld [vmem:[%s416 + $0x768] sm:$0xff]
        %v748 = vld [vmem:[%s416 + $0x770] sm:$0xff]
        %v749 = vld [vmem:[%s416 + $0x778] sm:$0xff]
        %v750 = vld [vmem:[%s416 + $0x780] sm:$0xff]
        %v751 = vld [vmem:[%s416 + $0x788] sm:$0xff]
        %v752 = vld [vmem:[%s416 + $0x790] sm:$0xff]
        %v753 = vld [vmem:[%s416 + $0x798] sm:$0xff]
        %v754 = vld [vmem:[%s416 + $0x7a0] sm:$0xff]
        %v755 = vld [vmem:[%s416 + $0x7a8] sm:$0xff]
        %v756 = vld [vmem:[%s416 + $0x7b0] sm:$0xff]
        %v757 = vld [vmem:[%s416 + $0x7b8] sm:$0xff]
        %v758 = vld [vmem:[%s416 + $0x7c0] sm:$0xff]
        %v759 = vld [vmem:[%s416 + $0x7c8] sm:$0xff]
        %v760 = vld [vmem:[%s416 + $0x7d0] sm:$0xff]
        %v761 = vld [vmem:[%s416 + $0x7d8] sm:$0xff]
        %v762 = vld [vmem:[%s416 + $0x7e0] sm:$0xff]
        %v763 = vld [vmem:[%s416 + $0x7e8] sm:$0xff]
        %v764 = vld [vmem:[%s416 + $0x7f0] sm:$0xff]
        %v765 = vld [vmem:[%s416 + $0x7f8] sm:$0xff]
        %v766 = vld [vmem:[%s416 + $0x800] sm:$0xff]
        %v767 = vld [vmem:[%s416 + $0x808] sm:$0xff]
        %v768 = vld [vmem:[%s416 + $0x810] sm:$0xff]
        %v769 = vld [vmem:[%s416 + $0x818] sm:$0xff]
        %v770 = vld [vmem:[%s416 + $0x820] sm:$0xff]
        %v771 = vld [vmem:[%s416 + $0x828] sm:$0xff]
        %v772 = vld [vmem:[%s416 + $0x830] sm:$0xff]
        %v773 = vld [vmem:[%s416 + $0x838] sm:$0xff]
        %v774 = vld [vmem:[%s416 + $0x840] sm:$0xff]
        %v775 = vld [vmem:[%s416 + $0x848] sm:$0xff]
        %v776 = vld [vmem:[%s416 + $0x850] sm:$0xff]
        %v777 = vld [vmem:[%s416 + $0x858] sm:$0xff]
        %v778 = vld [vmem:[%s416 + $0x860] sm:$0xff]
        %v779 = vld [vmem:[%s416 + $0x868] sm:$0xff]
        %v780 = vld [vmem:[%s416 + $0x870] sm:$0xff]
        %v781 = vld [vmem:[%s416 + $0x878] sm:$0xff]
        %v782 = vld [vmem:[%s416 + $0x880] sm:$0xff]
        %v783 = vld [vmem:[%s416 + $0x888] sm:$0xff]
        %v784 = vld [vmem:[%s416 + $0x890] sm:$0xff]
        %v785 = vld [vmem:[%s416 + $0x898] sm:$0xff]
        %v786 = vld [vmem:[%s416 + $0x8a0] sm:$0xff]
        %v787 = vld [vmem:[%s416 + $0x8a8] sm:$0xff]
        %v788 = vld [vmem:[%s416 + $0x8b0] sm:$0xff]
        %v789 = vld [vmem:[%s416 + $0x8b8] sm:$0xff]
        %v790 = vld [vmem:[%s416 + $0x8c0] sm:$0xff]
        %v791 = vld [vmem:[%s416 + $0x8c8] sm:$0xff]
        %v792 = vld [vmem:[%s416 + $0x8d0] sm:$0xff]
        %v793 = vld [vmem:[%s416 + $0x8d8] sm:$0xff]
        %v794 = vld [vmem:[%s416 + $0x8e0] sm:$0xff]
        %v795 = vld [vmem:[%s416 + $0x8e8] sm:$0xff]
        %v796 = vld [vmem:[%s416 + $0x8f0] sm:$0xff]
        %v797 = vld [vmem:[%s416 + $0x8f8] sm:$0xff]
        %v798 = vld [vmem:[%s416 + $0x900] sm:$0xff]
        %v799 = vld [vmem:[%s416 + $0x908] sm:$0xff]
        %v800 = vld [vmem:[%s416 + $0x910] sm:$0xff]
        %v801 = vld [vmem:[%s416 + $0x918] sm:$0xff]
        %v802 = vld [vmem:[%s416 + $0x920] sm:$0xff]
        %v803 = vld [vmem:[%s416 + $0x928] sm:$0xff]
        %v804 = vld [vmem:[%s416 + $0x930] sm:$0xff]
        %v805 = vld [vmem:[%s416 + $0x938] sm:$0xff]
        %v806 = vld [vmem:[%s416 + $0x940] sm:$0xff]
        %v807 = vld [vmem:[%s416 + $0x948] sm:$0xff]
        %v808 = vld [vmem:[%s416 + $0x950] sm:$0xff]
        %v809 = vld [vmem:[%s416 + $0x958] sm:$0xff]
        %v810 = vld [vmem:[%s416 + $0x960] sm:$0xff]
        %v811 = vld [vmem:[%s416 + $0x968] sm:$0xff]
        %v812 = vld [vmem:[%s416 + $0x970] sm:$0xff]
        %v813 = vld [vmem:[%s416 + $0x978] sm:$0xff]
        %v814 = vld [vmem:[%s416 + $0x980] sm:$0xff]
        %v815 = vld [vmem:[%s416 + $0x988] sm:$0xff]
        %v816 = vld [vmem:[%s416 + $0x990] sm:$0xff]
        %v817 = vld [vmem:[%s416 + $0x998] sm:$0xff]
        %v818 = vld [vmem:[%s416 + $0x9a0] sm:$0xff]
        %v819 = vld [vmem:[%s416 + $0x9a8] sm:$0xff]
        %v820 = vld [vmem:[%s416 + $0x9b0] sm:$0xff]
        %v821 = vld [vmem:[%s416 + $0x9b8] sm:$0xff]
        %v822 = vld [vmem:[%s416 + $0x9c0] sm:$0xff]
        %v823 = vld [vmem:[%s416 + $0x9c8] sm:$0xff]
        %v824 = vld [vmem:[%s416 + $0x9d0] sm:$0xff]
        %v825 = vld [vmem:[%s416 + $0x9d8] sm:$0xff]
        %v826 = vld [vmem:[%s416 + $0x9e0] sm:$0xff]
        %v827 = vld [vmem:[%s416 + $0x9e8] sm:$0xff]
        %v828 = vld [vmem:[%s416 + $0x9f0] sm:$0xff]
        %v829 = vld [vmem:[%s416 + $0x9f8] sm:$0xff]
        %v830 = vld [vmem:[%s416 + $0xa00] sm:$0xff]
        %v831 = vld [vmem:[%s416 + $0xa08] sm:$0xff]
        %v832 = vld [vmem:[%s416 + $0xa10] sm:$0xff]
        %v833 = vld [vmem:[%s416 + $0xa18] sm:$0xff]
        %v834 = vld [vmem:[%s416 + $0xa20] sm:$0xff]
        %v835 = vld [vmem:[%s416 + $0xa28] sm:$0xff]
        %v836 = vld [vmem:[%s416 + $0xa30] sm:$0xff]
        %v837 = vld [vmem:[%s416 + $0xa38] sm:$0xff]
        %v838 = vld [vmem:[%s416 + $0xa40] sm:$0xff]
        %v839 = vld [vmem:[%s416 + $0xa48] sm:$0xff]
        %v840 = vld [vmem:[%s416 + $0xa50] sm:$0xff]
        %v841 = vld [vmem:[%s416 + $0xa58] sm:$0xff]
        %v842 = vld [vmem:[%s416 + $0xa60] sm:$0xff]
        %v843 = vld [vmem:[%s416 + $0xa68] sm:$0xff]
        %v844 = vld [vmem:[%s416 + $0xa70] sm:$0xff]
        %v845 = vld [vmem:[%s416 + $0xa78] sm:$0xff]
        %v846 = vld [vmem:[%s416 + $0xa80] sm:$0xff]
        %v847 = vld [vmem:[%s416 + $0xa88] sm:$0xff]
        %v848 = vld [vmem:[%s416 + $0xa90] sm:$0xff]
        %v849 = vld [vmem:[%s416 + $0xa98] sm:$0xff]
        %v850 = vld [vmem:[%s416 + $0xaa0] sm:$0xff]
        %v851 = vld [vmem:[%s416 + $0xaa8] sm:$0xff]
        %v852 = vld [vmem:[%s416 + $0xab0] sm:$0xff]
        %v853 = vld [vmem:[%s416 + $0xab8] sm:$0xff]
        %v854 = vld [vmem:[%s416 + $0xac0] sm:$0xff]
        %v855 = vld [vmem:[%s416 + $0xac8] sm:$0xff]
        %v856 = vld [vmem:[%s416 + $0xad0] sm:$0xff]
        %v857 = vld [vmem:[%s416 + $0xad8] sm:$0xff]
        %v858 = vld [vmem:[%s416 + $0xae0] sm:$0xff]
        %v859 = vld [vmem:[%s416 + $0xae8] sm:$0xff]
        %v860 = vld [vmem:[%s416 + $0xaf0] sm:$0xff]
        %v861 = vld [vmem:[%s416 + $0xaf8] sm:$0xff]
        %v862 = vld [vmem:[%s416 + $0xb00] sm:$0xff]
        %v863 = vld [vmem:[%s416 + $0xb08] sm:$0xff]
        %v864 = vld [vmem:[%s416 + $0xb10] sm:$0xff]
        %v865 = vld [vmem:[%s416 + $0xb18] sm:$0xff]
        %v866 = vld [vmem:[%s416 + $0xb20] sm:$0xff]
        %v867 = vld [vmem:[%s416 + $0xb28] sm:$0xff]
        %v868 = vld [vmem:[%s416 + $0xb30] sm:$0xff]
        %v869 = vld [vmem:[%s416 + $0xb38] sm:$0xff]
        %v870 = vld [vmem:[%s416 + $0xb40] sm:$0xff]
        %v871 = vld [vmem:[%s416 + $0xb48] sm:$0xff]
        %v872 = vld [vmem:[%s416 + $0xb50] sm:$0xff]
        %v873 = vld [vmem:[%s416 + $0xb58] sm:$0xff]
        %v874 = vld [vmem:[%s416 + $0xb60] sm:$0xff]
        %v875 = vld [vmem:[%s416 + $0xb68] sm:$0xff]
        %v876 = vld [vmem:[%s416 + $0xb70] sm:$0xff]
        %v877 = vld [vmem:[%s416 + $0xb78] sm:$0xff]
        %v878 = vld [vmem:[%s416 + $0xb80] sm:$0xff]
        %v879 = vld [vmem:[%s416 + $0xb88] sm:$0xff]
        %v880 = vld [vmem:[%s416 + $0xb90] sm:$0xff]
        %v881 = vld [vmem:[%s416 + $0xb98] sm:$0xff]
        %v882 = vld [vmem:[%s416 + $0xba0] sm:$0xff]
        %v883 = vld [vmem:[%s416 + $0xba8] sm:$0xff]
        %v884 = vld [vmem:[%s416 + $0xbb0] sm:$0xff]
        %v885 = vld [vmem:[%s416 + $0xbb8] sm:$0xff]
        %v886 = vld [vmem:[%s416 + $0xbc0] sm:$0xff]
        %v887 = vld [vmem:[%s416 + $0xbc8] sm:$0xff]
        %v888 = vld [vmem:[%s416 + $0xbd0] sm:$0xff]
        %v889 = vld [vmem:[%s416 + $0xbd8] sm:$0xff]
        %v890 = vld [vmem:[%s416 + $0xbe0] sm:$0xff]
        %v891 = vld [vmem:[%s416 + $0xbe8] sm:$0xff]
        %v892 = vld [vmem:[%s416 + $0xbf0] sm:$0xff]
        %v893 = vld [vmem:[%s416 + $0xbf8] sm:$0xff]
        %v894 = vld [vmem:[%s416 + $0xc00] sm:$0xff]
        %v895 = vld [vmem:[%s416 + $0xc08] sm:$0xff]
        %v896 = vld [vmem:[%s416 + $0xc10] sm:$0xff]
        %v897 = vld [vmem:[%s416 + $0xc18] sm:$0xff]
        %v898 = vld [vmem:[%s416 + $0xc20] sm:$0xff]
        %v899 = vld [vmem:[%s416 + $0xc28] sm:$0xff]
        %v900 = vld [vmem:[%s416 + $0xc30] sm:$0xff]
        %v901 = vld [vmem:[%s416 + $0xc38] sm:$0xff]
        %v902 = vld [vmem:[%s416 + $0xc40] sm:$0xff]
        %v903 = vld [vmem:[%s416 + $0xc48] sm:$0xff]
        %v904 = vld [vmem:[%s416 + $0xc50] sm:$0xff]
        %v905 = vld [vmem:[%s416 + $0xc58] sm:$0xff]
        %v906 = vld [vmem:[%s416 + $0xc60] sm:$0xff]
        %v907 = vld [vmem:[%s416 + $0xc68] sm:$0xff]
        %v908 = vld [vmem:[%s416 + $0xc70] sm:$0xff]
        %v909 = vld [vmem:[%s416 + $0xc78] sm:$0xff]
        %v910 = vld [vmem:[%s416 + $0xc80] sm:$0xff]
        %v911 = vld [vmem:[%s416 + $0xc88] sm:$0xff]
        %v912 = vld [vmem:[%s416 + $0xc90] sm:$0xff]
        %v913 = vld [vmem:[%s416 + $0xc98] sm:$0xff]
        %v914 = vld [vmem:[%s416 + $0xca0] sm:$0xff]
        %v915 = vld [vmem:[%s416 + $0xca8] sm:$0xff]
        %v916 = vld [vmem:[%s416 + $0xcb0] sm:$0xff]
        %v917 = vld [vmem:[%s416 + $0xcb8] sm:$0xff]
        %v918 = vld [vmem:[%s416 + $0xcc0] sm:$0xff]
        %v919 = vld [vmem:[%s416 + $0xcc8] sm:$0xff]
        %v920 = vld [vmem:[%s416 + $0xcd0] sm:$0xff]
        %v921 = vld [vmem:[%s416 + $0xcd8] sm:$0xff]
        %v922 = vld [vmem:[%s416 + $0xce0] sm:$0xff]
        %v923 = vld [vmem:[%s416 + $0xce8] sm:$0xff]
        %v924 = vld [vmem:[%s416 + $0xcf0] sm:$0xff]
        %v925 = vld [vmem:[%s416 + $0xcf8] sm:$0xff]
        %v926 = vld [vmem:[%s416 + $0xd00] sm:$0xff]
        %v927 = vld [vmem:[%s416 + $0xd08] sm:$0xff]
        %v928 = vld [vmem:[%s416 + $0xd10] sm:$0xff]
        %v929 = vld [vmem:[%s416 + $0xd18] sm:$0xff]
        %v930 = vld [vmem:[%s416 + $0xd20] sm:$0xff]
        %v931 = vld [vmem:[%s416 + $0xd28] sm:$0xff]
        %v932 = vld [vmem:[%s416 + $0xd30] sm:$0xff]
        %v933 = vld [vmem:[%s416 + $0xd38] sm:$0xff]
        %v934 = vld [vmem:[%s416 + $0xd40] sm:$0xff]
        %v935 = vld [vmem:[%s416 + $0xd48] sm:$0xff]
        %v936 = vld [vmem:[%s416 + $0xd50] sm:$0xff]
        %v937 = vld [vmem:[%s416 + $0xd58] sm:$0xff]
        %v938 = vld [vmem:[%s416 + $0xd60] sm:$0xff]
        %v939 = vld [vmem:[%s416 + $0xd68] sm:$0xff]
        %v940 = vld [vmem:[%s416 + $0xd70] sm:$0xff]
        %v941 = vld [vmem:[%s416 + $0xd78] sm:$0xff]
        %v942 = vld [vmem:[%s416 + $0xd80] sm:$0xff]
        %v943 = vld [vmem:[%s416 + $0xd88] sm:$0xff]
        %v944 = vld [vmem:[%s416 + $0xd90] sm:$0xff]
        %v945 = vld [vmem:[%s416 + $0xd98] sm:$0xff]
        %v946 = vld [vmem:[%s416 + $0xda0] sm:$0xff]
        %v947 = vld [vmem:[%s416 + $0xda8] sm:$0xff]
        %v948 = vld [vmem:[%s416 + $0xdb0] sm:$0xff]
        %v949 = vld [vmem:[%s416 + $0xdb8] sm:$0xff]
        %v950 = vld [vmem:[%s416 + $0xdc0] sm:$0xff]
        %v951 = vld [vmem:[%s416 + $0xdc8] sm:$0xff]
        %v952 = vld [vmem:[%s416 + $0xdd0] sm:$0xff]
        %v953 = vld [vmem:[%s416 + $0xdd8] sm:$0xff]
        %v954 = vld [vmem:[%s416 + $0xde0] sm:$0xff]
        %v955 = vld [vmem:[%s416 + $0xde8] sm:$0xff]
        %v956 = vld [vmem:[%s416 + $0xdf0] sm:$0xff]
        %v957 = vld [vmem:[%s416 + $0xdf8] sm:$0xff]
        %v958 = vld [vmem:[%s416 + $0xe00] sm:$0xff]
        %v959 = vld [vmem:[%s416 + $0xe08] sm:$0xff]
        %v960 = vld [vmem:[%s416 + $0xe10] sm:$0xff]
        %v961 = vld [vmem:[%s416 + $0xe18] sm:$0xff]
        %v962 = vld [vmem:[%s416 + $0xe20] sm:$0xff]
        %v963 = vld [vmem:[%s416 + $0xe28] sm:$0xff]
        %v964 = vld [vmem:[%s416 + $0xe30] sm:$0xff]
        %v965 = vld [vmem:[%s416 + $0xe38] sm:$0xff]
        %v966 = vld [vmem:[%s416 + $0xe40] sm:$0xff]
        %v967 = vld [vmem:[%s416 + $0xe48] sm:$0xff]
        %v968 = vld [vmem:[%s416 + $0xe50] sm:$0xff]
        %v969 = vld [vmem:[%s416 + $0xe58] sm:$0xff]
        %v970 = vld [vmem:[%s416 + $0xe60] sm:$0xff]
        %v971 = vld [vmem:[%s416 + $0xe68] sm:$0xff]
        %v972 = vld [vmem:[%s416 + $0xe70] sm:$0xff]
        %v973 = vld [vmem:[%s416 + $0xe78] sm:$0xff]
        %v974 = vld [vmem:[%s416 + $0xe80] sm:$0xff]
        %v975 = vld [vmem:[%s416 + $0xe88] sm:$0xff]
        %v976 = vld [vmem:[%s416 + $0xe90] sm:$0xff]
        %v977 = vld [vmem:[%s416 + $0xe98] sm:$0xff]
        %v978 = vld [vmem:[%s416 + $0xea0] sm:$0xff]
        %v979 = vld [vmem:[%s416 + $0xea8] sm:$0xff]
        %v980 = vld [vmem:[%s416 + $0xeb0] sm:$0xff]
        %v981 = vld [vmem:[%s416 + $0xeb8] sm:$0xff]
        %v982 = vld [vmem:[%s416 + $0xec0] sm:$0xff]
        %v983 = vld [vmem:[%s416 + $0xec8] sm:$0xff]
        %v984 = vld [vmem:[%s416 + $0xed0] sm:$0xff]
        %v985 = vld [vmem:[%s416 + $0xed8] sm:$0xff]
        %v986 = vld [vmem:[%s416 + $0xee0] sm:$0xff]
        %v987 = vld [vmem:[%s416 + $0xee8] sm:$0xff]
        %v988 = vld [vmem:[%s416 + $0xef0] sm:$0xff]
        %v989 = vld [vmem:[%s416 + $0xef8] sm:$0xff]
        %v990 = vld [vmem:[%s416 + $0xf00] sm:$0xff]
        %v991 = vld [vmem:[%s416 + $0xf08] sm:$0xff]
        %v992 = vld [vmem:[%s416 + $0xf10] sm:$0xff]
        %v993 = vld [vmem:[%s416 + $0xf18] sm:$0xff]
        %v994 = vld [vmem:[%s416 + $0xf20] sm:$0xff]
        %v995 = vld [vmem:[%s416 + $0xf28] sm:$0xff]
        %v996 = vld [vmem:[%s416 + $0xf30] sm:$0xff]
        %v997 = vld [vmem:[%s416 + $0xf38] sm:$0xff]
        %v998 = vld [vmem:[%s416 + $0xf40] sm:$0xff]
        %v999 = vld [vmem:[%s416 + $0xf48] sm:$0xff]
        %v1000 = vld [vmem:[%s416 + $0xf50] sm:$0xff]
        %v1001 = vld [vmem:[%s416 + $0xf58] sm:$0xff]
        %v1002 = vld [vmem:[%s416 + $0xf60] sm:$0xff]
        %v1003 = vld [vmem:[%s416 + $0xf68] sm:$0xff]
        %v1004 = vld [vmem:[%s416 + $0xf70] sm:$0xff]
        %v1005 = vld [vmem:[%s416 + $0xf78] sm:$0xff]
        %v1006 = vld [vmem:[%s416 + $0xf80] sm:$0xff]
        %v1007 = vld [vmem:[%s416 + $0xf88] sm:$0xff]
        %v1008 = vld [vmem:[%s416 + $0xf90] sm:$0xff]
        %v1009 = vld [vmem:[%s416 + $0xf98] sm:$0xff]
        %v1010 = vld [vmem:[%s416 + $0xfa0] sm:$0xff]
        %v1011 = vld [vmem:[%s416 + $0xfa8] sm:$0xff]
        %v1012 = vld [vmem:[%s416 + $0xfb0] sm:$0xff]
        %v1013 = vld [vmem:[%s416 + $0xfb8] sm:$0xff]
        %v1014 = vld [vmem:[%s416 + $0xfc0] sm:$0xff]
        %v1015 = vld [vmem:[%s416 + $0xfc8] sm:$0xff]
        %v1016 = vld [vmem:[%s416 + $0xfd0] sm:$0xff]
        %v1017 = vld [vmem:[%s416 + $0xfd8] sm:$0xff]
        %v1018 = vld [vmem:[%s416 + $0xfe0] sm:$0xff]
        %v1019 = vld [vmem:[%s416 + $0xfe8] sm:$0xff]
        %v1020 = vld [vmem:[%s416 + $0xff0] sm:$0xff]
        %v1021 = vld [vmem:[%s416 + $0xff8] sm:$0xff]
        %v1022 = vld [vmem:[%s416 + $0x1000] sm:$0xff]
        %v1023 = vld [vmem:[%s416 + $0x1008] sm:$0xff]
        %v1024 = vld [vmem:[%s416 + $0x1010] sm:$0xff]
        %v1025 = vld [vmem:[%s416 + $0x1018] sm:$0xff]
        %v1026 = vld [vmem:[%s416 + $0x1020] sm:$0xff]
        %v1027 = vld [vmem:[%s416 + $0x1028] sm:$0xff]
        %v1028 = vld [vmem:[%s416 + $0x1030] sm:$0xff]
        %v1029 = vld [vmem:[%s416 + $0x1038] sm:$0xff]
        %v1030 = vld [vmem:[%s416 + $0x1040] sm:$0xff]
        %v1031 = vld [vmem:[%s416 + $0x1048] sm:$0xff]
        %v1032 = vld [vmem:[%s416 + $0x1050] sm:$0xff]
        %v1033 = vld [vmem:[%s416 + $0x1058] sm:$0xff]
        %v1034 = vld [vmem:[%s416 + $0x1060] sm:$0xff]
        %v1035 = vld [vmem:[%s416 + $0x1068] sm:$0xff]
        %v1036 = vld [vmem:[%s416 + $0x1070] sm:$0xff]
        %v1037 = vld [vmem:[%s416 + $0x1078] sm:$0xff]
        %v1038 = vld [vmem:[%s416 + $0x1080] sm:$0xff]
        %v1039 = vld [vmem:[%s416 + $0x1088] sm:$0xff]
        %v1040 = vld [vmem:[%s416 + $0x1090] sm:$0xff]
        %v1041 = vld [vmem:[%s416 + $0x1098] sm:$0xff]
        %v1042 = vld [vmem:[%s416 + $0x10a0] sm:$0xff]
        %v1043 = vld [vmem:[%s416 + $0x10a8] sm:$0xff]
        %v1044 = vld [vmem:[%s416 + $0x10b0] sm:$0xff]
        %v1045 = vld [vmem:[%s416 + $0x10b8] sm:$0xff]
        %v1046 = vld [vmem:[%s416 + $0x10c0] sm:$0xff]
        %v1047 = vld [vmem:[%s416 + $0x10c8] sm:$0xff]
        %v1048 = vld [vmem:[%s416 + $0x10d0] sm:$0xff]
        %v1049 = vld [vmem:[%s416 + $0x10d8] sm:$0xff]
        %v1050 = vld [vmem:[%s416 + $0x10e0] sm:$0xff]
        %v1051 = vld [vmem:[%s416 + $0x10e8] sm:$0xff]
        %v1052 = vld [vmem:[%s416 + $0x10f0] sm:$0xff]
        %v1053 = vld [vmem:[%s416 + $0x10f8] sm:$0xff]
        %v1054 = vld [vmem:[%s416 + $0x1100] sm:$0xff]
        %v1055 = vld [vmem:[%s416 + $0x1108] sm:$0xff]
        %v1056 = vld [vmem:[%s416 + $0x1110] sm:$0xff]
        %v1057 = vld [vmem:[%s416 + $0x1118] sm:$0xff]
        %v1058 = vld [vmem:[%s416 + $0x1120] sm:$0xff]
        %v1059 = vld [vmem:[%s416 + $0x1128] sm:$0xff]
        %v1060 = vld [vmem:[%s416 + $0x1130] sm:$0xff]
        %v1061 = vld [vmem:[%s416 + $0x1138] sm:$0xff]
        %v1062 = vld [vmem:[%s416 + $0x1140] sm:$0xff]
        %v1063 = vld [vmem:[%s416 + $0x1148] sm:$0xff]
        %v1064 = vld [vmem:[%s416 + $0x1150] sm:$0xff]
        %v1065 = vld [vmem:[%s416 + $0x1158] sm:$0xff]
        %v1066 = vld [vmem:[%s416 + $0x1160] sm:$0xff]
        %v1067 = vld [vmem:[%s416 + $0x1168] sm:$0xff]
        %v1068 = vld [vmem:[%s416 + $0x1170] sm:$0xff]
        %v1069 = vld [vmem:[%s416 + $0x1178] sm:$0xff]
        %v1070 = vld [vmem:[%s416 + $0x1180] sm:$0xff]
        %v1071 = vld [vmem:[%s416 + $0x1188] sm:$0xff]
        %v1072 = vld [vmem:[%s416 + $0x1190] sm:$0xff]
        %v1073 = vld [vmem:[%s416 + $0x1198] sm:$0xff]
        %v1074 = vld [vmem:[%s416 + $0x11a0] sm:$0xff]
        %v1075 = vld [vmem:[%s416 + $0x11a8] sm:$0xff]
        %v1076 = vld [vmem:[%s416 + $0x11b0] sm:$0xff]
        %v1077 = vld [vmem:[%s416 + $0x11b8] sm:$0xff]
        %v1078 = vld [vmem:[%s416 + $0x11c0] sm:$0xff]
        %v1079 = vld [vmem:[%s416 + $0x11c8] sm:$0xff]
        %v1080 = vld [vmem:[%s416 + $0x11d0] sm:$0xff]
        %v1081 = vld [vmem:[%s416 + $0x11d8] sm:$0xff]
        %v1082 = vld [vmem:[%s416 + $0x11e0] sm:$0xff]
        %v1083 = vld [vmem:[%s416 + $0x11e8] sm:$0xff]
        %v1084 = vld [vmem:[%s416 + $0x11f0] sm:$0xff]
        %v1085 = vld [vmem:[%s416 + $0x11f8] sm:$0xff]
        %v1086 = vld [vmem:[%s416 + $0x1200] sm:$0xff]
        %v1087 = vld [vmem:[%s416 + $0x1208] sm:$0xff]
        %v1088 = vld [vmem:[%s416 + $0x1210] sm:$0xff]
        %v1089 = vld [vmem:[%s416 + $0x1218] sm:$0xff]
        %v1090 = vld [vmem:[%s416 + $0x1220] sm:$0xff]
        %v1091 = vld [vmem:[%s416 + $0x1228] sm:$0xff]
        %v1092 = vld [vmem:[%s416 + $0x1230] sm:$0xff]
        %v1093 = vld [vmem:[%s416 + $0x1238] sm:$0xff]
        %v1094 = vld [vmem:[%s416 + $0x1240] sm:$0xff]
        %v1095 = vld [vmem:[%s416 + $0x1248] sm:$0xff]
        %v1096 = vld [vmem:[%s416 + $0x1250] sm:$0xff]
        %v1097 = vld [vmem:[%s416 + $0x1258] sm:$0xff]
        %v1098 = vld [vmem:[%s416 + $0x1260] sm:$0xff]
        %v1099 = vld [vmem:[%s416 + $0x1268] sm:$0xff]
        %v1100 = vld [vmem:[%s416 + $0x1270] sm:$0xff]
        %v1101 = vld [vmem:[%s416 + $0x1278] sm:$0xff]
        %v1102 = vld [vmem:[%s416 + $0x1280] sm:$0xff]
        %v1103 = vld [vmem:[%s416 + $0x1288] sm:$0xff]
        %v1104 = vld [vmem:[%s416 + $0x1290] sm:$0xff]
        %v1105 = vld [vmem:[%s416 + $0x1298] sm:$0xff]
        %v1106 = vld [vmem:[%s416 + $0x12a0] sm:$0xff]
        %v1107 = vld [vmem:[%s416 + $0x12a8] sm:$0xff]
        %v1108 = vld [vmem:[%s416 + $0x12b0] sm:$0xff]
        %v1109 = vld [vmem:[%s416 + $0x12b8] sm:$0xff]
        %v1110 = vld [vmem:[%s416 + $0x12c0] sm:$0xff]
        %v1111 = vld [vmem:[%s416 + $0x12c8] sm:$0xff]
        %v1112 = vld [vmem:[%s416 + $0x12d0] sm:$0xff]
        %v1113 = vld [vmem:[%s416 + $0x12d8] sm:$0xff]
        %v1114 = vld [vmem:[%s416 + $0x12e0] sm:$0xff]
        %v1115 = vld [vmem:[%s416 + $0x12e8] sm:$0xff]
        %v1116 = vld [vmem:[%s416 + $0x12f0] sm:$0xff]
        %v1117 = vld [vmem:[%s416 + $0x12f8] sm:$0xff]
        %v1118 = vld [vmem:[%s416 + $0x1300] sm:$0xff]
        %v1119 = vld [vmem:[%s416 + $0x1308] sm:$0xff]
        %v1120 = vld [vmem:[%s416 + $0x1310] sm:$0xff]
        %v1121 = vld [vmem:[%s416 + $0x1318] sm:$0xff]
        %v1122 = vld [vmem:[%s416 + $0x1320] sm:$0xff]
        %v1123 = vld [vmem:[%s416 + $0x1328] sm:$0xff]
        %v1124 = vld [vmem:[%s416 + $0x1330] sm:$0xff]
        %v1125 = vld [vmem:[%s416 + $0x1338] sm:$0xff]
        %v1126 = vld [vmem:[%s416 + $0x1340] sm:$0xff]
        %v1127 = vld [vmem:[%s416 + $0x1348] sm:$0xff]
        %v1128 = vld [vmem:[%s416 + $0x1350] sm:$0xff]
        %v1129 = vld [vmem:[%s416 + $0x1358] sm:$0xff]
        %v1130 = vld [vmem:[%s416 + $0x1360] sm:$0xff]
        %v1131 = vld [vmem:[%s416 + $0x1368] sm:$0xff]
        %v1132 = vld [vmem:[%s416 + $0x1370] sm:$0xff]
        %v1133 = vld [vmem:[%s416 + $0x1378] sm:$0xff]
        %v1134 = vld [vmem:[%s416 + $0x1380] sm:$0xff]
        %v1135 = vld [vmem:[%s416 + $0x1388] sm:$0xff]
        %v1136 = vld [vmem:[%s416 + $0x1390] sm:$0xff]
        %v1137 = vld [vmem:[%s416 + $0x1398] sm:$0xff]
        %v1138 = vld [vmem:[%s416 + $0x13a0] sm:$0xff]
        %v1139 = vld [vmem:[%s416 + $0x13a8] sm:$0xff]
        %v1140 = vld [vmem:[%s416 + $0x13b0] sm:$0xff]
        %v1141 = vld [vmem:[%s416 + $0x13b8] sm:$0xff]
        %v1142 = vld [vmem:[%s416 + $0x13c0] sm:$0xff]
        %v1143 = vld [vmem:[%s416 + $0x13c8] sm:$0xff]
        %v1144 = vld [vmem:[%s416 + $0x13d0] sm:$0xff]
        %v1145 = vld [vmem:[%s416 + $0x13d8] sm:$0xff]
        %v1146 = vld [vmem:[%s416 + $0x13e0] sm:$0xff]
        %v1147 = vld [vmem:[%s416 + $0x13e8] sm:$0xff]
        %v1148 = vld [vmem:[%s416 + $0x13f0] sm:$0xff]
        %v1149 = vld [vmem:[%s416 + $0x13f8] sm:$0xff]
        %v1150 = vld [vmem:[%s416 + $0x1400] sm:$0xff]
        %v1151 = vld [vmem:[%s416 + $0x1408] sm:$0xff]
        %v1152 = vld [vmem:[%s416 + $0x1410] sm:$0xff]
        %v1153 = vld [vmem:[%s416 + $0x1418] sm:$0xff]
        %v1154 = vld [vmem:[%s416 + $0x1420] sm:$0xff]
        %v1155 = vld [vmem:[%s416 + $0x1428] sm:$0xff]
        %v1156 = vld [vmem:[%s416 + $0x1430] sm:$0xff]
        %v1157 = vld [vmem:[%s416 + $0x1438] sm:$0xff]
        %v1158 = vld [vmem:[%s416 + $0x1440] sm:$0xff]
        %v1159 = vld [vmem:[%s416 + $0x1448] sm:$0xff]
        %v1160 = vld [vmem:[%s416 + $0x1450] sm:$0xff]
        %v1161 = vld [vmem:[%s416 + $0x1458] sm:$0xff]
        %v1162 = vld [vmem:[%s416 + $0x1460] sm:$0xff]
        %v1163 = vld [vmem:[%s416 + $0x1468] sm:$0xff]
        %v1164 = vld [vmem:[%s416 + $0x1470] sm:$0xff]
        %v1165 = vld [vmem:[%s416 + $0x1478] sm:$0xff]
        %v1166 = vld [vmem:[%s416 + $0x1480] sm:$0xff]
        %v1167 = vld [vmem:[%s416 + $0x1488] sm:$0xff]
        %v1168 = vld [vmem:[%s416 + $0x1490] sm:$0xff]
        %v1169 = vld [vmem:[%s416 + $0x1498] sm:$0xff]
        %v1170 = vld [vmem:[%s416 + $0x14a0] sm:$0xff]
        %v1171 = vld [vmem:[%s416 + $0x14a8] sm:$0xff]
        %v1172 = vld [vmem:[%s416 + $0x14b0] sm:$0xff]
        %v1173 = vld [vmem:[%s416 + $0x14b8] sm:$0xff]
        %v1174 = vld [vmem:[%s416 + $0x14c0] sm:$0xff]
        %v1175 = vld [vmem:[%s416 + $0x14c8] sm:$0xff]
        %v1176 = vld [vmem:[%s416 + $0x14d0] sm:$0xff]
        %v1177 = vld [vmem:[%s416 + $0x14d8] sm:$0xff]
        %v1178 = vld [vmem:[%s416 + $0x14e0] sm:$0xff]
        %v1179 = vld [vmem:[%s416 + $0x14e8] sm:$0xff]
        %v1180 = vld [vmem:[%s416 + $0x14f0] sm:$0xff]
        %v1181 = vld [vmem:[%s416 + $0x14f8] sm:$0xff]
        %v1182 = vld [vmem:[%s416 + $0x1500] sm:$0xff]
        %v1183 = vld [vmem:[%s416 + $0x1508] sm:$0xff]
        %v1184 = vld [vmem:[%s416 + $0x1510] sm:$0xff]
        %v1185 = vld [vmem:[%s416 + $0x1518] sm:$0xff]
        %v1186 = vld [vmem:[%s416 + $0x1520] sm:$0xff]
        %v1187 = vld [vmem:[%s416 + $0x1528] sm:$0xff]
        %v1188 = vld [vmem:[%s416 + $0x1530] sm:$0xff]
        %v1189 = vld [vmem:[%s416 + $0x1538] sm:$0xff]
        %v1190 = vld [vmem:[%s416 + $0x1540] sm:$0xff]
        %v1191 = vld [vmem:[%s416 + $0x1548] sm:$0xff]
        %v1192 = vld [vmem:[%s416 + $0x1550] sm:$0xff]
        %v1193 = vld [vmem:[%s416 + $0x1558] sm:$0xff]
        %v1194 = vld [vmem:[%s416 + $0x1560] sm:$0xff]
        %v1195 = vld [vmem:[%s416 + $0x1568] sm:$0xff]
        %v1196 = vld [vmem:[%s416 + $0x1570] sm:$0xff]
        %v1197 = vld [vmem:[%s416 + $0x1578] sm:$0xff]
        %v1198 = vld [vmem:[%s416 + $0x1580] sm:$0xff]
        %v1199 = vld [vmem:[%s416 + $0x1588] sm:$0xff]
        %v1200 = vld [vmem:[%s416 + $0x1590] sm:$0xff]
        %v1201 = vld [vmem:[%s416 + $0x1598] sm:$0xff]
        %v1202 = vld [vmem:[%s416 + $0x15a0] sm:$0xff]
        %v1203 = vld [vmem:[%s416 + $0x15a8] sm:$0xff]
        %v1204 = vld [vmem:[%s416 + $0x15b0] sm:$0xff]
        %v1205 = vld [vmem:[%s416 + $0x15b8] sm:$0xff]
        %v1206 = vld [vmem:[%s416 + $0x15c0] sm:$0xff]
        %v1207 = vld [vmem:[%s416 + $0x15c8] sm:$0xff]
        %v1208 = vld [vmem:[%s416 + $0x15d0] sm:$0xff]
        %v1209 = vld [vmem:[%s416 + $0x15d8] sm:$0xff]
        %v1210 = vld [vmem:[%s416 + $0x15e0] sm:$0xff]
        %v1211 = vld [vmem:[%s416 + $0x15e8] sm:$0xff]
        %v1212 = vld [vmem:[%s416 + $0x15f0] sm:$0xff]
        %v1213 = vld [vmem:[%s416 + $0x15f8] sm:$0xff]
        %v1214 = vld [vmem:[%s416 + $0x1600] sm:$0xff]
        %v1215 = vld [vmem:[%s416 + $0x1608] sm:$0xff]
        %v1216 = vld [vmem:[%s416 + $0x1610] sm:$0xff]
        %v1217 = vld [vmem:[%s416 + $0x1618] sm:$0xff]
        %v1218 = vld [vmem:[%s416 + $0x1620] sm:$0xff]
        %v1219 = vld [vmem:[%s416 + $0x1628] sm:$0xff]
        %v1220 = vld [vmem:[%s416 + $0x1630] sm:$0xff]
        %v1221 = vld [vmem:[%s416 + $0x1638] sm:$0xff]
        %v1222 = vld [vmem:[%s416 + $0x1640] sm:$0xff]
        %v1223 = vld [vmem:[%s416 + $0x1648] sm:$0xff]
        %v1224 = vld [vmem:[%s416 + $0x1650] sm:$0xff]
        %v1225 = vld [vmem:[%s416 + $0x1658] sm:$0xff]
        %v1226 = vld [vmem:[%s416 + $0x1660] sm:$0xff]
        %v1227 = vld [vmem:[%s416 + $0x1668] sm:$0xff]
        %v1228 = vld [vmem:[%s416 + $0x1670] sm:$0xff]
        %v1229 = vld [vmem:[%s416 + $0x1678] sm:$0xff]
        %v1230 = vld [vmem:[%s416 + $0x1680] sm:$0xff]
        %v1231 = vld [vmem:[%s416 + $0x1688] sm:$0xff]
        %v1232 = vld [vmem:[%s416 + $0x1690] sm:$0xff]
        %v1233 = vld [vmem:[%s416 + $0x1698] sm:$0xff]
        %v1234 = vld [vmem:[%s416 + $0x16a0] sm:$0xff]
        %v1235 = vld [vmem:[%s416 + $0x16a8] sm:$0xff]
        %v1236 = vld [vmem:[%s416 + $0x16b0] sm:$0xff]
        %v1237 = vld [vmem:[%s416 + $0x16b8] sm:$0xff]
        %v1238 = vld [vmem:[%s416 + $0x16c0] sm:$0xff]
        %v1239 = vld [vmem:[%s416 + $0x16c8] sm:$0xff]
        %v1240 = vld [vmem:[%s416 + $0x16d0] sm:$0xff]
        %v1241 = vld [vmem:[%s416 + $0x16d8] sm:$0xff]
        %v1242 = vld [vmem:[%s416 + $0x16e0] sm:$0xff]
        %v1243 = vld [vmem:[%s416 + $0x16e8] sm:$0xff]
        %v1244 = vld [vmem:[%s416 + $0x16f0] sm:$0xff]
        %v1245 = vld [vmem:[%s416 + $0x16f8] sm:$0xff]
        %v1246 = vld [vmem:[%s416 + $0x1700] sm:$0xff]
        %v1247 = vld [vmem:[%s416 + $0x1708] sm:$0xff]
        %v1248 = vld [vmem:[%s416 + $0x1710] sm:$0xff]
        %v1249 = vld [vmem:[%s416 + $0x1718] sm:$0xff]
        %v1250 = vld [vmem:[%s416 + $0x1720] sm:$0xff]
        %v1251 = vld [vmem:[%s416 + $0x1728] sm:$0xff]
        %v1252 = vld [vmem:[%s416 + $0x1730] sm:$0xff]
        %v1253 = vld [vmem:[%s416 + $0x1738] sm:$0xff]
        %v1254 = vld [vmem:[%s416 + $0x1740] sm:$0xff]
        %v1255 = vld [vmem:[%s416 + $0x1748] sm:$0xff]
        %v1256 = vld [vmem:[%s416 + $0x1750] sm:$0xff]
        %v1257 = vld [vmem:[%s416 + $0x1758] sm:$0xff]
        %v1258 = vld [vmem:[%s416 + $0x1760] sm:$0xff]
        %v1259 = vld [vmem:[%s416 + $0x1768] sm:$0xff]
        %v1260 = vld [vmem:[%s416 + $0x1770] sm:$0xff]
        %v1261 = vld [vmem:[%s416 + $0x1778] sm:$0xff]
        %v1262 = vld [vmem:[%s416 + $0x1780] sm:$0xff]
        %v1263 = vld [vmem:[%s416 + $0x1788] sm:$0xff]
        %v1264 = vld [vmem:[%s416 + $0x1790] sm:$0xff]
        %v1265 = vld [vmem:[%s416 + $0x1798] sm:$0xff]
        %v1266 = vld [vmem:[%s416 + $0x17a0] sm:$0xff]
        %v1267 = vld [vmem:[%s416 + $0x17a8] sm:$0xff]
        %v1268 = vld [vmem:[%s416 + $0x17b0] sm:$0xff]
        %v1269 = vld [vmem:[%s416 + $0x17b8] sm:$0xff]
        %v1270 = vld [vmem:[%s416 + $0x17c0] sm:$0xff]
        %v1271 = vld [vmem:[%s416 + $0x17c8] sm:$0xff]
        %v1272 = vld [vmem:[%s416 + $0x17d0] sm:$0xff]
        %v1273 = vld [vmem:[%s416 + $0x17d8] sm:$0xff]
        %v1274 = vld [vmem:[%s416 + $0x17e0] sm:$0xff]
        %v1275 = vld [vmem:[%s416 + $0x17e8] sm:$0xff]
        %v1276 = vld [vmem:[%s416 + $0x17f0] sm:$0xff]
        %v1277 = vld [vmem:[%s416 + $0x17f8] sm:$0xff]
        %v1278 = vld [vmem:[%s416 + $0x1800] sm:$0xff]
        %v1279 = vld [vmem:[%s416 + $0x1808] sm:$0xff]
        %v1280 = vld [vmem:[%s416 + $0x1810] sm:$0xff]
        %v1281 = vld [vmem:[%s416 + $0x1818] sm:$0xff]
        %v1282 = vld [vmem:[%s416 + $0x1820] sm:$0xff]
        %v1283 = vld [vmem:[%s416 + $0x1828] sm:$0xff]
        %v1284 = vld [vmem:[%s416 + $0x1830] sm:$0xff]
        %v1285 = vld [vmem:[%s416 + $0x1838] sm:$0xff]
        %v1286 = vld [vmem:[%s416 + $0x1840] sm:$0xff]
        %v1287 = vld [vmem:[%s416 + $0x1848] sm:$0xff]
        %v1288 = vld [vmem:[%s416 + $0x1850] sm:$0xff]
        %v1289 = vld [vmem:[%s416 + $0x1858] sm:$0xff]
        %v1290 = vld [vmem:[%s416 + $0x1860] sm:$0xff]
        %v1291 = vld [vmem:[%s416 + $0x1868] sm:$0xff]
        %v1292 = vld [vmem:[%s416 + $0x1870] sm:$0xff]
        %v1293 = vld [vmem:[%s416 + $0x1878] sm:$0xff]
        %v1294 = vld [vmem:[%s416 + $0x1880] sm:$0xff]
        %v1295 = vld [vmem:[%s416 + $0x1888] sm:$0xff]
        %v1296 = vld [vmem:[%s416 + $0x1890] sm:$0xff]
        %v1297 = vld [vmem:[%s416 + $0x1898] sm:$0xff]
        %v1298 = vld [vmem:[%s416 + $0x18a0] sm:$0xff]
        %v1299 = vld [vmem:[%s416 + $0x18a8] sm:$0xff]
        %v1300 = vld [vmem:[%s416 + $0x18b0] sm:$0xff]
        %v1301 = vld [vmem:[%s416 + $0x18b8] sm:$0xff]
        %v1302 = vld [vmem:[%s416 + $0x18c0] sm:$0xff]
        %v1303 = vld [vmem:[%s416 + $0x18c8] sm:$0xff]
        %v1304 = vld [vmem:[%s416 + $0x18d0] sm:$0xff]
        %v1305 = vld [vmem:[%s416 + $0x18d8] sm:$0xff]
        %v1306 = vld [vmem:[%s416 + $0x18e0] sm:$0xff]
        %v1307 = vld [vmem:[%s416 + $0x18e8] sm:$0xff]
        %v1308 = vld [vmem:[%s416 + $0x18f0] sm:$0xff]
        %v1309 = vld [vmem:[%s416 + $0x18f8] sm:$0xff]
        %v1310 = vld [vmem:[%s416 + $0x1900] sm:$0xff]
        %v1311 = vld [vmem:[%s416 + $0x1908] sm:$0xff]
        %v1312 = vld [vmem:[%s416 + $0x1910] sm:$0xff]
        %v1313 = vld [vmem:[%s416 + $0x1918] sm:$0xff]
        %v1314 = vld [vmem:[%s416 + $0x1920] sm:$0xff]
        %v1315 = vld [vmem:[%s416 + $0x1928] sm:$0xff]
        %v1316 = vld [vmem:[%s416 + $0x1930] sm:$0xff]
        %v1317 = vld [vmem:[%s416 + $0x1938] sm:$0xff]
        %v1318 = vld [vmem:[%s416 + $0x1940] sm:$0xff]
        %v1319 = vld [vmem:[%s416 + $0x1948] sm:$0xff]
        %v1320 = vld [vmem:[%s416 + $0x1950] sm:$0xff]
        %v1321 = vld [vmem:[%s416 + $0x1958] sm:$0xff]
        %v1322 = vld [vmem:[%s416 + $0x1960] sm:$0xff]
        %v1323 = vld [vmem:[%s416 + $0x1968] sm:$0xff]
        %v1324 = vld [vmem:[%s416 + $0x1970] sm:$0xff]
        %v1325 = vld [vmem:[%s416 + $0x1978] sm:$0xff]
        %v1326 = vld [vmem:[%s416 + $0x1980] sm:$0xff]
        %v1327 = vld [vmem:[%s416 + $0x1988] sm:$0xff]
        %v1328 = vld [vmem:[%s416 + $0x1990] sm:$0xff]
        %v1329 = vld [vmem:[%s416 + $0x1998] sm:$0xff]
        %v1330 = vld [vmem:[%s416 + $0x19a0] sm:$0xff]
        %v1331 = vld [vmem:[%s416 + $0x19a8] sm:$0xff]
        %v1332 = vld [vmem:[%s416 + $0x19b0] sm:$0xff]
        %v1333 = vld [vmem:[%s416 + $0x19b8] sm:$0xff]
        %v1334 = vld [vmem:[%s416 + $0x19c0] sm:$0xff]
        %v1335 = vld [vmem:[%s416 + $0x19c8] sm:$0xff]
        %v1336 = vld [vmem:[%s416 + $0x19d0] sm:$0xff]
        %v1337 = vld [vmem:[%s416 + $0x19d8] sm:$0xff]
        %v1338 = vld [vmem:[%s416 + $0x19e0] sm:$0xff]
        %v1339 = vld [vmem:[%s416 + $0x19e8] sm:$0xff]
        %v1340 = vld [vmem:[%s416 + $0x19f0] sm:$0xff]
        %v1341 = vld [vmem:[%s416 + $0x19f8] sm:$0xff]
        %v1342 = vld [vmem:[%s416 + $0x1a00] sm:$0xff]
        %v1343 = vld [vmem:[%s416 + $0x1a08] sm:$0xff]
        %v1344 = vld [vmem:[%s416 + $0x1a10] sm:$0xff]
        %v1345 = vld [vmem:[%s416 + $0x1a18] sm:$0xff]
        %v1346 = vld [vmem:[%s416 + $0x1a20] sm:$0xff]
        %v1347 = vld [vmem:[%s416 + $0x1a28] sm:$0xff]
        %v1348 = vld [vmem:[%s416 + $0x1a30] sm:$0xff]
        %v1349 = vld [vmem:[%s416 + $0x1a38] sm:$0xff]
        %v1350 = vld [vmem:[%s416 + $0x1a40] sm:$0xff]
        %v1351 = vld [vmem:[%s416 + $0x1a48] sm:$0xff]
        %v1352 = vld [vmem:[%s416 + $0x1a50] sm:$0xff]
        %v1353 = vld [vmem:[%s416 + $0x1a58] sm:$0xff]
        %v1354 = vld [vmem:[%s416 + $0x1a60] sm:$0xff]
        %v1355 = vld [vmem:[%s416 + $0x1a68] sm:$0xff]
        %v1356 = vld [vmem:[%s416 + $0x1a70] sm:$0xff]
        %v1357 = vld [vmem:[%s416 + $0x1a78] sm:$0xff]
        %v1358 = vld [vmem:[%s416 + $0x1a80] sm:$0xff]
        %v1359 = vld [vmem:[%s416 + $0x1a88] sm:$0xff]
        %v1360 = vld [vmem:[%s416 + $0x1a90] sm:$0xff]
        %v1361 = vld [vmem:[%s416 + $0x1a98] sm:$0xff]
        %v1362 = vld [vmem:[%s416 + $0x1aa0] sm:$0xff]
        %v1363 = vld [vmem:[%s416 + $0x1aa8] sm:$0xff]
        %v1364 = vld [vmem:[%s416 + $0x1ab0] sm:$0xff]
        %v1365 = vld [vmem:[%s416 + $0x1ab8] sm:$0xff]
        %v1366 = vld [vmem:[%s416 + $0x1ac0] sm:$0xff]
        %v1367 = vld [vmem:[%s416 + $0x1ac8] sm:$0xff]
        %v1368 = vld [vmem:[%s416 + $0x1ad0] sm:$0xff]
        %v1369 = vld [vmem:[%s416 + $0x1ad8] sm:$0xff]
        %v1370 = vld [vmem:[%s416 + $0x1ae0] sm:$0xff]
        %v1371 = vld [vmem:[%s416 + $0x1ae8] sm:$0xff]
        %v1372 = vld [vmem:[%s416 + $0x1af0] sm:$0xff]
        %v1373 = vld [vmem:[%s416 + $0x1af8] sm:$0xff]
        %v1374 = vld [vmem:[%s416 + $0x1b00] sm:$0xff]
        %v1375 = vld [vmem:[%s416 + $0x1b08] sm:$0xff]
        %v1376 = vld [vmem:[%s416 + $0x1b10] sm:$0xff]
        %v1377 = vld [vmem:[%s416 + $0x1b18] sm:$0xff]
        %v1378 = vld [vmem:[%s416 + $0x1b20] sm:$0xff]
        %v1379 = vld [vmem:[%s416 + $0x1b28] sm:$0xff]
        %v1380 = vld [vmem:[%s416 + $0x1b30] sm:$0xff]
        %v1381 = vld [vmem:[%s416 + $0x1b38] sm:$0xff]
        %v1382 = vld [vmem:[%s416 + $0x1b40] sm:$0xff]
        %v1383 = vld [vmem:[%s416 + $0x1b48] sm:$0xff]
        %v1384 = vld [vmem:[%s416 + $0x1b50] sm:$0xff]
        %v1385 = vld [vmem:[%s416 + $0x1b58] sm:$0xff]
        %v1386 = vld [vmem:[%s416 + $0x1b60] sm:$0xff]
        %v1387 = vld [vmem:[%s416 + $0x1b68] sm:$0xff]
        %v1388 = vld [vmem:[%s416 + $0x1b70] sm:$0xff]
        %v1389 = vld [vmem:[%s416 + $0x1b78] sm:$0xff]
        %v1390 = vld [vmem:[%s416 + $0x1b80] sm:$0xff]
        %v1391 = vld [vmem:[%s416 + $0x1b88] sm:$0xff]
        %v1392 = vld [vmem:[%s416 + $0x1b90] sm:$0xff]
        %v1393 = vld [vmem:[%s416 + $0x1b98] sm:$0xff]
        %v1394 = vld [vmem:[%s416 + $0x1ba0] sm:$0xff]
        %v1395 = vld [vmem:[%s416 + $0x1ba8] sm:$0xff]
        %v1396 = vld [vmem:[%s416 + $0x1bb0] sm:$0xff]
        %v1397 = vld [vmem:[%s416 + $0x1bb8] sm:$0xff]
        %v1398 = vld [vmem:[%s416 + $0x1bc0] sm:$0xff]
        %v1399 = vld [vmem:[%s416 + $0x1bc8] sm:$0xff]
        %v1400 = vld [vmem:[%s416 + $0x1bd0] sm:$0xff]
        %v1401 = vld [vmem:[%s416 + $0x1bd8] sm:$0xff]
        %v1402 = vld [vmem:[%s416 + $0x1be0] sm:$0xff]
        %v1403 = vld [vmem:[%s416 + $0x1be8] sm:$0xff]
        %v1404 = vld [vmem:[%s416 + $0x1bf0] sm:$0xff]
        %v1405 = vld [vmem:[%s416 + $0x1bf8] sm:$0xff]
        %v1406 = vld [vmem:[%s416 + $0x1c00] sm:$0xff]
        %v1407 = vld [vmem:[%s416 + $0x1c08] sm:$0xff]
        %v1408 = vld [vmem:[%s416 + $0x1c10] sm:$0xff]
        %v1409 = vld [vmem:[%s416 + $0x1c18] sm:$0xff]
        %v1410 = vld [vmem:[%s416 + $0x1c20] sm:$0xff]
        %v1411 = vld [vmem:[%s416 + $0x1c28] sm:$0xff]
        %v1412 = vld [vmem:[%s416 + $0x1c30] sm:$0xff]
        %v1413 = vld [vmem:[%s416 + $0x1c38] sm:$0xff]
        %v1414 = vld [vmem:[%s416 + $0x1c40] sm:$0xff]
        %v1415 = vld [vmem:[%s416 + $0x1c48] sm:$0xff]
        %v1416 = vld [vmem:[%s416 + $0x1c50] sm:$0xff]
        %v1417 = vld [vmem:[%s416 + $0x1c58] sm:$0xff]
        %v1418 = vld [vmem:[%s416 + $0x1c60] sm:$0xff]
        %v1419 = vld [vmem:[%s416 + $0x1c68] sm:$0xff]
        %v1420 = vld [vmem:[%s416 + $0x1c70] sm:$0xff]
        %v1421 = vld [vmem:[%s416 + $0x1c78] sm:$0xff]
        %v1422 = vld [vmem:[%s416 + $0x1c80] sm:$0xff]
        %v1423 = vld [vmem:[%s416 + $0x1c88] sm:$0xff]
        %v1424 = vld [vmem:[%s416 + $0x1c90] sm:$0xff]
        %v1425 = vld [vmem:[%s416 + $0x1c98] sm:$0xff]
        %v1426 = vld [vmem:[%s416 + $0x1ca0] sm:$0xff]
        %v1427 = vld [vmem:[%s416 + $0x1ca8] sm:$0xff]
        %v1428 = vld [vmem:[%s416 + $0x1cb0] sm:$0xff]
        %v1429 = vld [vmem:[%s416 + $0x1cb8] sm:$0xff]
        %v1430 = vld [vmem:[%s416 + $0x1cc0] sm:$0xff]
        %v1431 = vld [vmem:[%s416 + $0x1cc8] sm:$0xff]
        %v1432 = vld [vmem:[%s416 + $0x1cd0] sm:$0xff]
        %v1433 = vld [vmem:[%s416 + $0x1cd8] sm:$0xff]
        %v1434 = vld [vmem:[%s416 + $0x1ce0] sm:$0xff]
        %v1435 = vld [vmem:[%s416 + $0x1ce8] sm:$0xff]
        %v1436 = vld [vmem:[%s416 + $0x1cf0] sm:$0xff]
        %v1437 = vld [vmem:[%s416 + $0x1cf8] sm:$0xff]
        %v1438 = vld [vmem:[%s416 + $0x1d00] sm:$0xff]
        %v1439 = vld [vmem:[%s416 + $0x1d08] sm:$0xff]
        %v1440 = vld [vmem:[%s416 + $0x1d10] sm:$0xff]
        %v1441 = vld [vmem:[%s416 + $0x1d18] sm:$0xff]
        %v1442 = vld [vmem:[%s416 + $0x1d20] sm:$0xff]
        %v1443 = vld [vmem:[%s416 + $0x1d28] sm:$0xff]
        %v1444 = vld [vmem:[%s416 + $0x1d30] sm:$0xff]
        %v1445 = vld [vmem:[%s416 + $0x1d38] sm:$0xff]
        %v1446 = vld [vmem:[%s416 + $0x1d40] sm:$0xff]
        %v1447 = vld [vmem:[%s416 + $0x1d48] sm:$0xff]
        %v1448 = vld [vmem:[%s416 + $0x1d50] sm:$0xff]
        %v1449 = vld [vmem:[%s416 + $0x1d58] sm:$0xff]
        %v1450 = vld [vmem:[%s416 + $0x1d60] sm:$0xff]
        %v1451 = vld [vmem:[%s416 + $0x1d68] sm:$0xff]
        %v1452 = vld [vmem:[%s416 + $0x1d70] sm:$0xff]
        %v1453 = vld [vmem:[%s416 + $0x1d78] sm:$0xff]
        %v1454 = vld [vmem:[%s416 + $0x1d80] sm:$0xff]
        %v1455 = vld [vmem:[%s416 + $0x1d88] sm:$0xff]
        %v1456 = vld [vmem:[%s416 + $0x1d90] sm:$0xff]
        %v1457 = vld [vmem:[%s416 + $0x1d98] sm:$0xff]
        %v1458 = vld [vmem:[%s416 + $0x1da0] sm:$0xff]
        %v1459 = vld [vmem:[%s416 + $0x1da8] sm:$0xff]
        %v1460 = vld [vmem:[%s416 + $0x1db0] sm:$0xff]
        %v1461 = vld [vmem:[%s416 + $0x1db8] sm:$0xff]
        %v1462 = vld [vmem:[%s416 + $0x1dc0] sm:$0xff]
        %v1463 = vld [vmem:[%s416 + $0x1dc8] sm:$0xff]
        %v1464 = vld [vmem:[%s416 + $0x1dd0] sm:$0xff]
        %v1465 = vld [vmem:[%s416 + $0x1dd8] sm:$0xff]
        %v1466 = vld [vmem:[%s416 + $0x1de0] sm:$0xff]
        %v1467 = vld [vmem:[%s416 + $0x1de8] sm:$0xff]
        %v1468 = vld [vmem:[%s416 + $0x1df0] sm:$0xff]
        %v1469 = vld [vmem:[%s416 + $0x1df8] sm:$0xff]
        %v1470 = vld [vmem:[%s416 + $0x1e00] sm:$0xff]
        %v1471 = vld [vmem:[%s416 + $0x1e08] sm:$0xff]
        %v1472 = vld [vmem:[%s416 + $0x1e10] sm:$0xff]
        %v1473 = vld [vmem:[%s416 + $0x1e18] sm:$0xff]
        %v1474 = vld [vmem:[%s416 + $0x1e20] sm:$0xff]
        %v1475 = vld [vmem:[%s416 + $0x1e28] sm:$0xff]
        %v1476 = vld [vmem:[%s416 + $0x1e30] sm:$0xff]
        %v1477 = vld [vmem:[%s416 + $0x1e38] sm:$0xff]
        %v1478 = vld [vmem:[%s416 + $0x1e40] sm:$0xff]
        %v1479 = vld [vmem:[%s416 + $0x1e48] sm:$0xff]
        %v1480 = vld [vmem:[%s416 + $0x1e50] sm:$0xff]
        %v1481 = vld [vmem:[%s416 + $0x1e58] sm:$0xff]
        %v1482 = vld [vmem:[%s416 + $0x1e60] sm:$0xff]
        %v1483 = vld [vmem:[%s416 + $0x1e68] sm:$0xff]
        %v1484 = vld [vmem:[%s416 + $0x1e70] sm:$0xff]
        %v1485 = vld [vmem:[%s416 + $0x1e78] sm:$0xff]
        %v1486 = vld [vmem:[%s416 + $0x1e80] sm:$0xff]
        %v1487 = vld [vmem:[%s416 + $0x1e88] sm:$0xff]
        %v1488 = vld [vmem:[%s416 + $0x1e90] sm:$0xff]
        %v1489 = vld [vmem:[%s416 + $0x1e98] sm:$0xff]
        %v1490 = vld [vmem:[%s416 + $0x1ea0] sm:$0xff]
        %v1491 = vld [vmem:[%s416 + $0x1ea8] sm:$0xff]
        %v1492 = vld [vmem:[%s416 + $0x1eb0] sm:$0xff]
        %v1493 = vld [vmem:[%s416 + $0x1eb8] sm:$0xff]
        %v1494 = vld [vmem:[%s416 + $0x1ec0] sm:$0xff]
        %v1495 = vld [vmem:[%s416 + $0x1ec8] sm:$0xff]
        %v1496 = vld [vmem:[%s416 + $0x1ed0] sm:$0xff]
        %v1497 = vld [vmem:[%s416 + $0x1ed8] sm:$0xff]
        %v1498 = vld [vmem:[%s416 + $0x1ee0] sm:$0xff]
        %v1499 = vld [vmem:[%s416 + $0x1ee8] sm:$0xff]
        %v1500 = vld [vmem:[%s416 + $0x1ef0] sm:$0xff]
        %v1501 = vld [vmem:[%s416 + $0x1ef8] sm:$0xff]
        %v1502 = vld [vmem:[%s416 + $0x1f00] sm:$0xff]
        %v1503 = vld [vmem:[%s416 + $0x1f08] sm:$0xff]
        %v1504 = vld [vmem:[%s416 + $0x1f10] sm:$0xff]
        %v1505 = vld [vmem:[%s416 + $0x1f18] sm:$0xff]
        %v1506 = vld [vmem:[%s416 + $0x1f20] sm:$0xff]
        %v1507 = vld [vmem:[%s416 + $0x1f28] sm:$0xff]
        %v1508 = vld [vmem:[%s416 + $0x1f30] sm:$0xff]
        %v1509 = vld [vmem:[%s416 + $0x1f38] sm:$0xff]
        %v1510 = vld [vmem:[%s416 + $0x1f40] sm:$0xff]
        %v1511 = vld [vmem:[%s416 + $0x1f48] sm:$0xff]
        %v1512 = vld [vmem:[%s416 + $0x1f50] sm:$0xff]
        %v1513 = vld [vmem:[%s416 + $0x1f58] sm:$0xff]
        %v1514 = vld [vmem:[%s416 + $0x1f60] sm:$0xff]
        %v1515 = vld [vmem:[%s416 + $0x1f68] sm:$0xff]
        %v1516 = vld [vmem:[%s416 + $0x1f70] sm:$0xff]
        %v1517 = vld [vmem:[%s416 + $0x1f78] sm:$0xff]
        %v1518 = vld [vmem:[%s416 + $0x1f80] sm:$0xff]
        %v1519 = vld [vmem:[%s416 + $0x1f88] sm:$0xff]
        %v1520 = vld [vmem:[%s416 + $0x1f90] sm:$0xff]
        %v1521 = vld [vmem:[%s416 + $0x1f98] sm:$0xff]
        %v1522 = vld [vmem:[%s416 + $0x1fa0] sm:$0xff]
        %v1523 = vld [vmem:[%s416 + $0x1fa8] sm:$0xff]
        %v1524 = vld [vmem:[%s416 + $0x1fb0] sm:$0xff]
        %v1525 = vld [vmem:[%s416 + $0x1fb8] sm:$0xff]
        %v1526 = vld [vmem:[%s416 + $0x1fc0] sm:$0xff]
        %v1527 = vld [vmem:[%s416 + $0x1fc8] sm:$0xff]
        %v1528 = vld [vmem:[%s416 + $0x1fd0] sm:$0xff]
        %v1529 = vld [vmem:[%s416 + $0x1fd8] sm:$0xff]
        %v1530 = vld [vmem:[%s416 + $0x1fe0] sm:$0xff]
        %v1531 = vld [vmem:[%s416 + $0x1fe8] sm:$0xff]
        %v1532 = vld [vmem:[%s416 + $0x1ff0] sm:$0xff]
        %v1533 = vld [vmem:[%s416 + $0x1ff8] sm:$0xff]
        %v1534 = vld [vmem:[%s416 + $0x2000] sm:$0xff]
        %v1535 = vld [vmem:[%s416 + $0x2008] sm:$0xff]
        %v1536 = vld [vmem:[%s416 + $0x2010] sm:$0xff]
        %v1537 = vld [vmem:[%s416 + $0x2018] sm:$0xff]
        %v1538 = vld [vmem:[%s416 + $0x2020] sm:$0xff]
        %v1539 = vld [vmem:[%s416 + $0x2028] sm:$0xff]
        %v1540 = vld [vmem:[%s416 + $0x2030] sm:$0xff]
        %v1541 = vld [vmem:[%s416 + $0x2038] sm:$0xff]
        %v1542 = vld [vmem:[%s416 + $0x2040] sm:$0xff]
        %v1543 = vld [vmem:[%s416 + $0x2048] sm:$0xff]
        %v1544 = vld [vmem:[%s416 + $0x2050] sm:$0xff]
        %v1545 = vld [vmem:[%s416 + $0x2058] sm:$0xff]
        %v1546 = vld [vmem:[%s416 + $0x2060] sm:$0xff]
        %v1547 = vld [vmem:[%s416 + $0x2068] sm:$0xff]
        %v1548 = vld [vmem:[%s416 + $0x2070] sm:$0xff]
        %v1549 = vld [vmem:[%s416 + $0x2078] sm:$0xff]
        %v1550 = vld [vmem:[%s416 + $0x2080] sm:$0xff]
        %v1551 = vld [vmem:[%s416 + $0x2088] sm:$0xff]
        %v1552 = vld [vmem:[%s416 + $0x2090] sm:$0xff]
        %v1553 = vld [vmem:[%s416 + $0x2098] sm:$0xff]
        %v1554 = vld [vmem:[%s416 + $0x20a0] sm:$0xff]
        %v1555 = vld [vmem:[%s416 + $0x20a8] sm:$0xff]
        %v1556 = vld [vmem:[%s416 + $0x20b0] sm:$0xff]
        %v1557 = vld [vmem:[%s416 + $0x20b8] sm:$0xff]
        %v1558 = vld [vmem:[%s416 + $0x20c0] sm:$0xff]
        %v1559 = vld [vmem:[%s416 + $0x20c8] sm:$0xff]
        %v1560 = vld [vmem:[%s416 + $0x20d0] sm:$0xff]
        %v1561 = vld [vmem:[%s416 + $0x20d8] sm:$0xff]
        %v1562 = vld [vmem:[%s416 + $0x20e0] sm:$0xff]
        %v1563 = vld [vmem:[%s416 + $0x20e8] sm:$0xff]
        %v1564 = vld [vmem:[%s416 + $0x20f0] sm:$0xff]
        %v1565 = vld [vmem:[%s416 + $0x20f8] sm:$0xff]
        %v1566 = vld [vmem:[%s416 + $0x2100] sm:$0xff]
        %v1567 = vld [vmem:[%s416 + $0x2108] sm:$0xff]
        %v1568 = vld [vmem:[%s416 + $0x2110] sm:$0xff]
        %v1569 = vld [vmem:[%s416 + $0x2118] sm:$0xff]
        %v1570 = vld [vmem:[%s416 + $0x2120] sm:$0xff]
        %v1571 = vld [vmem:[%s416 + $0x2128] sm:$0xff]
        %v1572 = vld [vmem:[%s416 + $0x2130] sm:$0xff]
        %v1573 = vld [vmem:[%s416 + $0x2138] sm:$0xff]
        %v1574 = vld [vmem:[%s416 + $0x2140] sm:$0xff]
        %v1575 = vld [vmem:[%s416 + $0x2148] sm:$0xff]
        %v1576 = vld [vmem:[%s416 + $0x2150] sm:$0xff]
        %v1577 = vld [vmem:[%s416 + $0x2158] sm:$0xff]
        %v1578 = vld [vmem:[%s416 + $0x2160] sm:$0xff]
        %v1579 = vld [vmem:[%s416 + $0x2168] sm:$0xff]
        %v1580 = vld [vmem:[%s416 + $0x2170] sm:$0xff]
        %v1581 = vld [vmem:[%s416 + $0x2178] sm:$0xff]
        %v1582 = vld [vmem:[%s416 + $0x2180] sm:$0xff]
        %v1583 = vld [vmem:[%s416 + $0x2188] sm:$0xff]
        %v1584 = vld [vmem:[%s416 + $0x2190] sm:$0xff]
        %v1585 = vld [vmem:[%s416 + $0x2198] sm:$0xff]
        %v1586 = vld [vmem:[%s416 + $0x21a0] sm:$0xff]
        %v1587 = vld [vmem:[%s416 + $0x21a8] sm:$0xff]
        %v1588 = vld [vmem:[%s416 + $0x21b0] sm:$0xff]
        %v1589 = vld [vmem:[%s416 + $0x21b8] sm:$0xff]
        %v1590 = vld [vmem:[%s416 + $0x21c0] sm:$0xff]
        %v1591 = vld [vmem:[%s416 + $0x21c8] sm:$0xff]
        %v1592 = vld [vmem:[%s416 + $0x21d0] sm:$0xff]
        %v1593 = vld [vmem:[%s416 + $0x21d8] sm:$0xff]
        %v1594 = vld [vmem:[%s416 + $0x21e0] sm:$0xff]
        %v1595 = vld [vmem:[%s416 + $0x21e8] sm:$0xff]
        %v1596 = vld [vmem:[%s416 + $0x21f0] sm:$0xff]
        %v1597 = vld [vmem:[%s416 + $0x21f8] sm:$0xff]
        %v1598 = vld [vmem:[%s416 + $0x2200] sm:$0xff]
        %v1599 = vld [vmem:[%s416 + $0x2208] sm:$0xff]
        %v1600 = vld [vmem:[%s416 + $0x2210] sm:$0xff]
        %v1601 = vld [vmem:[%s416 + $0x2218] sm:$0xff]
        %v1602 = vld [vmem:[%s416 + $0x2220] sm:$0xff]
        %v1603 = vld [vmem:[%s416 + $0x2228] sm:$0xff]
        %v1604 = vld [vmem:[%s416 + $0x2230] sm:$0xff]
        %v1605 = vld [vmem:[%s416 + $0x2238] sm:$0xff]
        %v1606 = vld [vmem:[%s416 + $0x2240] sm:$0xff]
        %v1607 = vld [vmem:[%s416 + $0x2248] sm:$0xff]
        %v1608 = vld [vmem:[%s416 + $0x2250] sm:$0xff]
        %v1609 = vld [vmem:[%s416 + $0x2258] sm:$0xff]
        %v1610 = vld [vmem:[%s416 + $0x2260] sm:$0xff]
        %v1611 = vld [vmem:[%s416 + $0x2268] sm:$0xff]
        %v1612 = vld [vmem:[%s416 + $0x2270] sm:$0xff]
        %v1613 = vld [vmem:[%s416 + $0x2278] sm:$0xff]
        %v1614 = vld [vmem:[%s416 + $0x2280] sm:$0xff]
        %v1615 = vld [vmem:[%s416 + $0x2288] sm:$0xff]
        %v1616 = vld [vmem:[%s416 + $0x2290] sm:$0xff]
        %v1617 = vld [vmem:[%s416 + $0x2298] sm:$0xff]
        %v1618 = vld [vmem:[%s416 + $0x22a0] sm:$0xff]
        %v1619 = vld [vmem:[%s416 + $0x22a8] sm:$0xff]
        %v1620 = vld [vmem:[%s416 + $0x22b0] sm:$0xff]
        %v1621 = vld [vmem:[%s416 + $0x22b8] sm:$0xff]
        %v1622 = vld [vmem:[%s416 + $0x22c0] sm:$0xff]
        %v1623 = vld [vmem:[%s416 + $0x22c8] sm:$0xff]
        %v1624 = vld [vmem:[%s416 + $0x22d0] sm:$0xff]
        %v1625 = vld [vmem:[%s416 + $0x22d8] sm:$0xff]
        %v1626 = vld [vmem:[%s416 + $0x22e0] sm:$0xff]
        %v1627 = vld [vmem:[%s416 + $0x22e8] sm:$0xff]
        %v1628 = vld [vmem:[%s416 + $0x22f0] sm:$0xff]
        %v1629 = vld [vmem:[%s416 + $0x22f8] sm:$0xff]
        %v1630 = vld [vmem:[%s416 + $0x2300] sm:$0xff]
        %v1631 = vld [vmem:[%s416 + $0x2308] sm:$0xff]
        %v1632 = vld [vmem:[%s416 + $0x2310] sm:$0xff]
        %v1633 = vld [vmem:[%s416 + $0x2318] sm:$0xff]
        %v1634 = vld [vmem:[%s416 + $0x2320] sm:$0xff]
        %v1635 = vld [vmem:[%s416 + $0x2328] sm:$0xff]
        %v1636 = vld [vmem:[%s416 + $0x2330] sm:$0xff]
        %v1637 = vld [vmem:[%s416 + $0x2338] sm:$0xff]
        %v1638 = vld [vmem:[%s416 + $0x2340] sm:$0xff]
        %v1639 = vld [vmem:[%s416 + $0x2348] sm:$0xff]
        %v1640 = vld [vmem:[%s416 + $0x2350] sm:$0xff]
        %v1641 = vld [vmem:[%s416 + $0x2358] sm:$0xff]
        %v1642 = vld [vmem:[%s416 + $0x2360] sm:$0xff]
        %v1643 = vld [vmem:[%s416 + $0x2368] sm:$0xff]
        %v1644 = vld [vmem:[%s416 + $0x2370] sm:$0xff]
        %v1645 = vld [vmem:[%s416 + $0x2378] sm:$0xff]
        %v1646 = vld [vmem:[%s416 + $0x2380] sm:$0xff]
        %v1647 = vld [vmem:[%s416 + $0x2388] sm:$0xff]
        %v1648 = vld [vmem:[%s416 + $0x2390] sm:$0xff]
        %v1649 = vld [vmem:[%s416 + $0x2398] sm:$0xff]
        %v1650 = vld [vmem:[%s416 + $0x23a0] sm:$0xff]
        %v1651 = vld [vmem:[%s416 + $0x23a8] sm:$0xff]
        %v1652 = vld [vmem:[%s416 + $0x23b0] sm:$0xff]
        %v1653 = vld [vmem:[%s416 + $0x23b8] sm:$0xff]
        %v1654 = vld [vmem:[%s416 + $0x23c0] sm:$0xff]
        %v1655 = vld [vmem:[%s416 + $0x23c8] sm:$0xff]
        %v1656 = vld [vmem:[%s416 + $0x23d0] sm:$0xff]
        %v1657 = vld [vmem:[%s416 + $0x23d8] sm:$0xff]
        %v1658 = vld [vmem:[%s416 + $0x23e0] sm:$0xff]
        %v1659 = vld [vmem:[%s416 + $0x23e8] sm:$0xff]
        %v1660 = vld [vmem:[%s416 + $0x23f0] sm:$0xff]
        %v1661 = vld [vmem:[%s416 + $0x23f8] sm:$0xff]
        %v1662 = vld [vmem:[%s416 + $0x2400] sm:$0xff]
        %v1663 = vld [vmem:[%s416 + $0x2408] sm:$0xff]
        %v1664 = vld [vmem:[%s416 + $0x2410] sm:$0xff]
        %v1665 = vld [vmem:[%s416 + $0x2418] sm:$0xff]
        %v1666 = vld [vmem:[%s416 + $0x2420] sm:$0xff]
        %v1667 = vld [vmem:[%s416 + $0x2428] sm:$0xff]
        %v1668 = vld [vmem:[%s416 + $0x2430] sm:$0xff]
        %v1669 = vld [vmem:[%s416 + $0x2438] sm:$0xff]
        %v1670 = vld [vmem:[%s416 + $0x2440] sm:$0xff]
        %v1671 = vld [vmem:[%s416 + $0x2448] sm:$0xff]
        %v1672 = vld [vmem:[%s416 + $0x2450] sm:$0xff]
        %v1673 = vld [vmem:[%s416 + $0x2458] sm:$0xff]
        %v1674 = vld [vmem:[%s416 + $0x2460] sm:$0xff]
        %v1675 = vld [vmem:[%s416 + $0x2468] sm:$0xff]
        %v1676 = vld [vmem:[%s416 + $0x2470] sm:$0xff]
        %v1677 = vld [vmem:[%s416 + $0x2478] sm:$0xff]
        %v1678 = vld [vmem:[%s416 + $0x2480] sm:$0xff]
        %v1679 = vld [vmem:[%s416 + $0x2488] sm:$0xff]
        %v1680 = vld [vmem:[%s416 + $0x2490] sm:$0xff]
        %v1681 = vld [vmem:[%s416 + $0x2498] sm:$0xff]
        %v1682 = vld [vmem:[%s416 + $0x24a0] sm:$0xff]
        %v1683 = vld [vmem:[%s416 + $0x24a8] sm:$0xff]
        %v1684 = vld [vmem:[%s416 + $0x24b0] sm:$0xff]
        %v1685 = vld [vmem:[%s416 + $0x24b8] sm:$0xff]
        %v1686 = vld [vmem:[%s416 + $0x24c0] sm:$0xff]
        %v1687 = vld [vmem:[%s416 + $0x24c8] sm:$0xff]
        %v1688 = vld [vmem:[%s416 + $0x24d0] sm:$0xff]
        %v1689 = vld [vmem:[%s416 + $0x24d8] sm:$0xff]
        %v1690 = vld [vmem:[%s416 + $0x24e0] sm:$0xff]
        %v1691 = vld [vmem:[%s416 + $0x24e8] sm:$0xff]
        %v1692 = vld [vmem:[%s416 + $0x24f0] sm:$0xff]
        %v1693 = vld [vmem:[%s416 + $0x24f8] sm:$0xff]
        %v1694 = vld [vmem:[%s416 + $0x2500] sm:$0xff]
        %v1695 = vld [vmem:[%s416 + $0x2508] sm:$0xff]
        %v1696 = vld [vmem:[%s416 + $0x2510] sm:$0xff]
        %v1697 = vld [vmem:[%s416 + $0x2518] sm:$0xff]
        %v1698 = vld [vmem:[%s416 + $0x2520] sm:$0xff]
        %v1699 = vld [vmem:[%s416 + $0x2528] sm:$0xff]
        %v1700 = vld [vmem:[%s416 + $0x2530] sm:$0xff]
        %v1701 = vld [vmem:[%s416 + $0x2538] sm:$0xff]
        %v1702 = vld [vmem:[%s416 + $0x2540] sm:$0xff]
        %v1703 = vld [vmem:[%s416 + $0x2548] sm:$0xff]
        %v1704 = vld [vmem:[%s416 + $0x2550] sm:$0xff]
        %v1705 = vld [vmem:[%s416 + $0x2558] sm:$0xff]
        %v1706 = vld [vmem:[%s416 + $0x2560] sm:$0xff]
        %v1707 = vld [vmem:[%s416 + $0x2568] sm:$0xff]
        %v1708 = vld [vmem:[%s416 + $0x2570] sm:$0xff]
        %v1709 = vld [vmem:[%s416 + $0x2578] sm:$0xff]
        %v1710 = vld [vmem:[%s416 + $0x2580] sm:$0xff]
        %v1711 = vld [vmem:[%s416 + $0x2588] sm:$0xff]
        %v1712 = vld [vmem:[%s416 + $0x2590] sm:$0xff]
        %v1713 = vld [vmem:[%s416 + $0x2598] sm:$0xff]
        %v1714 = vld [vmem:[%s416 + $0x25a0] sm:$0xff]
        %v1715 = vld [vmem:[%s416 + $0x25a8] sm:$0xff]
        %v1716 = vld [vmem:[%s416 + $0x25b0] sm:$0xff]
        %v1717 = vld [vmem:[%s416 + $0x25b8] sm:$0xff]
        %v1718 = vld [vmem:[%s416 + $0x25c0] sm:$0xff]
        %v1719 = vld [vmem:[%s416 + $0x25c8] sm:$0xff]
        %v1720 = vld [vmem:[%s416 + $0x25d0] sm:$0xff]
        %v1721 = vld [vmem:[%s416 + $0x25d8] sm:$0xff]
        %v1722 = vld [vmem:[%s416 + $0x25e0] sm:$0xff]
        %v1723 = vld [vmem:[%s416 + $0x25e8] sm:$0xff]
        %v1724 = vld [vmem:[%s416 + $0x25f0] sm:$0xff]
        %v1725 = vld [vmem:[%s416 + $0x25f8] sm:$0xff]
        %v1726 = vld [vmem:[%s416 + $0x2600] sm:$0xff]
        %v1727 = vld [vmem:[%s416 + $0x2608] sm:$0xff]
        %v1728 = vld [vmem:[%s416 + $0x2610] sm:$0xff]
        %v1729 = vld [vmem:[%s416 + $0x2618] sm:$0xff]
        %v1730 = vld [vmem:[%s416 + $0x2620] sm:$0xff]
        %v1731 = vld [vmem:[%s416 + $0x2628] sm:$0xff]
        %v1732 = vld [vmem:[%s416 + $0x2630] sm:$0xff]
        %v1733 = vld [vmem:[%s416 + $0x2638] sm:$0xff]
        %v1734 = vld [vmem:[%s416 + $0x2640] sm:$0xff]
        %v1735 = vld [vmem:[%s416 + $0x2648] sm:$0xff]
        %v1736 = vld [vmem:[%s416 + $0x2650] sm:$0xff]
        %v1737 = vld [vmem:[%s416 + $0x2658] sm:$0xff]
        %v1738 = vld [vmem:[%s416 + $0x2660] sm:$0xff]
        %v1739 = vld [vmem:[%s416 + $0x2668] sm:$0xff]
        %v1740 = vld [vmem:[%s416 + $0x2670] sm:$0xff]
        %v1741 = vld [vmem:[%s416 + $0x2678] sm:$0xff]
        %v1742 = vld [vmem:[%s416 + $0x2680] sm:$0xff]
        %v1743 = vld [vmem:[%s416 + $0x2688] sm:$0xff]
        %v1744 = vld [vmem:[%s416 + $0x2690] sm:$0xff]
        %v1745 = vld [vmem:[%s416 + $0x2698] sm:$0xff]
        %v1746 = vld [vmem:[%s416 + $0x26a0] sm:$0xff]
        %v1747 = vld [vmem:[%s416 + $0x26a8] sm:$0xff]
        %v1748 = vld [vmem:[%s416 + $0x26b0] sm:$0xff]
        %v1749 = vld [vmem:[%s416 + $0x26b8] sm:$0xff]
        %v1750 = vld [vmem:[%s416 + $0x26c0] sm:$0xff]
        %v1751 = vld [vmem:[%s416 + $0x26c8] sm:$0xff]
        %v1752 = vld [vmem:[%s416 + $0x26d0] sm:$0xff]
        %v1753 = vld [vmem:[%s416 + $0x26d8] sm:$0xff]
        %v1754 = vld [vmem:[%s416 + $0x26e0] sm:$0xff]
        %v1755 = vld [vmem:[%s416 + $0x26e8] sm:$0xff]
        %v1756 = vld [vmem:[%s416 + $0x26f0] sm:$0xff]
        %v1757 = vld [vmem:[%s416 + $0x26f8] sm:$0xff]
        %v1758 = vld [vmem:[%s416 + $0x2700] sm:$0xff]
        %v1759 = vld [vmem:[%s416 + $0x2708] sm:$0xff]
        %v1760 = vld [vmem:[%s425] sm:$0x3]
        %v1762 = vlaneseq
        %v1763 = vshrl.u32 %v1762, 7
        %v1764 = vsub.s32 0, %v1763
        %v1765 = vrot.slane %v1760, %v1764
        %v1766 = vlaneseq
        %v1767 = vshrl.u32 %v1766, 7
        %v1768 = vsub.s32 1, %v1767
        %v1769 = vrot.slane %v1760, %v1768
        %v1782 = vcombine.high %v500, %v500
        %v1784 = vunpack.c.l.s4 1966171168
        %v1785 = vunpack.c.0.s8 %v1784
        %v1786 = vlaneseq
        %v1787 = vshrl.u32 %v1786, 7
        %v1788 = vsub.s32 %v1785, %v1787
        %v1789 = vrot.slane %v500, %v1788
        %v1791 = vunpack.c.l.s4 1966171168
        %v1792 = vunpack.c.0.s8 %v1791
        %v1793 = vlaneseq
        %v1794 = vshrl.u32 %v1793, 7
        %v1795 = vsub.s32 %v1792, %v1794
        %v1796 = vrot.slane %v1782, %v1795
        %v1797 = vcombine.high %v1789, %v1789
        %v1798 = vcombine.high %v1796, %v1796
        %v1800 = vunpack.c.l.s4 1966171168
        %v1801 = vunpack.c.0.s8 %v1800
        %v1802 = vlaneseq
        %v1803 = vshrl.u32 %v1802, 7
        %v1804 = vsub.s32 %v1801, %v1803
        %v1805 = vrot.slane %v1789, %v1804
        %v1807 = vunpack.c.l.s4 1966171168
        %v1808 = vunpack.c.0.s8 %v1807
        %v1809 = vlaneseq
        %v1810 = vshrl.u32 %v1809, 7
        %v1811 = vsub.s32 %v1808, %v1810
        %v1812 = vrot.slane %v1796, %v1811
        %v1814 = vunpack.c.l.s4 1966171168
        %v1815 = vunpack.c.0.s8 %v1814
        %v1816 = vlaneseq
        %v1817 = vshrl.u32 %v1816, 7
        %v1818 = vsub.s32 %v1815, %v1817
        %v1819 = vrot.slane %v1797, %v1818
        %v1821 = vunpack.c.l.s4 1966171168
        %v1822 = vunpack.c.0.s8 %v1821
        %v1823 = vlaneseq
        %v1824 = vshrl.u32 %v1823, 7
        %v1825 = vsub.s32 %v1822, %v1824
        %v1826 = vrot.slane %v1798, %v1825
        %v1827 = vcombine.high %v1805, %v1805
        %v1828 = vcombine.high %v1812, %v1812
        %v1829 = vcombine.high %v1819, %v1819
        %v1830 = vcombine.high %v1826, %v1826
        %v1831 = vcombine.high %v501, %v501
        %v1833 = vunpack.c.l.s4 1966171168
        %v1834 = vunpack.c.0.s8 %v1833
        %v1835 = vlaneseq
        %v1836 = vshrl.u32 %v1835, 7
        %v1837 = vsub.s32 %v1834, %v1836
        %v1838 = vrot.slane %v501, %v1837
        %v1840 = vunpack.c.l.s4 1966171168
        %v1841 = vunpack.c.0.s8 %v1840
        %v1842 = vlaneseq
        %v1843 = vshrl.u32 %v1842, 7
        %v1844 = vsub.s32 %v1841, %v1843
        %v1845 = vrot.slane %v1831, %v1844
        %v1846 = vcombine.high %v1838, %v1838
        %v1847 = vcombine.high %v1845, %v1845
        %v1849 = vunpack.c.l.s4 1966171168
        %v1850 = vunpack.c.0.s8 %v1849
        %v1851 = vlaneseq
        %v1852 = vshrl.u32 %v1851, 7
        %v1853 = vsub.s32 %v1850, %v1852
        %v1854 = vrot.slane %v1838, %v1853
        %v1856 = vunpack.c.l.s4 1966171168
        %v1857 = vunpack.c.0.s8 %v1856
        %v1858 = vlaneseq
        %v1859 = vshrl.u32 %v1858, 7
        %v1860 = vsub.s32 %v1857, %v1859
        %v1861 = vrot.slane %v1845, %v1860
        %v1863 = vunpack.c.l.s4 1966171168
        %v1864 = vunpack.c.0.s8 %v1863
        %v1865 = vlaneseq
        %v1866 = vshrl.u32 %v1865, 7
        %v1867 = vsub.s32 %v1864, %v1866
        %v1868 = vrot.slane %v1846, %v1867
        %v1870 = vunpack.c.l.s4 1966171168
        %v1871 = vunpack.c.0.s8 %v1870
        %v1872 = vlaneseq
        %v1873 = vshrl.u32 %v1872, 7
        %v1874 = vsub.s32 %v1871, %v1873
        %v1875 = vrot.slane %v1847, %v1874
        %v1876 = vcombine.high %v1854, %v1854
        %v1877 = vcombine.high %v1861, %v1861
        %v1878 = vcombine.high %v1868, %v1868
        %v1879 = vcombine.high %v1875, %v1875
        %v1880 = vcombine.high %v502, %v502
        %v1882 = vunpack.c.l.s4 1966171168
        %v1883 = vunpack.c.0.s8 %v1882
        %v1884 = vlaneseq
        %v1885 = vshrl.u32 %v1884, 7
        %v1886 = vsub.s32 %v1883, %v1885
        %v1887 = vrot.slane %v502, %v1886
        %v1889 = vunpack.c.l.s4 1966171168
        %v1890 = vunpack.c.0.s8 %v1889
        %v1891 = vlaneseq
        %v1892 = vshrl.u32 %v1891, 7
        %v1893 = vsub.s32 %v1890, %v1892
        %v1894 = vrot.slane %v1880, %v1893
        %v1895 = vcombine.high %v1887, %v1887
        %v1896 = vcombine.high %v1894, %v1894
        %v1898 = vunpack.c.l.s4 1966171168
        %v1899 = vunpack.c.0.s8 %v1898
        %v1900 = vlaneseq
        %v1901 = vshrl.u32 %v1900, 7
        %v1902 = vsub.s32 %v1899, %v1901
        %v1903 = vrot.slane %v1887, %v1902
        %v1905 = vunpack.c.l.s4 1966171168
        %v1906 = vunpack.c.0.s8 %v1905
        %v1907 = vlaneseq
        %v1908 = vshrl.u32 %v1907, 7
        %v1909 = vsub.s32 %v1906, %v1908
        %v1910 = vrot.slane %v1894, %v1909
        %v1912 = vunpack.c.l.s4 1966171168
        %v1913 = vunpack.c.0.s8 %v1912
        %v1914 = vlaneseq
        %v1915 = vshrl.u32 %v1914, 7
        %v1916 = vsub.s32 %v1913, %v1915
        %v1917 = vrot.slane %v1895, %v1916
        %v1919 = vunpack.c.l.s4 1966171168
        %v1920 = vunpack.c.0.s8 %v1919
        %v1921 = vlaneseq
        %v1922 = vshrl.u32 %v1921, 7
        %v1923 = vsub.s32 %v1920, %v1922
        %v1924 = vrot.slane %v1896, %v1923
        %v1925 = vcombine.high %v1903, %v1903
        %v1926 = vcombine.high %v1910, %v1910
        %v1927 = vcombine.high %v1917, %v1917
        %v1928 = vcombine.high %v1924, %v1924
        %v1929 = vcombine.high %v503, %v503
        %v1931 = vunpack.c.l.s4 1966171168
        %v1932 = vunpack.c.0.s8 %v1931
        %v1933 = vlaneseq
        %v1934 = vshrl.u32 %v1933, 7
        %v1935 = vsub.s32 %v1932, %v1934
        %v1936 = vrot.slane %v503, %v1935
        %v1938 = vunpack.c.l.s4 1966171168
        %v1939 = vunpack.c.0.s8 %v1938
        %v1940 = vlaneseq
        %v1941 = vshrl.u32 %v1940, 7
        %v1942 = vsub.s32 %v1939, %v1941
        %v1943 = vrot.slane %v1929, %v1942
        %v1944 = vcombine.high %v1936, %v1936
        %v1945 = vcombine.high %v1943, %v1943
        %v1947 = vunpack.c.l.s4 1966171168
        %v1948 = vunpack.c.0.s8 %v1947
        %v1949 = vlaneseq
        %v1950 = vshrl.u32 %v1949, 7
        %v1951 = vsub.s32 %v1948, %v1950
        %v1952 = vrot.slane %v1936, %v1951
        %v1954 = vunpack.c.l.s4 1966171168
        %v1955 = vunpack.c.0.s8 %v1954
        %v1956 = vlaneseq
        %v1957 = vshrl.u32 %v1956, 7
        %v1958 = vsub.s32 %v1955, %v1957
        %v1959 = vrot.slane %v1943, %v1958
        %v1961 = vunpack.c.l.s4 1966171168
        %v1962 = vunpack.c.0.s8 %v1961
        %v1963 = vlaneseq
        %v1964 = vshrl.u32 %v1963, 7
        %v1965 = vsub.s32 %v1962, %v1964
        %v1966 = vrot.slane %v1944, %v1965
        %v1968 = vunpack.c.l.s4 1966171168
        %v1969 = vunpack.c.0.s8 %v1968
        %v1970 = vlaneseq
        %v1971 = vshrl.u32 %v1970, 7
        %v1972 = vsub.s32 %v1969, %v1971
        %v1973 = vrot.slane %v1945, %v1972
        %v1974 = vcombine.high %v1952, %v1952
        %v1975 = vcombine.high %v1959, %v1959
        %v1976 = vcombine.high %v1966, %v1966
        %v1977 = vcombine.high %v1973, %v1973
        %v1978 = vcombine.high %v504, %v504
        %v1980 = vunpack.c.l.s4 1966171168
        %v1981 = vunpack.c.0.s8 %v1980
        %v1982 = vlaneseq
        %v1983 = vshrl.u32 %v1982, 7
        %v1984 = vsub.s32 %v1981, %v1983
        %v1985 = vrot.slane %v504, %v1984
        %v1987 = vunpack.c.l.s4 1966171168
        %v1988 = vunpack.c.0.s8 %v1987
        %v1989 = vlaneseq
        %v1990 = vshrl.u32 %v1989, 7
        %v1991 = vsub.s32 %v1988, %v1990
        %v1992 = vrot.slane %v1978, %v1991
        %v1993 = vcombine.high %v1985, %v1985
        %v1994 = vcombine.high %v1992, %v1992
        %v1996 = vunpack.c.l.s4 1966171168
        %v1997 = vunpack.c.0.s8 %v1996
        %v1998 = vlaneseq
        %v1999 = vshrl.u32 %v1998, 7
        %v2000 = vsub.s32 %v1997, %v1999
        %v2001 = vrot.slane %v1985, %v2000
        %v2003 = vunpack.c.l.s4 1966171168
        %v2004 = vunpack.c.0.s8 %v2003
        %v2005 = vlaneseq
        %v2006 = vshrl.u32 %v2005, 7
        %v2007 = vsub.s32 %v2004, %v2006
        %v2008 = vrot.slane %v1992, %v2007
        %v2010 = vunpack.c.l.s4 1966171168
        %v2011 = vunpack.c.0.s8 %v2010
        %v2012 = vlaneseq
        %v2013 = vshrl.u32 %v2012, 7
        %v2014 = vsub.s32 %v2011, %v2013
        %v2015 = vrot.slane %v1993, %v2014
        %v2017 = vunpack.c.l.s4 1966171168
        %v2018 = vunpack.c.0.s8 %v2017
        %v2019 = vlaneseq
        %v2020 = vshrl.u32 %v2019, 7
        %v2021 = vsub.s32 %v2018, %v2020
        %v2022 = vrot.slane %v1994, %v2021
        %v2023 = vcombine.high %v2001, %v2001
        %v2024 = vcombine.high %v2008, %v2008
        %v2025 = vcombine.high %v2015, %v2015
        %v2026 = vcombine.high %v2022, %v2022
        %v2027 = vcombine.high %v505, %v505
        %v2029 = vunpack.c.l.s4 1966171168
        %v2030 = vunpack.c.0.s8 %v2029
        %v2031 = vlaneseq
        %v2032 = vshrl.u32 %v2031, 7
        %v2033 = vsub.s32 %v2030, %v2032
        %v2034 = vrot.slane %v505, %v2033
        %v2036 = vunpack.c.l.s4 1966171168
        %v2037 = vunpack.c.0.s8 %v2036
        %v2038 = vlaneseq
        %v2039 = vshrl.u32 %v2038, 7
        %v2040 = vsub.s32 %v2037, %v2039
        %v2041 = vrot.slane %v2027, %v2040
        %v2042 = vcombine.high %v2034, %v2034
        %v2043 = vcombine.high %v2041, %v2041
        %v2045 = vunpack.c.l.s4 1966171168
        %v2046 = vunpack.c.0.s8 %v2045
        %v2047 = vlaneseq
        %v2048 = vshrl.u32 %v2047, 7
        %v2049 = vsub.s32 %v2046, %v2048
        %v2050 = vrot.slane %v2034, %v2049
        %v2052 = vunpack.c.l.s4 1966171168
        %v2053 = vunpack.c.0.s8 %v2052
        %v2054 = vlaneseq
        %v2055 = vshrl.u32 %v2054, 7
        %v2056 = vsub.s32 %v2053, %v2055
        %v2057 = vrot.slane %v2041, %v2056
        %v2059 = vunpack.c.l.s4 1966171168
        %v2060 = vunpack.c.0.s8 %v2059
        %v2061 = vlaneseq
        %v2062 = vshrl.u32 %v2061, 7
        %v2063 = vsub.s32 %v2060, %v2062
        %v2064 = vrot.slane %v2042, %v2063
        %v2066 = vunpack.c.l.s4 1966171168
        %v2067 = vunpack.c.0.s8 %v2066
        %v2068 = vlaneseq
        %v2069 = vshrl.u32 %v2068, 7
        %v2070 = vsub.s32 %v2067, %v2069
        %v2071 = vrot.slane %v2043, %v2070
        %v2072 = vcombine.high %v2050, %v2050
        %v2073 = vcombine.high %v2057, %v2057
        %v2074 = vcombine.high %v2064, %v2064
        %v2075 = vcombine.high %v2071, %v2071
        %v2076 = vcombine.high %v506, %v506
        %v2078 = vunpack.c.l.s4 1966171168
        %v2079 = vunpack.c.0.s8 %v2078
        %v2080 = vlaneseq
        %v2081 = vshrl.u32 %v2080, 7
        %v2082 = vsub.s32 %v2079, %v2081
        %v2083 = vrot.slane %v506, %v2082
        %v2085 = vunpack.c.l.s4 1966171168
        %v2086 = vunpack.c.0.s8 %v2085
        %v2087 = vlaneseq
        %v2088 = vshrl.u32 %v2087, 7
        %v2089 = vsub.s32 %v2086, %v2088
        %v2090 = vrot.slane %v2076, %v2089
        %v2091 = vcombine.high %v2083, %v2083
        %v2092 = vcombine.high %v2090, %v2090
        %v2094 = vunpack.c.l.s4 1966171168
        %v2095 = vunpack.c.0.s8 %v2094
        %v2096 = vlaneseq
        %v2097 = vshrl.u32 %v2096, 7
        %v2098 = vsub.s32 %v2095, %v2097
        %v2099 = vrot.slane %v2083, %v2098
        %v2101 = vunpack.c.l.s4 1966171168
        %v2102 = vunpack.c.0.s8 %v2101
        %v2103 = vlaneseq
        %v2104 = vshrl.u32 %v2103, 7
        %v2105 = vsub.s32 %v2102, %v2104
        %v2106 = vrot.slane %v2090, %v2105
        %v2108 = vunpack.c.l.s4 1966171168
        %v2109 = vunpack.c.0.s8 %v2108
        %v2110 = vlaneseq
        %v2111 = vshrl.u32 %v2110, 7
        %v2112 = vsub.s32 %v2109, %v2111
        %v2113 = vrot.slane %v2091, %v2112
        %v2115 = vunpack.c.l.s4 1966171168
        %v2116 = vunpack.c.0.s8 %v2115
        %v2117 = vlaneseq
        %v2118 = vshrl.u32 %v2117, 7
        %v2119 = vsub.s32 %v2116, %v2118
        %v2120 = vrot.slane %v2092, %v2119
        %v2121 = vcombine.high %v2099, %v2099
        %v2122 = vcombine.high %v2106, %v2106
        %v2123 = vcombine.high %v2113, %v2113
        %v2124 = vcombine.high %v2120, %v2120
        %v2125 = vcombine.high %v507, %v507
        %v2127 = vunpack.c.l.s4 1966171168
        %v2128 = vunpack.c.0.s8 %v2127
        %v2129 = vlaneseq
        %v2130 = vshrl.u32 %v2129, 7
        %v2131 = vsub.s32 %v2128, %v2130
        %v2132 = vrot.slane %v507, %v2131
        %v2134 = vunpack.c.l.s4 1966171168
        %v2135 = vunpack.c.0.s8 %v2134
        %v2136 = vlaneseq
        %v2137 = vshrl.u32 %v2136, 7
        %v2138 = vsub.s32 %v2135, %v2137
        %v2139 = vrot.slane %v2125, %v2138
        %v2140 = vcombine.high %v2132, %v2132
        %v2141 = vcombine.high %v2139, %v2139
        %v2143 = vunpack.c.l.s4 1966171168
        %v2144 = vunpack.c.0.s8 %v2143
        %v2145 = vlaneseq
        %v2146 = vshrl.u32 %v2145, 7
        %v2147 = vsub.s32 %v2144, %v2146
        %v2148 = vrot.slane %v2132, %v2147
        %v2150 = vunpack.c.l.s4 1966171168
        %v2151 = vunpack.c.0.s8 %v2150
        %v2152 = vlaneseq
        %v2153 = vshrl.u32 %v2152, 7
        %v2154 = vsub.s32 %v2151, %v2153
        %v2155 = vrot.slane %v2139, %v2154
        %v2157 = vunpack.c.l.s4 1966171168
        %v2158 = vunpack.c.0.s8 %v2157
        %v2159 = vlaneseq
        %v2160 = vshrl.u32 %v2159, 7
        %v2161 = vsub.s32 %v2158, %v2160
        %v2162 = vrot.slane %v2140, %v2161
        %v2164 = vunpack.c.l.s4 1966171168
        %v2165 = vunpack.c.0.s8 %v2164
        %v2166 = vlaneseq
        %v2167 = vshrl.u32 %v2166, 7
        %v2168 = vsub.s32 %v2165, %v2167
        %v2169 = vrot.slane %v2141, %v2168
        %v2170 = vcombine.high %v2148, %v2148
        %v2171 = vcombine.high %v2155, %v2155
        %v2172 = vcombine.high %v2162, %v2162
        %v2173 = vcombine.high %v2169, %v2169
        %v2174 = vcombine.high %v508, %v508
        %v2176 = vunpack.c.l.s4 1966171168
        %v2177 = vunpack.c.0.s8 %v2176
        %v2178 = vlaneseq
        %v2179 = vshrl.u32 %v2178, 7
        %v2180 = vsub.s32 %v2177, %v2179
        %v2181 = vrot.slane %v508, %v2180
        %v2183 = vunpack.c.l.s4 1966171168
        %v2184 = vunpack.c.0.s8 %v2183
        %v2185 = vlaneseq
        %v2186 = vshrl.u32 %v2185, 7
        %v2187 = vsub.s32 %v2184, %v2186
        %v2188 = vrot.slane %v2174, %v2187
        %v2189 = vcombine.high %v2181, %v2181
        %v2190 = vcombine.high %v2188, %v2188
        %v2192 = vunpack.c.l.s4 1966171168
        %v2193 = vunpack.c.0.s8 %v2192
        %v2194 = vlaneseq
        %v2195 = vshrl.u32 %v2194, 7
        %v2196 = vsub.s32 %v2193, %v2195
        %v2197 = vrot.slane %v2181, %v2196
        %v2199 = vunpack.c.l.s4 1966171168
        %v2200 = vunpack.c.0.s8 %v2199
        %v2201 = vlaneseq
        %v2202 = vshrl.u32 %v2201, 7
        %v2203 = vsub.s32 %v2200, %v2202
        %v2204 = vrot.slane %v2188, %v2203
        %v2206 = vunpack.c.l.s4 1966171168
        %v2207 = vunpack.c.0.s8 %v2206
        %v2208 = vlaneseq
        %v2209 = vshrl.u32 %v2208, 7
        %v2210 = vsub.s32 %v2207, %v2209
        %v2211 = vrot.slane %v2189, %v2210
        %v2213 = vunpack.c.l.s4 1966171168
        %v2214 = vunpack.c.0.s8 %v2213
        %v2215 = vlaneseq
        %v2216 = vshrl.u32 %v2215, 7
        %v2217 = vsub.s32 %v2214, %v2216
        %v2218 = vrot.slane %v2190, %v2217
        %v2219 = vcombine.high %v2197, %v2197
        %v2220 = vcombine.high %v2204, %v2204
        %v2221 = vcombine.high %v2211, %v2211
        %v2222 = vcombine.high %v2218, %v2218
        %v2223 = vcombine.high %v509, %v509
        %v2225 = vunpack.c.l.s4 1966171168
        %v2226 = vunpack.c.0.s8 %v2225
        %v2227 = vlaneseq
        %v2228 = vshrl.u32 %v2227, 7
        %v2229 = vsub.s32 %v2226, %v2228
        %v2230 = vrot.slane %v509, %v2229
        %v2232 = vunpack.c.l.s4 1966171168
        %v2233 = vunpack.c.0.s8 %v2232
        %v2234 = vlaneseq
        %v2235 = vshrl.u32 %v2234, 7
        %v2236 = vsub.s32 %v2233, %v2235
        %v2237 = vrot.slane %v2223, %v2236
        %v2238 = vcombine.high %v2230, %v2230
        %v2239 = vcombine.high %v2237, %v2237
        %v2241 = vunpack.c.l.s4 1966171168
        %v2242 = vunpack.c.0.s8 %v2241
        %v2243 = vlaneseq
        %v2244 = vshrl.u32 %v2243, 7
        %v2245 = vsub.s32 %v2242, %v2244
        %v2246 = vrot.slane %v2230, %v2245
        %v2248 = vunpack.c.l.s4 1966171168
        %v2249 = vunpack.c.0.s8 %v2248
        %v2250 = vlaneseq
        %v2251 = vshrl.u32 %v2250, 7
        %v2252 = vsub.s32 %v2249, %v2251
        %v2253 = vrot.slane %v2237, %v2252
        %v2255 = vunpack.c.l.s4 1966171168
        %v2256 = vunpack.c.0.s8 %v2255
        %v2257 = vlaneseq
        %v2258 = vshrl.u32 %v2257, 7
        %v2259 = vsub.s32 %v2256, %v2258
        %v2260 = vrot.slane %v2238, %v2259
        %v2262 = vunpack.c.l.s4 1966171168
        %v2263 = vunpack.c.0.s8 %v2262
        %v2264 = vlaneseq
        %v2265 = vshrl.u32 %v2264, 7
        %v2266 = vsub.s32 %v2263, %v2265
        %v2267 = vrot.slane %v2239, %v2266
        %v2268 = vcombine.high %v2246, %v2246
        %v2269 = vcombine.high %v2253, %v2253
        %v2270 = vcombine.high %v2260, %v2260
        %v3599 = vunpack.c.l.b16 %v510
        %v3600 = vunpack.c.h.b16 %v510
        %v3601 = vunpack.c.l.b16 %v511
        %v3602 = vunpack.c.h.b16 %v511
        %v3603 = vunpack.c.l.b16 %v512
        %v3604 = vunpack.c.h.b16 %v512
        %v3605 = vunpack.c.l.b16 %v513
        %v3606 = vunpack.c.h.b16 %v513
        %v3607 = vunpack.c.l.b16 %v514
        %v3608 = vunpack.c.h.b16 %v514
        %v3609 = vunpack.c.l.b16 %v515
        %v3610 = vunpack.c.h.b16 %v515
        %v3611 = vunpack.c.l.b16 %v516
        %v3612 = vunpack.c.h.b16 %v516
        %v3613 = vunpack.c.l.b16 %v517
        %v3614 = vunpack.c.h.b16 %v517
        %v3615 = vunpack.c.l.b16 %v518
        %v3616 = vunpack.c.h.b16 %v518
        %v3617 = vunpack.c.l.b16 %v519
        %v3618 = vunpack.c.h.b16 %v519
        %v3619 = vunpack.c.l.b16 %v520
        %v3620 = vunpack.c.h.b16 %v520
        %v3621 = vunpack.c.l.b16 %v521
        %v3622 = vunpack.c.h.b16 %v521
        %v3623 = vunpack.c.l.b16 %v522
        %v3624 = vunpack.c.h.b16 %v522
        %v3625 = vunpack.c.l.b16 %v523
        %v3626 = vunpack.c.h.b16 %v523
        %v3627 = vunpack.c.l.b16 %v524
        %v3628 = vunpack.c.h.b16 %v524
        %v3629 = vunpack.c.l.b16 %v525
        %v3630 = vunpack.c.h.b16 %v525
        %v3631 = vunpack.c.l.b16 %v526
        %v3632 = vunpack.c.h.b16 %v526
        %v3633 = vunpack.c.l.b16 %v527
        %v3634 = vunpack.c.h.b16 %v527
        %v3635 = vunpack.c.l.b16 %v528
        %v3636 = vunpack.c.h.b16 %v528
        %v3637 = vunpack.c.l.b16 %v529
        %v3638 = vunpack.c.h.b16 %v529
        %v3639 = vunpack.c.l.b16 %v530
        %v3640 = vunpack.c.h.b16 %v530
        %v3641 = vunpack.c.l.b16 %v531
        %v3642 = vunpack.c.h.b16 %v531
        %v3643 = vunpack.c.l.b16 %v532
        %v3644 = vunpack.c.h.b16 %v532
        %v3645 = vunpack.c.l.b16 %v533
        %v3646 = vunpack.c.h.b16 %v533
        %v3647 = vunpack.c.l.b16 %v534
        %v3648 = vunpack.c.h.b16 %v534
        %v3649 = vunpack.c.l.b16 %v535
        %v3650 = vunpack.c.h.b16 %v535
        %v3651 = vunpack.c.l.b16 %v536
        %v3652 = vunpack.c.h.b16 %v536
        %v3653 = vunpack.c.l.b16 %v537
        %v3654 = vunpack.c.h.b16 %v537
        %v3655 = vunpack.c.l.b16 %v538
        %v3656 = vunpack.c.h.b16 %v538
        %v3657 = vunpack.c.l.b16 %v539
        %v3658 = vunpack.c.h.b16 %v539
        %v3659 = vunpack.c.l.b16 %v540
        %v3660 = vunpack.c.h.b16 %v540
        %v3661 = vunpack.c.l.b16 %v541
        %v3662 = vunpack.c.h.b16 %v541
        %v3663 = vunpack.c.l.b16 %v542
        %v3664 = vunpack.c.h.b16 %v542
        %v3665 = vunpack.c.l.b16 %v543
        %v3666 = vunpack.c.h.b16 %v543
        %v3667 = vunpack.c.l.b16 %v544
        %v3668 = vunpack.c.h.b16 %v544
        %v3669 = vunpack.c.l.b16 %v545
        %v3670 = vunpack.c.h.b16 %v545
        %v3671 = vunpack.c.l.b16 %v546
        %v3672 = vunpack.c.h.b16 %v546
        %v3673 = vunpack.c.l.b16 %v547
        %v3674 = vunpack.c.h.b16 %v547
        %v3675 = vunpack.c.l.b16 %v548
        %v3676 = vunpack.c.h.b16 %v548
        %v3677 = vunpack.c.l.b16 %v549
        %v3678 = vunpack.c.h.b16 %v549
        %v3679 = vunpack.c.l.b16 %v550
        %v3680 = vunpack.c.h.b16 %v550
        %v3681 = vunpack.c.l.b16 %v551
        %v3682 = vunpack.c.h.b16 %v551
        %v3683 = vunpack.c.l.b16 %v552
        %v3684 = vunpack.c.h.b16 %v552
        %v3685 = vunpack.c.l.b16 %v553
        %v3686 = vunpack.c.h.b16 %v553
        %v3687 = vunpack.c.l.b16 %v554
        %v3688 = vunpack.c.h.b16 %v554
        %v3689 = vunpack.c.l.b16 %v555
        %v3690 = vunpack.c.h.b16 %v555
        %v3691 = vunpack.c.l.b16 %v556
        %v3692 = vunpack.c.h.b16 %v556
        %v3693 = vunpack.c.l.b16 %v557
        %v3694 = vunpack.c.h.b16 %v557
        %v3695 = vunpack.c.l.b16 %v558
        %v3696 = vunpack.c.h.b16 %v558
        %v3697 = vunpack.c.l.b16 %v559
        %v3698 = vunpack.c.h.b16 %v559
        %v3699 = vunpack.c.l.b16 %v560
        %v3700 = vunpack.c.h.b16 %v560
        %v3701 = vunpack.c.l.b16 %v561
        %v3702 = vunpack.c.h.b16 %v561
        %v3703 = vunpack.c.l.b16 %v562
        %v3704 = vunpack.c.h.b16 %v562
        %v3705 = vunpack.c.l.b16 %v563
        %v3706 = vunpack.c.h.b16 %v563
        %v3707 = vunpack.c.l.b16 %v564
        %v3708 = vunpack.c.h.b16 %v564
        %v3709 = vunpack.c.l.b16 %v565
        %v3710 = vunpack.c.h.b16 %v565
        %v3711 = vunpack.c.l.b16 %v566
        %v3712 = vunpack.c.h.b16 %v566
        %v3713 = vunpack.c.l.b16 %v567
        %v3714 = vunpack.c.h.b16 %v567
        %v3715 = vunpack.c.l.b16 %v568
        %v3716 = vunpack.c.h.b16 %v568
        %v3717 = vunpack.c.l.b16 %v569
        %v3718 = vunpack.c.h.b16 %v569
        %v3719 = vunpack.c.l.b16 %v570
        %v3720 = vunpack.c.h.b16 %v570
        %v3721 = vunpack.c.l.b16 %v571
        %v3722 = vunpack.c.h.b16 %v571
        %v3723 = vunpack.c.l.b16 %v572
        %v3724 = vunpack.c.h.b16 %v572
        %v3725 = vunpack.c.l.b16 %v573
        %v3726 = vunpack.c.h.b16 %v573
        %v3727 = vunpack.c.l.b16 %v574
        %v3728 = vunpack.c.h.b16 %v574
        %v3729 = vunpack.c.l.b16 %v575
        %v3730 = vunpack.c.h.b16 %v575
        %v3731 = vunpack.c.l.b16 %v576
        %v3732 = vunpack.c.h.b16 %v576
        %v3733 = vunpack.c.l.b16 %v577
        %v3734 = vunpack.c.h.b16 %v577
        %v3735 = vunpack.c.l.b16 %v578
        %v3736 = vunpack.c.h.b16 %v578
        %v3737 = vunpack.c.l.b16 %v579
        %v3738 = vunpack.c.h.b16 %v579
        %v3739 = vunpack.c.l.b16 %v580
        %v3740 = vunpack.c.h.b16 %v580
        %v3741 = vunpack.c.l.b16 %v581
        %v3742 = vunpack.c.h.b16 %v581
        %v3743 = vunpack.c.l.b16 %v582
        %v3744 = vunpack.c.h.b16 %v582
        %v3745 = vunpack.c.l.b16 %v583
        %v3746 = vunpack.c.h.b16 %v583
        %v3747 = vunpack.c.l.b16 %v584
        %v3748 = vunpack.c.h.b16 %v584
        %v3749 = vunpack.c.l.b16 %v585
        %v3750 = vunpack.c.h.b16 %v585
        %v3751 = vunpack.c.l.b16 %v586
        %v3752 = vunpack.c.h.b16 %v586
        %v3753 = vunpack.c.l.b16 %v587
        %v3754 = vunpack.c.h.b16 %v587
        %v3755 = vunpack.c.l.b16 %v588
        %v3756 = vunpack.c.h.b16 %v588
        %v3757 = vunpack.c.l.b16 %v589
        %v3758 = vunpack.c.h.b16 %v589
        %v3759 = vunpack.c.l.b16 %v590
        %v3760 = vunpack.c.h.b16 %v590
        %v3761 = vunpack.c.l.b16 %v591
        %v3762 = vunpack.c.h.b16 %v591
        %v3763 = vunpack.c.l.b16 %v592
        %v3764 = vunpack.c.h.b16 %v592
        %v3765 = vunpack.c.l.b16 %v593
        %v3766 = vunpack.c.h.b16 %v593
        %v3767 = vunpack.c.l.b16 %v594
        %v3768 = vunpack.c.h.b16 %v594
        %v3769 = vunpack.c.l.b16 %v595
        %v3770 = vunpack.c.h.b16 %v595
        %v3771 = vunpack.c.l.b16 %v596
        %v3772 = vunpack.c.h.b16 %v596
        %v3773 = vunpack.c.l.b16 %v597
        %v3774 = vunpack.c.h.b16 %v597
        %v3775 = vunpack.c.l.b16 %v598
        %v3776 = vunpack.c.h.b16 %v598
        %v3777 = vunpack.c.l.b16 %v599
        %v3778 = vunpack.c.h.b16 %v599
        %v3779 = vunpack.c.l.b16 %v600
        %v3780 = vunpack.c.h.b16 %v600
        %v3781 = vunpack.c.l.b16 %v601
        %v3782 = vunpack.c.h.b16 %v601
        %v3783 = vunpack.c.l.b16 %v602
        %v3784 = vunpack.c.h.b16 %v602
        %v3785 = vunpack.c.l.b16 %v603
        %v3786 = vunpack.c.h.b16 %v603
        %v3787 = vunpack.c.l.b16 %v604
        %v3788 = vunpack.c.h.b16 %v604
        %v3789 = vunpack.c.l.b16 %v605
        %v3790 = vunpack.c.h.b16 %v605
        %v3791 = vunpack.c.l.b16 %v606
        %v3792 = vunpack.c.h.b16 %v606
        %v3793 = vunpack.c.l.b16 %v607
        %v3794 = vunpack.c.h.b16 %v607
        %v3795 = vunpack.c.l.b16 %v608
        %v3796 = vunpack.c.h.b16 %v608
        %v3797 = vunpack.c.l.b16 %v609
        %v3798 = vunpack.c.h.b16 %v609
        %v3799 = vunpack.c.l.b16 %v610
        %v3800 = vunpack.c.h.b16 %v610
        %v3801 = vunpack.c.l.b16 %v611
        %v3802 = vunpack.c.h.b16 %v611
        %v3803 = vunpack.c.l.b16 %v612
        %v3804 = vunpack.c.h.b16 %v612
        %v3805 = vunpack.c.l.b16 %v613
        %v3806 = vunpack.c.h.b16 %v613
        %v3807 = vunpack.c.l.b16 %v614
        %v3808 = vunpack.c.h.b16 %v614
        %v3809 = vunpack.c.l.b16 %v615
        %v3810 = vunpack.c.h.b16 %v615
        %v3811 = vunpack.c.l.b16 %v616
        %v3812 = vunpack.c.h.b16 %v616
        %v3813 = vunpack.c.l.b16 %v617
        %v3814 = vunpack.c.h.b16 %v617
        %v3815 = vunpack.c.l.b16 %v618
        %v3816 = vunpack.c.h.b16 %v618
        %v3817 = vunpack.c.l.b16 %v619
        %v3818 = vunpack.c.h.b16 %v619
        %v3819 = vunpack.c.l.b16 %v620
        %v3820 = vunpack.c.h.b16 %v620
        %v3821 = vunpack.c.l.b16 %v621
        %v3822 = vunpack.c.h.b16 %v621
        %v3823 = vunpack.c.l.b16 %v622
        %v3824 = vunpack.c.h.b16 %v622
        %v3825 = vunpack.c.l.b16 %v623
        %v3826 = vunpack.c.h.b16 %v623
        %v3827 = vunpack.c.l.b16 %v624
        %v3828 = vunpack.c.h.b16 %v624
        %v3829 = vunpack.c.l.b16 %v625
        %v3830 = vunpack.c.h.b16 %v625
        %v3831 = vunpack.c.l.b16 %v626
        %v3832 = vunpack.c.h.b16 %v626
        %v3833 = vunpack.c.l.b16 %v627
        %v3834 = vunpack.c.h.b16 %v627
        %v3835 = vunpack.c.l.b16 %v628
        %v3836 = vunpack.c.h.b16 %v628
        %v3837 = vunpack.c.l.b16 %v629
        %v3838 = vunpack.c.h.b16 %v629
        %v3839 = vunpack.c.l.b16 %v630
        %v3840 = vunpack.c.h.b16 %v630
        %v3841 = vunpack.c.l.b16 %v631
        %v3842 = vunpack.c.h.b16 %v631
        %v3843 = vunpack.c.l.b16 %v632
        %v3844 = vunpack.c.h.b16 %v632
        %v3845 = vunpack.c.l.b16 %v633
        %v3846 = vunpack.c.h.b16 %v633
        %v3847 = vunpack.c.l.b16 %v634
        %v3848 = vunpack.c.h.b16 %v634
        %v3849 = vunpack.c.l.b16 %v635
        %v3850 = vunpack.c.h.b16 %v635
        %v3851 = vunpack.c.l.b16 %v636
        %v3852 = vunpack.c.h.b16 %v636
        %v3853 = vunpack.c.l.b16 %v637
        %v3854 = vunpack.c.h.b16 %v637
        %v3855 = vunpack.c.l.b16 %v638
        %v3856 = vunpack.c.h.b16 %v638
        %v3857 = vunpack.c.l.b16 %v639
        %v3858 = vunpack.c.h.b16 %v639
        %v3859 = vunpack.c.l.b16 %v640
        %v3860 = vunpack.c.h.b16 %v640
        %v3861 = vunpack.c.l.b16 %v641
        %v3862 = vunpack.c.h.b16 %v641
        %v3863 = vunpack.c.l.b16 %v642
        %v3864 = vunpack.c.h.b16 %v642
        %v3865 = vunpack.c.l.b16 %v643
        %v3866 = vunpack.c.h.b16 %v643
        %v3867 = vunpack.c.l.b16 %v644
        %v3868 = vunpack.c.h.b16 %v644
        %v3869 = vunpack.c.l.b16 %v645
        %v3870 = vunpack.c.h.b16 %v645
        %v3871 = vunpack.c.l.b16 %v646
        %v3872 = vunpack.c.h.b16 %v646
        %v3873 = vunpack.c.l.b16 %v647
        %v3874 = vunpack.c.h.b16 %v647
        %v3875 = vunpack.c.l.b16 %v648
        %v3876 = vunpack.c.h.b16 %v648
        %v3877 = vunpack.c.l.b16 %v649
        %v3878 = vunpack.c.h.b16 %v649
        %v3879 = vunpack.c.l.b16 %v650
        %v3880 = vunpack.c.h.b16 %v650
        %v3881 = vunpack.c.l.b16 %v651
        %v3882 = vunpack.c.h.b16 %v651
        %v3883 = vunpack.c.l.b16 %v652
        %v3884 = vunpack.c.h.b16 %v652
        %v3885 = vunpack.c.l.b16 %v653
        %v3886 = vunpack.c.h.b16 %v653
        %v3887 = vunpack.c.l.b16 %v654
        %v3888 = vunpack.c.h.b16 %v654
        %v3889 = vunpack.c.l.b16 %v655
        %v3890 = vunpack.c.h.b16 %v655
        %v3891 = vunpack.c.l.b16 %v656
        %v3892 = vunpack.c.h.b16 %v656
        %v3893 = vunpack.c.l.b16 %v657
        %v3894 = vunpack.c.h.b16 %v657
        %v3895 = vunpack.c.l.b16 %v658
        %v3896 = vunpack.c.h.b16 %v658
        %v3897 = vunpack.c.l.b16 %v659
        %v3898 = vunpack.c.h.b16 %v659
        %v3899 = vunpack.c.l.b16 %v660
        %v3900 = vunpack.c.h.b16 %v660
        %v3901 = vunpack.c.l.b16 %v661
        %v3902 = vunpack.c.h.b16 %v661
        %v3903 = vunpack.c.l.b16 %v662
        %v3904 = vunpack.c.h.b16 %v662
        %v3905 = vunpack.c.l.b16 %v663
        %v3906 = vunpack.c.h.b16 %v663
        %v3907 = vunpack.c.l.b16 %v664
        %v3908 = vunpack.c.h.b16 %v664
        %v3909 = vunpack.c.l.b16 %v665
        %v3910 = vunpack.c.h.b16 %v665
        %v3911 = vunpack.c.l.b16 %v666
        %v3912 = vunpack.c.h.b16 %v666
        %v3913 = vunpack.c.l.b16 %v667
        %v3914 = vunpack.c.h.b16 %v667
        %v3915 = vunpack.c.l.b16 %v668
        %v3916 = vunpack.c.h.b16 %v668
        %v3917 = vunpack.c.l.b16 %v669
        %v3918 = vunpack.c.h.b16 %v669
        %v3919 = vunpack.c.l.b16 %v670
        %v3920 = vunpack.c.h.b16 %v670
        %v3921 = vunpack.c.l.b16 %v671
        %v3922 = vunpack.c.h.b16 %v671
        %v3923 = vunpack.c.l.b16 %v672
        %v3924 = vunpack.c.h.b16 %v672
        %v3925 = vunpack.c.l.b16 %v673
        %v3926 = vunpack.c.h.b16 %v673
        %v3927 = vunpack.c.l.b16 %v674
        %v3928 = vunpack.c.h.b16 %v674
        %v3929 = vunpack.c.l.b16 %v675
        %v3930 = vunpack.c.h.b16 %v675
        %v3931 = vunpack.c.l.b16 %v676
        %v3932 = vunpack.c.h.b16 %v676
        %v3933 = vunpack.c.l.b16 %v677
        %v3934 = vunpack.c.h.b16 %v677
        %v3935 = vunpack.c.l.b16 %v678
        %v3936 = vunpack.c.h.b16 %v678
        %v3937 = vunpack.c.l.b16 %v679
        %v3938 = vunpack.c.h.b16 %v679
        %v3939 = vunpack.c.l.b16 %v680
        %v3940 = vunpack.c.h.b16 %v680
        %v3941 = vunpack.c.l.b16 %v681
        %v3942 = vunpack.c.h.b16 %v681
        %v3943 = vunpack.c.l.b16 %v682
        %v3944 = vunpack.c.h.b16 %v682
        %v3945 = vunpack.c.l.b16 %v683
        %v3946 = vunpack.c.h.b16 %v683
        %v3947 = vunpack.c.l.b16 %v684
        %v3948 = vunpack.c.h.b16 %v684
        %v3949 = vunpack.c.l.b16 %v685
        %v3950 = vunpack.c.h.b16 %v685
        %v3951 = vunpack.c.l.b16 %v686
        %v3952 = vunpack.c.h.b16 %v686
        %v3953 = vunpack.c.l.b16 %v687
        %v3954 = vunpack.c.h.b16 %v687
        %v3955 = vunpack.c.l.b16 %v688
        %v3956 = vunpack.c.h.b16 %v688
        %v3957 = vunpack.c.l.b16 %v689
        %v3958 = vunpack.c.h.b16 %v689
        %v3959 = vunpack.c.l.b16 %v690
        %v3960 = vunpack.c.h.b16 %v690
        %v3961 = vunpack.c.l.b16 %v691
        %v3962 = vunpack.c.h.b16 %v691
        %v3963 = vunpack.c.l.b16 %v692
        %v3964 = vunpack.c.h.b16 %v692
        %v3965 = vunpack.c.l.b16 %v693
        %v3966 = vunpack.c.h.b16 %v693
        %v3967 = vunpack.c.l.b16 %v694
        %v3968 = vunpack.c.h.b16 %v694
        %v3969 = vunpack.c.l.b16 %v695
        %v3970 = vunpack.c.h.b16 %v695
        %v3971 = vunpack.c.l.b16 %v696
        %v3972 = vunpack.c.h.b16 %v696
        %v3973 = vunpack.c.l.b16 %v697
        %v3974 = vunpack.c.h.b16 %v697
        %v3975 = vunpack.c.l.b16 %v698
        %v3976 = vunpack.c.h.b16 %v698
        %v3977 = vunpack.c.l.b16 %v699
        %v3978 = vunpack.c.h.b16 %v699
        %v3979 = vunpack.c.l.b16 %v700
        %v3980 = vunpack.c.h.b16 %v700
        %v3981 = vunpack.c.l.b16 %v701
        %v3982 = vunpack.c.h.b16 %v701
        %v3983 = vunpack.c.l.b16 %v702
        %v3984 = vunpack.c.h.b16 %v702
        %v3985 = vunpack.c.l.b16 %v703
        %v3986 = vunpack.c.h.b16 %v703
        %v3987 = vunpack.c.l.b16 %v704
        %v3988 = vunpack.c.h.b16 %v704
        %v3989 = vunpack.c.l.b16 %v705
        %v3990 = vunpack.c.h.b16 %v705
        %v3991 = vunpack.c.l.b16 %v706
        %v3992 = vunpack.c.h.b16 %v706
        %v3993 = vunpack.c.l.b16 %v707
        %v3994 = vunpack.c.h.b16 %v707
        %v3995 = vunpack.c.l.b16 %v708
        %v3996 = vunpack.c.h.b16 %v708
        %v3997 = vunpack.c.l.b16 %v709
        %v3998 = vunpack.c.h.b16 %v709
        %v3999 = vunpack.c.l.b16 %v710
        %v4000 = vunpack.c.h.b16 %v710
        %v4001 = vunpack.c.l.b16 %v711
        %v4002 = vunpack.c.h.b16 %v711
        %v4003 = vunpack.c.l.b16 %v712
        %v4004 = vunpack.c.h.b16 %v712
        %v4005 = vunpack.c.l.b16 %v713
        %v4006 = vunpack.c.h.b16 %v713
        %v4007 = vunpack.c.l.b16 %v714
        %v4008 = vunpack.c.h.b16 %v714
        %v4009 = vunpack.c.l.b16 %v715
        %v4010 = vunpack.c.h.b16 %v715
        %v4011 = vunpack.c.l.b16 %v716
        %v4012 = vunpack.c.h.b16 %v716
        %v4013 = vunpack.c.l.b16 %v717
        %v4014 = vunpack.c.h.b16 %v717
        %v4015 = vunpack.c.l.b16 %v718
        %v4016 = vunpack.c.h.b16 %v718
        %v4017 = vunpack.c.l.b16 %v719
        %v4018 = vunpack.c.h.b16 %v719
        %v4019 = vunpack.c.l.b16 %v720
        %v4020 = vunpack.c.h.b16 %v720
        %v4021 = vunpack.c.l.b16 %v721
        %v4022 = vunpack.c.h.b16 %v721
        %v4023 = vunpack.c.l.b16 %v722
        %v4024 = vunpack.c.h.b16 %v722
        %v4025 = vunpack.c.l.b16 %v723
        %v4026 = vunpack.c.h.b16 %v723
        %v4027 = vunpack.c.l.b16 %v724
        %v4028 = vunpack.c.h.b16 %v724
        %v4029 = vunpack.c.l.b16 %v725
        %v4030 = vunpack.c.h.b16 %v725
        %v4031 = vunpack.c.l.b16 %v726
        %v4032 = vunpack.c.h.b16 %v726
        %v4033 = vunpack.c.l.b16 %v727
        %v4034 = vunpack.c.h.b16 %v727
        %v4035 = vunpack.c.l.b16 %v728
        %v4036 = vunpack.c.h.b16 %v728
        %v4037 = vunpack.c.l.b16 %v729
        %v4038 = vunpack.c.h.b16 %v729
        %v4039 = vunpack.c.l.b16 %v730
        %v4040 = vunpack.c.h.b16 %v730
        %v4041 = vunpack.c.l.b16 %v731
        %v4042 = vunpack.c.h.b16 %v731
        %v4043 = vunpack.c.l.b16 %v732
        %v4044 = vunpack.c.h.b16 %v732
        %v4045 = vunpack.c.l.b16 %v733
        %v4046 = vunpack.c.h.b16 %v733
        %v4047 = vunpack.c.l.b16 %v734
        %v4048 = vunpack.c.h.b16 %v734
        %v4049 = vunpack.c.l.b16 %v735
        %v4050 = vunpack.c.h.b16 %v735
        %v4051 = vunpack.c.l.b16 %v736
        %v4052 = vunpack.c.h.b16 %v736
        %v4053 = vunpack.c.l.b16 %v737
        %v4054 = vunpack.c.h.b16 %v737
        %v4055 = vunpack.c.l.b16 %v738
        %v4056 = vunpack.c.h.b16 %v738
        %v4057 = vunpack.c.l.b16 %v739
        %v4058 = vunpack.c.h.b16 %v739
        %v4059 = vunpack.c.l.b16 %v740
        %v4060 = vunpack.c.h.b16 %v740
        %v4061 = vunpack.c.l.b16 %v741
        %v4062 = vunpack.c.h.b16 %v741
        %v4063 = vunpack.c.l.b16 %v742
        %v4064 = vunpack.c.h.b16 %v742
        %v4065 = vunpack.c.l.b16 %v743
        %v4066 = vunpack.c.h.b16 %v743
        %v4067 = vunpack.c.l.b16 %v744
        %v4068 = vunpack.c.h.b16 %v744
        %v4069 = vunpack.c.l.b16 %v745
        %v4070 = vunpack.c.h.b16 %v745
        %v4071 = vunpack.c.l.b16 %v746
        %v4072 = vunpack.c.h.b16 %v746
        %v4073 = vunpack.c.l.b16 %v747
        %v4074 = vunpack.c.h.b16 %v747
        %v4075 = vunpack.c.l.b16 %v748
        %v4076 = vunpack.c.h.b16 %v748
        %v4077 = vunpack.c.l.b16 %v749
        %v4078 = vunpack.c.h.b16 %v749
        %v4079 = vunpack.c.l.b16 %v750
        %v4080 = vunpack.c.h.b16 %v750
        %v4081 = vunpack.c.l.b16 %v751
        %v4082 = vunpack.c.h.b16 %v751
        %v4083 = vunpack.c.l.b16 %v752
        %v4084 = vunpack.c.h.b16 %v752
        %v4085 = vunpack.c.l.b16 %v753
        %v4086 = vunpack.c.h.b16 %v753
        %v4087 = vunpack.c.l.b16 %v754
        %v4088 = vunpack.c.h.b16 %v754
        %v4089 = vunpack.c.l.b16 %v755
        %v4090 = vunpack.c.h.b16 %v755
        %v4091 = vunpack.c.l.b16 %v756
        %v4092 = vunpack.c.h.b16 %v756
        %v4093 = vunpack.c.l.b16 %v757
        %v4094 = vunpack.c.h.b16 %v757
        %v4095 = vunpack.c.l.b16 %v758
        %v4096 = vunpack.c.h.b16 %v758
        %v4097 = vunpack.c.l.b16 %v759
        %v4098 = vunpack.c.h.b16 %v759
        %v4099 = vunpack.c.l.b16 %v760
        %v4100 = vunpack.c.h.b16 %v760
        %v4101 = vunpack.c.l.b16 %v761
        %v4102 = vunpack.c.h.b16 %v761
        %v4103 = vunpack.c.l.b16 %v762
        %v4104 = vunpack.c.h.b16 %v762
        %v4105 = vunpack.c.l.b16 %v763
        %v4106 = vunpack.c.h.b16 %v763
        %v4107 = vunpack.c.l.b16 %v764
        %v4108 = vunpack.c.h.b16 %v764
        %v4109 = vunpack.c.l.b16 %v765
        %v4110 = vunpack.c.h.b16 %v765
        %v4111 = vunpack.c.l.b16 %v766
        %v4112 = vunpack.c.h.b16 %v766
        %v4113 = vunpack.c.l.b16 %v767
        %v4114 = vunpack.c.h.b16 %v767
        %v4115 = vunpack.c.l.b16 %v768
        %v4116 = vunpack.c.h.b16 %v768
        %v4117 = vunpack.c.l.b16 %v769
        %v4118 = vunpack.c.h.b16 %v769
        %v4119 = vunpack.c.l.b16 %v770
        %v4120 = vunpack.c.h.b16 %v770
        %v4121 = vunpack.c.l.b16 %v771
        %v4122 = vunpack.c.h.b16 %v771
        %v4123 = vunpack.c.l.b16 %v772
        %v4124 = vunpack.c.h.b16 %v772
        %v4125 = vunpack.c.l.b16 %v773
        %v4126 = vunpack.c.h.b16 %v773
        %v4127 = vunpack.c.l.b16 %v774
        %v4128 = vunpack.c.h.b16 %v774
        %v4129 = vunpack.c.l.b16 %v775
        %v4130 = vunpack.c.h.b16 %v775
        %v4131 = vunpack.c.l.b16 %v776
        %v4132 = vunpack.c.h.b16 %v776
        %v4133 = vunpack.c.l.b16 %v777
        %v4134 = vunpack.c.h.b16 %v777
        %v4135 = vunpack.c.l.b16 %v778
        %v4136 = vunpack.c.h.b16 %v778
        %v4137 = vunpack.c.l.b16 %v779
        %v4138 = vunpack.c.h.b16 %v779
        %v4139 = vunpack.c.l.b16 %v780
        %v4140 = vunpack.c.h.b16 %v780
        %v4141 = vunpack.c.l.b16 %v781
        %v4142 = vunpack.c.h.b16 %v781
        %v4143 = vunpack.c.l.b16 %v782
        %v4144 = vunpack.c.h.b16 %v782
        %v4145 = vunpack.c.l.b16 %v783
        %v4146 = vunpack.c.h.b16 %v783
        %v4147 = vunpack.c.l.b16 %v784
        %v4148 = vunpack.c.h.b16 %v784
        %v4149 = vunpack.c.l.b16 %v785
        %v4150 = vunpack.c.h.b16 %v785
        %v4151 = vunpack.c.l.b16 %v786
        %v4152 = vunpack.c.h.b16 %v786
        %v4153 = vunpack.c.l.b16 %v787
        %v4154 = vunpack.c.h.b16 %v787
        %v4155 = vunpack.c.l.b16 %v788
        %v4156 = vunpack.c.h.b16 %v788
        %v4157 = vunpack.c.l.b16 %v789
        %v4158 = vunpack.c.h.b16 %v789
        %v4159 = vunpack.c.l.b16 %v790
        %v4160 = vunpack.c.h.b16 %v790
        %v4161 = vunpack.c.l.b16 %v791
        %v4162 = vunpack.c.h.b16 %v791
        %v4163 = vunpack.c.l.b16 %v792
        %v4164 = vunpack.c.h.b16 %v792
        %v4165 = vunpack.c.l.b16 %v793
        %v4166 = vunpack.c.h.b16 %v793
        %v4167 = vunpack.c.l.b16 %v794
        %v4168 = vunpack.c.h.b16 %v794
        %v4169 = vunpack.c.l.b16 %v795
        %v4170 = vunpack.c.h.b16 %v795
        %v4171 = vunpack.c.l.b16 %v796
        %v4172 = vunpack.c.h.b16 %v796
        %v4173 = vunpack.c.l.b16 %v797
        %v4174 = vunpack.c.h.b16 %v797
        %v4175 = vunpack.c.l.b16 %v798
        %v4176 = vunpack.c.h.b16 %v798
        %v4177 = vunpack.c.l.b16 %v799
        %v4178 = vunpack.c.h.b16 %v799
        %v4179 = vunpack.c.l.b16 %v800
        %v4180 = vunpack.c.h.b16 %v800
        %v4181 = vunpack.c.l.b16 %v801
        %v4182 = vunpack.c.h.b16 %v801
        %v4183 = vunpack.c.l.b16 %v802
        %v4184 = vunpack.c.h.b16 %v802
        %v4185 = vunpack.c.l.b16 %v803
        %v4186 = vunpack.c.h.b16 %v803
        %v4187 = vunpack.c.l.b16 %v804
        %v4188 = vunpack.c.h.b16 %v804
        %v4189 = vunpack.c.l.b16 %v805
        %v4190 = vunpack.c.h.b16 %v805
        %v4191 = vunpack.c.l.b16 %v806
        %v4192 = vunpack.c.h.b16 %v806
        %v4193 = vunpack.c.l.b16 %v807
        %v4194 = vunpack.c.h.b16 %v807
        %v4195 = vunpack.c.l.b16 %v808
        %v4196 = vunpack.c.h.b16 %v808
        %v4197 = vunpack.c.l.b16 %v809
        %v4198 = vunpack.c.h.b16 %v809
        %v4199 = vunpack.c.l.b16 %v810
        %v4200 = vunpack.c.h.b16 %v810
        %v4201 = vunpack.c.l.b16 %v811
        %v4202 = vunpack.c.h.b16 %v811
        %v4203 = vunpack.c.l.b16 %v812
        %v4204 = vunpack.c.h.b16 %v812
        %v4205 = vunpack.c.l.b16 %v813
        %v4206 = vunpack.c.h.b16 %v813
        %v4207 = vunpack.c.l.b16 %v814
        %v4208 = vunpack.c.h.b16 %v814
        %v4209 = vunpack.c.l.b16 %v815
        %v4210 = vunpack.c.h.b16 %v815
        %v4211 = vunpack.c.l.b16 %v816
        %v4212 = vunpack.c.h.b16 %v816
        %v4213 = vunpack.c.l.b16 %v817
        %v4214 = vunpack.c.h.b16 %v817
        %v4215 = vunpack.c.l.b16 %v818
        %v4216 = vunpack.c.h.b16 %v818
        %v4217 = vunpack.c.l.b16 %v819
        %v4218 = vunpack.c.h.b16 %v819
        %v4219 = vunpack.c.l.b16 %v820
        %v4220 = vunpack.c.h.b16 %v820
        %v4221 = vunpack.c.l.b16 %v821
        %v4222 = vunpack.c.h.b16 %v821
        %v4223 = vunpack.c.l.b16 %v822
        %v4224 = vunpack.c.h.b16 %v822
        %v4225 = vunpack.c.l.b16 %v823
        %v4226 = vunpack.c.h.b16 %v823
        %v4227 = vunpack.c.l.b16 %v824
        %v4228 = vunpack.c.h.b16 %v824
        %v4229 = vunpack.c.l.b16 %v825
        %v4230 = vunpack.c.h.b16 %v825
        %v4231 = vunpack.c.l.b16 %v826
        %v4232 = vunpack.c.h.b16 %v826
        %v4233 = vunpack.c.l.b16 %v827
        %v4234 = vunpack.c.h.b16 %v827
        %v4235 = vunpack.c.l.b16 %v828
        %v4236 = vunpack.c.h.b16 %v828
        %v4237 = vunpack.c.l.b16 %v829
        %v4238 = vunpack.c.h.b16 %v829
        %v4239 = vunpack.c.l.b16 %v830
        %v4240 = vunpack.c.h.b16 %v830
        %v4241 = vunpack.c.l.b16 %v831
        %v4242 = vunpack.c.h.b16 %v831
        %v4243 = vunpack.c.l.b16 %v832
        %v4244 = vunpack.c.h.b16 %v832
        %v4245 = vunpack.c.l.b16 %v833
        %v4246 = vunpack.c.h.b16 %v833
        %v4247 = vunpack.c.l.b16 %v834
        %v4248 = vunpack.c.h.b16 %v834
        %v4249 = vunpack.c.l.b16 %v835
        %v4250 = vunpack.c.h.b16 %v835
        %v4251 = vunpack.c.l.b16 %v836
        %v4252 = vunpack.c.h.b16 %v836
        %v4253 = vunpack.c.l.b16 %v837
        %v4254 = vunpack.c.h.b16 %v837
        %v4255 = vunpack.c.l.b16 %v838
        %v4256 = vunpack.c.h.b16 %v838
        %v4257 = vunpack.c.l.b16 %v839
        %v4258 = vunpack.c.h.b16 %v839
        %v4259 = vunpack.c.l.b16 %v840
        %v4260 = vunpack.c.h.b16 %v840
        %v4261 = vunpack.c.l.b16 %v841
        %v4262 = vunpack.c.h.b16 %v841
        %v4263 = vunpack.c.l.b16 %v842
        %v4264 = vunpack.c.h.b16 %v842
        %v4265 = vunpack.c.l.b16 %v843
        %v4266 = vunpack.c.h.b16 %v843
        %v4267 = vunpack.c.l.b16 %v844
        %v4268 = vunpack.c.h.b16 %v844
        %v4269 = vunpack.c.l.b16 %v845
        %v4270 = vunpack.c.h.b16 %v845
        %v4271 = vunpack.c.l.b16 %v846
        %v4272 = vunpack.c.h.b16 %v846
        %v4273 = vunpack.c.l.b16 %v847
        %v4274 = vunpack.c.h.b16 %v847
        %v4275 = vunpack.c.l.b16 %v848
        %v4276 = vunpack.c.h.b16 %v848
        %v4277 = vunpack.c.l.b16 %v849
        %v4278 = vunpack.c.h.b16 %v849
        %v4279 = vunpack.c.l.b16 %v850
        %v4280 = vunpack.c.h.b16 %v850
        %v4281 = vunpack.c.l.b16 %v851
        %v4282 = vunpack.c.h.b16 %v851
        %v4283 = vunpack.c.l.b16 %v852
        %v4284 = vunpack.c.h.b16 %v852
        %v4285 = vunpack.c.l.b16 %v853
        %v4286 = vunpack.c.h.b16 %v853
        %v4287 = vunpack.c.l.b16 %v854
        %v4288 = vunpack.c.h.b16 %v854
        %v4289 = vunpack.c.l.b16 %v855
        %v4290 = vunpack.c.h.b16 %v855
        %v4291 = vunpack.c.l.b16 %v856
        %v4292 = vunpack.c.h.b16 %v856
        %v4293 = vunpack.c.l.b16 %v857
        %v4294 = vunpack.c.h.b16 %v857
        %v4295 = vunpack.c.l.b16 %v858
        %v4296 = vunpack.c.h.b16 %v858
        %v4297 = vunpack.c.l.b16 %v859
        %v4298 = vunpack.c.h.b16 %v859
        %v4299 = vunpack.c.l.b16 %v860
        %v4300 = vunpack.c.h.b16 %v860
        %v4301 = vunpack.c.l.b16 %v861
        %v4302 = vunpack.c.h.b16 %v861
        %v4303 = vunpack.c.l.b16 %v862
        %v4304 = vunpack.c.h.b16 %v862
        %v4305 = vunpack.c.l.b16 %v863
        %v4306 = vunpack.c.h.b16 %v863
        %v4307 = vunpack.c.l.b16 %v864
        %v4308 = vunpack.c.h.b16 %v864
        %v4309 = vunpack.c.l.b16 %v865
        %v4310 = vunpack.c.h.b16 %v865
        %v4311 = vunpack.c.l.b16 %v866
        %v4312 = vunpack.c.h.b16 %v866
        %v4313 = vunpack.c.l.b16 %v867
        %v4314 = vunpack.c.h.b16 %v867
        %v4315 = vunpack.c.l.b16 %v868
        %v4316 = vunpack.c.h.b16 %v868
        %v4317 = vunpack.c.l.b16 %v869
        %v4318 = vunpack.c.h.b16 %v869
        %v4319 = vunpack.c.l.b16 %v870
        %v4320 = vunpack.c.h.b16 %v870
        %v4321 = vunpack.c.l.b16 %v871
        %v4322 = vunpack.c.h.b16 %v871
        %v4323 = vunpack.c.l.b16 %v872
        %v4324 = vunpack.c.h.b16 %v872
        %v4325 = vunpack.c.l.b16 %v873
        %v4326 = vunpack.c.h.b16 %v873
        %v4327 = vunpack.c.l.b16 %v874
        %v4328 = vunpack.c.h.b16 %v874
        %v4329 = vunpack.c.l.b16 %v875
        %v4330 = vunpack.c.h.b16 %v875
        %v4331 = vunpack.c.l.b16 %v876
        %v4332 = vunpack.c.h.b16 %v876
        %v4333 = vunpack.c.l.b16 %v877
        %v4334 = vunpack.c.h.b16 %v877
        %v4335 = vunpack.c.l.b16 %v878
        %v4336 = vunpack.c.h.b16 %v878
        %v4337 = vunpack.c.l.b16 %v879
        %v4338 = vunpack.c.h.b16 %v879
        %v4339 = vunpack.c.l.b16 %v880
        %v4340 = vunpack.c.h.b16 %v880
        %v4341 = vunpack.c.l.b16 %v881
        %v4342 = vunpack.c.h.b16 %v881
        %v4343 = vunpack.c.l.b16 %v882
        %v4344 = vunpack.c.h.b16 %v882
        %v4345 = vunpack.c.l.b16 %v883
        %v4346 = vunpack.c.h.b16 %v883
        %v4347 = vunpack.c.l.b16 %v884
        %v4348 = vunpack.c.h.b16 %v884
        %v4349 = vunpack.c.l.b16 %v885
        %v4350 = vunpack.c.h.b16 %v885
        %v4351 = vunpack.c.l.b16 %v886
        %v4352 = vunpack.c.h.b16 %v886
        %v4353 = vunpack.c.l.b16 %v887
        %v4354 = vunpack.c.h.b16 %v887
        %v4355 = vunpack.c.l.b16 %v888
        %v4356 = vunpack.c.h.b16 %v888
        %v4357 = vunpack.c.l.b16 %v889
        %v4358 = vunpack.c.h.b16 %v889
        %v4359 = vunpack.c.l.b16 %v890
        %v4360 = vunpack.c.h.b16 %v890
        %v4361 = vunpack.c.l.b16 %v891
        %v4362 = vunpack.c.h.b16 %v891
        %v4363 = vunpack.c.l.b16 %v892
        %v4364 = vunpack.c.h.b16 %v892
        %v4365 = vunpack.c.l.b16 %v893
        %v4366 = vunpack.c.h.b16 %v893
        %v4367 = vunpack.c.l.b16 %v894
        %v4368 = vunpack.c.h.b16 %v894
        %v4369 = vunpack.c.l.b16 %v895
        %v4370 = vunpack.c.h.b16 %v895
        %v4371 = vunpack.c.l.b16 %v896
        %v4372 = vunpack.c.h.b16 %v896
        %v4373 = vunpack.c.l.b16 %v897
        %v4374 = vunpack.c.h.b16 %v897
        %v4375 = vunpack.c.l.b16 %v898
        %v4376 = vunpack.c.h.b16 %v898
        %v4377 = vunpack.c.l.b16 %v899
        %v4378 = vunpack.c.h.b16 %v899
        %v4379 = vunpack.c.l.b16 %v900
        %v4380 = vunpack.c.h.b16 %v900
        %v4381 = vunpack.c.l.b16 %v901
        %v4382 = vunpack.c.h.b16 %v901
        %v4383 = vunpack.c.l.b16 %v902
        %v4384 = vunpack.c.h.b16 %v902
        %v4385 = vunpack.c.l.b16 %v903
        %v4386 = vunpack.c.h.b16 %v903
        %v4387 = vunpack.c.l.b16 %v904
        %v4388 = vunpack.c.h.b16 %v904
        %v4389 = vunpack.c.l.b16 %v905
        %v4390 = vunpack.c.h.b16 %v905
        %v4391 = vunpack.c.l.b16 %v906
        %v4392 = vunpack.c.h.b16 %v906
        %v4393 = vunpack.c.l.b16 %v907
        %v4394 = vunpack.c.h.b16 %v907
        %v4395 = vunpack.c.l.b16 %v908
        %v4396 = vunpack.c.h.b16 %v908
        %v4397 = vunpack.c.l.b16 %v909
        %v4398 = vunpack.c.h.b16 %v909
        %v4399 = vunpack.c.l.b16 %v910
        %v4400 = vunpack.c.h.b16 %v910
        %v4401 = vunpack.c.l.b16 %v911
        %v4402 = vunpack.c.h.b16 %v911
        %v4403 = vunpack.c.l.b16 %v912
        %v4404 = vunpack.c.h.b16 %v912
        %v4405 = vunpack.c.l.b16 %v913
        %v4406 = vunpack.c.h.b16 %v913
        %v4407 = vunpack.c.l.b16 %v914
        %v4408 = vunpack.c.h.b16 %v914
        %v4409 = vunpack.c.l.b16 %v915
        %v4410 = vunpack.c.h.b16 %v915
        %v4411 = vunpack.c.l.b16 %v916
        %v4412 = vunpack.c.h.b16 %v916
        %v4413 = vunpack.c.l.b16 %v917
        %v4414 = vunpack.c.h.b16 %v917
        %v4415 = vunpack.c.l.b16 %v918
        %v4416 = vunpack.c.h.b16 %v918
        %v4417 = vunpack.c.l.b16 %v919
        %v4418 = vunpack.c.h.b16 %v919
        %v4419 = vunpack.c.l.b16 %v920
        %v4420 = vunpack.c.h.b16 %v920
        %v4421 = vunpack.c.l.b16 %v921
        %v4422 = vunpack.c.h.b16 %v921
        %v4423 = vunpack.c.l.b16 %v922
        %v4424 = vunpack.c.h.b16 %v922
        %v4425 = vunpack.c.l.b16 %v923
        %v4426 = vunpack.c.h.b16 %v923
        %v4427 = vunpack.c.l.b16 %v924
        %v4428 = vunpack.c.h.b16 %v924
        %v4429 = vunpack.c.l.b16 %v925
        %v4430 = vunpack.c.h.b16 %v925
        %v4431 = vunpack.c.l.b16 %v926
        %v4432 = vunpack.c.h.b16 %v926
        %v4433 = vunpack.c.l.b16 %v927
        %v4434 = vunpack.c.h.b16 %v927
        %v4435 = vunpack.c.l.b16 %v928
        %v4436 = vunpack.c.h.b16 %v928
        %v4437 = vunpack.c.l.b16 %v929
        %v4438 = vunpack.c.h.b16 %v929
        %v4439 = vunpack.c.l.b16 %v930
        %v4440 = vunpack.c.h.b16 %v930
        %v4441 = vunpack.c.l.b16 %v931
        %v4442 = vunpack.c.h.b16 %v931
        %v4443 = vunpack.c.l.b16 %v932
        %v4444 = vunpack.c.h.b16 %v932
        %v4445 = vunpack.c.l.b16 %v933
        %v4446 = vunpack.c.h.b16 %v933
        %v4447 = vunpack.c.l.b16 %v934
        %v4448 = vunpack.c.h.b16 %v934
        %v4449 = vunpack.c.l.b16 %v935
        %v4450 = vunpack.c.h.b16 %v935
        %v4451 = vunpack.c.l.b16 %v936
        %v4452 = vunpack.c.h.b16 %v936
        %v4453 = vunpack.c.l.b16 %v937
        %v4454 = vunpack.c.h.b16 %v937
        %v4455 = vunpack.c.l.b16 %v938
        %v4456 = vunpack.c.h.b16 %v938
        %v4457 = vunpack.c.l.b16 %v939
        %v4458 = vunpack.c.h.b16 %v939
        %v4459 = vunpack.c.l.b16 %v940
        %v4460 = vunpack.c.h.b16 %v940
        %v4461 = vunpack.c.l.b16 %v941
        %v4462 = vunpack.c.h.b16 %v941
        %v4463 = vunpack.c.l.b16 %v942
        %v4464 = vunpack.c.h.b16 %v942
        %v4465 = vunpack.c.l.b16 %v943
        %v4466 = vunpack.c.h.b16 %v943
        %v4467 = vunpack.c.l.b16 %v944
        %v4468 = vunpack.c.h.b16 %v944
        %v4469 = vunpack.c.l.b16 %v945
        %v4470 = vunpack.c.h.b16 %v945
        %v4471 = vunpack.c.l.b16 %v946
        %v4472 = vunpack.c.h.b16 %v946
        %v4473 = vunpack.c.l.b16 %v947
        %v4474 = vunpack.c.h.b16 %v947
        %v4475 = vunpack.c.l.b16 %v948
        %v4476 = vunpack.c.h.b16 %v948
        %v4477 = vunpack.c.l.b16 %v949
        %v4478 = vunpack.c.h.b16 %v949
        %v4479 = vunpack.c.l.b16 %v950
        %v4480 = vunpack.c.h.b16 %v950
        %v4481 = vunpack.c.l.b16 %v951
        %v4482 = vunpack.c.h.b16 %v951
        %v4483 = vunpack.c.l.b16 %v952
        %v4484 = vunpack.c.h.b16 %v952
        %v4485 = vunpack.c.l.b16 %v953
        %v4486 = vunpack.c.h.b16 %v953
        %v4487 = vunpack.c.l.b16 %v954
        %v4488 = vunpack.c.h.b16 %v954
        %v4489 = vunpack.c.l.b16 %v955
        %v4490 = vunpack.c.h.b16 %v955
        %v4491 = vunpack.c.l.b16 %v956
        %v4492 = vunpack.c.h.b16 %v956
        %v4493 = vunpack.c.l.b16 %v957
        %v4494 = vunpack.c.h.b16 %v957
        %v4495 = vunpack.c.l.b16 %v958
        %v4496 = vunpack.c.h.b16 %v958
        %v4497 = vunpack.c.l.b16 %v959
        %v4498 = vunpack.c.h.b16 %v959
        %v4499 = vunpack.c.l.b16 %v960
        %v4500 = vunpack.c.h.b16 %v960
        %v4501 = vunpack.c.l.b16 %v961
        %v4502 = vunpack.c.h.b16 %v961
        %v4503 = vunpack.c.l.b16 %v962
        %v4504 = vunpack.c.h.b16 %v962
        %v4505 = vunpack.c.l.b16 %v963
        %v4506 = vunpack.c.h.b16 %v963
        %v4507 = vunpack.c.l.b16 %v964
        %v4508 = vunpack.c.h.b16 %v964
        %v4509 = vunpack.c.l.b16 %v965
        %v4510 = vunpack.c.h.b16 %v965
        %v4511 = vunpack.c.l.b16 %v966
        %v4512 = vunpack.c.h.b16 %v966
        %v4513 = vunpack.c.l.b16 %v967
        %v4514 = vunpack.c.h.b16 %v967
        %v4515 = vunpack.c.l.b16 %v968
        %v4516 = vunpack.c.h.b16 %v968
        %v4517 = vunpack.c.l.b16 %v969
        %v4518 = vunpack.c.h.b16 %v969
        %v4519 = vunpack.c.l.b16 %v970
        %v4520 = vunpack.c.h.b16 %v970
        %v4521 = vunpack.c.l.b16 %v971
        %v4522 = vunpack.c.h.b16 %v971
        %v4523 = vunpack.c.l.b16 %v972
        %v4524 = vunpack.c.h.b16 %v972
        %v4525 = vunpack.c.l.b16 %v973
        %v4526 = vunpack.c.h.b16 %v973
        %v4527 = vunpack.c.l.b16 %v974
        %v4528 = vunpack.c.h.b16 %v974
        %v4529 = vunpack.c.l.b16 %v975
        %v4530 = vunpack.c.h.b16 %v975
        %v4531 = vunpack.c.l.b16 %v976
        %v4532 = vunpack.c.h.b16 %v976
        %v4533 = vunpack.c.l.b16 %v977
        %v4534 = vunpack.c.h.b16 %v977
        %v4535 = vunpack.c.l.b16 %v978
        %v4536 = vunpack.c.h.b16 %v978
        %v4537 = vunpack.c.l.b16 %v979
        %v4538 = vunpack.c.h.b16 %v979
        %v4539 = vunpack.c.l.b16 %v980
        %v4540 = vunpack.c.h.b16 %v980
        %v4541 = vunpack.c.l.b16 %v981
        %v4542 = vunpack.c.h.b16 %v981
        %v4543 = vunpack.c.l.b16 %v982
        %v4544 = vunpack.c.h.b16 %v982
        %v4545 = vunpack.c.l.b16 %v983
        %v4546 = vunpack.c.h.b16 %v983
        %v4547 = vunpack.c.l.b16 %v984
        %v4548 = vunpack.c.h.b16 %v984
        %v4549 = vunpack.c.l.b16 %v985
        %v4550 = vunpack.c.h.b16 %v985
        %v4551 = vunpack.c.l.b16 %v986
        %v4552 = vunpack.c.h.b16 %v986
        %v4553 = vunpack.c.l.b16 %v987
        %v4554 = vunpack.c.h.b16 %v987
        %v4555 = vunpack.c.l.b16 %v988
        %v4556 = vunpack.c.h.b16 %v988
        %v4557 = vunpack.c.l.b16 %v989
        %v4558 = vunpack.c.h.b16 %v989
        %v4559 = vunpack.c.l.b16 %v990
        %v4560 = vunpack.c.h.b16 %v990
        %v4561 = vunpack.c.l.b16 %v991
        %v4562 = vunpack.c.h.b16 %v991
        %v4563 = vunpack.c.l.b16 %v992
        %v4564 = vunpack.c.h.b16 %v992
        %v4565 = vunpack.c.l.b16 %v993
        %v4566 = vunpack.c.h.b16 %v993
        %v4567 = vunpack.c.l.b16 %v994
        %v4568 = vunpack.c.h.b16 %v994
        %v4569 = vunpack.c.l.b16 %v995
        %v4570 = vunpack.c.h.b16 %v995
        %v4571 = vunpack.c.l.b16 %v996
        %v4572 = vunpack.c.h.b16 %v996
        %v4573 = vunpack.c.l.b16 %v997
        %v4574 = vunpack.c.h.b16 %v997
        %v4575 = vunpack.c.l.b16 %v998
        %v4576 = vunpack.c.h.b16 %v998
        %v4577 = vunpack.c.l.b16 %v999
        %v4578 = vunpack.c.h.b16 %v999
        %v4579 = vunpack.c.l.b16 %v1000
        %v4580 = vunpack.c.h.b16 %v1000
        %v4581 = vunpack.c.l.b16 %v1001
        %v4582 = vunpack.c.h.b16 %v1001
        %v4583 = vunpack.c.l.b16 %v1002
        %v4584 = vunpack.c.h.b16 %v1002
        %v4585 = vunpack.c.l.b16 %v1003
        %v4586 = vunpack.c.h.b16 %v1003
        %v4587 = vunpack.c.l.b16 %v1004
        %v4588 = vunpack.c.h.b16 %v1004
        %v4589 = vunpack.c.l.b16 %v1005
        %v4590 = vunpack.c.h.b16 %v1005
        %v4591 = vunpack.c.l.b16 %v1006
        %v4592 = vunpack.c.h.b16 %v1006
        %v4593 = vunpack.c.l.b16 %v1007
        %v4594 = vunpack.c.h.b16 %v1007
        %v4595 = vunpack.c.l.b16 %v1008
        %v4596 = vunpack.c.h.b16 %v1008
        %v4597 = vunpack.c.l.b16 %v1009
        %v4598 = vunpack.c.h.b16 %v1009
        %v4599 = vunpack.c.l.b16 %v1010
        %v4600 = vunpack.c.h.b16 %v1010
        %v4601 = vunpack.c.l.b16 %v1011
        %v4602 = vunpack.c.h.b16 %v1011
        %v4603 = vunpack.c.l.b16 %v1012
        %v4604 = vunpack.c.h.b16 %v1012
        %v4605 = vunpack.c.l.b16 %v1013
        %v4606 = vunpack.c.h.b16 %v1013
        %v4607 = vunpack.c.l.b16 %v1014
        %v4608 = vunpack.c.h.b16 %v1014
        %v4609 = vunpack.c.l.b16 %v1015
        %v4610 = vunpack.c.h.b16 %v1015
        %v4611 = vunpack.c.l.b16 %v1016
        %v4612 = vunpack.c.h.b16 %v1016
        %v4613 = vunpack.c.l.b16 %v1017
        %v4614 = vunpack.c.h.b16 %v1017
        %v4615 = vunpack.c.l.b16 %v1018
        %v4616 = vunpack.c.h.b16 %v1018
        %v4617 = vunpack.c.l.b16 %v1019
        %v4618 = vunpack.c.h.b16 %v1019
        %v4619 = vunpack.c.l.b16 %v1020
        %v4620 = vunpack.c.h.b16 %v1020
        %v4621 = vunpack.c.l.b16 %v1021
        %v4622 = vunpack.c.h.b16 %v1021
        %v4623 = vunpack.c.l.b16 %v1022
        %v4624 = vunpack.c.h.b16 %v1022
        %v4625 = vunpack.c.l.b16 %v1023
        %v4626 = vunpack.c.h.b16 %v1023
        %v4627 = vunpack.c.l.b16 %v1024
        %v4628 = vunpack.c.h.b16 %v1024
        %v4629 = vunpack.c.l.b16 %v1025
        %v4630 = vunpack.c.h.b16 %v1025
        %v4631 = vunpack.c.l.b16 %v1026
        %v4632 = vunpack.c.h.b16 %v1026
        %v4633 = vunpack.c.l.b16 %v1027
        %v4634 = vunpack.c.h.b16 %v1027
        %v4635 = vunpack.c.l.b16 %v1028
        %v4636 = vunpack.c.h.b16 %v1028
        %v4637 = vunpack.c.l.b16 %v1029
        %v4638 = vunpack.c.h.b16 %v1029
        %v4639 = vunpack.c.l.b16 %v1030
        %v4640 = vunpack.c.h.b16 %v1030
        %v4641 = vunpack.c.l.b16 %v1031
        %v4642 = vunpack.c.h.b16 %v1031
        %v4643 = vunpack.c.l.b16 %v1032
        %v4644 = vunpack.c.h.b16 %v1032
        %v4645 = vunpack.c.l.b16 %v1033
        %v4646 = vunpack.c.h.b16 %v1033
        %v4647 = vunpack.c.l.b16 %v1034
        %v4648 = vunpack.c.h.b16 %v1034
        %v4649 = vunpack.c.l.b16 %v1035
        %v4650 = vunpack.c.h.b16 %v1035
        %v4651 = vunpack.c.l.b16 %v1036
        %v4652 = vunpack.c.h.b16 %v1036
        %v4653 = vunpack.c.l.b16 %v1037
        %v4654 = vunpack.c.h.b16 %v1037
        %v4655 = vunpack.c.l.b16 %v1038
        %v4656 = vunpack.c.h.b16 %v1038
        %v4657 = vunpack.c.l.b16 %v1039
        %v4658 = vunpack.c.h.b16 %v1039
        %v4659 = vunpack.c.l.b16 %v1040
        %v4660 = vunpack.c.h.b16 %v1040
        %v4661 = vunpack.c.l.b16 %v1041
        %v4662 = vunpack.c.h.b16 %v1041
        %v4663 = vunpack.c.l.b16 %v1042
        %v4664 = vunpack.c.h.b16 %v1042
        %v4665 = vunpack.c.l.b16 %v1043
        %v4666 = vunpack.c.h.b16 %v1043
        %v4667 = vunpack.c.l.b16 %v1044
        %v4668 = vunpack.c.h.b16 %v1044
        %v4669 = vunpack.c.l.b16 %v1045
        %v4670 = vunpack.c.h.b16 %v1045
        %v4671 = vunpack.c.l.b16 %v1046
        %v4672 = vunpack.c.h.b16 %v1046
        %v4673 = vunpack.c.l.b16 %v1047
        %v4674 = vunpack.c.h.b16 %v1047
        %v4675 = vunpack.c.l.b16 %v1048
        %v4676 = vunpack.c.h.b16 %v1048
        %v4677 = vunpack.c.l.b16 %v1049
        %v4678 = vunpack.c.h.b16 %v1049
        %v4679 = vunpack.c.l.b16 %v1050
        %v4680 = vunpack.c.h.b16 %v1050
        %v4681 = vunpack.c.l.b16 %v1051
        %v4682 = vunpack.c.h.b16 %v1051
        %v4683 = vunpack.c.l.b16 %v1052
        %v4684 = vunpack.c.h.b16 %v1052
        %v4685 = vunpack.c.l.b16 %v1053
        %v4686 = vunpack.c.h.b16 %v1053
        %v4687 = vunpack.c.l.b16 %v1054
        %v4688 = vunpack.c.h.b16 %v1054
        %v4689 = vunpack.c.l.b16 %v1055
        %v4690 = vunpack.c.h.b16 %v1055
        %v4691 = vunpack.c.l.b16 %v1056
        %v4692 = vunpack.c.h.b16 %v1056
        %v4693 = vunpack.c.l.b16 %v1057
        %v4694 = vunpack.c.h.b16 %v1057
        %v4695 = vunpack.c.l.b16 %v1058
        %v4696 = vunpack.c.h.b16 %v1058
        %v4697 = vunpack.c.l.b16 %v1059
        %v4698 = vunpack.c.h.b16 %v1059
        %v4699 = vunpack.c.l.b16 %v1060
        %v4700 = vunpack.c.h.b16 %v1060
        %v4701 = vunpack.c.l.b16 %v1061
        %v4702 = vunpack.c.h.b16 %v1061
        %v4703 = vunpack.c.l.b16 %v1062
        %v4704 = vunpack.c.h.b16 %v1062
        %v4705 = vunpack.c.l.b16 %v1063
        %v4706 = vunpack.c.h.b16 %v1063
        %v4707 = vunpack.c.l.b16 %v1064
        %v4708 = vunpack.c.h.b16 %v1064
        %v4709 = vunpack.c.l.b16 %v1065
        %v4710 = vunpack.c.h.b16 %v1065
        %v4711 = vunpack.c.l.b16 %v1066
        %v4712 = vunpack.c.h.b16 %v1066
        %v4713 = vunpack.c.l.b16 %v1067
        %v4714 = vunpack.c.h.b16 %v1067
        %v4715 = vunpack.c.l.b16 %v1068
        %v4716 = vunpack.c.h.b16 %v1068
        %v4717 = vunpack.c.l.b16 %v1069
        %v4718 = vunpack.c.h.b16 %v1069
        %v4719 = vunpack.c.l.b16 %v1070
        %v4720 = vunpack.c.h.b16 %v1070
        %v4721 = vunpack.c.l.b16 %v1071
        %v4722 = vunpack.c.h.b16 %v1071
        %v4723 = vunpack.c.l.b16 %v1072
        %v4724 = vunpack.c.h.b16 %v1072
        %v4725 = vunpack.c.l.b16 %v1073
        %v4726 = vunpack.c.h.b16 %v1073
        %v4727 = vunpack.c.l.b16 %v1074
        %v4728 = vunpack.c.h.b16 %v1074
        %v4729 = vunpack.c.l.b16 %v1075
        %v4730 = vunpack.c.h.b16 %v1075
        %v4731 = vunpack.c.l.b16 %v1076
        %v4732 = vunpack.c.h.b16 %v1076
        %v4733 = vunpack.c.l.b16 %v1077
        %v4734 = vunpack.c.h.b16 %v1077
        %v4735 = vunpack.c.l.b16 %v1078
        %v4736 = vunpack.c.h.b16 %v1078
        %v4737 = vunpack.c.l.b16 %v1079
        %v4738 = vunpack.c.h.b16 %v1079
        %v4739 = vunpack.c.l.b16 %v1080
        %v4740 = vunpack.c.h.b16 %v1080
        %v4741 = vunpack.c.l.b16 %v1081
        %v4742 = vunpack.c.h.b16 %v1081
        %v4743 = vunpack.c.l.b16 %v1082
        %v4744 = vunpack.c.h.b16 %v1082
        %v4745 = vunpack.c.l.b16 %v1083
        %v4746 = vunpack.c.h.b16 %v1083
        %v4747 = vunpack.c.l.b16 %v1084
        %v4748 = vunpack.c.h.b16 %v1084
        %v4749 = vunpack.c.l.b16 %v1085
        %v4750 = vunpack.c.h.b16 %v1085
        %v4751 = vunpack.c.l.b16 %v1086
        %v4752 = vunpack.c.h.b16 %v1086
        %v4753 = vunpack.c.l.b16 %v1087
        %v4754 = vunpack.c.h.b16 %v1087
        %v4755 = vunpack.c.l.b16 %v1088
        %v4756 = vunpack.c.h.b16 %v1088
        %v4757 = vunpack.c.l.b16 %v1089
        %v4758 = vunpack.c.h.b16 %v1089
        %v4759 = vunpack.c.l.b16 %v1090
        %v4760 = vunpack.c.h.b16 %v1090
        %v4761 = vunpack.c.l.b16 %v1091
        %v4762 = vunpack.c.h.b16 %v1091
        %v4763 = vunpack.c.l.b16 %v1092
        %v4764 = vunpack.c.h.b16 %v1092
        %v4765 = vunpack.c.l.b16 %v1093
        %v4766 = vunpack.c.h.b16 %v1093
        %v4767 = vunpack.c.l.b16 %v1094
        %v4768 = vunpack.c.h.b16 %v1094
        %v4769 = vunpack.c.l.b16 %v1095
        %v4770 = vunpack.c.h.b16 %v1095
        %v4771 = vunpack.c.l.b16 %v1096
        %v4772 = vunpack.c.h.b16 %v1096
        %v4773 = vunpack.c.l.b16 %v1097
        %v4774 = vunpack.c.h.b16 %v1097
        %v4775 = vunpack.c.l.b16 %v1098
        %v4776 = vunpack.c.h.b16 %v1098
        %v4777 = vunpack.c.l.b16 %v1099
        %v4778 = vunpack.c.h.b16 %v1099
        %v4779 = vunpack.c.l.b16 %v1100
        %v4780 = vunpack.c.h.b16 %v1100
        %v4781 = vunpack.c.l.b16 %v1101
        %v4782 = vunpack.c.h.b16 %v1101
        %v4783 = vunpack.c.l.b16 %v1102
        %v4784 = vunpack.c.h.b16 %v1102
        %v4785 = vunpack.c.l.b16 %v1103
        %v4786 = vunpack.c.h.b16 %v1103
        %v4787 = vunpack.c.l.b16 %v1104
        %v4788 = vunpack.c.h.b16 %v1104
        %v4789 = vunpack.c.l.b16 %v1105
        %v4790 = vunpack.c.h.b16 %v1105
        %v4791 = vunpack.c.l.b16 %v1106
        %v4792 = vunpack.c.h.b16 %v1106
        %v4793 = vunpack.c.l.b16 %v1107
        %v4794 = vunpack.c.h.b16 %v1107
        %v4795 = vunpack.c.l.b16 %v1108
        %v4796 = vunpack.c.h.b16 %v1108
        %v4797 = vunpack.c.l.b16 %v1109
        %v4798 = vunpack.c.h.b16 %v1109
        %v4799 = vunpack.c.l.b16 %v1110
        %v4800 = vunpack.c.h.b16 %v1110
        %v4801 = vunpack.c.l.b16 %v1111
        %v4802 = vunpack.c.h.b16 %v1111
        %v4803 = vunpack.c.l.b16 %v1112
        %v4804 = vunpack.c.h.b16 %v1112
        %v4805 = vunpack.c.l.b16 %v1113
        %v4806 = vunpack.c.h.b16 %v1113
        %v4807 = vunpack.c.l.b16 %v1114
        %v4808 = vunpack.c.h.b16 %v1114
        %v4809 = vunpack.c.l.b16 %v1115
        %v4810 = vunpack.c.h.b16 %v1115
        %v4811 = vunpack.c.l.b16 %v1116
        %v4812 = vunpack.c.h.b16 %v1116
        %v4813 = vunpack.c.l.b16 %v1117
        %v4814 = vunpack.c.h.b16 %v1117
        %v4815 = vunpack.c.l.b16 %v1118
        %v4816 = vunpack.c.h.b16 %v1118
        %v4817 = vunpack.c.l.b16 %v1119
        %v4818 = vunpack.c.h.b16 %v1119
        %v4819 = vunpack.c.l.b16 %v1120
        %v4820 = vunpack.c.h.b16 %v1120
        %v4821 = vunpack.c.l.b16 %v1121
        %v4822 = vunpack.c.h.b16 %v1121
        %v4823 = vunpack.c.l.b16 %v1122
        %v4824 = vunpack.c.h.b16 %v1122
        %v4825 = vunpack.c.l.b16 %v1123
        %v4826 = vunpack.c.h.b16 %v1123
        %v4827 = vunpack.c.l.b16 %v1124
        %v4828 = vunpack.c.h.b16 %v1124
        %v4829 = vunpack.c.l.b16 %v1125
        %v4830 = vunpack.c.h.b16 %v1125
        %v4831 = vunpack.c.l.b16 %v1126
        %v4832 = vunpack.c.h.b16 %v1126
        %v4833 = vunpack.c.l.b16 %v1127
        %v4834 = vunpack.c.h.b16 %v1127
        %v4835 = vunpack.c.l.b16 %v1128
        %v4836 = vunpack.c.h.b16 %v1128
        %v4837 = vunpack.c.l.b16 %v1129
        %v4838 = vunpack.c.h.b16 %v1129
        %v4839 = vunpack.c.l.b16 %v1130
        %v4840 = vunpack.c.h.b16 %v1130
        %v4841 = vunpack.c.l.b16 %v1131
        %v4842 = vunpack.c.h.b16 %v1131
        %v4843 = vunpack.c.l.b16 %v1132
        %v4844 = vunpack.c.h.b16 %v1132
        %v4845 = vunpack.c.l.b16 %v1133
        %v4846 = vunpack.c.h.b16 %v1133
        %v4847 = vunpack.c.l.b16 %v1134
        %v4848 = vunpack.c.h.b16 %v1134
        %v4849 = vunpack.c.l.b16 %v1135
        %v4850 = vunpack.c.h.b16 %v1135
        %v4851 = vunpack.c.l.b16 %v1136
        %v4852 = vunpack.c.h.b16 %v1136
        %v4853 = vunpack.c.l.b16 %v1137
        %v4854 = vunpack.c.h.b16 %v1137
        %v4855 = vunpack.c.l.b16 %v1138
        %v4856 = vunpack.c.h.b16 %v1138
        %v4857 = vunpack.c.l.b16 %v1139
        %v4858 = vunpack.c.h.b16 %v1139
        %v4859 = vunpack.c.l.b16 %v1140
        %v4860 = vunpack.c.h.b16 %v1140
        %v4861 = vunpack.c.l.b16 %v1141
        %v4862 = vunpack.c.h.b16 %v1141
        %v4863 = vunpack.c.l.b16 %v1142
        %v4864 = vunpack.c.h.b16 %v1142
        %v4865 = vunpack.c.l.b16 %v1143
        %v4866 = vunpack.c.h.b16 %v1143
        %v4867 = vunpack.c.l.b16 %v1144
        %v4868 = vunpack.c.h.b16 %v1144
        %v4869 = vunpack.c.l.b16 %v1145
        %v4870 = vunpack.c.h.b16 %v1145
        %v4871 = vunpack.c.l.b16 %v1146
        %v4872 = vunpack.c.h.b16 %v1146
        %v4873 = vunpack.c.l.b16 %v1147
        %v4874 = vunpack.c.h.b16 %v1147
        %v4875 = vunpack.c.l.b16 %v1148
        %v4876 = vunpack.c.h.b16 %v1148
        %v4877 = vunpack.c.l.b16 %v1149
        %v4878 = vunpack.c.h.b16 %v1149
        %v4879 = vunpack.c.l.b16 %v1150
        %v4880 = vunpack.c.h.b16 %v1150
        %v4881 = vunpack.c.l.b16 %v1151
        %v4882 = vunpack.c.h.b16 %v1151
        %v4883 = vunpack.c.l.b16 %v1152
        %v4884 = vunpack.c.h.b16 %v1152
        %v4885 = vunpack.c.l.b16 %v1153
        %v4886 = vunpack.c.h.b16 %v1153
        %v4887 = vunpack.c.l.b16 %v1154
        %v4888 = vunpack.c.h.b16 %v1154
        %v4889 = vunpack.c.l.b16 %v1155
        %v4890 = vunpack.c.h.b16 %v1155
        %v4891 = vunpack.c.l.b16 %v1156
        %v4892 = vunpack.c.h.b16 %v1156
        %v4893 = vunpack.c.l.b16 %v1157
        %v4894 = vunpack.c.h.b16 %v1157
        %v4895 = vunpack.c.l.b16 %v1158
        %v4896 = vunpack.c.h.b16 %v1158
        %v4897 = vunpack.c.l.b16 %v1159
        %v4898 = vunpack.c.h.b16 %v1159
        %v4899 = vunpack.c.l.b16 %v1160
        %v4900 = vunpack.c.h.b16 %v1160
        %v4901 = vunpack.c.l.b16 %v1161
        %v4902 = vunpack.c.h.b16 %v1161
        %v4903 = vunpack.c.l.b16 %v1162
        %v4904 = vunpack.c.h.b16 %v1162
        %v4905 = vunpack.c.l.b16 %v1163
        %v4906 = vunpack.c.h.b16 %v1163
        %v4907 = vunpack.c.l.b16 %v1164
        %v4908 = vunpack.c.h.b16 %v1164
        %v4909 = vunpack.c.l.b16 %v1165
        %v4910 = vunpack.c.h.b16 %v1165
        %v4911 = vunpack.c.l.b16 %v1166
        %v4912 = vunpack.c.h.b16 %v1166
        %v4913 = vunpack.c.l.b16 %v1167
        %v4914 = vunpack.c.h.b16 %v1167
        %v4915 = vunpack.c.l.b16 %v1168
        %v4916 = vunpack.c.h.b16 %v1168
        %v4917 = vunpack.c.l.b16 %v1169
        %v4918 = vunpack.c.h.b16 %v1169
        %v4919 = vunpack.c.l.b16 %v1170
        %v4920 = vunpack.c.h.b16 %v1170
        %v4921 = vunpack.c.l.b16 %v1171
        %v4922 = vunpack.c.h.b16 %v1171
        %v4923 = vunpack.c.l.b16 %v1172
        %v4924 = vunpack.c.h.b16 %v1172
        %v4925 = vunpack.c.l.b16 %v1173
        %v4926 = vunpack.c.h.b16 %v1173
        %v4927 = vunpack.c.l.b16 %v1174
        %v4928 = vunpack.c.h.b16 %v1174
        %v4929 = vunpack.c.l.b16 %v1175
        %v4930 = vunpack.c.h.b16 %v1175
        %v4931 = vunpack.c.l.b16 %v1176
        %v4932 = vunpack.c.h.b16 %v1176
        %v4933 = vunpack.c.l.b16 %v1177
        %v4934 = vunpack.c.h.b16 %v1177
        %v4935 = vunpack.c.l.b16 %v1178
        %v4936 = vunpack.c.h.b16 %v1178
        %v4937 = vunpack.c.l.b16 %v1179
        %v4938 = vunpack.c.h.b16 %v1179
        %v4939 = vunpack.c.l.b16 %v1180
        %v4940 = vunpack.c.h.b16 %v1180
        %v4941 = vunpack.c.l.b16 %v1181
        %v4942 = vunpack.c.h.b16 %v1181
        %v4943 = vunpack.c.l.b16 %v1182
        %v4944 = vunpack.c.h.b16 %v1182
        %v4945 = vunpack.c.l.b16 %v1183
        %v4946 = vunpack.c.h.b16 %v1183
        %v4947 = vunpack.c.l.b16 %v1184
        %v4948 = vunpack.c.h.b16 %v1184
        %v4949 = vunpack.c.l.b16 %v1185
        %v4950 = vunpack.c.h.b16 %v1185
        %v4951 = vunpack.c.l.b16 %v1186
        %v4952 = vunpack.c.h.b16 %v1186
        %v4953 = vunpack.c.l.b16 %v1187
        %v4954 = vunpack.c.h.b16 %v1187
        %v4955 = vunpack.c.l.b16 %v1188
        %v4956 = vunpack.c.h.b16 %v1188
        %v4957 = vunpack.c.l.b16 %v1189
        %v4958 = vunpack.c.h.b16 %v1189
        %v4959 = vunpack.c.l.b16 %v1190
        %v4960 = vunpack.c.h.b16 %v1190
        %v4961 = vunpack.c.l.b16 %v1191
        %v4962 = vunpack.c.h.b16 %v1191
        %v4963 = vunpack.c.l.b16 %v1192
        %v4964 = vunpack.c.h.b16 %v1192
        %v4965 = vunpack.c.l.b16 %v1193
        %v4966 = vunpack.c.h.b16 %v1193
        %v4967 = vunpack.c.l.b16 %v1194
        %v4968 = vunpack.c.h.b16 %v1194
        %v4969 = vunpack.c.l.b16 %v1195
        %v4970 = vunpack.c.h.b16 %v1195
        %v4971 = vunpack.c.l.b16 %v1196
        %v4972 = vunpack.c.h.b16 %v1196
        %v4973 = vunpack.c.l.b16 %v1197
        %v4974 = vunpack.c.h.b16 %v1197
        %v4975 = vunpack.c.l.b16 %v1198
        %v4976 = vunpack.c.h.b16 %v1198
        %v4977 = vunpack.c.l.b16 %v1199
        %v4978 = vunpack.c.h.b16 %v1199
        %v4979 = vunpack.c.l.b16 %v1200
        %v4980 = vunpack.c.h.b16 %v1200
        %v4981 = vunpack.c.l.b16 %v1201
        %v4982 = vunpack.c.h.b16 %v1201
        %v4983 = vunpack.c.l.b16 %v1202
        %v4984 = vunpack.c.h.b16 %v1202
        %v4985 = vunpack.c.l.b16 %v1203
        %v4986 = vunpack.c.h.b16 %v1203
        %v4987 = vunpack.c.l.b16 %v1204
        %v4988 = vunpack.c.h.b16 %v1204
        %v4989 = vunpack.c.l.b16 %v1205
        %v4990 = vunpack.c.h.b16 %v1205
        %v4991 = vunpack.c.l.b16 %v1206
        %v4992 = vunpack.c.h.b16 %v1206
        %v4993 = vunpack.c.l.b16 %v1207
        %v4994 = vunpack.c.h.b16 %v1207
        %v4995 = vunpack.c.l.b16 %v1208
        %v4996 = vunpack.c.h.b16 %v1208
        %v4997 = vunpack.c.l.b16 %v1209
        %v4998 = vunpack.c.h.b16 %v1209
        %v4999 = vunpack.c.l.b16 %v1210
        %v5000 = vunpack.c.h.b16 %v1210
        %v5001 = vunpack.c.l.b16 %v1211
        %v5002 = vunpack.c.h.b16 %v1211
        %v5003 = vunpack.c.l.b16 %v1212
        %v5004 = vunpack.c.h.b16 %v1212
        %v5005 = vunpack.c.l.b16 %v1213
        %v5006 = vunpack.c.h.b16 %v1213
        %v5007 = vunpack.c.l.b16 %v1214
        %v5008 = vunpack.c.h.b16 %v1214
        %v5009 = vunpack.c.l.b16 %v1215
        %v5010 = vunpack.c.h.b16 %v1215
        %v5011 = vunpack.c.l.b16 %v1216
        %v5012 = vunpack.c.h.b16 %v1216
        %v5013 = vunpack.c.l.b16 %v1217
        %v5014 = vunpack.c.h.b16 %v1217
        %v5015 = vunpack.c.l.b16 %v1218
        %v5016 = vunpack.c.h.b16 %v1218
        %v5017 = vunpack.c.l.b16 %v1219
        %v5018 = vunpack.c.h.b16 %v1219
        %v5019 = vunpack.c.l.b16 %v1220
        %v5020 = vunpack.c.h.b16 %v1220
        %v5021 = vunpack.c.l.b16 %v1221
        %v5022 = vunpack.c.h.b16 %v1221
        %v5023 = vunpack.c.l.b16 %v1222
        %v5024 = vunpack.c.h.b16 %v1222
        %v5025 = vunpack.c.l.b16 %v1223
        %v5026 = vunpack.c.h.b16 %v1223
        %v5027 = vunpack.c.l.b16 %v1224
        %v5028 = vunpack.c.h.b16 %v1224
        %v5029 = vunpack.c.l.b16 %v1225
        %v5030 = vunpack.c.h.b16 %v1225
        %v5031 = vunpack.c.l.b16 %v1226
        %v5032 = vunpack.c.h.b16 %v1226
        %v5033 = vunpack.c.l.b16 %v1227
        %v5034 = vunpack.c.h.b16 %v1227
        %v5035 = vunpack.c.l.b16 %v1228
        %v5036 = vunpack.c.h.b16 %v1228
        %v5037 = vunpack.c.l.b16 %v1229
        %v5038 = vunpack.c.h.b16 %v1229
        %v5039 = vunpack.c.l.b16 %v1230
        %v5040 = vunpack.c.h.b16 %v1230
        %v5041 = vunpack.c.l.b16 %v1231
        %v5042 = vunpack.c.h.b16 %v1231
        %v5043 = vunpack.c.l.b16 %v1232
        %v5044 = vunpack.c.h.b16 %v1232
        %v5045 = vunpack.c.l.b16 %v1233
        %v5046 = vunpack.c.h.b16 %v1233
        %v5047 = vunpack.c.l.b16 %v1234
        %v5048 = vunpack.c.h.b16 %v1234
        %v5049 = vunpack.c.l.b16 %v1235
        %v5050 = vunpack.c.h.b16 %v1235
        %v5051 = vunpack.c.l.b16 %v1236
        %v5052 = vunpack.c.h.b16 %v1236
        %v5053 = vunpack.c.l.b16 %v1237
        %v5054 = vunpack.c.h.b16 %v1237
        %v5055 = vunpack.c.l.b16 %v1238
        %v5056 = vunpack.c.h.b16 %v1238
        %v5057 = vunpack.c.l.b16 %v1239
        %v5058 = vunpack.c.h.b16 %v1239
        %v5059 = vunpack.c.l.b16 %v1240
        %v5060 = vunpack.c.h.b16 %v1240
        %v5061 = vunpack.c.l.b16 %v1241
        %v5062 = vunpack.c.h.b16 %v1241
        %v5063 = vunpack.c.l.b16 %v1242
        %v5064 = vunpack.c.h.b16 %v1242
        %v5065 = vunpack.c.l.b16 %v1243
        %v5066 = vunpack.c.h.b16 %v1243
        %v5067 = vunpack.c.l.b16 %v1244
        %v5068 = vunpack.c.h.b16 %v1244
        %v5069 = vunpack.c.l.b16 %v1245
        %v5070 = vunpack.c.h.b16 %v1245
        %v5071 = vunpack.c.l.b16 %v1246
        %v5072 = vunpack.c.h.b16 %v1246
        %v5073 = vunpack.c.l.b16 %v1247
        %v5074 = vunpack.c.h.b16 %v1247
        %v5075 = vunpack.c.l.b16 %v1248
        %v5076 = vunpack.c.h.b16 %v1248
        %v5077 = vunpack.c.l.b16 %v1249
        %v5078 = vunpack.c.h.b16 %v1249
        %v5079 = vunpack.c.l.b16 %v1250
        %v5080 = vunpack.c.h.b16 %v1250
        %v5081 = vunpack.c.l.b16 %v1251
        %v5082 = vunpack.c.h.b16 %v1251
        %v5083 = vunpack.c.l.b16 %v1252
        %v5084 = vunpack.c.h.b16 %v1252
        %v5085 = vunpack.c.l.b16 %v1253
        %v5086 = vunpack.c.h.b16 %v1253
        %v5087 = vunpack.c.l.b16 %v1254
        %v5088 = vunpack.c.h.b16 %v1254
        %v5089 = vunpack.c.l.b16 %v1255
        %v5090 = vunpack.c.h.b16 %v1255
        %v5091 = vunpack.c.l.b16 %v1256
        %v5092 = vunpack.c.h.b16 %v1256
        %v5093 = vunpack.c.l.b16 %v1257
        %v5094 = vunpack.c.h.b16 %v1257
        %v5095 = vunpack.c.l.b16 %v1258
        %v5096 = vunpack.c.h.b16 %v1258
        %v5097 = vunpack.c.l.b16 %v1259
        %v5098 = vunpack.c.h.b16 %v1259
        %v5099 = vunpack.c.l.b16 %v1260
        %v5100 = vunpack.c.h.b16 %v1260
        %v5101 = vunpack.c.l.b16 %v1261
        %v5102 = vunpack.c.h.b16 %v1261
        %v5103 = vunpack.c.l.b16 %v1262
        %v5104 = vunpack.c.h.b16 %v1262
        %v5105 = vunpack.c.l.b16 %v1263
        %v5106 = vunpack.c.h.b16 %v1263
        %v5107 = vunpack.c.l.b16 %v1264
        %v5108 = vunpack.c.h.b16 %v1264
        %v5109 = vunpack.c.l.b16 %v1265
        %v5110 = vunpack.c.h.b16 %v1265
        %v5111 = vunpack.c.l.b16 %v1266
        %v5112 = vunpack.c.h.b16 %v1266
        %v5113 = vunpack.c.l.b16 %v1267
        %v5114 = vunpack.c.h.b16 %v1267
        %v5115 = vunpack.c.l.b16 %v1268
        %v5116 = vunpack.c.h.b16 %v1268
        %v5117 = vunpack.c.l.b16 %v1269
        %v5118 = vunpack.c.h.b16 %v1269
        %v5119 = vunpack.c.l.b16 %v1270
        %v5120 = vunpack.c.h.b16 %v1270
        %v5121 = vunpack.c.l.b16 %v1271
        %v5122 = vunpack.c.h.b16 %v1271
        %v5123 = vunpack.c.l.b16 %v1272
        %v5124 = vunpack.c.h.b16 %v1272
        %v5125 = vunpack.c.l.b16 %v1273
        %v5126 = vunpack.c.h.b16 %v1273
        %v5127 = vunpack.c.l.b16 %v1274
        %v5128 = vunpack.c.h.b16 %v1274
        %v5129 = vunpack.c.l.b16 %v1275
        %v5130 = vunpack.c.h.b16 %v1275
        %v5131 = vunpack.c.l.b16 %v1276
        %v5132 = vunpack.c.h.b16 %v1276
        %v5133 = vunpack.c.l.b16 %v1277
        %v5134 = vunpack.c.h.b16 %v1277
        %v5135 = vunpack.c.l.b16 %v1278
        %v5136 = vunpack.c.h.b16 %v1278
        %v5137 = vunpack.c.l.b16 %v1279
        %v5138 = vunpack.c.h.b16 %v1279
        %v5139 = vunpack.c.l.b16 %v1280
        %v5140 = vunpack.c.h.b16 %v1280
        %v5141 = vunpack.c.l.b16 %v1281
        %v5142 = vunpack.c.h.b16 %v1281
        %v5143 = vunpack.c.l.b16 %v1282
        %v5144 = vunpack.c.h.b16 %v1282
        %v5145 = vunpack.c.l.b16 %v1283
        %v5146 = vunpack.c.h.b16 %v1283
        %v5147 = vunpack.c.l.b16 %v1284
        %v5148 = vunpack.c.h.b16 %v1284
        %v5149 = vunpack.c.l.b16 %v1285
        %v5150 = vunpack.c.h.b16 %v1285
        %v5151 = vunpack.c.l.b16 %v1286
        %v5152 = vunpack.c.h.b16 %v1286
        %v5153 = vunpack.c.l.b16 %v1287
        %v5154 = vunpack.c.h.b16 %v1287
        %v5155 = vunpack.c.l.b16 %v1288
        %v5156 = vunpack.c.h.b16 %v1288
        %v5157 = vunpack.c.l.b16 %v1289
        %v5158 = vunpack.c.h.b16 %v1289
        %v5159 = vunpack.c.l.b16 %v1290
        %v5160 = vunpack.c.h.b16 %v1290
        %v5161 = vunpack.c.l.b16 %v1291
        %v5162 = vunpack.c.h.b16 %v1291
        %v5163 = vunpack.c.l.b16 %v1292
        %v5164 = vunpack.c.h.b16 %v1292
        %v5165 = vunpack.c.l.b16 %v1293
        %v5166 = vunpack.c.h.b16 %v1293
        %v5167 = vunpack.c.l.b16 %v1294
        %v5168 = vunpack.c.h.b16 %v1294
        %v5169 = vunpack.c.l.b16 %v1295
        %v5170 = vunpack.c.h.b16 %v1295
        %v5171 = vunpack.c.l.b16 %v1296
        %v5172 = vunpack.c.h.b16 %v1296
        %v5173 = vunpack.c.l.b16 %v1297
        %v5174 = vunpack.c.h.b16 %v1297
        %v5175 = vunpack.c.l.b16 %v1298
        %v5176 = vunpack.c.h.b16 %v1298
        %v5177 = vunpack.c.l.b16 %v1299
        %v5178 = vunpack.c.h.b16 %v1299
        %v5179 = vunpack.c.l.b16 %v1300
        %v5180 = vunpack.c.h.b16 %v1300
        %v5181 = vunpack.c.l.b16 %v1301
        %v5182 = vunpack.c.h.b16 %v1301
        %v5183 = vunpack.c.l.b16 %v1302
        %v5184 = vunpack.c.h.b16 %v1302
        %v5185 = vunpack.c.l.b16 %v1303
        %v5186 = vunpack.c.h.b16 %v1303
        %v5187 = vunpack.c.l.b16 %v1304
        %v5188 = vunpack.c.h.b16 %v1304
        %v5189 = vunpack.c.l.b16 %v1305
        %v5190 = vunpack.c.h.b16 %v1305
        %v5191 = vunpack.c.l.b16 %v1306
        %v5192 = vunpack.c.h.b16 %v1306
        %v5193 = vunpack.c.l.b16 %v1307
        %v5194 = vunpack.c.h.b16 %v1307
        %v5195 = vunpack.c.l.b16 %v1308
        %v5196 = vunpack.c.h.b16 %v1308
        %v5197 = vunpack.c.l.b16 %v1309
        %v5198 = vunpack.c.h.b16 %v1309
        %v5199 = vunpack.c.l.b16 %v1310
        %v5200 = vunpack.c.h.b16 %v1310
        %v5201 = vunpack.c.l.b16 %v1311
        %v5202 = vunpack.c.h.b16 %v1311
        %v5203 = vunpack.c.l.b16 %v1312
        %v5204 = vunpack.c.h.b16 %v1312
        %v5205 = vunpack.c.l.b16 %v1313
        %v5206 = vunpack.c.h.b16 %v1313
        %v5207 = vunpack.c.l.b16 %v1314
        %v5208 = vunpack.c.h.b16 %v1314
        %v5209 = vunpack.c.l.b16 %v1315
        %v5210 = vunpack.c.h.b16 %v1315
        %v5211 = vunpack.c.l.b16 %v1316
        %v5212 = vunpack.c.h.b16 %v1316
        %v5213 = vunpack.c.l.b16 %v1317
        %v5214 = vunpack.c.h.b16 %v1317
        %v5215 = vunpack.c.l.b16 %v1318
        %v5216 = vunpack.c.h.b16 %v1318
        %v5217 = vunpack.c.l.b16 %v1319
        %v5218 = vunpack.c.h.b16 %v1319
        %v5219 = vunpack.c.l.b16 %v1320
        %v5220 = vunpack.c.h.b16 %v1320
        %v5221 = vunpack.c.l.b16 %v1321
        %v5222 = vunpack.c.h.b16 %v1321
        %v5223 = vunpack.c.l.b16 %v1322
        %v5224 = vunpack.c.h.b16 %v1322
        %v5225 = vunpack.c.l.b16 %v1323
        %v5226 = vunpack.c.h.b16 %v1323
        %v5227 = vunpack.c.l.b16 %v1324
        %v5228 = vunpack.c.h.b16 %v1324
        %v5229 = vunpack.c.l.b16 %v1325
        %v5230 = vunpack.c.h.b16 %v1325
        %v5231 = vunpack.c.l.b16 %v1326
        %v5232 = vunpack.c.h.b16 %v1326
        %v5233 = vunpack.c.l.b16 %v1327
        %v5234 = vunpack.c.h.b16 %v1327
        %v5235 = vunpack.c.l.b16 %v1328
        %v5236 = vunpack.c.h.b16 %v1328
        %v5237 = vunpack.c.l.b16 %v1329
        %v5238 = vunpack.c.h.b16 %v1329
        %v5239 = vunpack.c.l.b16 %v1330
        %v5240 = vunpack.c.h.b16 %v1330
        %v5241 = vunpack.c.l.b16 %v1331
        %v5242 = vunpack.c.h.b16 %v1331
        %v5243 = vunpack.c.l.b16 %v1332
        %v5244 = vunpack.c.h.b16 %v1332
        %v5245 = vunpack.c.l.b16 %v1333
        %v5246 = vunpack.c.h.b16 %v1333
        %v5247 = vunpack.c.l.b16 %v1334
        %v5248 = vunpack.c.h.b16 %v1334
        %v5249 = vunpack.c.l.b16 %v1335
        %v5250 = vunpack.c.h.b16 %v1335
        %v5251 = vunpack.c.l.b16 %v1336
        %v5252 = vunpack.c.h.b16 %v1336
        %v5253 = vunpack.c.l.b16 %v1337
        %v5254 = vunpack.c.h.b16 %v1337
        %v5255 = vunpack.c.l.b16 %v1338
        %v5256 = vunpack.c.h.b16 %v1338
        %v5257 = vunpack.c.l.b16 %v1339
        %v5258 = vunpack.c.h.b16 %v1339
        %v5259 = vunpack.c.l.b16 %v1340
        %v5260 = vunpack.c.h.b16 %v1340
        %v5261 = vunpack.c.l.b16 %v1341
        %v5262 = vunpack.c.h.b16 %v1341
        %v5263 = vunpack.c.l.b16 %v1342
        %v5264 = vunpack.c.h.b16 %v1342
        %v5265 = vunpack.c.l.b16 %v1343
        %v5266 = vunpack.c.h.b16 %v1343
        %v5267 = vunpack.c.l.b16 %v1344
        %v5268 = vunpack.c.h.b16 %v1344
        %v5269 = vunpack.c.l.b16 %v1345
        %v5270 = vunpack.c.h.b16 %v1345
        %v5271 = vunpack.c.l.b16 %v1346
        %v5272 = vunpack.c.h.b16 %v1346
        %v5273 = vunpack.c.l.b16 %v1347
        %v5274 = vunpack.c.h.b16 %v1347
        %v5275 = vunpack.c.l.b16 %v1348
        %v5276 = vunpack.c.h.b16 %v1348
        %v5277 = vunpack.c.l.b16 %v1349
        %v5278 = vunpack.c.h.b16 %v1349
        %v5279 = vunpack.c.l.b16 %v1350
        %v5280 = vunpack.c.h.b16 %v1350
        %v5281 = vunpack.c.l.b16 %v1351
        %v5282 = vunpack.c.h.b16 %v1351
        %v5283 = vunpack.c.l.b16 %v1352
        %v5284 = vunpack.c.h.b16 %v1352
        %v5285 = vunpack.c.l.b16 %v1353
        %v5286 = vunpack.c.h.b16 %v1353
        %v5287 = vunpack.c.l.b16 %v1354
        %v5288 = vunpack.c.h.b16 %v1354
        %v5289 = vunpack.c.l.b16 %v1355
        %v5290 = vunpack.c.h.b16 %v1355
        %v5291 = vunpack.c.l.b16 %v1356
        %v5292 = vunpack.c.h.b16 %v1356
        %v5293 = vunpack.c.l.b16 %v1357
        %v5294 = vunpack.c.h.b16 %v1357
        %v5295 = vunpack.c.l.b16 %v1358
        %v5296 = vunpack.c.h.b16 %v1358
        %v5297 = vunpack.c.l.b16 %v1359
        %v5298 = vunpack.c.h.b16 %v1359
        %v5299 = vunpack.c.l.b16 %v1360
        %v5300 = vunpack.c.h.b16 %v1360
        %v5301 = vunpack.c.l.b16 %v1361
        %v5302 = vunpack.c.h.b16 %v1361
        %v5303 = vunpack.c.l.b16 %v1362
        %v5304 = vunpack.c.h.b16 %v1362
        %v5305 = vunpack.c.l.b16 %v1363
        %v5306 = vunpack.c.h.b16 %v1363
        %v5307 = vunpack.c.l.b16 %v1364
        %v5308 = vunpack.c.h.b16 %v1364
        %v5309 = vunpack.c.l.b16 %v1365
        %v5310 = vunpack.c.h.b16 %v1365
        %v5311 = vunpack.c.l.b16 %v1366
        %v5312 = vunpack.c.h.b16 %v1366
        %v5313 = vunpack.c.l.b16 %v1367
        %v5314 = vunpack.c.h.b16 %v1367
        %v5315 = vunpack.c.l.b16 %v1368
        %v5316 = vunpack.c.h.b16 %v1368
        %v5317 = vunpack.c.l.b16 %v1369
        %v5318 = vunpack.c.h.b16 %v1369
        %v5319 = vunpack.c.l.b16 %v1370
        %v5320 = vunpack.c.h.b16 %v1370
        %v5321 = vunpack.c.l.b16 %v1371
        %v5322 = vunpack.c.h.b16 %v1371
        %v5323 = vunpack.c.l.b16 %v1372
        %v5324 = vunpack.c.h.b16 %v1372
        %v5325 = vunpack.c.l.b16 %v1373
        %v5326 = vunpack.c.h.b16 %v1373
        %v5327 = vunpack.c.l.b16 %v1374
        %v5328 = vunpack.c.h.b16 %v1374
        %v5329 = vunpack.c.l.b16 %v1375
        %v5330 = vunpack.c.h.b16 %v1375
        %v5331 = vunpack.c.l.b16 %v1376
        %v5332 = vunpack.c.h.b16 %v1376
        %v5333 = vunpack.c.l.b16 %v1377
        %v5334 = vunpack.c.h.b16 %v1377
        %v5335 = vunpack.c.l.b16 %v1378
        %v5336 = vunpack.c.h.b16 %v1378
        %v5337 = vunpack.c.l.b16 %v1379
        %v5338 = vunpack.c.h.b16 %v1379
        %v5339 = vunpack.c.l.b16 %v1380
        %v5340 = vunpack.c.h.b16 %v1380
        %v5341 = vunpack.c.l.b16 %v1381
        %v5342 = vunpack.c.h.b16 %v1381
        %v5343 = vunpack.c.l.b16 %v1382
        %v5344 = vunpack.c.h.b16 %v1382
        %v5345 = vunpack.c.l.b16 %v1383
        %v5346 = vunpack.c.h.b16 %v1383
        %v5347 = vunpack.c.l.b16 %v1384
        %v5348 = vunpack.c.h.b16 %v1384
        %v5349 = vunpack.c.l.b16 %v1385
        %v5350 = vunpack.c.h.b16 %v1385
        %v5351 = vunpack.c.l.b16 %v1386
        %v5352 = vunpack.c.h.b16 %v1386
        %v5353 = vunpack.c.l.b16 %v1387
        %v5354 = vunpack.c.h.b16 %v1387
        %v5355 = vunpack.c.l.b16 %v1388
        %v5356 = vunpack.c.h.b16 %v1388
        %v5357 = vunpack.c.l.b16 %v1389
        %v5358 = vunpack.c.h.b16 %v1389
        %v5359 = vunpack.c.l.b16 %v1390
        %v5360 = vunpack.c.h.b16 %v1390
        %v5361 = vunpack.c.l.b16 %v1391
        %v5362 = vunpack.c.h.b16 %v1391
        %v5363 = vunpack.c.l.b16 %v1392
        %v5364 = vunpack.c.h.b16 %v1392
        %v5365 = vunpack.c.l.b16 %v1393
        %v5366 = vunpack.c.h.b16 %v1393
        %v5367 = vunpack.c.l.b16 %v1394
        %v5368 = vunpack.c.h.b16 %v1394
        %v5369 = vunpack.c.l.b16 %v1395
        %v5370 = vunpack.c.h.b16 %v1395
        %v5371 = vunpack.c.l.b16 %v1396
        %v5372 = vunpack.c.h.b16 %v1396
        %v5373 = vunpack.c.l.b16 %v1397
        %v5374 = vunpack.c.h.b16 %v1397
        %v5375 = vunpack.c.l.b16 %v1398
        %v5376 = vunpack.c.h.b16 %v1398
        %v5377 = vunpack.c.l.b16 %v1399
        %v5378 = vunpack.c.h.b16 %v1399
        %v5379 = vunpack.c.l.b16 %v1400
        %v5380 = vunpack.c.h.b16 %v1400
        %v5381 = vunpack.c.l.b16 %v1401
        %v5382 = vunpack.c.h.b16 %v1401
        %v5383 = vunpack.c.l.b16 %v1402
        %v5384 = vunpack.c.h.b16 %v1402
        %v5385 = vunpack.c.l.b16 %v1403
        %v5386 = vunpack.c.h.b16 %v1403
        %v5387 = vunpack.c.l.b16 %v1404
        %v5388 = vunpack.c.h.b16 %v1404
        %v5389 = vunpack.c.l.b16 %v1405
        %v5390 = vunpack.c.h.b16 %v1405
        %v5391 = vunpack.c.l.b16 %v1406
        %v5392 = vunpack.c.h.b16 %v1406
        %v5393 = vunpack.c.l.b16 %v1407
        %v5394 = vunpack.c.h.b16 %v1407
        %v5395 = vunpack.c.l.b16 %v1408
        %v5396 = vunpack.c.h.b16 %v1408
        %v5397 = vunpack.c.l.b16 %v1409
        %v5398 = vunpack.c.h.b16 %v1409
        %v5399 = vunpack.c.l.b16 %v1410
        %v5400 = vunpack.c.h.b16 %v1410
        %v5401 = vunpack.c.l.b16 %v1411
        %v5402 = vunpack.c.h.b16 %v1411
        %v5403 = vunpack.c.l.b16 %v1412
        %v5404 = vunpack.c.h.b16 %v1412
        %v5405 = vunpack.c.l.b16 %v1413
        %v5406 = vunpack.c.h.b16 %v1413
        %v5407 = vunpack.c.l.b16 %v1414
        %v5408 = vunpack.c.h.b16 %v1414
        %v5409 = vunpack.c.l.b16 %v1415
        %v5410 = vunpack.c.h.b16 %v1415
        %v5411 = vunpack.c.l.b16 %v1416
        %v5412 = vunpack.c.h.b16 %v1416
        %v5413 = vunpack.c.l.b16 %v1417
        %v5414 = vunpack.c.h.b16 %v1417
        %v5415 = vunpack.c.l.b16 %v1418
        %v5416 = vunpack.c.h.b16 %v1418
        %v5417 = vunpack.c.l.b16 %v1419
        %v5418 = vunpack.c.h.b16 %v1419
        %v5419 = vunpack.c.l.b16 %v1420
        %v5420 = vunpack.c.h.b16 %v1420
        %v5421 = vunpack.c.l.b16 %v1421
        %v5422 = vunpack.c.h.b16 %v1421
        %v5423 = vunpack.c.l.b16 %v1422
        %v5424 = vunpack.c.h.b16 %v1422
        %v5425 = vunpack.c.l.b16 %v1423
        %v5426 = vunpack.c.h.b16 %v1423
        %v5427 = vunpack.c.l.b16 %v1424
        %v5428 = vunpack.c.h.b16 %v1424
        %v5429 = vunpack.c.l.b16 %v1425
        %v5430 = vunpack.c.h.b16 %v1425
        %v5431 = vunpack.c.l.b16 %v1426
        %v5432 = vunpack.c.h.b16 %v1426
        %v5433 = vunpack.c.l.b16 %v1427
        %v5434 = vunpack.c.h.b16 %v1427
        %v5435 = vunpack.c.l.b16 %v1428
        %v5436 = vunpack.c.h.b16 %v1428
        %v5437 = vunpack.c.l.b16 %v1429
        %v5438 = vunpack.c.h.b16 %v1429
        %v5439 = vunpack.c.l.b16 %v1430
        %v5440 = vunpack.c.h.b16 %v1430
        %v5441 = vunpack.c.l.b16 %v1431
        %v5442 = vunpack.c.h.b16 %v1431
        %v5443 = vunpack.c.l.b16 %v1432
        %v5444 = vunpack.c.h.b16 %v1432
        %v5445 = vunpack.c.l.b16 %v1433
        %v5446 = vunpack.c.h.b16 %v1433
        %v5447 = vunpack.c.l.b16 %v1434
        %v5448 = vunpack.c.h.b16 %v1434
        %v5449 = vunpack.c.l.b16 %v1435
        %v5450 = vunpack.c.h.b16 %v1435
        %v5451 = vunpack.c.l.b16 %v1436
        %v5452 = vunpack.c.h.b16 %v1436
        %v5453 = vunpack.c.l.b16 %v1437
        %v5454 = vunpack.c.h.b16 %v1437
        %v5455 = vunpack.c.l.b16 %v1438
        %v5456 = vunpack.c.h.b16 %v1438
        %v5457 = vunpack.c.l.b16 %v1439
        %v5458 = vunpack.c.h.b16 %v1439
        %v5459 = vunpack.c.l.b16 %v1440
        %v5460 = vunpack.c.h.b16 %v1440
        %v5461 = vunpack.c.l.b16 %v1441
        %v5462 = vunpack.c.h.b16 %v1441
        %v5463 = vunpack.c.l.b16 %v1442
        %v5464 = vunpack.c.h.b16 %v1442
        %v5465 = vunpack.c.l.b16 %v1443
        %v5466 = vunpack.c.h.b16 %v1443
        %v5467 = vunpack.c.l.b16 %v1444
        %v5468 = vunpack.c.h.b16 %v1444
        %v5469 = vunpack.c.l.b16 %v1445
        %v5470 = vunpack.c.h.b16 %v1445
        %v5471 = vunpack.c.l.b16 %v1446
        %v5472 = vunpack.c.h.b16 %v1446
        %v5473 = vunpack.c.l.b16 %v1447
        %v5474 = vunpack.c.h.b16 %v1447
        %v5475 = vunpack.c.l.b16 %v1448
        %v5476 = vunpack.c.h.b16 %v1448
        %v5477 = vunpack.c.l.b16 %v1449
        %v5478 = vunpack.c.h.b16 %v1449
        %v5479 = vunpack.c.l.b16 %v1450
        %v5480 = vunpack.c.h.b16 %v1450
        %v5481 = vunpack.c.l.b16 %v1451
        %v5482 = vunpack.c.h.b16 %v1451
        %v5483 = vunpack.c.l.b16 %v1452
        %v5484 = vunpack.c.h.b16 %v1452
        %v5485 = vunpack.c.l.b16 %v1453
        %v5486 = vunpack.c.h.b16 %v1453
        %v5487 = vunpack.c.l.b16 %v1454
        %v5488 = vunpack.c.h.b16 %v1454
        %v5489 = vunpack.c.l.b16 %v1455
        %v5490 = vunpack.c.h.b16 %v1455
        %v5491 = vunpack.c.l.b16 %v1456
        %v5492 = vunpack.c.h.b16 %v1456
        %v5493 = vunpack.c.l.b16 %v1457
        %v5494 = vunpack.c.h.b16 %v1457
        %v5495 = vunpack.c.l.b16 %v1458
        %v5496 = vunpack.c.h.b16 %v1458
        %v5497 = vunpack.c.l.b16 %v1459
        %v5498 = vunpack.c.h.b16 %v1459
        %v5499 = vunpack.c.l.b16 %v1460
        %v5500 = vunpack.c.h.b16 %v1460
        %v5501 = vunpack.c.l.b16 %v1461
        %v5502 = vunpack.c.h.b16 %v1461
        %v5503 = vunpack.c.l.b16 %v1462
        %v5504 = vunpack.c.h.b16 %v1462
        %v5505 = vunpack.c.l.b16 %v1463
        %v5506 = vunpack.c.h.b16 %v1463
        %v5507 = vunpack.c.l.b16 %v1464
        %v5508 = vunpack.c.h.b16 %v1464
        %v5509 = vunpack.c.l.b16 %v1465
        %v5510 = vunpack.c.h.b16 %v1465
        %v5511 = vunpack.c.l.b16 %v1466
        %v5512 = vunpack.c.h.b16 %v1466
        %v5513 = vunpack.c.l.b16 %v1467
        %v5514 = vunpack.c.h.b16 %v1467
        %v5515 = vunpack.c.l.b16 %v1468
        %v5516 = vunpack.c.h.b16 %v1468
        %v5517 = vunpack.c.l.b16 %v1469
        %v5518 = vunpack.c.h.b16 %v1469
        %v5519 = vunpack.c.l.b16 %v1470
        %v5520 = vunpack.c.h.b16 %v1470
        %v5521 = vunpack.c.l.b16 %v1471
        %v5522 = vunpack.c.h.b16 %v1471
        %v5523 = vunpack.c.l.b16 %v1472
        %v5524 = vunpack.c.h.b16 %v1472
        %v5525 = vunpack.c.l.b16 %v1473
        %v5526 = vunpack.c.h.b16 %v1473
        %v5527 = vunpack.c.l.b16 %v1474
        %v5528 = vunpack.c.h.b16 %v1474
        %v5529 = vunpack.c.l.b16 %v1475
        %v5530 = vunpack.c.h.b16 %v1475
        %v5531 = vunpack.c.l.b16 %v1476
        %v5532 = vunpack.c.h.b16 %v1476
        %v5533 = vunpack.c.l.b16 %v1477
        %v5534 = vunpack.c.h.b16 %v1477
        %v5535 = vunpack.c.l.b16 %v1478
        %v5536 = vunpack.c.h.b16 %v1478
        %v5537 = vunpack.c.l.b16 %v1479
        %v5538 = vunpack.c.h.b16 %v1479
        %v5539 = vunpack.c.l.b16 %v1480
        %v5540 = vunpack.c.h.b16 %v1480
        %v5541 = vunpack.c.l.b16 %v1481
        %v5542 = vunpack.c.h.b16 %v1481
        %v5543 = vunpack.c.l.b16 %v1482
        %v5544 = vunpack.c.h.b16 %v1482
        %v5545 = vunpack.c.l.b16 %v1483
        %v5546 = vunpack.c.h.b16 %v1483
        %v5547 = vunpack.c.l.b16 %v1484
        %v5548 = vunpack.c.h.b16 %v1484
        %v5549 = vunpack.c.l.b16 %v1485
        %v5550 = vunpack.c.h.b16 %v1485
        %v5551 = vunpack.c.l.b16 %v1486
        %v5552 = vunpack.c.h.b16 %v1486
        %v5553 = vunpack.c.l.b16 %v1487
        %v5554 = vunpack.c.h.b16 %v1487
        %v5555 = vunpack.c.l.b16 %v1488
        %v5556 = vunpack.c.h.b16 %v1488
        %v5557 = vunpack.c.l.b16 %v1489
        %v5558 = vunpack.c.h.b16 %v1489
        %v5559 = vunpack.c.l.b16 %v1490
        %v5560 = vunpack.c.h.b16 %v1490
        %v5561 = vunpack.c.l.b16 %v1491
        %v5562 = vunpack.c.h.b16 %v1491
        %v5563 = vunpack.c.l.b16 %v1492
        %v5564 = vunpack.c.h.b16 %v1492
        %v5565 = vunpack.c.l.b16 %v1493
        %v5566 = vunpack.c.h.b16 %v1493
        %v5567 = vunpack.c.l.b16 %v1494
        %v5568 = vunpack.c.h.b16 %v1494
        %v5569 = vunpack.c.l.b16 %v1495
        %v5570 = vunpack.c.h.b16 %v1495
        %v5571 = vunpack.c.l.b16 %v1496
        %v5572 = vunpack.c.h.b16 %v1496
        %v5573 = vunpack.c.l.b16 %v1497
        %v5574 = vunpack.c.h.b16 %v1497
        %v5575 = vunpack.c.l.b16 %v1498
        %v5576 = vunpack.c.h.b16 %v1498
        %v5577 = vunpack.c.l.b16 %v1499
        %v5578 = vunpack.c.h.b16 %v1499
        %v5579 = vunpack.c.l.b16 %v1500
        %v5580 = vunpack.c.h.b16 %v1500
        %v5581 = vunpack.c.l.b16 %v1501
        %v5582 = vunpack.c.h.b16 %v1501
        %v5583 = vunpack.c.l.b16 %v1502
        %v5584 = vunpack.c.h.b16 %v1502
        %v5585 = vunpack.c.l.b16 %v1503
        %v5586 = vunpack.c.h.b16 %v1503
        %v5587 = vunpack.c.l.b16 %v1504
        %v5588 = vunpack.c.h.b16 %v1504
        %v5589 = vunpack.c.l.b16 %v1505
        %v5590 = vunpack.c.h.b16 %v1505
        %v5591 = vunpack.c.l.b16 %v1506
        %v5592 = vunpack.c.h.b16 %v1506
        %v5593 = vunpack.c.l.b16 %v1507
        %v5594 = vunpack.c.h.b16 %v1507
        %v5595 = vunpack.c.l.b16 %v1508
        %v5596 = vunpack.c.h.b16 %v1508
        %v5597 = vunpack.c.l.b16 %v1509
        %v5598 = vunpack.c.h.b16 %v1509
        %v5599 = vunpack.c.l.b16 %v1510
        %v5600 = vunpack.c.h.b16 %v1510
        %v5601 = vunpack.c.l.b16 %v1511
        %v5602 = vunpack.c.h.b16 %v1511
        %v5603 = vunpack.c.l.b16 %v1512
        %v5604 = vunpack.c.h.b16 %v1512
        %v5605 = vunpack.c.l.b16 %v1513
        %v5606 = vunpack.c.h.b16 %v1513
        %v5607 = vunpack.c.l.b16 %v1514
        %v5608 = vunpack.c.h.b16 %v1514
        %v5609 = vunpack.c.l.b16 %v1515
        %v5610 = vunpack.c.h.b16 %v1515
        %v5611 = vunpack.c.l.b16 %v1516
        %v5612 = vunpack.c.h.b16 %v1516
        %v5613 = vunpack.c.l.b16 %v1517
        %v5614 = vunpack.c.h.b16 %v1517
        %v5615 = vunpack.c.l.b16 %v1518
        %v5616 = vunpack.c.h.b16 %v1518
        %v5617 = vunpack.c.l.b16 %v1519
        %v5618 = vunpack.c.h.b16 %v1519
        %v5619 = vunpack.c.l.b16 %v1520
        %v5620 = vunpack.c.h.b16 %v1520
        %v5621 = vunpack.c.l.b16 %v1521
        %v5622 = vunpack.c.h.b16 %v1521
        %v5623 = vunpack.c.l.b16 %v1522
        %v5624 = vunpack.c.h.b16 %v1522
        %v5625 = vunpack.c.l.b16 %v1523
        %v5626 = vunpack.c.h.b16 %v1523
        %v5627 = vunpack.c.l.b16 %v1524
        %v5628 = vunpack.c.h.b16 %v1524
        %v5629 = vunpack.c.l.b16 %v1525
        %v5630 = vunpack.c.h.b16 %v1525
        %v5631 = vunpack.c.l.b16 %v1526
        %v5632 = vunpack.c.h.b16 %v1526
        %v5633 = vunpack.c.l.b16 %v1527
        %v5634 = vunpack.c.h.b16 %v1527
        %v5635 = vunpack.c.l.b16 %v1528
        %v5636 = vunpack.c.h.b16 %v1528
        %v5637 = vunpack.c.l.b16 %v1529
        %v5638 = vunpack.c.h.b16 %v1529
        %v5639 = vunpack.c.l.b16 %v1530
        %v5640 = vunpack.c.h.b16 %v1530
        %v5641 = vunpack.c.l.b16 %v1531
        %v5642 = vunpack.c.h.b16 %v1531
        %v5643 = vunpack.c.l.b16 %v1532
        %v5644 = vunpack.c.h.b16 %v1532
        %v5645 = vunpack.c.l.b16 %v1533
        %v5646 = vunpack.c.h.b16 %v1533
        %v5647 = vunpack.c.l.b16 %v1534
        %v5648 = vunpack.c.h.b16 %v1534
        %v5649 = vunpack.c.l.b16 %v1535
        %v5650 = vunpack.c.h.b16 %v1535
        %v5651 = vunpack.c.l.b16 %v1536
        %v5652 = vunpack.c.h.b16 %v1536
        %v5653 = vunpack.c.l.b16 %v1537
        %v5654 = vunpack.c.h.b16 %v1537
        %v5655 = vunpack.c.l.b16 %v1538
        %v5656 = vunpack.c.h.b16 %v1538
        %v5657 = vunpack.c.l.b16 %v1539
        %v5658 = vunpack.c.h.b16 %v1539
        %v5659 = vunpack.c.l.b16 %v1540
        %v5660 = vunpack.c.h.b16 %v1540
        %v5661 = vunpack.c.l.b16 %v1541
        %v5662 = vunpack.c.h.b16 %v1541
        %v5663 = vunpack.c.l.b16 %v1542
        %v5664 = vunpack.c.h.b16 %v1542
        %v5665 = vunpack.c.l.b16 %v1543
        %v5666 = vunpack.c.h.b16 %v1543
        %v5667 = vunpack.c.l.b16 %v1544
        %v5668 = vunpack.c.h.b16 %v1544
        %v5669 = vunpack.c.l.b16 %v1545
        %v5670 = vunpack.c.h.b16 %v1545
        %v5671 = vunpack.c.l.b16 %v1546
        %v5672 = vunpack.c.h.b16 %v1546
        %v5673 = vunpack.c.l.b16 %v1547
        %v5674 = vunpack.c.h.b16 %v1547
        %v5675 = vunpack.c.l.b16 %v1548
        %v5676 = vunpack.c.h.b16 %v1548
        %v5677 = vunpack.c.l.b16 %v1549
        %v5678 = vunpack.c.h.b16 %v1549
        %v5679 = vunpack.c.l.b16 %v1550
        %v5680 = vunpack.c.h.b16 %v1550
        %v5681 = vunpack.c.l.b16 %v1551
        %v5682 = vunpack.c.h.b16 %v1551
        %v5683 = vunpack.c.l.b16 %v1552
        %v5684 = vunpack.c.h.b16 %v1552
        %v5685 = vunpack.c.l.b16 %v1553
        %v5686 = vunpack.c.h.b16 %v1553
        %v5687 = vunpack.c.l.b16 %v1554
        %v5688 = vunpack.c.h.b16 %v1554
        %v5689 = vunpack.c.l.b16 %v1555
        %v5690 = vunpack.c.h.b16 %v1555
        %v5691 = vunpack.c.l.b16 %v1556
        %v5692 = vunpack.c.h.b16 %v1556
        %v5693 = vunpack.c.l.b16 %v1557
        %v5694 = vunpack.c.h.b16 %v1557
        %v5695 = vunpack.c.l.b16 %v1558
        %v5696 = vunpack.c.h.b16 %v1558
        %v5697 = vunpack.c.l.b16 %v1559
        %v5698 = vunpack.c.h.b16 %v1559
        %v5699 = vunpack.c.l.b16 %v1560
        %v5700 = vunpack.c.h.b16 %v1560
        %v5701 = vunpack.c.l.b16 %v1561
        %v5702 = vunpack.c.h.b16 %v1561
        %v5703 = vunpack.c.l.b16 %v1562
        %v5704 = vunpack.c.h.b16 %v1562
        %v5705 = vunpack.c.l.b16 %v1563
        %v5706 = vunpack.c.h.b16 %v1563
        %v5707 = vunpack.c.l.b16 %v1564
        %v5708 = vunpack.c.h.b16 %v1564
        %v5709 = vunpack.c.l.b16 %v1565
        %v5710 = vunpack.c.h.b16 %v1565
        %v5711 = vunpack.c.l.b16 %v1566
        %v5712 = vunpack.c.h.b16 %v1566
        %v5713 = vunpack.c.l.b16 %v1567
        %v5714 = vunpack.c.h.b16 %v1567
        %v5715 = vunpack.c.l.b16 %v1568
        %v5716 = vunpack.c.h.b16 %v1568
        %v5717 = vunpack.c.l.b16 %v1569
        %v5718 = vunpack.c.h.b16 %v1569
        %v5719 = vunpack.c.l.b16 %v1570
        %v5720 = vunpack.c.h.b16 %v1570
        %v5721 = vunpack.c.l.b16 %v1571
        %v5722 = vunpack.c.h.b16 %v1571
        %v5723 = vunpack.c.l.b16 %v1572
        %v5724 = vunpack.c.h.b16 %v1572
        %v5725 = vunpack.c.l.b16 %v1573
        %v5726 = vunpack.c.h.b16 %v1573
        %v5727 = vunpack.c.l.b16 %v1574
        %v5728 = vunpack.c.h.b16 %v1574
        %v5729 = vunpack.c.l.b16 %v1575
        %v5730 = vunpack.c.h.b16 %v1575
        %v5731 = vunpack.c.l.b16 %v1576
        %v5732 = vunpack.c.h.b16 %v1576
        %v5733 = vunpack.c.l.b16 %v1577
        %v5734 = vunpack.c.h.b16 %v1577
        %v5735 = vunpack.c.l.b16 %v1578
        %v5736 = vunpack.c.h.b16 %v1578
        %v5737 = vunpack.c.l.b16 %v1579
        %v5738 = vunpack.c.h.b16 %v1579
        %v5739 = vunpack.c.l.b16 %v1580
        %v5740 = vunpack.c.h.b16 %v1580
        %v5741 = vunpack.c.l.b16 %v1581
        %v5742 = vunpack.c.h.b16 %v1581
        %v5743 = vunpack.c.l.b16 %v1582
        %v5744 = vunpack.c.h.b16 %v1582
        %v5745 = vunpack.c.l.b16 %v1583
        %v5746 = vunpack.c.h.b16 %v1583
        %v5747 = vunpack.c.l.b16 %v1584
        %v5748 = vunpack.c.h.b16 %v1584
        %v5749 = vunpack.c.l.b16 %v1585
        %v5750 = vunpack.c.h.b16 %v1585
        %v5751 = vunpack.c.l.b16 %v1586
        %v5752 = vunpack.c.h.b16 %v1586
        %v5753 = vunpack.c.l.b16 %v1587
        %v5754 = vunpack.c.h.b16 %v1587
        %v5755 = vunpack.c.l.b16 %v1588
        %v5756 = vunpack.c.h.b16 %v1588
        %v5757 = vunpack.c.l.b16 %v1589
        %v5758 = vunpack.c.h.b16 %v1589
        %v5759 = vunpack.c.l.b16 %v1590
        %v5760 = vunpack.c.h.b16 %v1590
        %v5761 = vunpack.c.l.b16 %v1591
        %v5762 = vunpack.c.h.b16 %v1591
        %v5763 = vunpack.c.l.b16 %v1592
        %v5764 = vunpack.c.h.b16 %v1592
        %v5765 = vunpack.c.l.b16 %v1593
        %v5766 = vunpack.c.h.b16 %v1593
        %v5767 = vunpack.c.l.b16 %v1594
        %v5768 = vunpack.c.h.b16 %v1594
        %v5769 = vunpack.c.l.b16 %v1595
        %v5770 = vunpack.c.h.b16 %v1595
        %v5771 = vunpack.c.l.b16 %v1596
        %v5772 = vunpack.c.h.b16 %v1596
        %v5773 = vunpack.c.l.b16 %v1597
        %v5774 = vunpack.c.h.b16 %v1597
        %v5775 = vunpack.c.l.b16 %v1598
        %v5776 = vunpack.c.h.b16 %v1598
        %v5777 = vunpack.c.l.b16 %v1599
        %v5778 = vunpack.c.h.b16 %v1599
        %v5779 = vunpack.c.l.b16 %v1600
        %v5780 = vunpack.c.h.b16 %v1600
        %v5781 = vunpack.c.l.b16 %v1601
        %v5782 = vunpack.c.h.b16 %v1601
        %v5783 = vunpack.c.l.b16 %v1602
        %v5784 = vunpack.c.h.b16 %v1602
        %v5785 = vunpack.c.l.b16 %v1603
        %v5786 = vunpack.c.h.b16 %v1603
        %v5787 = vunpack.c.l.b16 %v1604
        %v5788 = vunpack.c.h.b16 %v1604
        %v5789 = vunpack.c.l.b16 %v1605
        %v5790 = vunpack.c.h.b16 %v1605
        %v5791 = vunpack.c.l.b16 %v1606
        %v5792 = vunpack.c.h.b16 %v1606
        %v5793 = vunpack.c.l.b16 %v1607
        %v5794 = vunpack.c.h.b16 %v1607
        %v5795 = vunpack.c.l.b16 %v1608
        %v5796 = vunpack.c.h.b16 %v1608
        %v5797 = vunpack.c.l.b16 %v1609
        %v5798 = vunpack.c.h.b16 %v1609
        %v5799 = vunpack.c.l.b16 %v1610
        %v5800 = vunpack.c.h.b16 %v1610
        %v5801 = vunpack.c.l.b16 %v1611
        %v5802 = vunpack.c.h.b16 %v1611
        %v5803 = vunpack.c.l.b16 %v1612
        %v5804 = vunpack.c.h.b16 %v1612
        %v5805 = vunpack.c.l.b16 %v1613
        %v5806 = vunpack.c.h.b16 %v1613
        %v5807 = vunpack.c.l.b16 %v1614
        %v5808 = vunpack.c.h.b16 %v1614
        %v5809 = vunpack.c.l.b16 %v1615
        %v5810 = vunpack.c.h.b16 %v1615
        %v5811 = vunpack.c.l.b16 %v1616
        %v5812 = vunpack.c.h.b16 %v1616
        %v5813 = vunpack.c.l.b16 %v1617
        %v5814 = vunpack.c.h.b16 %v1617
        %v5815 = vunpack.c.l.b16 %v1618
        %v5816 = vunpack.c.h.b16 %v1618
        %v5817 = vunpack.c.l.b16 %v1619
        %v5818 = vunpack.c.h.b16 %v1619
        %v5819 = vunpack.c.l.b16 %v1620
        %v5820 = vunpack.c.h.b16 %v1620
        %v5821 = vunpack.c.l.b16 %v1621
        %v5822 = vunpack.c.h.b16 %v1621
        %v5823 = vunpack.c.l.b16 %v1622
        %v5824 = vunpack.c.h.b16 %v1622
        %v5825 = vunpack.c.l.b16 %v1623
        %v5826 = vunpack.c.h.b16 %v1623
        %v5827 = vunpack.c.l.b16 %v1624
        %v5828 = vunpack.c.h.b16 %v1624
        %v5829 = vunpack.c.l.b16 %v1625
        %v5830 = vunpack.c.h.b16 %v1625
        %v5831 = vunpack.c.l.b16 %v1626
        %v5832 = vunpack.c.h.b16 %v1626
        %v5833 = vunpack.c.l.b16 %v1627
        %v5834 = vunpack.c.h.b16 %v1627
        %v5835 = vunpack.c.l.b16 %v1628
        %v5836 = vunpack.c.h.b16 %v1628
        %v5837 = vunpack.c.l.b16 %v1629
        %v5838 = vunpack.c.h.b16 %v1629
        %v5839 = vunpack.c.l.b16 %v1630
        %v5840 = vunpack.c.h.b16 %v1630
        %v5841 = vunpack.c.l.b16 %v1631
        %v5842 = vunpack.c.h.b16 %v1631
        %v5843 = vunpack.c.l.b16 %v1632
        %v5844 = vunpack.c.h.b16 %v1632
        %v5845 = vunpack.c.l.b16 %v1633
        %v5846 = vunpack.c.h.b16 %v1633
        %v5847 = vunpack.c.l.b16 %v1634
        %v5848 = vunpack.c.h.b16 %v1634
        %v5849 = vunpack.c.l.b16 %v1635
        %v5850 = vunpack.c.h.b16 %v1635
        %v5851 = vunpack.c.l.b16 %v1636
        %v5852 = vunpack.c.h.b16 %v1636
        %v5853 = vunpack.c.l.b16 %v1637
        %v5854 = vunpack.c.h.b16 %v1637
        %v5855 = vunpack.c.l.b16 %v1638
        %v5856 = vunpack.c.h.b16 %v1638
        %v5857 = vunpack.c.l.b16 %v1639
        %v5858 = vunpack.c.h.b16 %v1639
        %v5859 = vunpack.c.l.b16 %v1640
        %v5860 = vunpack.c.h.b16 %v1640
        %v5861 = vunpack.c.l.b16 %v1641
        %v5862 = vunpack.c.h.b16 %v1641
        %v5863 = vunpack.c.l.b16 %v1642
        %v5864 = vunpack.c.h.b16 %v1642
        %v5865 = vunpack.c.l.b16 %v1643
        %v5866 = vunpack.c.h.b16 %v1643
        %v5867 = vunpack.c.l.b16 %v1644
        %v5868 = vunpack.c.h.b16 %v1644
        %v5869 = vunpack.c.l.b16 %v1645
        %v5870 = vunpack.c.h.b16 %v1645
        %v5871 = vunpack.c.l.b16 %v1646
        %v5872 = vunpack.c.h.b16 %v1646
        %v5873 = vunpack.c.l.b16 %v1647
        %v5874 = vunpack.c.h.b16 %v1647
        %v5875 = vunpack.c.l.b16 %v1648
        %v5876 = vunpack.c.h.b16 %v1648
        %v5877 = vunpack.c.l.b16 %v1649
        %v5878 = vunpack.c.h.b16 %v1649
        %v5879 = vunpack.c.l.b16 %v1650
        %v5880 = vunpack.c.h.b16 %v1650
        %v5881 = vunpack.c.l.b16 %v1651
        %v5882 = vunpack.c.h.b16 %v1651
        %v5883 = vunpack.c.l.b16 %v1652
        %v5884 = vunpack.c.h.b16 %v1652
        %v5885 = vunpack.c.l.b16 %v1653
        %v5886 = vunpack.c.h.b16 %v1653
        %v5887 = vunpack.c.l.b16 %v1654
        %v5888 = vunpack.c.h.b16 %v1654
        %v5889 = vunpack.c.l.b16 %v1655
        %v5890 = vunpack.c.h.b16 %v1655
        %v5891 = vunpack.c.l.b16 %v1656
        %v5892 = vunpack.c.h.b16 %v1656
        %v5893 = vunpack.c.l.b16 %v1657
        %v5894 = vunpack.c.h.b16 %v1657
        %v5895 = vunpack.c.l.b16 %v1658
        %v5896 = vunpack.c.h.b16 %v1658
        %v5897 = vunpack.c.l.b16 %v1659
        %v5898 = vunpack.c.h.b16 %v1659
        %v5899 = vunpack.c.l.b16 %v1660
        %v5900 = vunpack.c.h.b16 %v1660
        %v5901 = vunpack.c.l.b16 %v1661
        %v5902 = vunpack.c.h.b16 %v1661
        %v5903 = vunpack.c.l.b16 %v1662
        %v5904 = vunpack.c.h.b16 %v1662
        %v5905 = vunpack.c.l.b16 %v1663
        %v5906 = vunpack.c.h.b16 %v1663
        %v5907 = vunpack.c.l.b16 %v1664
        %v5908 = vunpack.c.h.b16 %v1664
        %v5909 = vunpack.c.l.b16 %v1665
        %v5910 = vunpack.c.h.b16 %v1665
        %v5911 = vunpack.c.l.b16 %v1666
        %v5912 = vunpack.c.h.b16 %v1666
        %v5913 = vunpack.c.l.b16 %v1667
        %v5914 = vunpack.c.h.b16 %v1667
        %v5915 = vunpack.c.l.b16 %v1668
        %v5916 = vunpack.c.h.b16 %v1668
        %v5917 = vunpack.c.l.b16 %v1669
        %v5918 = vunpack.c.h.b16 %v1669
        %v5919 = vunpack.c.l.b16 %v1670
        %v5920 = vunpack.c.h.b16 %v1670
        %v5921 = vunpack.c.l.b16 %v1671
        %v5922 = vunpack.c.h.b16 %v1671
        %v5923 = vunpack.c.l.b16 %v1672
        %v5924 = vunpack.c.h.b16 %v1672
        %v5925 = vunpack.c.l.b16 %v1673
        %v5926 = vunpack.c.h.b16 %v1673
        %v5927 = vunpack.c.l.b16 %v1674
        %v5928 = vunpack.c.h.b16 %v1674
        %v5929 = vunpack.c.l.b16 %v1675
        %v5930 = vunpack.c.h.b16 %v1675
        %v5931 = vunpack.c.l.b16 %v1676
        %v5932 = vunpack.c.h.b16 %v1676
        %v5933 = vunpack.c.l.b16 %v1677
        %v5934 = vunpack.c.h.b16 %v1677
        %v5935 = vunpack.c.l.b16 %v1678
        %v5936 = vunpack.c.h.b16 %v1678
        %v5937 = vunpack.c.l.b16 %v1679
        %v5938 = vunpack.c.h.b16 %v1679
        %v5939 = vunpack.c.l.b16 %v1680
        %v5940 = vunpack.c.h.b16 %v1680
        %v5941 = vunpack.c.l.b16 %v1681
        %v5942 = vunpack.c.h.b16 %v1681
        %v5943 = vunpack.c.l.b16 %v1682
        %v5944 = vunpack.c.h.b16 %v1682
        %v5945 = vunpack.c.l.b16 %v1683
        %v5946 = vunpack.c.h.b16 %v1683
        %v5947 = vunpack.c.l.b16 %v1684
        %v5948 = vunpack.c.h.b16 %v1684
        %v5949 = vunpack.c.l.b16 %v1685
        %v5950 = vunpack.c.h.b16 %v1685
        %v5951 = vunpack.c.l.b16 %v1686
        %v5952 = vunpack.c.h.b16 %v1686
        %v5953 = vunpack.c.l.b16 %v1687
        %v5954 = vunpack.c.h.b16 %v1687
        %v5955 = vunpack.c.l.b16 %v1688
        %v5956 = vunpack.c.h.b16 %v1688
        %v5957 = vunpack.c.l.b16 %v1689
        %v5958 = vunpack.c.h.b16 %v1689
        %v5959 = vunpack.c.l.b16 %v1690
        %v5960 = vunpack.c.h.b16 %v1690
        %v5961 = vunpack.c.l.b16 %v1691
        %v5962 = vunpack.c.h.b16 %v1691
        %v5963 = vunpack.c.l.b16 %v1692
        %v5964 = vunpack.c.h.b16 %v1692
        %v5965 = vunpack.c.l.b16 %v1693
        %v5966 = vunpack.c.h.b16 %v1693
        %v5967 = vunpack.c.l.b16 %v1694
        %v5968 = vunpack.c.h.b16 %v1694
        %v5969 = vunpack.c.l.b16 %v1695
        %v5970 = vunpack.c.h.b16 %v1695
        %v5971 = vunpack.c.l.b16 %v1696
        %v5972 = vunpack.c.h.b16 %v1696
        %v5973 = vunpack.c.l.b16 %v1697
        %v5974 = vunpack.c.h.b16 %v1697
        %v5975 = vunpack.c.l.b16 %v1698
        %v5976 = vunpack.c.h.b16 %v1698
        %v5977 = vunpack.c.l.b16 %v1699
        %v5978 = vunpack.c.h.b16 %v1699
        %v5979 = vunpack.c.l.b16 %v1700
        %v5980 = vunpack.c.h.b16 %v1700
        %v5981 = vunpack.c.l.b16 %v1701
        %v5982 = vunpack.c.h.b16 %v1701
        %v5983 = vunpack.c.l.b16 %v1702
        %v5984 = vunpack.c.h.b16 %v1702
        %v5985 = vunpack.c.l.b16 %v1703
        %v5986 = vunpack.c.h.b16 %v1703
        %v5987 = vunpack.c.l.b16 %v1704
        %v5988 = vunpack.c.h.b16 %v1704
        %v5989 = vunpack.c.l.b16 %v1705
        %v5990 = vunpack.c.h.b16 %v1705
        %v5991 = vunpack.c.l.b16 %v1706
        %v5992 = vunpack.c.h.b16 %v1706
        %v5993 = vunpack.c.l.b16 %v1707
        %v5994 = vunpack.c.h.b16 %v1707
        %v5995 = vunpack.c.l.b16 %v1708
        %v5996 = vunpack.c.h.b16 %v1708
        %v5997 = vunpack.c.l.b16 %v1709
        %v5998 = vunpack.c.h.b16 %v1709
        %v5999 = vunpack.c.l.b16 %v1710
        %v6000 = vunpack.c.h.b16 %v1710
        %v6001 = vunpack.c.l.b16 %v1711
        %v6002 = vunpack.c.h.b16 %v1711
        %v6003 = vunpack.c.l.b16 %v1712
        %v6004 = vunpack.c.h.b16 %v1712
        %v6005 = vunpack.c.l.b16 %v1713
        %v6006 = vunpack.c.h.b16 %v1713
        %v6007 = vunpack.c.l.b16 %v1714
        %v6008 = vunpack.c.h.b16 %v1714
        %v6009 = vunpack.c.l.b16 %v1715
        %v6010 = vunpack.c.h.b16 %v1715
        %v6011 = vunpack.c.l.b16 %v1716
        %v6012 = vunpack.c.h.b16 %v1716
        %v6013 = vunpack.c.l.b16 %v1717
        %v6014 = vunpack.c.h.b16 %v1717
        %v6015 = vunpack.c.l.b16 %v1718
        %v6016 = vunpack.c.h.b16 %v1718
        %v6017 = vunpack.c.l.b16 %v1719
        %v6018 = vunpack.c.h.b16 %v1719
        %v6019 = vunpack.c.l.b16 %v1720
        %v6020 = vunpack.c.h.b16 %v1720
        %v6021 = vunpack.c.l.b16 %v1721
        %v6022 = vunpack.c.h.b16 %v1721
        %v6023 = vunpack.c.l.b16 %v1722
        %v6024 = vunpack.c.h.b16 %v1722
        %v6025 = vunpack.c.l.b16 %v1723
        %v6026 = vunpack.c.h.b16 %v1723
        %v6027 = vunpack.c.l.b16 %v1724
        %v6028 = vunpack.c.h.b16 %v1724
        %v6029 = vunpack.c.l.b16 %v1725
        %v6030 = vunpack.c.h.b16 %v1725
        %v6031 = vunpack.c.l.b16 %v1726
        %v6032 = vunpack.c.h.b16 %v1726
        %v6033 = vunpack.c.l.b16 %v1727
        %v6034 = vunpack.c.h.b16 %v1727
        %v6035 = vunpack.c.l.b16 %v1728
        %v6036 = vunpack.c.h.b16 %v1728
        %v6037 = vunpack.c.l.b16 %v1729
        %v6038 = vunpack.c.h.b16 %v1729
        %v6039 = vunpack.c.l.b16 %v1730
        %v6040 = vunpack.c.h.b16 %v1730
        %v6041 = vunpack.c.l.b16 %v1731
        %v6042 = vunpack.c.h.b16 %v1731
        %v6043 = vunpack.c.l.b16 %v1732
        %v6044 = vunpack.c.h.b16 %v1732
        %v6045 = vunpack.c.l.b16 %v1733
        %v6046 = vunpack.c.h.b16 %v1733
        %v6047 = vunpack.c.l.b16 %v1734
        %v6048 = vunpack.c.h.b16 %v1734
        %v6049 = vunpack.c.l.b16 %v1735
        %v6050 = vunpack.c.h.b16 %v1735
        %v6051 = vunpack.c.l.b16 %v1736
        %v6052 = vunpack.c.h.b16 %v1736
        %v6053 = vunpack.c.l.b16 %v1737
        %v6054 = vunpack.c.h.b16 %v1737
        %v6055 = vunpack.c.l.b16 %v1738
        %v6056 = vunpack.c.h.b16 %v1738
        %v6057 = vunpack.c.l.b16 %v1739
        %v6058 = vunpack.c.h.b16 %v1739
        %v6059 = vunpack.c.l.b16 %v1740
        %v6060 = vunpack.c.h.b16 %v1740
        %v6061 = vunpack.c.l.b16 %v1741
        %v6062 = vunpack.c.h.b16 %v1741
        %v6063 = vunpack.c.l.b16 %v1742
        %v6064 = vunpack.c.h.b16 %v1742
        %v6065 = vunpack.c.l.b16 %v1743
        %v6066 = vunpack.c.h.b16 %v1743
        %v6067 = vunpack.c.l.b16 %v1744
        %v6068 = vunpack.c.h.b16 %v1744
        %v6069 = vunpack.c.l.b16 %v1745
        %v6070 = vunpack.c.h.b16 %v1745
        %v6071 = vunpack.c.l.b16 %v1746
        %v6072 = vunpack.c.h.b16 %v1746
        %v6073 = vunpack.c.l.b16 %v1747
        %v6074 = vunpack.c.h.b16 %v1747
        %v6075 = vunpack.c.l.b16 %v1748
        %v6076 = vunpack.c.h.b16 %v1748
        %v6077 = vunpack.c.l.b16 %v1749
        %v6078 = vunpack.c.h.b16 %v1749
        %v6079 = vunpack.c.l.b16 %v1750
        %v6080 = vunpack.c.h.b16 %v1750
        %v6081 = vunpack.c.l.b16 %v1751
        %v6082 = vunpack.c.h.b16 %v1751
        %v6083 = vunpack.c.l.b16 %v1752
        %v6084 = vunpack.c.h.b16 %v1752
        %v6085 = vunpack.c.l.b16 %v1753
        %v6086 = vunpack.c.h.b16 %v1753
        %v6087 = vunpack.c.l.b16 %v1754
        %v6088 = vunpack.c.h.b16 %v1754
        %v6089 = vunpack.c.l.b16 %v1755
        %v6090 = vunpack.c.h.b16 %v1755
        %v6091 = vunpack.c.l.b16 %v1756
        %v6092 = vunpack.c.h.b16 %v1756
        %v6093 = vunpack.c.l.b16 %v1757
        %v6094 = vunpack.c.h.b16 %v1757
        %v6095 = vunpack.c.l.b16 %v1758
        %v6096 = vunpack.c.h.b16 %v1758
        %v6097 = vunpack.c.l.b16 %v1759
        %v6098 = vunpack.c.h.b16 %v1759
        %v6099 = vpack.c.b16 %v3601, %v3599
        %v6100 = vpack.c.b16 %v3602, %v3600
        %v6101 = vpack.c.b16 %v3605, %v3603
        %v6102 = vpack.c.b16 %v3606, %v3604
        %v6103 = vpack.c.b16 %v3609, %v3607
        %v6104 = vpack.c.b16 %v3610, %v3608
        %v6105 = vpack.c.b16 %v3613, %v3611
        %v6106 = vpack.c.b16 %v3614, %v3612
        %v6107 = vpack.c.b16 %v3617, %v3615
        %v6108 = vpack.c.b16 %v3618, %v3616
        %v6109 = vpack.c.b16 %v3621, %v3619
        %v6110 = vpack.c.b16 %v3622, %v3620
        %v6111 = vpack.c.b16 %v3625, %v3623
        %v6112 = vpack.c.b16 %v3626, %v3624
        %v6113 = vpack.c.b16 %v3629, %v3627
        %v6114 = vpack.c.b16 %v3630, %v3628
        %v6115 = vpack.c.b16 %v3633, %v3631
        %v6116 = vpack.c.b16 %v3634, %v3632
        %v6117 = vpack.c.b16 %v3637, %v3635
        %v6118 = vpack.c.b16 %v3638, %v3636
        %v6119 = vpack.c.b16 %v3641, %v3639
        %v6120 = vpack.c.b16 %v3642, %v3640
        %v6121 = vpack.c.b16 %v3645, %v3643
        %v6122 = vpack.c.b16 %v3646, %v3644
        %v6123 = vpack.c.b16 %v3649, %v3647
        %v6124 = vpack.c.b16 %v3650, %v3648
        %v6125 = vpack.c.b16 %v3653, %v3651
        %v6126 = vpack.c.b16 %v3654, %v3652
        %v6127 = vpack.c.b16 %v3657, %v3655
        %v6128 = vpack.c.b16 %v3658, %v3656
        %v6129 = vpack.c.b16 %v3661, %v3659
        %v6130 = vpack.c.b16 %v3662, %v3660
        %v6131 = vpack.c.b16 %v3665, %v3663
        %v6132 = vpack.c.b16 %v3666, %v3664
        %v6133 = vpack.c.b16 %v3669, %v3667
        %v6134 = vpack.c.b16 %v3670, %v3668
        %v6135 = vpack.c.b16 %v3673, %v3671
        %v6136 = vpack.c.b16 %v3674, %v3672
        %v6137 = vpack.c.b16 %v3677, %v3675
        %v6138 = vpack.c.b16 %v3678, %v3676
        %v6139 = vpack.c.b16 %v3681, %v3679
        %v6140 = vpack.c.b16 %v3682, %v3680
        %v6141 = vpack.c.b16 %v3685, %v3683
        %v6142 = vpack.c.b16 %v3686, %v3684
        %v6143 = vpack.c.b16 %v3689, %v3687
        %v6144 = vpack.c.b16 %v3690, %v3688
        %v6145 = vpack.c.b16 %v3693, %v3691
        %v6146 = vpack.c.b16 %v3694, %v3692
        %v6147 = vpack.c.b16 %v3697, %v3695
        %v6148 = vpack.c.b16 %v3698, %v3696
        %v6149 = vpack.c.b16 %v3701, %v3699
        %v6150 = vpack.c.b16 %v3702, %v3700
        %v6151 = vpack.c.b16 %v3705, %v3703
        %v6152 = vpack.c.b16 %v3706, %v3704
        %v6153 = vpack.c.b16 %v3709, %v3707
        %v6154 = vpack.c.b16 %v3710, %v3708
        %v6155 = vpack.c.b16 %v3713, %v3711
        %v6156 = vpack.c.b16 %v3714, %v3712
        %v6157 = vpack.c.b16 %v3717, %v3715
        %v6158 = vpack.c.b16 %v3718, %v3716
        %v6159 = vpack.c.b16 %v3721, %v3719
        %v6160 = vpack.c.b16 %v3722, %v3720
        %v6161 = vpack.c.b16 %v3725, %v3723
        %v6162 = vpack.c.b16 %v3726, %v3724
        %v6163 = vpack.c.b16 %v3729, %v3727
        %v6164 = vpack.c.b16 %v3730, %v3728
        %v6165 = vpack.c.b16 %v3733, %v3731
        %v6166 = vpack.c.b16 %v3734, %v3732
        %v6167 = vpack.c.b16 %v3737, %v3735
        %v6168 = vpack.c.b16 %v3738, %v3736
        %v6169 = vpack.c.b16 %v3741, %v3739
        %v6170 = vpack.c.b16 %v3742, %v3740
        %v6171 = vpack.c.b16 %v3745, %v3743
        %v6172 = vpack.c.b16 %v3746, %v3744
        %v6173 = vpack.c.b16 %v3749, %v3747
        %v6174 = vpack.c.b16 %v3750, %v3748
        %v6175 = vpack.c.b16 %v3753, %v3751
        %v6176 = vpack.c.b16 %v3754, %v3752
        %v6177 = vpack.c.b16 %v3757, %v3755
        %v6178 = vpack.c.b16 %v3758, %v3756
        %v6179 = vpack.c.b16 %v3761, %v3759
        %v6180 = vpack.c.b16 %v3762, %v3760
        %v6181 = vpack.c.b16 %v3765, %v3763
        %v6182 = vpack.c.b16 %v3766, %v3764
        %v6183 = vpack.c.b16 %v3769, %v3767
        %v6184 = vpack.c.b16 %v3770, %v3768
        %v6185 = vpack.c.b16 %v3773, %v3771
        %v6186 = vpack.c.b16 %v3774, %v3772
        %v6187 = vpack.c.b16 %v3777, %v3775
        %v6188 = vpack.c.b16 %v3778, %v3776
        %v6189 = vpack.c.b16 %v3781, %v3779
        %v6190 = vpack.c.b16 %v3782, %v3780
        %v6191 = vpack.c.b16 %v3785, %v3783
        %v6192 = vpack.c.b16 %v3786, %v3784
        %v6193 = vpack.c.b16 %v3789, %v3787
        %v6194 = vpack.c.b16 %v3790, %v3788
        %v6195 = vpack.c.b16 %v3793, %v3791
        %v6196 = vpack.c.b16 %v3794, %v3792
        %v6197 = vpack.c.b16 %v3797, %v3795
        %v6198 = vpack.c.b16 %v3798, %v3796
        %v6199 = vpack.c.b16 %v3801, %v3799
        %v6200 = vpack.c.b16 %v3802, %v3800
        %v6201 = vpack.c.b16 %v3805, %v3803
        %v6202 = vpack.c.b16 %v3806, %v3804
        %v6203 = vpack.c.b16 %v3809, %v3807
        %v6204 = vpack.c.b16 %v3810, %v3808
        %v6205 = vpack.c.b16 %v3813, %v3811
        %v6206 = vpack.c.b16 %v3814, %v3812
        %v6207 = vpack.c.b16 %v3817, %v3815
        %v6208 = vpack.c.b16 %v3818, %v3816
        %v6209 = vpack.c.b16 %v3821, %v3819
        %v6210 = vpack.c.b16 %v3822, %v3820
        %v6211 = vpack.c.b16 %v3825, %v3823
        %v6212 = vpack.c.b16 %v3826, %v3824
        %v6213 = vpack.c.b16 %v3829, %v3827
        %v6214 = vpack.c.b16 %v3830, %v3828
        %v6215 = vpack.c.b16 %v3833, %v3831
        %v6216 = vpack.c.b16 %v3834, %v3832
        %v6217 = vpack.c.b16 %v3837, %v3835
        %v6218 = vpack.c.b16 %v3838, %v3836
        %v6219 = vpack.c.b16 %v3841, %v3839
        %v6220 = vpack.c.b16 %v3842, %v3840
        %v6221 = vpack.c.b16 %v3845, %v3843
        %v6222 = vpack.c.b16 %v3846, %v3844
        %v6223 = vpack.c.b16 %v3849, %v3847
        %v6224 = vpack.c.b16 %v3850, %v3848
        %v6225 = vpack.c.b16 %v3853, %v3851
        %v6226 = vpack.c.b16 %v3854, %v3852
        %v6227 = vpack.c.b16 %v3857, %v3855
        %v6228 = vpack.c.b16 %v3858, %v3856
        %v6229 = vpack.c.b16 %v3861, %v3859
        %v6230 = vpack.c.b16 %v3862, %v3860
        %v6231 = vpack.c.b16 %v3865, %v3863
        %v6232 = vpack.c.b16 %v3866, %v3864
        %v6233 = vpack.c.b16 %v3869, %v3867
        %v6234 = vpack.c.b16 %v3870, %v3868
        %v6235 = vpack.c.b16 %v3873, %v3871
        %v6236 = vpack.c.b16 %v3874, %v3872
        %v6237 = vpack.c.b16 %v3877, %v3875
        %v6238 = vpack.c.b16 %v3878, %v3876
        %v6239 = vpack.c.b16 %v3881, %v3879
        %v6240 = vpack.c.b16 %v3882, %v3880
        %v6241 = vpack.c.b16 %v3885, %v3883
        %v6242 = vpack.c.b16 %v3886, %v3884
        %v6243 = vpack.c.b16 %v3889, %v3887
        %v6244 = vpack.c.b16 %v3890, %v3888
        %v6245 = vpack.c.b16 %v3893, %v3891
        %v6246 = vpack.c.b16 %v3894, %v3892
        %v6247 = vpack.c.b16 %v3897, %v3895
        %v6248 = vpack.c.b16 %v3898, %v3896
        %v6249 = vpack.c.b16 %v3901, %v3899
        %v6250 = vpack.c.b16 %v3902, %v3900
        %v6251 = vpack.c.b16 %v3905, %v3903
        %v6252 = vpack.c.b16 %v3906, %v3904
        %v6253 = vpack.c.b16 %v3909, %v3907
        %v6254 = vpack.c.b16 %v3910, %v3908
        %v6255 = vpack.c.b16 %v3913, %v3911
        %v6256 = vpack.c.b16 %v3914, %v3912
        %v6257 = vpack.c.b16 %v3917, %v3915
        %v6258 = vpack.c.b16 %v3918, %v3916
        %v6259 = vpack.c.b16 %v3921, %v3919
        %v6260 = vpack.c.b16 %v3922, %v3920
        %v6261 = vpack.c.b16 %v3925, %v3923
        %v6262 = vpack.c.b16 %v3926, %v3924
        %v6263 = vpack.c.b16 %v3929, %v3927
        %v6264 = vpack.c.b16 %v3930, %v3928
        %v6265 = vpack.c.b16 %v3933, %v3931
        %v6266 = vpack.c.b16 %v3934, %v3932
        %v6267 = vpack.c.b16 %v3937, %v3935
        %v6268 = vpack.c.b16 %v3938, %v3936
        %v6269 = vpack.c.b16 %v3941, %v3939
        %v6270 = vpack.c.b16 %v3942, %v3940
        %v6271 = vpack.c.b16 %v3945, %v3943
        %v6272 = vpack.c.b16 %v3946, %v3944
        %v6273 = vpack.c.b16 %v3949, %v3947
        %v6274 = vpack.c.b16 %v3950, %v3948
        %v6275 = vpack.c.b16 %v3953, %v3951
        %v6276 = vpack.c.b16 %v3954, %v3952
        %v6277 = vpack.c.b16 %v3957, %v3955
        %v6278 = vpack.c.b16 %v3958, %v3956
        %v6279 = vpack.c.b16 %v3961, %v3959
        %v6280 = vpack.c.b16 %v3962, %v3960
        %v6281 = vpack.c.b16 %v3965, %v3963
        %v6282 = vpack.c.b16 %v3966, %v3964
        %v6283 = vpack.c.b16 %v3969, %v3967
        %v6284 = vpack.c.b16 %v3970, %v3968
        %v6285 = vpack.c.b16 %v3973, %v3971
        %v6286 = vpack.c.b16 %v3974, %v3972
        %v6287 = vpack.c.b16 %v3977, %v3975
        %v6288 = vpack.c.b16 %v3978, %v3976
        %v6289 = vpack.c.b16 %v3981, %v3979
        %v6290 = vpack.c.b16 %v3982, %v3980
        %v6291 = vpack.c.b16 %v3985, %v3983
        %v6292 = vpack.c.b16 %v3986, %v3984
        %v6293 = vpack.c.b16 %v3989, %v3987
        %v6294 = vpack.c.b16 %v3990, %v3988
        %v6295 = vpack.c.b16 %v3993, %v3991
        %v6296 = vpack.c.b16 %v3994, %v3992
        %v6297 = vpack.c.b16 %v3997, %v3995
        %v6298 = vpack.c.b16 %v3998, %v3996
        %v6299 = vpack.c.b16 %v4001, %v3999
        %v6300 = vpack.c.b16 %v4002, %v4000
        %v6301 = vpack.c.b16 %v4005, %v4003
        %v6302 = vpack.c.b16 %v4006, %v4004
        %v6303 = vpack.c.b16 %v4009, %v4007
        %v6304 = vpack.c.b16 %v4010, %v4008
        %v6305 = vpack.c.b16 %v4013, %v4011
        %v6306 = vpack.c.b16 %v4014, %v4012
        %v6307 = vpack.c.b16 %v4017, %v4015
        %v6308 = vpack.c.b16 %v4018, %v4016
        %v6309 = vpack.c.b16 %v4021, %v4019
        %v6310 = vpack.c.b16 %v4022, %v4020
        %v6311 = vpack.c.b16 %v4025, %v4023
        %v6312 = vpack.c.b16 %v4026, %v4024
        %v6313 = vpack.c.b16 %v4029, %v4027
        %v6314 = vpack.c.b16 %v4030, %v4028
        %v6315 = vpack.c.b16 %v4033, %v4031
        %v6316 = vpack.c.b16 %v4034, %v4032
        %v6317 = vpack.c.b16 %v4037, %v4035
        %v6318 = vpack.c.b16 %v4038, %v4036
        %v6319 = vpack.c.b16 %v4041, %v4039
        %v6320 = vpack.c.b16 %v4042, %v4040
        %v6321 = vpack.c.b16 %v4045, %v4043
        %v6322 = vpack.c.b16 %v4046, %v4044
        %v6323 = vpack.c.b16 %v4049, %v4047
        %v6324 = vpack.c.b16 %v4050, %v4048
        %v6325 = vpack.c.b16 %v4053, %v4051
        %v6326 = vpack.c.b16 %v4054, %v4052
        %v6327 = vpack.c.b16 %v4057, %v4055
        %v6328 = vpack.c.b16 %v4058, %v4056
        %v6329 = vpack.c.b16 %v4061, %v4059
        %v6330 = vpack.c.b16 %v4062, %v4060
        %v6331 = vpack.c.b16 %v4065, %v4063
        %v6332 = vpack.c.b16 %v4066, %v4064
        %v6333 = vpack.c.b16 %v4069, %v4067
        %v6334 = vpack.c.b16 %v4070, %v4068
        %v6335 = vpack.c.b16 %v4073, %v4071
        %v6336 = vpack.c.b16 %v4074, %v4072
        %v6337 = vpack.c.b16 %v4077, %v4075
        %v6338 = vpack.c.b16 %v4078, %v4076
        %v6339 = vpack.c.b16 %v4081, %v4079
        %v6340 = vpack.c.b16 %v4082, %v4080
        %v6341 = vpack.c.b16 %v4085, %v4083
        %v6342 = vpack.c.b16 %v4086, %v4084
        %v6343 = vpack.c.b16 %v4089, %v4087
        %v6344 = vpack.c.b16 %v4090, %v4088
        %v6345 = vpack.c.b16 %v4093, %v4091
        %v6346 = vpack.c.b16 %v4094, %v4092
        %v6347 = vpack.c.b16 %v4097, %v4095
        %v6348 = vpack.c.b16 %v4098, %v4096
        %v6349 = vpack.c.b16 %v4101, %v4099
        %v6350 = vpack.c.b16 %v4102, %v4100
        %v6351 = vpack.c.b16 %v4105, %v4103
        %v6352 = vpack.c.b16 %v4106, %v4104
        %v6353 = vpack.c.b16 %v4109, %v4107
        %v6354 = vpack.c.b16 %v4110, %v4108
        %v6355 = vpack.c.b16 %v4113, %v4111
        %v6356 = vpack.c.b16 %v4114, %v4112
        %v6357 = vpack.c.b16 %v4117, %v4115
        %v6358 = vpack.c.b16 %v4118, %v4116
        %v6359 = vpack.c.b16 %v4121, %v4119
        %v6360 = vpack.c.b16 %v4122, %v4120
        %v6361 = vpack.c.b16 %v4125, %v4123
        %v6362 = vpack.c.b16 %v4126, %v4124
        %v6363 = vpack.c.b16 %v4129, %v4127
        %v6364 = vpack.c.b16 %v4130, %v4128
        %v6365 = vpack.c.b16 %v4133, %v4131
        %v6366 = vpack.c.b16 %v4134, %v4132
        %v6367 = vpack.c.b16 %v4137, %v4135
        %v6368 = vpack.c.b16 %v4138, %v4136
        %v6369 = vpack.c.b16 %v4141, %v4139
        %v6370 = vpack.c.b16 %v4142, %v4140
        %v6371 = vpack.c.b16 %v4145, %v4143
        %v6372 = vpack.c.b16 %v4146, %v4144
        %v6373 = vpack.c.b16 %v4149, %v4147
        %v6374 = vpack.c.b16 %v4150, %v4148
        %v6375 = vpack.c.b16 %v4153, %v4151
        %v6376 = vpack.c.b16 %v4154, %v4152
        %v6377 = vpack.c.b16 %v4157, %v4155
        %v6378 = vpack.c.b16 %v4158, %v4156
        %v6379 = vpack.c.b16 %v4161, %v4159
        %v6380 = vpack.c.b16 %v4162, %v4160
        %v6381 = vpack.c.b16 %v4165, %v4163
        %v6382 = vpack.c.b16 %v4166, %v4164
        %v6383 = vpack.c.b16 %v4169, %v4167
        %v6384 = vpack.c.b16 %v4170, %v4168
        %v6385 = vpack.c.b16 %v4173, %v4171
        %v6386 = vpack.c.b16 %v4174, %v4172
        %v6387 = vpack.c.b16 %v4177, %v4175
        %v6388 = vpack.c.b16 %v4178, %v4176
        %v6389 = vpack.c.b16 %v4181, %v4179
        %v6390 = vpack.c.b16 %v4182, %v4180
        %v6391 = vpack.c.b16 %v4185, %v4183
        %v6392 = vpack.c.b16 %v4186, %v4184
        %v6393 = vpack.c.b16 %v4189, %v4187
        %v6394 = vpack.c.b16 %v4190, %v4188
        %v6395 = vpack.c.b16 %v4193, %v4191
        %v6396 = vpack.c.b16 %v4194, %v4192
        %v6397 = vpack.c.b16 %v4197, %v4195
        %v6398 = vpack.c.b16 %v4198, %v4196
        %v6399 = vpack.c.b16 %v4201, %v4199
        %v6400 = vpack.c.b16 %v4202, %v4200
        %v6401 = vpack.c.b16 %v4205, %v4203
        %v6402 = vpack.c.b16 %v4206, %v4204
        %v6403 = vpack.c.b16 %v4209, %v4207
        %v6404 = vpack.c.b16 %v4210, %v4208
        %v6405 = vpack.c.b16 %v4213, %v4211
        %v6406 = vpack.c.b16 %v4214, %v4212
        %v6407 = vpack.c.b16 %v4217, %v4215
        %v6408 = vpack.c.b16 %v4218, %v4216
        %v6409 = vpack.c.b16 %v4221, %v4219
        %v6410 = vpack.c.b16 %v4222, %v4220
        %v6411 = vpack.c.b16 %v4225, %v4223
        %v6412 = vpack.c.b16 %v4226, %v4224
        %v6413 = vpack.c.b16 %v4229, %v4227
        %v6414 = vpack.c.b16 %v4230, %v4228
        %v6415 = vpack.c.b16 %v4233, %v4231
        %v6416 = vpack.c.b16 %v4234, %v4232
        %v6417 = vpack.c.b16 %v4237, %v4235
        %v6418 = vpack.c.b16 %v4238, %v4236
        %v6419 = vpack.c.b16 %v4241, %v4239
        %v6420 = vpack.c.b16 %v4242, %v4240
        %v6421 = vpack.c.b16 %v4245, %v4243
        %v6422 = vpack.c.b16 %v4246, %v4244
        %v6423 = vpack.c.b16 %v4249, %v4247
        %v6424 = vpack.c.b16 %v4250, %v4248
        %v6425 = vpack.c.b16 %v4253, %v4251
        %v6426 = vpack.c.b16 %v4254, %v4252
        %v6427 = vpack.c.b16 %v4257, %v4255
        %v6428 = vpack.c.b16 %v4258, %v4256
        %v6429 = vpack.c.b16 %v4261, %v4259
        %v6430 = vpack.c.b16 %v4262, %v4260
        %v6431 = vpack.c.b16 %v4265, %v4263
        %v6432 = vpack.c.b16 %v4266, %v4264
        %v6433 = vpack.c.b16 %v4269, %v4267
        %v6434 = vpack.c.b16 %v4270, %v4268
        %v6435 = vpack.c.b16 %v4273, %v4271
        %v6436 = vpack.c.b16 %v4274, %v4272
        %v6437 = vpack.c.b16 %v4277, %v4275
        %v6438 = vpack.c.b16 %v4278, %v4276
        %v6439 = vpack.c.b16 %v4281, %v4279
        %v6440 = vpack.c.b16 %v4282, %v4280
        %v6441 = vpack.c.b16 %v4285, %v4283
        %v6442 = vpack.c.b16 %v4286, %v4284
        %v6443 = vpack.c.b16 %v4289, %v4287
        %v6444 = vpack.c.b16 %v4290, %v4288
        %v6445 = vpack.c.b16 %v4293, %v4291
        %v6446 = vpack.c.b16 %v4294, %v4292
        %v6447 = vpack.c.b16 %v4297, %v4295
        %v6448 = vpack.c.b16 %v4298, %v4296
        %v6449 = vpack.c.b16 %v4301, %v4299
        %v6450 = vpack.c.b16 %v4302, %v4300
        %v6451 = vpack.c.b16 %v4305, %v4303
        %v6452 = vpack.c.b16 %v4306, %v4304
        %v6453 = vpack.c.b16 %v4309, %v4307
        %v6454 = vpack.c.b16 %v4310, %v4308
        %v6455 = vpack.c.b16 %v4313, %v4311
        %v6456 = vpack.c.b16 %v4314, %v4312
        %v6457 = vpack.c.b16 %v4317, %v4315
        %v6458 = vpack.c.b16 %v4318, %v4316
        %v6459 = vpack.c.b16 %v4321, %v4319
        %v6460 = vpack.c.b16 %v4322, %v4320
        %v6461 = vpack.c.b16 %v4325, %v4323
        %v6462 = vpack.c.b16 %v4326, %v4324
        %v6463 = vpack.c.b16 %v4329, %v4327
        %v6464 = vpack.c.b16 %v4330, %v4328
        %v6465 = vpack.c.b16 %v4333, %v4331
        %v6466 = vpack.c.b16 %v4334, %v4332
        %v6467 = vpack.c.b16 %v4337, %v4335
        %v6468 = vpack.c.b16 %v4338, %v4336
        %v6469 = vpack.c.b16 %v4341, %v4339
        %v6470 = vpack.c.b16 %v4342, %v4340
        %v6471 = vpack.c.b16 %v4345, %v4343
        %v6472 = vpack.c.b16 %v4346, %v4344
        %v6473 = vpack.c.b16 %v4349, %v4347
        %v6474 = vpack.c.b16 %v4350, %v4348
        %v6475 = vpack.c.b16 %v4353, %v4351
        %v6476 = vpack.c.b16 %v4354, %v4352
        %v6477 = vpack.c.b16 %v4357, %v4355
        %v6478 = vpack.c.b16 %v4358, %v4356
        %v6479 = vpack.c.b16 %v4361, %v4359
        %v6480 = vpack.c.b16 %v4362, %v4360
        %v6481 = vpack.c.b16 %v4365, %v4363
        %v6482 = vpack.c.b16 %v4366, %v4364
        %v6483 = vpack.c.b16 %v4369, %v4367
        %v6484 = vpack.c.b16 %v4370, %v4368
        %v6485 = vpack.c.b16 %v4373, %v4371
        %v6486 = vpack.c.b16 %v4374, %v4372
        %v6487 = vpack.c.b16 %v4377, %v4375
        %v6488 = vpack.c.b16 %v4378, %v4376
        %v6489 = vpack.c.b16 %v4381, %v4379
        %v6490 = vpack.c.b16 %v4382, %v4380
        %v6491 = vpack.c.b16 %v4385, %v4383
        %v6492 = vpack.c.b16 %v4386, %v4384
        %v6493 = vpack.c.b16 %v4389, %v4387
        %v6494 = vpack.c.b16 %v4390, %v4388
        %v6495 = vpack.c.b16 %v4393, %v4391
        %v6496 = vpack.c.b16 %v4394, %v4392
        %v6497 = vpack.c.b16 %v4397, %v4395
        %v6498 = vpack.c.b16 %v4398, %v4396
        %v6499 = vpack.c.b16 %v4401, %v4399
        %v6500 = vpack.c.b16 %v4402, %v4400
        %v6501 = vpack.c.b16 %v4405, %v4403
        %v6502 = vpack.c.b16 %v4406, %v4404
        %v6503 = vpack.c.b16 %v4409, %v4407
        %v6504 = vpack.c.b16 %v4410, %v4408
        %v6505 = vpack.c.b16 %v4413, %v4411
        %v6506 = vpack.c.b16 %v4414, %v4412
        %v6507 = vpack.c.b16 %v4417, %v4415
        %v6508 = vpack.c.b16 %v4418, %v4416
        %v6509 = vpack.c.b16 %v4421, %v4419
        %v6510 = vpack.c.b16 %v4422, %v4420
        %v6511 = vpack.c.b16 %v4425, %v4423
        %v6512 = vpack.c.b16 %v4426, %v4424
        %v6513 = vpack.c.b16 %v4429, %v4427
        %v6514 = vpack.c.b16 %v4430, %v4428
        %v6515 = vpack.c.b16 %v4433, %v4431
        %v6516 = vpack.c.b16 %v4434, %v4432
        %v6517 = vpack.c.b16 %v4437, %v4435
        %v6518 = vpack.c.b16 %v4438, %v4436
        %v6519 = vpack.c.b16 %v4441, %v4439
        %v6520 = vpack.c.b16 %v4442, %v4440
        %v6521 = vpack.c.b16 %v4445, %v4443
        %v6522 = vpack.c.b16 %v4446, %v4444
        %v6523 = vpack.c.b16 %v4449, %v4447
        %v6524 = vpack.c.b16 %v4450, %v4448
        %v6525 = vpack.c.b16 %v4453, %v4451
        %v6526 = vpack.c.b16 %v4454, %v4452
        %v6527 = vpack.c.b16 %v4457, %v4455
        %v6528 = vpack.c.b16 %v4458, %v4456
        %v6529 = vpack.c.b16 %v4461, %v4459
        %v6530 = vpack.c.b16 %v4462, %v4460
        %v6531 = vpack.c.b16 %v4465, %v4463
        %v6532 = vpack.c.b16 %v4466, %v4464
        %v6533 = vpack.c.b16 %v4469, %v4467
        %v6534 = vpack.c.b16 %v4470, %v4468
        %v6535 = vpack.c.b16 %v4473, %v4471
        %v6536 = vpack.c.b16 %v4474, %v4472
        %v6537 = vpack.c.b16 %v4477, %v4475
        %v6538 = vpack.c.b16 %v4478, %v4476
        %v6539 = vpack.c.b16 %v4481, %v4479
        %v6540 = vpack.c.b16 %v4482, %v4480
        %v6541 = vpack.c.b16 %v4485, %v4483
        %v6542 = vpack.c.b16 %v4486, %v4484
        %v6543 = vpack.c.b16 %v4489, %v4487
        %v6544 = vpack.c.b16 %v4490, %v4488
        %v6545 = vpack.c.b16 %v4493, %v4491
        %v6546 = vpack.c.b16 %v4494, %v4492
        %v6547 = vpack.c.b16 %v4497, %v4495
        %v6548 = vpack.c.b16 %v4498, %v4496
        %v6549 = vpack.c.b16 %v4501, %v4499
        %v6550 = vpack.c.b16 %v4502, %v4500
        %v6551 = vpack.c.b16 %v4505, %v4503
        %v6552 = vpack.c.b16 %v4506, %v4504
        %v6553 = vpack.c.b16 %v4509, %v4507
        %v6554 = vpack.c.b16 %v4510, %v4508
        %v6555 = vpack.c.b16 %v4513, %v4511
        %v6556 = vpack.c.b16 %v4514, %v4512
        %v6557 = vpack.c.b16 %v4517, %v4515
        %v6558 = vpack.c.b16 %v4518, %v4516
        %v6559 = vpack.c.b16 %v4521, %v4519
        %v6560 = vpack.c.b16 %v4522, %v4520
        %v6561 = vpack.c.b16 %v4525, %v4523
        %v6562 = vpack.c.b16 %v4526, %v4524
        %v6563 = vpack.c.b16 %v4529, %v4527
        %v6564 = vpack.c.b16 %v4530, %v4528
        %v6565 = vpack.c.b16 %v4533, %v4531
        %v6566 = vpack.c.b16 %v4534, %v4532
        %v6567 = vpack.c.b16 %v4537, %v4535
        %v6568 = vpack.c.b16 %v4538, %v4536
        %v6569 = vpack.c.b16 %v4541, %v4539
        %v6570 = vpack.c.b16 %v4542, %v4540
        %v6571 = vpack.c.b16 %v4545, %v4543
        %v6572 = vpack.c.b16 %v4546, %v4544
        %v6573 = vpack.c.b16 %v4549, %v4547
        %v6574 = vpack.c.b16 %v4550, %v4548
        %v6575 = vpack.c.b16 %v4553, %v4551
        %v6576 = vpack.c.b16 %v4554, %v4552
        %v6577 = vpack.c.b16 %v4557, %v4555
        %v6578 = vpack.c.b16 %v4558, %v4556
        %v6579 = vpack.c.b16 %v4561, %v4559
        %v6580 = vpack.c.b16 %v4562, %v4560
        %v6581 = vpack.c.b16 %v4565, %v4563
        %v6582 = vpack.c.b16 %v4566, %v4564
        %v6583 = vpack.c.b16 %v4569, %v4567
        %v6584 = vpack.c.b16 %v4570, %v4568
        %v6585 = vpack.c.b16 %v4573, %v4571
        %v6586 = vpack.c.b16 %v4574, %v4572
        %v6587 = vpack.c.b16 %v4577, %v4575
        %v6588 = vpack.c.b16 %v4578, %v4576
        %v6589 = vpack.c.b16 %v4581, %v4579
        %v6590 = vpack.c.b16 %v4582, %v4580
        %v6591 = vpack.c.b16 %v4585, %v4583
        %v6592 = vpack.c.b16 %v4586, %v4584
        %v6593 = vpack.c.b16 %v4589, %v4587
        %v6594 = vpack.c.b16 %v4590, %v4588
        %v6595 = vpack.c.b16 %v4593, %v4591
        %v6596 = vpack.c.b16 %v4594, %v4592
        %v6597 = vpack.c.b16 %v4597, %v4595
        %v6598 = vpack.c.b16 %v4598, %v4596
        %v6599 = vpack.c.b16 %v4601, %v4599
        %v6600 = vpack.c.b16 %v4602, %v4600
        %v6601 = vpack.c.b16 %v4605, %v4603
        %v6602 = vpack.c.b16 %v4606, %v4604
        %v6603 = vpack.c.b16 %v4609, %v4607
        %v6604 = vpack.c.b16 %v4610, %v4608
        %v6605 = vpack.c.b16 %v4613, %v4611
        %v6606 = vpack.c.b16 %v4614, %v4612
        %v6607 = vpack.c.b16 %v4617, %v4615
        %v6608 = vpack.c.b16 %v4618, %v4616
        %v6609 = vpack.c.b16 %v4621, %v4619
        %v6610 = vpack.c.b16 %v4622, %v4620
        %v6611 = vpack.c.b16 %v4625, %v4623
        %v6612 = vpack.c.b16 %v4626, %v4624
        %v6613 = vpack.c.b16 %v4629, %v4627
        %v6614 = vpack.c.b16 %v4630, %v4628
        %v6615 = vpack.c.b16 %v4633, %v4631
        %v6616 = vpack.c.b16 %v4634, %v4632
        %v6617 = vpack.c.b16 %v4637, %v4635
        %v6618 = vpack.c.b16 %v4638, %v4636
        %v6619 = vpack.c.b16 %v4641, %v4639
        %v6620 = vpack.c.b16 %v4642, %v4640
        %v6621 = vpack.c.b16 %v4645, %v4643
        %v6622 = vpack.c.b16 %v4646, %v4644
        %v6623 = vpack.c.b16 %v4649, %v4647
        %v6624 = vpack.c.b16 %v4650, %v4648
        %v6625 = vpack.c.b16 %v4653, %v4651
        %v6626 = vpack.c.b16 %v4654, %v4652
        %v6627 = vpack.c.b16 %v4657, %v4655
        %v6628 = vpack.c.b16 %v4658, %v4656
        %v6629 = vpack.c.b16 %v4661, %v4659
        %v6630 = vpack.c.b16 %v4662, %v4660
        %v6631 = vpack.c.b16 %v4665, %v4663
        %v6632 = vpack.c.b16 %v4666, %v4664
        %v6633 = vpack.c.b16 %v4669, %v4667
        %v6634 = vpack.c.b16 %v4670, %v4668
        %v6635 = vpack.c.b16 %v4673, %v4671
        %v6636 = vpack.c.b16 %v4674, %v4672
        %v6637 = vpack.c.b16 %v4677, %v4675
        %v6638 = vpack.c.b16 %v4678, %v4676
        %v6639 = vpack.c.b16 %v4681, %v4679
        %v6640 = vpack.c.b16 %v4682, %v4680
        %v6641 = vpack.c.b16 %v4685, %v4683
        %v6642 = vpack.c.b16 %v4686, %v4684
        %v6643 = vpack.c.b16 %v4689, %v4687
        %v6644 = vpack.c.b16 %v4690, %v4688
        %v6645 = vpack.c.b16 %v4693, %v4691
        %v6646 = vpack.c.b16 %v4694, %v4692
        %v6647 = vpack.c.b16 %v4697, %v4695
        %v6648 = vpack.c.b16 %v4698, %v4696
        %v6649 = vpack.c.b16 %v4701, %v4699
        %v6650 = vpack.c.b16 %v4702, %v4700
        %v6651 = vpack.c.b16 %v4705, %v4703
        %v6652 = vpack.c.b16 %v4706, %v4704
        %v6653 = vpack.c.b16 %v4709, %v4707
        %v6654 = vpack.c.b16 %v4710, %v4708
        %v6655 = vpack.c.b16 %v4713, %v4711
        %v6656 = vpack.c.b16 %v4714, %v4712
        %v6657 = vpack.c.b16 %v4717, %v4715
        %v6658 = vpack.c.b16 %v4718, %v4716
        %v6659 = vpack.c.b16 %v4721, %v4719
        %v6660 = vpack.c.b16 %v4722, %v4720
        %v6661 = vpack.c.b16 %v4725, %v4723
        %v6662 = vpack.c.b16 %v4726, %v4724
        %v6663 = vpack.c.b16 %v4729, %v4727
        %v6664 = vpack.c.b16 %v4730, %v4728
        %v6665 = vpack.c.b16 %v4733, %v4731
        %v6666 = vpack.c.b16 %v4734, %v4732
        %v6667 = vpack.c.b16 %v4737, %v4735
        %v6668 = vpack.c.b16 %v4738, %v4736
        %v6669 = vpack.c.b16 %v4741, %v4739
        %v6670 = vpack.c.b16 %v4742, %v4740
        %v6671 = vpack.c.b16 %v4745, %v4743
        %v6672 = vpack.c.b16 %v4746, %v4744
        %v6673 = vpack.c.b16 %v4749, %v4747
        %v6674 = vpack.c.b16 %v4750, %v4748
        %v6675 = vpack.c.b16 %v4753, %v4751
        %v6676 = vpack.c.b16 %v4754, %v4752
        %v6677 = vpack.c.b16 %v4757, %v4755
        %v6678 = vpack.c.b16 %v4758, %v4756
        %v6679 = vpack.c.b16 %v4761, %v4759
        %v6680 = vpack.c.b16 %v4762, %v4760
        %v6681 = vpack.c.b16 %v4765, %v4763
        %v6682 = vpack.c.b16 %v4766, %v4764
        %v6683 = vpack.c.b16 %v4769, %v4767
        %v6684 = vpack.c.b16 %v4770, %v4768
        %v6685 = vpack.c.b16 %v4773, %v4771
        %v6686 = vpack.c.b16 %v4774, %v4772
        %v6687 = vpack.c.b16 %v4777, %v4775
        %v6688 = vpack.c.b16 %v4778, %v4776
        %v6689 = vpack.c.b16 %v4781, %v4779
        %v6690 = vpack.c.b16 %v4782, %v4780
        %v6691 = vpack.c.b16 %v4785, %v4783
        %v6692 = vpack.c.b16 %v4786, %v4784
        %v6693 = vpack.c.b16 %v4789, %v4787
        %v6694 = vpack.c.b16 %v4790, %v4788
        %v6695 = vpack.c.b16 %v4793, %v4791
        %v6696 = vpack.c.b16 %v4794, %v4792
        %v6697 = vpack.c.b16 %v4797, %v4795
        %v6698 = vpack.c.b16 %v4798, %v4796
        %v6699 = vpack.c.b16 %v4801, %v4799
        %v6700 = vpack.c.b16 %v4802, %v4800
        %v6701 = vpack.c.b16 %v4805, %v4803
        %v6702 = vpack.c.b16 %v4806, %v4804
        %v6703 = vpack.c.b16 %v4809, %v4807
        %v6704 = vpack.c.b16 %v4810, %v4808
        %v6705 = vpack.c.b16 %v4813, %v4811
        %v6706 = vpack.c.b16 %v4814, %v4812
        %v6707 = vpack.c.b16 %v4817, %v4815
        %v6708 = vpack.c.b16 %v4818, %v4816
        %v6709 = vpack.c.b16 %v4821, %v4819
        %v6710 = vpack.c.b16 %v4822, %v4820
        %v6711 = vpack.c.b16 %v4825, %v4823
        %v6712 = vpack.c.b16 %v4826, %v4824
        %v6713 = vpack.c.b16 %v4829, %v4827
        %v6714 = vpack.c.b16 %v4830, %v4828
        %v6715 = vpack.c.b16 %v4833, %v4831
        %v6716 = vpack.c.b16 %v4834, %v4832
        %v6717 = vpack.c.b16 %v4837, %v4835
        %v6718 = vpack.c.b16 %v4838, %v4836
        %v6719 = vpack.c.b16 %v4841, %v4839
        %v6720 = vpack.c.b16 %v4842, %v4840
        %v6721 = vpack.c.b16 %v4845, %v4843
        %v6722 = vpack.c.b16 %v4846, %v4844
        %v6723 = vpack.c.b16 %v4849, %v4847
        %v6724 = vpack.c.b16 %v4850, %v4848
        %v6725 = vpack.c.b16 %v4853, %v4851
        %v6726 = vpack.c.b16 %v4854, %v4852
        %v6727 = vpack.c.b16 %v4857, %v4855
        %v6728 = vpack.c.b16 %v4858, %v4856
        %v6729 = vpack.c.b16 %v4861, %v4859
        %v6730 = vpack.c.b16 %v4862, %v4860
        %v6731 = vpack.c.b16 %v4865, %v4863
        %v6732 = vpack.c.b16 %v4866, %v4864
        %v6733 = vpack.c.b16 %v4869, %v4867
        %v6734 = vpack.c.b16 %v4870, %v4868
        %v6735 = vpack.c.b16 %v4873, %v4871
        %v6736 = vpack.c.b16 %v4874, %v4872
        %v6737 = vpack.c.b16 %v4877, %v4875
        %v6738 = vpack.c.b16 %v4878, %v4876
        %v6739 = vpack.c.b16 %v4881, %v4879
        %v6740 = vpack.c.b16 %v4882, %v4880
        %v6741 = vpack.c.b16 %v4885, %v4883
        %v6742 = vpack.c.b16 %v4886, %v4884
        %v6743 = vpack.c.b16 %v4889, %v4887
        %v6744 = vpack.c.b16 %v4890, %v4888
        %v6745 = vpack.c.b16 %v4893, %v4891
        %v6746 = vpack.c.b16 %v4894, %v4892
        %v6747 = vpack.c.b16 %v4897, %v4895
        %v6748 = vpack.c.b16 %v4898, %v4896
        %v6749 = vpack.c.b16 %v4901, %v4899
        %v6750 = vpack.c.b16 %v4902, %v4900
        %v6751 = vpack.c.b16 %v4905, %v4903
        %v6752 = vpack.c.b16 %v4906, %v4904
        %v6753 = vpack.c.b16 %v4909, %v4907
        %v6754 = vpack.c.b16 %v4910, %v4908
        %v6755 = vpack.c.b16 %v4913, %v4911
        %v6756 = vpack.c.b16 %v4914, %v4912
        %v6757 = vpack.c.b16 %v4917, %v4915
        %v6758 = vpack.c.b16 %v4918, %v4916
        %v6759 = vpack.c.b16 %v4921, %v4919
        %v6760 = vpack.c.b16 %v4922, %v4920
        %v6761 = vpack.c.b16 %v4925, %v4923
        %v6762 = vpack.c.b16 %v4926, %v4924
        %v6763 = vpack.c.b16 %v4929, %v4927
        %v6764 = vpack.c.b16 %v4930, %v4928
        %v6765 = vpack.c.b16 %v4933, %v4931
        %v6766 = vpack.c.b16 %v4934, %v4932
        %v6767 = vpack.c.b16 %v4937, %v4935
        %v6768 = vpack.c.b16 %v4938, %v4936
        %v6769 = vpack.c.b16 %v4941, %v4939
        %v6770 = vpack.c.b16 %v4942, %v4940
        %v6771 = vpack.c.b16 %v4945, %v4943
        %v6772 = vpack.c.b16 %v4946, %v4944
        %v6773 = vpack.c.b16 %v4949, %v4947
        %v6774 = vpack.c.b16 %v4950, %v4948
        %v6775 = vpack.c.b16 %v4953, %v4951
        %v6776 = vpack.c.b16 %v4954, %v4952
        %v6777 = vpack.c.b16 %v4957, %v4955
        %v6778 = vpack.c.b16 %v4958, %v4956
        %v6779 = vpack.c.b16 %v4961, %v4959
        %v6780 = vpack.c.b16 %v4962, %v4960
        %v6781 = vpack.c.b16 %v4965, %v4963
        %v6782 = vpack.c.b16 %v4966, %v4964
        %v6783 = vpack.c.b16 %v4969, %v4967
        %v6784 = vpack.c.b16 %v4970, %v4968
        %v6785 = vpack.c.b16 %v4973, %v4971
        %v6786 = vpack.c.b16 %v4974, %v4972
        %v6787 = vpack.c.b16 %v4977, %v4975
        %v6788 = vpack.c.b16 %v4978, %v4976
        %v6789 = vpack.c.b16 %v4981, %v4979
        %v6790 = vpack.c.b16 %v4982, %v4980
        %v6791 = vpack.c.b16 %v4985, %v4983
        %v6792 = vpack.c.b16 %v4986, %v4984
        %v6793 = vpack.c.b16 %v4989, %v4987
        %v6794 = vpack.c.b16 %v4990, %v4988
        %v6795 = vpack.c.b16 %v4993, %v4991
        %v6796 = vpack.c.b16 %v4994, %v4992
        %v6797 = vpack.c.b16 %v4997, %v4995
        %v6798 = vpack.c.b16 %v4998, %v4996
        %v6799 = vpack.c.b16 %v5001, %v4999
        %v6800 = vpack.c.b16 %v5002, %v5000
        %v6801 = vpack.c.b16 %v5005, %v5003
        %v6802 = vpack.c.b16 %v5006, %v5004
        %v6803 = vpack.c.b16 %v5009, %v5007
        %v6804 = vpack.c.b16 %v5010, %v5008
        %v6805 = vpack.c.b16 %v5013, %v5011
        %v6806 = vpack.c.b16 %v5014, %v5012
        %v6807 = vpack.c.b16 %v5017, %v5015
        %v6808 = vpack.c.b16 %v5018, %v5016
        %v6809 = vpack.c.b16 %v5021, %v5019
        %v6810 = vpack.c.b16 %v5022, %v5020
        %v6811 = vpack.c.b16 %v5025, %v5023
        %v6812 = vpack.c.b16 %v5026, %v5024
        %v6813 = vpack.c.b16 %v5029, %v5027
        %v6814 = vpack.c.b16 %v5030, %v5028
        %v6815 = vpack.c.b16 %v5033, %v5031
        %v6816 = vpack.c.b16 %v5034, %v5032
        %v6817 = vpack.c.b16 %v5037, %v5035
        %v6818 = vpack.c.b16 %v5038, %v5036
        %v6819 = vpack.c.b16 %v5041, %v5039
        %v6820 = vpack.c.b16 %v5042, %v5040
        %v6821 = vpack.c.b16 %v5045, %v5043
        %v6822 = vpack.c.b16 %v5046, %v5044
        %v6823 = vpack.c.b16 %v5049, %v5047
        %v6824 = vpack.c.b16 %v5050, %v5048
        %v6825 = vpack.c.b16 %v5053, %v5051
        %v6826 = vpack.c.b16 %v5054, %v5052
        %v6827 = vpack.c.b16 %v5057, %v5055
        %v6828 = vpack.c.b16 %v5058, %v5056
        %v6829 = vpack.c.b16 %v5061, %v5059
        %v6830 = vpack.c.b16 %v5062, %v5060
        %v6831 = vpack.c.b16 %v5065, %v5063
        %v6832 = vpack.c.b16 %v5066, %v5064
        %v6833 = vpack.c.b16 %v5069, %v5067
        %v6834 = vpack.c.b16 %v5070, %v5068
        %v6835 = vpack.c.b16 %v5073, %v5071
        %v6836 = vpack.c.b16 %v5074, %v5072
        %v6837 = vpack.c.b16 %v5077, %v5075
        %v6838 = vpack.c.b16 %v5078, %v5076
        %v6839 = vpack.c.b16 %v5081, %v5079
        %v6840 = vpack.c.b16 %v5082, %v5080
        %v6841 = vpack.c.b16 %v5085, %v5083
        %v6842 = vpack.c.b16 %v5086, %v5084
        %v6843 = vpack.c.b16 %v5089, %v5087
        %v6844 = vpack.c.b16 %v5090, %v5088
        %v6845 = vpack.c.b16 %v5093, %v5091
        %v6846 = vpack.c.b16 %v5094, %v5092
        %v6847 = vpack.c.b16 %v5097, %v5095
        %v6848 = vpack.c.b16 %v5098, %v5096
        %v6849 = vpack.c.b16 %v5101, %v5099
        %v6850 = vpack.c.b16 %v5102, %v5100
        %v6851 = vpack.c.b16 %v5105, %v5103
        %v6852 = vpack.c.b16 %v5106, %v5104
        %v6853 = vpack.c.b16 %v5109, %v5107
        %v6854 = vpack.c.b16 %v5110, %v5108
        %v6855 = vpack.c.b16 %v5113, %v5111
        %v6856 = vpack.c.b16 %v5114, %v5112
        %v6857 = vpack.c.b16 %v5117, %v5115
        %v6858 = vpack.c.b16 %v5118, %v5116
        %v6859 = vpack.c.b16 %v5121, %v5119
        %v6860 = vpack.c.b16 %v5122, %v5120
        %v6861 = vpack.c.b16 %v5125, %v5123
        %v6862 = vpack.c.b16 %v5126, %v5124
        %v6863 = vpack.c.b16 %v5129, %v5127
        %v6864 = vpack.c.b16 %v5130, %v5128
        %v6865 = vpack.c.b16 %v5133, %v5131
        %v6866 = vpack.c.b16 %v5134, %v5132
        %v6867 = vpack.c.b16 %v5137, %v5135
        %v6868 = vpack.c.b16 %v5138, %v5136
        %v6869 = vpack.c.b16 %v5141, %v5139
        %v6870 = vpack.c.b16 %v5142, %v5140
        %v6871 = vpack.c.b16 %v5145, %v5143
        %v6872 = vpack.c.b16 %v5146, %v5144
        %v6873 = vpack.c.b16 %v5149, %v5147
        %v6874 = vpack.c.b16 %v5150, %v5148
        %v6875 = vpack.c.b16 %v5153, %v5151
        %v6876 = vpack.c.b16 %v5154, %v5152
        %v6877 = vpack.c.b16 %v5157, %v5155
        %v6878 = vpack.c.b16 %v5158, %v5156
        %v6879 = vpack.c.b16 %v5161, %v5159
        %v6880 = vpack.c.b16 %v5162, %v5160
        %v6881 = vpack.c.b16 %v5165, %v5163
        %v6882 = vpack.c.b16 %v5166, %v5164
        %v6883 = vpack.c.b16 %v5169, %v5167
        %v6884 = vpack.c.b16 %v5170, %v5168
        %v6885 = vpack.c.b16 %v5173, %v5171
        %v6886 = vpack.c.b16 %v5174, %v5172
        %v6887 = vpack.c.b16 %v5177, %v5175
        %v6888 = vpack.c.b16 %v5178, %v5176
        %v6889 = vpack.c.b16 %v5181, %v5179
        %v6890 = vpack.c.b16 %v5182, %v5180
        %v6891 = vpack.c.b16 %v5185, %v5183
        %v6892 = vpack.c.b16 %v5186, %v5184
        %v6893 = vpack.c.b16 %v5189, %v5187
        %v6894 = vpack.c.b16 %v5190, %v5188
        %v6895 = vpack.c.b16 %v5193, %v5191
        %v6896 = vpack.c.b16 %v5194, %v5192
        %v6897 = vpack.c.b16 %v5197, %v5195
        %v6898 = vpack.c.b16 %v5198, %v5196
        %v6899 = vpack.c.b16 %v5201, %v5199
        %v6900 = vpack.c.b16 %v5202, %v5200
        %v6901 = vpack.c.b16 %v5205, %v5203
        %v6902 = vpack.c.b16 %v5206, %v5204
        %v6903 = vpack.c.b16 %v5209, %v5207
        %v6904 = vpack.c.b16 %v5210, %v5208
        %v6905 = vpack.c.b16 %v5213, %v5211
        %v6906 = vpack.c.b16 %v5214, %v5212
        %v6907 = vpack.c.b16 %v5217, %v5215
        %v6908 = vpack.c.b16 %v5218, %v5216
        %v6909 = vpack.c.b16 %v5221, %v5219
        %v6910 = vpack.c.b16 %v5222, %v5220
        %v6911 = vpack.c.b16 %v5225, %v5223
        %v6912 = vpack.c.b16 %v5226, %v5224
        %v6913 = vpack.c.b16 %v5229, %v5227
        %v6914 = vpack.c.b16 %v5230, %v5228
        %v6915 = vpack.c.b16 %v5233, %v5231
        %v6916 = vpack.c.b16 %v5234, %v5232
        %v6917 = vpack.c.b16 %v5237, %v5235
        %v6918 = vpack.c.b16 %v5238, %v5236
        %v6919 = vpack.c.b16 %v5241, %v5239
        %v6920 = vpack.c.b16 %v5242, %v5240
        %v6921 = vpack.c.b16 %v5245, %v5243
        %v6922 = vpack.c.b16 %v5246, %v5244
        %v6923 = vpack.c.b16 %v5249, %v5247
        %v6924 = vpack.c.b16 %v5250, %v5248
        %v6925 = vpack.c.b16 %v5253, %v5251
        %v6926 = vpack.c.b16 %v5254, %v5252
        %v6927 = vpack.c.b16 %v5257, %v5255
        %v6928 = vpack.c.b16 %v5258, %v5256
        %v6929 = vpack.c.b16 %v5261, %v5259
        %v6930 = vpack.c.b16 %v5262, %v5260
        %v6931 = vpack.c.b16 %v5265, %v5263
        %v6932 = vpack.c.b16 %v5266, %v5264
        %v6933 = vpack.c.b16 %v5269, %v5267
        %v6934 = vpack.c.b16 %v5270, %v5268
        %v6935 = vpack.c.b16 %v5273, %v5271
        %v6936 = vpack.c.b16 %v5274, %v5272
        %v6937 = vpack.c.b16 %v5277, %v5275
        %v6938 = vpack.c.b16 %v5278, %v5276
        %v6939 = vpack.c.b16 %v5281, %v5279
        %v6940 = vpack.c.b16 %v5282, %v5280
        %v6941 = vpack.c.b16 %v5285, %v5283
        %v6942 = vpack.c.b16 %v5286, %v5284
        %v6943 = vpack.c.b16 %v5289, %v5287
        %v6944 = vpack.c.b16 %v5290, %v5288
        %v6945 = vpack.c.b16 %v5293, %v5291
        %v6946 = vpack.c.b16 %v5294, %v5292
        %v6947 = vpack.c.b16 %v5297, %v5295
        %v6948 = vpack.c.b16 %v5298, %v5296
        %v6949 = vpack.c.b16 %v5301, %v5299
        %v6950 = vpack.c.b16 %v5302, %v5300
        %v6951 = vpack.c.b16 %v5305, %v5303
        %v6952 = vpack.c.b16 %v5306, %v5304
        %v6953 = vpack.c.b16 %v5309, %v5307
        %v6954 = vpack.c.b16 %v5310, %v5308
        %v6955 = vpack.c.b16 %v5313, %v5311
        %v6956 = vpack.c.b16 %v5314, %v5312
        %v6957 = vpack.c.b16 %v5317, %v5315
        %v6958 = vpack.c.b16 %v5318, %v5316
        %v6959 = vpack.c.b16 %v5321, %v5319
        %v6960 = vpack.c.b16 %v5322, %v5320
        %v6961 = vpack.c.b16 %v5325, %v5323
        %v6962 = vpack.c.b16 %v5326, %v5324
        %v6963 = vpack.c.b16 %v5329, %v5327
        %v6964 = vpack.c.b16 %v5330, %v5328
        %v6965 = vpack.c.b16 %v5333, %v5331
        %v6966 = vpack.c.b16 %v5334, %v5332
        %v6967 = vpack.c.b16 %v5337, %v5335
        %v6968 = vpack.c.b16 %v5338, %v5336
        %v6969 = vpack.c.b16 %v5341, %v5339
        %v6970 = vpack.c.b16 %v5342, %v5340
        %v6971 = vpack.c.b16 %v5345, %v5343
        %v6972 = vpack.c.b16 %v5346, %v5344
        %v6973 = vpack.c.b16 %v5349, %v5347
        %v6974 = vpack.c.b16 %v5350, %v5348
        %v6975 = vpack.c.b16 %v5353, %v5351
        %v6976 = vpack.c.b16 %v5354, %v5352
        %v6977 = vpack.c.b16 %v5357, %v5355
        %v6978 = vpack.c.b16 %v5358, %v5356
        %v6979 = vpack.c.b16 %v5361, %v5359
        %v6980 = vpack.c.b16 %v5362, %v5360
        %v6981 = vpack.c.b16 %v5365, %v5363
        %v6982 = vpack.c.b16 %v5366, %v5364
        %v6983 = vpack.c.b16 %v5369, %v5367
        %v6984 = vpack.c.b16 %v5370, %v5368
        %v6985 = vpack.c.b16 %v5373, %v5371
        %v6986 = vpack.c.b16 %v5374, %v5372
        %v6987 = vpack.c.b16 %v5377, %v5375
        %v6988 = vpack.c.b16 %v5378, %v5376
        %v6989 = vpack.c.b16 %v5381, %v5379
        %v6990 = vpack.c.b16 %v5382, %v5380
        %v6991 = vpack.c.b16 %v5385, %v5383
        %v6992 = vpack.c.b16 %v5386, %v5384
        %v6993 = vpack.c.b16 %v5389, %v5387
        %v6994 = vpack.c.b16 %v5390, %v5388
        %v6995 = vpack.c.b16 %v5393, %v5391
        %v6996 = vpack.c.b16 %v5394, %v5392
        %v6997 = vpack.c.b16 %v5397, %v5395
        %v6998 = vpack.c.b16 %v5398, %v5396
        %v6999 = vpack.c.b16 %v5401, %v5399
        %v7000 = vpack.c.b16 %v5402, %v5400
        %v7001 = vpack.c.b16 %v5405, %v5403
        %v7002 = vpack.c.b16 %v5406, %v5404
        %v7003 = vpack.c.b16 %v5409, %v5407
        %v7004 = vpack.c.b16 %v5410, %v5408
        %v7005 = vpack.c.b16 %v5413, %v5411
        %v7006 = vpack.c.b16 %v5414, %v5412
        %v7007 = vpack.c.b16 %v5417, %v5415
        %v7008 = vpack.c.b16 %v5418, %v5416
        %v7009 = vpack.c.b16 %v5421, %v5419
        %v7010 = vpack.c.b16 %v5422, %v5420
        %v7011 = vpack.c.b16 %v5425, %v5423
        %v7012 = vpack.c.b16 %v5426, %v5424
        %v7013 = vpack.c.b16 %v5429, %v5427
        %v7014 = vpack.c.b16 %v5430, %v5428
        %v7015 = vpack.c.b16 %v5433, %v5431
        %v7016 = vpack.c.b16 %v5434, %v5432
        %v7017 = vpack.c.b16 %v5437, %v5435
        %v7018 = vpack.c.b16 %v5438, %v5436
        %v7019 = vpack.c.b16 %v5441, %v5439
        %v7020 = vpack.c.b16 %v5442, %v5440
        %v7021 = vpack.c.b16 %v5445, %v5443
        %v7022 = vpack.c.b16 %v5446, %v5444
        %v7023 = vpack.c.b16 %v5449, %v5447
        %v7024 = vpack.c.b16 %v5450, %v5448
        %v7025 = vpack.c.b16 %v5453, %v5451
        %v7026 = vpack.c.b16 %v5454, %v5452
        %v7027 = vpack.c.b16 %v5457, %v5455
        %v7028 = vpack.c.b16 %v5458, %v5456
        %v7029 = vpack.c.b16 %v5461, %v5459
        %v7030 = vpack.c.b16 %v5462, %v5460
        %v7031 = vpack.c.b16 %v5465, %v5463
        %v7032 = vpack.c.b16 %v5466, %v5464
        %v7033 = vpack.c.b16 %v5469, %v5467
        %v7034 = vpack.c.b16 %v5470, %v5468
        %v7035 = vpack.c.b16 %v5473, %v5471
        %v7036 = vpack.c.b16 %v5474, %v5472
        %v7037 = vpack.c.b16 %v5477, %v5475
        %v7038 = vpack.c.b16 %v5478, %v5476
        %v7039 = vpack.c.b16 %v5481, %v5479
        %v7040 = vpack.c.b16 %v5482, %v5480
        %v7041 = vpack.c.b16 %v5485, %v5483
        %v7042 = vpack.c.b16 %v5486, %v5484
        %v7043 = vpack.c.b16 %v5489, %v5487
        %v7044 = vpack.c.b16 %v5490, %v5488
        %v7045 = vpack.c.b16 %v5493, %v5491
        %v7046 = vpack.c.b16 %v5494, %v5492
        %v7047 = vpack.c.b16 %v5497, %v5495
        %v7048 = vpack.c.b16 %v5498, %v5496
        %v7049 = vpack.c.b16 %v5501, %v5499
        %v7050 = vpack.c.b16 %v5502, %v5500
        %v7051 = vpack.c.b16 %v5505, %v5503
        %v7052 = vpack.c.b16 %v5506, %v5504
        %v7053 = vpack.c.b16 %v5509, %v5507
        %v7054 = vpack.c.b16 %v5510, %v5508
        %v7055 = vpack.c.b16 %v5513, %v5511
        %v7056 = vpack.c.b16 %v5514, %v5512
        %v7057 = vpack.c.b16 %v5517, %v5515
        %v7058 = vpack.c.b16 %v5518, %v5516
        %v7059 = vpack.c.b16 %v5521, %v5519
        %v7060 = vpack.c.b16 %v5522, %v5520
        %v7061 = vpack.c.b16 %v5525, %v5523
        %v7062 = vpack.c.b16 %v5526, %v5524
        %v7063 = vpack.c.b16 %v5529, %v5527
        %v7064 = vpack.c.b16 %v5530, %v5528
        %v7065 = vpack.c.b16 %v5533, %v5531
        %v7066 = vpack.c.b16 %v5534, %v5532
        %v7067 = vpack.c.b16 %v5537, %v5535
        %v7068 = vpack.c.b16 %v5538, %v5536
        %v7069 = vpack.c.b16 %v5541, %v5539
        %v7070 = vpack.c.b16 %v5542, %v5540
        %v7071 = vpack.c.b16 %v5545, %v5543
        %v7072 = vpack.c.b16 %v5546, %v5544
        %v7073 = vpack.c.b16 %v5549, %v5547
        %v7074 = vpack.c.b16 %v5550, %v5548
        %v7075 = vpack.c.b16 %v5553, %v5551
        %v7076 = vpack.c.b16 %v5554, %v5552
        %v7077 = vpack.c.b16 %v5557, %v5555
        %v7078 = vpack.c.b16 %v5558, %v5556
        %v7079 = vpack.c.b16 %v5561, %v5559
        %v7080 = vpack.c.b16 %v5562, %v5560
        %v7081 = vpack.c.b16 %v5565, %v5563
        %v7082 = vpack.c.b16 %v5566, %v5564
        %v7083 = vpack.c.b16 %v5569, %v5567
        %v7084 = vpack.c.b16 %v5570, %v5568
        %v7085 = vpack.c.b16 %v5573, %v5571
        %v7086 = vpack.c.b16 %v5574, %v5572
        %v7087 = vpack.c.b16 %v5577, %v5575
        %v7088 = vpack.c.b16 %v5578, %v5576
        %v7089 = vpack.c.b16 %v5581, %v5579
        %v7090 = vpack.c.b16 %v5582, %v5580
        %v7091 = vpack.c.b16 %v5585, %v5583
        %v7092 = vpack.c.b16 %v5586, %v5584
        %v7093 = vpack.c.b16 %v5589, %v5587
        %v7094 = vpack.c.b16 %v5590, %v5588
        %v7095 = vpack.c.b16 %v5593, %v5591
        %v7096 = vpack.c.b16 %v5594, %v5592
        %v7097 = vpack.c.b16 %v5597, %v5595
        %v7098 = vpack.c.b16 %v5598, %v5596
        %v7099 = vpack.c.b16 %v5601, %v5599
        %v7100 = vpack.c.b16 %v5602, %v5600
        %v7101 = vpack.c.b16 %v5605, %v5603
        %v7102 = vpack.c.b16 %v5606, %v5604
        %v7103 = vpack.c.b16 %v5609, %v5607
        %v7104 = vpack.c.b16 %v5610, %v5608
        %v7105 = vpack.c.b16 %v5613, %v5611
        %v7106 = vpack.c.b16 %v5614, %v5612
        %v7107 = vpack.c.b16 %v5617, %v5615
        %v7108 = vpack.c.b16 %v5618, %v5616
        %v7109 = vpack.c.b16 %v5621, %v5619
        %v7110 = vpack.c.b16 %v5622, %v5620
        %v7111 = vpack.c.b16 %v5625, %v5623
        %v7112 = vpack.c.b16 %v5626, %v5624
        %v7113 = vpack.c.b16 %v5629, %v5627
        %v7114 = vpack.c.b16 %v5630, %v5628
        %v7115 = vpack.c.b16 %v5633, %v5631
        %v7116 = vpack.c.b16 %v5634, %v5632
        %v7117 = vpack.c.b16 %v5637, %v5635
        %v7118 = vpack.c.b16 %v5638, %v5636
        %v7119 = vpack.c.b16 %v5641, %v5639
        %v7120 = vpack.c.b16 %v5642, %v5640
        %v7121 = vpack.c.b16 %v5645, %v5643
        %v7122 = vpack.c.b16 %v5646, %v5644
        %v7123 = vpack.c.b16 %v5649, %v5647
        %v7124 = vpack.c.b16 %v5650, %v5648
        %v7125 = vpack.c.b16 %v5653, %v5651
        %v7126 = vpack.c.b16 %v5654, %v5652
        %v7127 = vpack.c.b16 %v5657, %v5655
        %v7128 = vpack.c.b16 %v5658, %v5656
        %v7129 = vpack.c.b16 %v5661, %v5659
        %v7130 = vpack.c.b16 %v5662, %v5660
        %v7131 = vpack.c.b16 %v5665, %v5663
        %v7132 = vpack.c.b16 %v5666, %v5664
        %v7133 = vpack.c.b16 %v5669, %v5667
        %v7134 = vpack.c.b16 %v5670, %v5668
        %v7135 = vpack.c.b16 %v5673, %v5671
        %v7136 = vpack.c.b16 %v5674, %v5672
        %v7137 = vpack.c.b16 %v5677, %v5675
        %v7138 = vpack.c.b16 %v5678, %v5676
        %v7139 = vpack.c.b16 %v5681, %v5679
        %v7140 = vpack.c.b16 %v5682, %v5680
        %v7141 = vpack.c.b16 %v5685, %v5683
        %v7142 = vpack.c.b16 %v5686, %v5684
        %v7143 = vpack.c.b16 %v5689, %v5687
        %v7144 = vpack.c.b16 %v5690, %v5688
        %v7145 = vpack.c.b16 %v5693, %v5691
        %v7146 = vpack.c.b16 %v5694, %v5692
        %v7147 = vpack.c.b16 %v5697, %v5695
        %v7148 = vpack.c.b16 %v5698, %v5696
        %v7149 = vpack.c.b16 %v5701, %v5699
        %v7150 = vpack.c.b16 %v5702, %v5700
        %v7151 = vpack.c.b16 %v5705, %v5703
        %v7152 = vpack.c.b16 %v5706, %v5704
        %v7153 = vpack.c.b16 %v5709, %v5707
        %v7154 = vpack.c.b16 %v5710, %v5708
        %v7155 = vpack.c.b16 %v5713, %v5711
        %v7156 = vpack.c.b16 %v5714, %v5712
        %v7157 = vpack.c.b16 %v5717, %v5715
        %v7158 = vpack.c.b16 %v5718, %v5716
        %v7159 = vpack.c.b16 %v5721, %v5719
        %v7160 = vpack.c.b16 %v5722, %v5720
        %v7161 = vpack.c.b16 %v5725, %v5723
        %v7162 = vpack.c.b16 %v5726, %v5724
        %v7163 = vpack.c.b16 %v5729, %v5727
        %v7164 = vpack.c.b16 %v5730, %v5728
        %v7165 = vpack.c.b16 %v5733, %v5731
        %v7166 = vpack.c.b16 %v5734, %v5732
        %v7167 = vpack.c.b16 %v5737, %v5735
        %v7168 = vpack.c.b16 %v5738, %v5736
        %v7169 = vpack.c.b16 %v5741, %v5739
        %v7170 = vpack.c.b16 %v5742, %v5740
        %v7171 = vpack.c.b16 %v5745, %v5743
        %v7172 = vpack.c.b16 %v5746, %v5744
        %v7173 = vpack.c.b16 %v5749, %v5747
        %v7174 = vpack.c.b16 %v5750, %v5748
        %v7175 = vpack.c.b16 %v5753, %v5751
        %v7176 = vpack.c.b16 %v5754, %v5752
        %v7177 = vpack.c.b16 %v5757, %v5755
        %v7178 = vpack.c.b16 %v5758, %v5756
        %v7179 = vpack.c.b16 %v5761, %v5759
        %v7180 = vpack.c.b16 %v5762, %v5760
        %v7181 = vpack.c.b16 %v5765, %v5763
        %v7182 = vpack.c.b16 %v5766, %v5764
        %v7183 = vpack.c.b16 %v5769, %v5767
        %v7184 = vpack.c.b16 %v5770, %v5768
        %v7185 = vpack.c.b16 %v5773, %v5771
        %v7186 = vpack.c.b16 %v5774, %v5772
        %v7187 = vpack.c.b16 %v5777, %v5775
        %v7188 = vpack.c.b16 %v5778, %v5776
        %v7189 = vpack.c.b16 %v5781, %v5779
        %v7190 = vpack.c.b16 %v5782, %v5780
        %v7191 = vpack.c.b16 %v5785, %v5783
        %v7192 = vpack.c.b16 %v5786, %v5784
        %v7193 = vpack.c.b16 %v5789, %v5787
        %v7194 = vpack.c.b16 %v5790, %v5788
        %v7195 = vpack.c.b16 %v5793, %v5791
        %v7196 = vpack.c.b16 %v5794, %v5792
        %v7197 = vpack.c.b16 %v5797, %v5795
        %v7198 = vpack.c.b16 %v5798, %v5796
        %v7199 = vpack.c.b16 %v5801, %v5799
        %v7200 = vpack.c.b16 %v5802, %v5800
        %v7201 = vpack.c.b16 %v5805, %v5803
        %v7202 = vpack.c.b16 %v5806, %v5804
        %v7203 = vpack.c.b16 %v5809, %v5807
        %v7204 = vpack.c.b16 %v5810, %v5808
        %v7205 = vpack.c.b16 %v5813, %v5811
        %v7206 = vpack.c.b16 %v5814, %v5812
        %v7207 = vpack.c.b16 %v5817, %v5815
        %v7208 = vpack.c.b16 %v5818, %v5816
        %v7209 = vpack.c.b16 %v5821, %v5819
        %v7210 = vpack.c.b16 %v5822, %v5820
        %v7211 = vpack.c.b16 %v5825, %v5823
        %v7212 = vpack.c.b16 %v5826, %v5824
        %v7213 = vpack.c.b16 %v5829, %v5827
        %v7214 = vpack.c.b16 %v5830, %v5828
        %v7215 = vpack.c.b16 %v5833, %v5831
        %v7216 = vpack.c.b16 %v5834, %v5832
        %v7217 = vpack.c.b16 %v5837, %v5835
        %v7218 = vpack.c.b16 %v5838, %v5836
        %v7219 = vpack.c.b16 %v5841, %v5839
        %v7220 = vpack.c.b16 %v5842, %v5840
        %v7221 = vpack.c.b16 %v5845, %v5843
        %v7222 = vpack.c.b16 %v5846, %v5844
        %v7223 = vpack.c.b16 %v5849, %v5847
        %v7224 = vpack.c.b16 %v5850, %v5848
        %v7225 = vpack.c.b16 %v5853, %v5851
        %v7226 = vpack.c.b16 %v5854, %v5852
        %v7227 = vpack.c.b16 %v5857, %v5855
        %v7228 = vpack.c.b16 %v5858, %v5856
        %v7229 = vpack.c.b16 %v5861, %v5859
        %v7230 = vpack.c.b16 %v5862, %v5860
        %v7231 = vpack.c.b16 %v5865, %v5863
        %v7232 = vpack.c.b16 %v5866, %v5864
        %v7233 = vpack.c.b16 %v5869, %v5867
        %v7234 = vpack.c.b16 %v5870, %v5868
        %v7235 = vpack.c.b16 %v5873, %v5871
        %v7236 = vpack.c.b16 %v5874, %v5872
        %v7237 = vpack.c.b16 %v5877, %v5875
        %v7238 = vpack.c.b16 %v5878, %v5876
        %v7239 = vpack.c.b16 %v5881, %v5879
        %v7240 = vpack.c.b16 %v5882, %v5880
        %v7241 = vpack.c.b16 %v5885, %v5883
        %v7242 = vpack.c.b16 %v5886, %v5884
        %v7243 = vpack.c.b16 %v5889, %v5887
        %v7244 = vpack.c.b16 %v5890, %v5888
        %v7245 = vpack.c.b16 %v5893, %v5891
        %v7246 = vpack.c.b16 %v5894, %v5892
        %v7247 = vpack.c.b16 %v5897, %v5895
        %v7248 = vpack.c.b16 %v5898, %v5896
        %v7249 = vpack.c.b16 %v5901, %v5899
        %v7250 = vpack.c.b16 %v5902, %v5900
        %v7251 = vpack.c.b16 %v5905, %v5903
        %v7252 = vpack.c.b16 %v5906, %v5904
        %v7253 = vpack.c.b16 %v5909, %v5907
        %v7254 = vpack.c.b16 %v5910, %v5908
        %v7255 = vpack.c.b16 %v5913, %v5911
        %v7256 = vpack.c.b16 %v5914, %v5912
        %v7257 = vpack.c.b16 %v5917, %v5915
        %v7258 = vpack.c.b16 %v5918, %v5916
        %v7259 = vpack.c.b16 %v5921, %v5919
        %v7260 = vpack.c.b16 %v5922, %v5920
        %v7261 = vpack.c.b16 %v5925, %v5923
        %v7262 = vpack.c.b16 %v5926, %v5924
        %v7263 = vpack.c.b16 %v5929, %v5927
        %v7264 = vpack.c.b16 %v5930, %v5928
        %v7265 = vpack.c.b16 %v5933, %v5931
        %v7266 = vpack.c.b16 %v5934, %v5932
        %v7267 = vpack.c.b16 %v5937, %v5935
        %v7268 = vpack.c.b16 %v5938, %v5936
        %v7269 = vpack.c.b16 %v5941, %v5939
        %v7270 = vpack.c.b16 %v5942, %v5940
        %v7271 = vpack.c.b16 %v5945, %v5943
        %v7272 = vpack.c.b16 %v5946, %v5944
        %v7273 = vpack.c.b16 %v5949, %v5947
        %v7274 = vpack.c.b16 %v5950, %v5948
        %v7275 = vpack.c.b16 %v5953, %v5951
        %v7276 = vpack.c.b16 %v5954, %v5952
        %v7277 = vpack.c.b16 %v5957, %v5955
        %v7278 = vpack.c.b16 %v5958, %v5956
        %v7279 = vpack.c.b16 %v5961, %v5959
        %v7280 = vpack.c.b16 %v5962, %v5960
        %v7281 = vpack.c.b16 %v5965, %v5963
        %v7282 = vpack.c.b16 %v5966, %v5964
        %v7283 = vpack.c.b16 %v5969, %v5967
        %v7284 = vpack.c.b16 %v5970, %v5968
        %v7285 = vpack.c.b16 %v5973, %v5971
        %v7286 = vpack.c.b16 %v5974, %v5972
        %v7287 = vpack.c.b16 %v5977, %v5975
        %v7288 = vpack.c.b16 %v5978, %v5976
        %v7289 = vpack.c.b16 %v5981, %v5979
        %v7290 = vpack.c.b16 %v5982, %v5980
        %v7291 = vpack.c.b16 %v5985, %v5983
        %v7292 = vpack.c.b16 %v5986, %v5984
        %v7293 = vpack.c.b16 %v5989, %v5987
        %v7294 = vpack.c.b16 %v5990, %v5988
        %v7295 = vpack.c.b16 %v5993, %v5991
        %v7296 = vpack.c.b16 %v5994, %v5992
        %v7297 = vpack.c.b16 %v5997, %v5995
        %v7298 = vpack.c.b16 %v5998, %v5996
        %v7299 = vpack.c.b16 %v6001, %v5999
        %v7300 = vpack.c.b16 %v6002, %v6000
        %v7301 = vpack.c.b16 %v6005, %v6003
        %v7302 = vpack.c.b16 %v6006, %v6004
        %v7303 = vpack.c.b16 %v6009, %v6007
        %v7304 = vpack.c.b16 %v6010, %v6008
        %v7305 = vpack.c.b16 %v6013, %v6011
        %v7306 = vpack.c.b16 %v6014, %v6012
        %v7307 = vpack.c.b16 %v6017, %v6015
        %v7308 = vpack.c.b16 %v6018, %v6016
        %v7309 = vpack.c.b16 %v6021, %v6019
        %v7310 = vpack.c.b16 %v6022, %v6020
        %v7311 = vpack.c.b16 %v6025, %v6023
        %v7312 = vpack.c.b16 %v6026, %v6024
        %v7313 = vpack.c.b16 %v6029, %v6027
        %v7314 = vpack.c.b16 %v6030, %v6028
        %v7315 = vpack.c.b16 %v6033, %v6031
        %v7316 = vpack.c.b16 %v6034, %v6032
        %v7317 = vpack.c.b16 %v6037, %v6035
        %v7318 = vpack.c.b16 %v6038, %v6036
        %v7319 = vpack.c.b16 %v6041, %v6039
        %v7320 = vpack.c.b16 %v6042, %v6040
        %v7321 = vpack.c.b16 %v6045, %v6043
        %v7322 = vpack.c.b16 %v6046, %v6044
        %v7323 = vpack.c.b16 %v6049, %v6047
        %v7324 = vpack.c.b16 %v6050, %v6048
        %v7325 = vpack.c.b16 %v6053, %v6051
        %v7326 = vpack.c.b16 %v6054, %v6052
        %v7327 = vpack.c.b16 %v6057, %v6055
        %v7328 = vpack.c.b16 %v6058, %v6056
        %v7329 = vpack.c.b16 %v6061, %v6059
        %v7330 = vpack.c.b16 %v6062, %v6060
        %v7331 = vpack.c.b16 %v6065, %v6063
        %v7332 = vpack.c.b16 %v6066, %v6064
        %v7333 = vpack.c.b16 %v6069, %v6067
        %v7334 = vpack.c.b16 %v6070, %v6068
        %v7335 = vpack.c.b16 %v6073, %v6071
        %v7336 = vpack.c.b16 %v6074, %v6072
        %v7337 = vpack.c.b16 %v6077, %v6075
        %v7338 = vpack.c.b16 %v6078, %v6076
        %v7339 = vpack.c.b16 %v6081, %v6079
        %v7340 = vpack.c.b16 %v6082, %v6080
        %v7341 = vpack.c.b16 %v6085, %v6083
        %v7342 = vpack.c.b16 %v6086, %v6084
        %v7343 = vpack.c.b16 %v6089, %v6087
        %v7344 = vpack.c.b16 %v6090, %v6088
        %v7345 = vpack.c.b16 %v6093, %v6091
        %v7346 = vpack.c.b16 %v6094, %v6092
        %v7347 = vpack.c.b16 %v6097, %v6095
        %v7348 = vpack.c.b16 %v6098, %v6096
        %vm8599 = vcmask 130048
        %v8601 = vsel %vm8599, %v2269, 0
        %8603 = vmatprep.subr.bf16.mxu0 %v6114
        %8604 = vmatpush1.bf16.msra.mxu0 %v6113
        %8605 = vmatprep.subr.bf16.mxu0 %v6112
        %8606 = vmatpush1.bf16.msra.mxu0 %v6111
        %8607 = vmatprep.subr.bf16.mxu0 %v6110
        %8608 = vmatpush1.bf16.msra.mxu0 %v6109
        %8609 = vmatprep.subr.bf16.mxu0 %v6108
        %8610 = vmatpush1.bf16.msra.mxu0 %v6107
        %8611 = vmatprep.subr.bf16.mxu0 %v6106
        %8612 = vmatpush1.bf16.msra.mxu0 %v6105
        %8613 = vmatprep.subr.bf16.mxu0 %v6104
        %8614 = vmatpush1.bf16.msra.mxu0 %v6103
        %8615 = vmatprep.subr.bf16.mxu0 %v6102
        %8616 = vmatpush1.bf16.msra.mxu0 %v6101
        %8617 = vmatprep.subr.bf16.mxu0 %v6100
        %8618 = vmatpush1.bf16.msra.mxu0 %v6099
        %8619 = vmatprep.subr.bf16.mxu0 %v6130
        %8620 = vmatpush2.bf16.msra.mxu0 %v6129
        %8621 = vmatprep.subr.bf16.mxu0 %v6128
        %8622 = vmatpush2.bf16.msra.mxu0 %v6127
        %8623 = vmatprep.subr.bf16.mxu0 %v6126
        %8624 = vmatpush2.bf16.msra.mxu0 %v6125
        %8625 = vmatprep.subr.bf16.mxu0 %v6124
        %8626 = vmatpush2.bf16.msra.mxu0 %v6123
        %8627 = vmatprep.subr.bf16.mxu0 %v6122
        %8628 = vmatpush2.bf16.msra.mxu0 %v6121
        %8629 = vmatprep.subr.bf16.mxu0 %v6120
        %8630 = vmatpush2.bf16.msra.mxu0 %v6119
        %8631 = vmatprep.subr.bf16.mxu0 %v6118
        %8632 = vmatpush2.bf16.msra.mxu0 %v6117
        %8633 = vmatprep.subr.bf16.mxu0 %v6116
        %8634 = vmatpush2.bf16.msra.mxu0 %v6115
        %8635 = vmatprep.mubr.bf16.mxu0 %v1819
        %8636 = vmatmul.mubr.bf16.gmra.mxu0 %v1805
        %v8637 = vpop.f32.mrf.mxu0
        %v8638 = vadd.f32 %v1765, %v8637
        %v8639 = vpop.f32.mrf.mxu0
        %v8640 = vadd.f32 %v1769, %v8639
        %v8641 = vpop.f32.mrf.mxu0
        %v8642 = vpop.f32.mrf.mxu0
        %8643 = vdwg.mxu0
        %8644 = vmatprep.subr.bf16.mxu0 %v6146
        %8645 = vmatpush1.bf16.msra.mxu0 %v6145
        %8646 = vmatprep.subr.bf16.mxu0 %v6144
        %8647 = vmatpush1.bf16.msra.mxu0 %v6143
        %8648 = vmatprep.subr.bf16.mxu0 %v6142
        %8649 = vmatpush1.bf16.msra.mxu0 %v6141
        %8650 = vmatprep.subr.bf16.mxu0 %v6140
        %8651 = vmatpush1.bf16.msra.mxu0 %v6139
        %8652 = vmatprep.subr.bf16.mxu0 %v6138
        %8653 = vmatpush1.bf16.msra.mxu0 %v6137
        %8654 = vmatprep.subr.bf16.mxu0 %v6136
        %8655 = vmatpush1.bf16.msra.mxu0 %v6135
        %8656 = vmatprep.subr.bf16.mxu0 %v6134
        %8657 = vmatpush1.bf16.msra.mxu0 %v6133
        %8658 = vmatprep.subr.bf16.mxu0 %v6132
        %8659 = vmatpush1.bf16.msra.mxu0 %v6131
        %8660 = vmatprep.subr.bf16.mxu0 %v6162
        %8661 = vmatpush2.bf16.msra.mxu0 %v6161
        %8662 = vmatprep.subr.bf16.mxu0 %v6160
        %8663 = vmatpush2.bf16.msra.mxu0 %v6159
        %8664 = vmatprep.subr.bf16.mxu0 %v6158
        %8665 = vmatpush2.bf16.msra.mxu0 %v6157
        %8666 = vmatprep.subr.bf16.mxu0 %v6156
        %8667 = vmatpush2.bf16.msra.mxu0 %v6155
        %8668 = vmatprep.subr.bf16.mxu0 %v6154
        %8669 = vmatpush2.bf16.msra.mxu0 %v6153
        %8670 = vmatprep.subr.bf16.mxu0 %v6152
        %8671 = vmatpush2.bf16.msra.mxu0 %v6151
        %8672 = vmatprep.subr.bf16.mxu0 %v6150
        %8673 = vmatpush2.bf16.msra.mxu0 %v6149
        %8674 = vmatprep.subr.bf16.mxu0 %v6148
        %8675 = vmatpush2.bf16.msra.mxu0 %v6147
        %8676 = vmatprep.mubr.bf16.mxu0 %v1829
        %8677 = vmatmul.mubr.bf16.gmra.mxu0 %v1827
        %v8678 = vpop.f32.mrf.mxu0
        %v8679 = vadd.f32 %v8638, %v8678
        %v8680 = vpop.f32.mrf.mxu0
        %v8681 = vadd.f32 %v8640, %v8680
        %v8682 = vpop.f32.mrf.mxu0
        %v8683 = vpop.f32.mrf.mxu0
        %8684 = vdwg.mxu0
        %8685 = vmatprep.subr.bf16.mxu0 %v6178
        %8686 = vmatpush1.bf16.msra.mxu0 %v6177
        %8687 = vmatprep.subr.bf16.mxu0 %v6176
        %8688 = vmatpush1.bf16.msra.mxu0 %v6175
        %8689 = vmatprep.subr.bf16.mxu0 %v6174
        %8690 = vmatpush1.bf16.msra.mxu0 %v6173
        %8691 = vmatprep.subr.bf16.mxu0 %v6172
        %8692 = vmatpush1.bf16.msra.mxu0 %v6171
        %8693 = vmatprep.subr.bf16.mxu0 %v6170
        %8694 = vmatpush1.bf16.msra.mxu0 %v6169
        %8695 = vmatprep.subr.bf16.mxu0 %v6168
        %8696 = vmatpush1.bf16.msra.mxu0 %v6167
        %8697 = vmatprep.subr.bf16.mxu0 %v6166
        %8698 = vmatpush1.bf16.msra.mxu0 %v6165
        %8699 = vmatprep.subr.bf16.mxu0 %v6164
        %8700 = vmatpush1.bf16.msra.mxu0 %v6163
        %8701 = vmatprep.subr.bf16.mxu0 %v6194
        %8702 = vmatpush2.bf16.msra.mxu0 %v6193
        %8703 = vmatprep.subr.bf16.mxu0 %v6192
        %8704 = vmatpush2.bf16.msra.mxu0 %v6191
        %8705 = vmatprep.subr.bf16.mxu0 %v6190
        %8706 = vmatpush2.bf16.msra.mxu0 %v6189
        %8707 = vmatprep.subr.bf16.mxu0 %v6188
        %8708 = vmatpush2.bf16.msra.mxu0 %v6187
        %8709 = vmatprep.subr.bf16.mxu0 %v6186
        %8710 = vmatpush2.bf16.msra.mxu0 %v6185
        %8711 = vmatprep.subr.bf16.mxu0 %v6184
        %8712 = vmatpush2.bf16.msra.mxu0 %v6183
        %8713 = vmatprep.subr.bf16.mxu0 %v6182
        %8714 = vmatpush2.bf16.msra.mxu0 %v6181
        %8715 = vmatprep.subr.bf16.mxu0 %v6180
        %8716 = vmatpush2.bf16.msra.mxu0 %v6179
        %8717 = vmatprep.mubr.bf16.mxu0 %v1826
        %8718 = vmatmul.mubr.bf16.gmra.mxu0 %v1812
        %v8719 = vpop.f32.mrf.mxu0
        %v8720 = vadd.f32 %v8679, %v8719
        %v8721 = vpop.f32.mrf.mxu0
        %v8722 = vadd.f32 %v8681, %v8721
        %v8723 = vpop.f32.mrf.mxu0
        %v8724 = vpop.f32.mrf.mxu0
        %8725 = vdwg.mxu0
        %8726 = vmatprep.subr.bf16.mxu0 %v6210
        %8727 = vmatpush1.bf16.msra.mxu0 %v6209
        %8728 = vmatprep.subr.bf16.mxu0 %v6208
        %8729 = vmatpush1.bf16.msra.mxu0 %v6207
        %8730 = vmatprep.subr.bf16.mxu0 %v6206
        %8731 = vmatpush1.bf16.msra.mxu0 %v6205
        %8732 = vmatprep.subr.bf16.mxu0 %v6204
        %8733 = vmatpush1.bf16.msra.mxu0 %v6203
        %8734 = vmatprep.subr.bf16.mxu0 %v6202
        %8735 = vmatpush1.bf16.msra.mxu0 %v6201
        %8736 = vmatprep.subr.bf16.mxu0 %v6200
        %8737 = vmatpush1.bf16.msra.mxu0 %v6199
        %8738 = vmatprep.subr.bf16.mxu0 %v6198
        %8739 = vmatpush1.bf16.msra.mxu0 %v6197
        %8740 = vmatprep.subr.bf16.mxu0 %v6196
        %8741 = vmatpush1.bf16.msra.mxu0 %v6195
        %8742 = vmatprep.subr.bf16.mxu0 %v6226
        %8743 = vmatpush2.bf16.msra.mxu0 %v6225
        %8744 = vmatprep.subr.bf16.mxu0 %v6224
        %8745 = vmatpush2.bf16.msra.mxu0 %v6223
        %8746 = vmatprep.subr.bf16.mxu0 %v6222
        %8747 = vmatpush2.bf16.msra.mxu0 %v6221
        %8748 = vmatprep.subr.bf16.mxu0 %v6220
        %8749 = vmatpush2.bf16.msra.mxu0 %v6219
        %8750 = vmatprep.subr.bf16.mxu0 %v6218
        %8751 = vmatpush2.bf16.msra.mxu0 %v6217
        %8752 = vmatprep.subr.bf16.mxu0 %v6216
        %8753 = vmatpush2.bf16.msra.mxu0 %v6215
        %8754 = vmatprep.subr.bf16.mxu0 %v6214
        %8755 = vmatpush2.bf16.msra.mxu0 %v6213
        %8756 = vmatprep.subr.bf16.mxu0 %v6212
        %8757 = vmatpush2.bf16.msra.mxu0 %v6211
        %8758 = vmatprep.mubr.bf16.mxu0 %v1830
        %8759 = vmatmul.mubr.bf16.gmra.mxu0 %v1828
        %v8760 = vpop.f32.mrf.mxu0
        %v8761 = vadd.f32 %v8720, %v8760
        %v8762 = vpop.f32.mrf.mxu0
        %v8763 = vadd.f32 %v8722, %v8762
        %v8764 = vpop.f32.mrf.mxu0
        %v8765 = vpop.f32.mrf.mxu0
        %8766 = vdwg.mxu0
        %8767 = vmatprep.subr.bf16.mxu0 %v6242
        %8768 = vmatpush1.bf16.msra.mxu0 %v6241
        %8769 = vmatprep.subr.bf16.mxu0 %v6240
        %8770 = vmatpush1.bf16.msra.mxu0 %v6239
        %8771 = vmatprep.subr.bf16.mxu0 %v6238
        %8772 = vmatpush1.bf16.msra.mxu0 %v6237
        %8773 = vmatprep.subr.bf16.mxu0 %v6236
        %8774 = vmatpush1.bf16.msra.mxu0 %v6235
        %8775 = vmatprep.subr.bf16.mxu0 %v6234
        %8776 = vmatpush1.bf16.msra.mxu0 %v6233
        %8777 = vmatprep.subr.bf16.mxu0 %v6232
        %8778 = vmatpush1.bf16.msra.mxu0 %v6231
        %8779 = vmatprep.subr.bf16.mxu0 %v6230
        %8780 = vmatpush1.bf16.msra.mxu0 %v6229
        %8781 = vmatprep.subr.bf16.mxu0 %v6228
        %8782 = vmatpush1.bf16.msra.mxu0 %v6227
        %8783 = vmatprep.subr.bf16.mxu0 %v6258
        %8784 = vmatpush2.bf16.msra.mxu0 %v6257
        %8785 = vmatprep.subr.bf16.mxu0 %v6256
        %8786 = vmatpush2.bf16.msra.mxu0 %v6255
        %8787 = vmatprep.subr.bf16.mxu0 %v6254
        %8788 = vmatpush2.bf16.msra.mxu0 %v6253
        %8789 = vmatprep.subr.bf16.mxu0 %v6252
        %8790 = vmatpush2.bf16.msra.mxu0 %v6251
        %8791 = vmatprep.subr.bf16.mxu0 %v6250
        %8792 = vmatpush2.bf16.msra.mxu0 %v6249
        %8793 = vmatprep.subr.bf16.mxu0 %v6248
        %8794 = vmatpush2.bf16.msra.mxu0 %v6247
        %8795 = vmatprep.subr.bf16.mxu0 %v6246
        %8796 = vmatpush2.bf16.msra.mxu0 %v6245
        %8797 = vmatprep.subr.bf16.mxu0 %v6244
        %8798 = vmatpush2.bf16.msra.mxu0 %v6243
        %8799 = vmatprep.mubr.bf16.mxu0 %v1868
        %8800 = vmatmul.mubr.bf16.gmra.mxu0 %v1854
        %v8801 = vpop.f32.mrf.mxu0
        %v8802 = vadd.f32 %v8761, %v8801
        %v8803 = vpop.f32.mrf.mxu0
        %v8804 = vadd.f32 %v8763, %v8803
        %v8805 = vpop.f32.mrf.mxu0
        %v8806 = vpop.f32.mrf.mxu0
        %8807 = vdwg.mxu0
        %8808 = vmatprep.subr.bf16.mxu0 %v6274
        %8809 = vmatpush1.bf16.msra.mxu0 %v6273
        %8810 = vmatprep.subr.bf16.mxu0 %v6272
        %8811 = vmatpush1.bf16.msra.mxu0 %v6271
        %8812 = vmatprep.subr.bf16.mxu0 %v6270
        %8813 = vmatpush1.bf16.msra.mxu0 %v6269
        %8814 = vmatprep.subr.bf16.mxu0 %v6268
        %8815 = vmatpush1.bf16.msra.mxu0 %v6267
        %8816 = vmatprep.subr.bf16.mxu0 %v6266
        %8817 = vmatpush1.bf16.msra.mxu0 %v6265
        %8818 = vmatprep.subr.bf16.mxu0 %v6264
        %8819 = vmatpush1.bf16.msra.mxu0 %v6263
        %8820 = vmatprep.subr.bf16.mxu0 %v6262
        %8821 = vmatpush1.bf16.msra.mxu0 %v6261
        %8822 = vmatprep.subr.bf16.mxu0 %v6260
        %8823 = vmatpush1.bf16.msra.mxu0 %v6259
        %8824 = vmatprep.subr.bf16.mxu0 %v6290
        %8825 = vmatpush2.bf16.msra.mxu0 %v6289
        %8826 = vmatprep.subr.bf16.mxu0 %v6288
        %8827 = vmatpush2.bf16.msra.mxu0 %v6287
        %8828 = vmatprep.subr.bf16.mxu0 %v6286
        %8829 = vmatpush2.bf16.msra.mxu0 %v6285
        %8830 = vmatprep.subr.bf16.mxu0 %v6284
        %8831 = vmatpush2.bf16.msra.mxu0 %v6283
        %8832 = vmatprep.subr.bf16.mxu0 %v6282
        %8833 = vmatpush2.bf16.msra.mxu0 %v6281
        %8834 = vmatprep.subr.bf16.mxu0 %v6280
        %8835 = vmatpush2.bf16.msra.mxu0 %v6279
        %8836 = vmatprep.subr.bf16.mxu0 %v6278
        %8837 = vmatpush2.bf16.msra.mxu0 %v6277
        %8838 = vmatprep.subr.bf16.mxu0 %v6276
        %8839 = vmatpush2.bf16.msra.mxu0 %v6275
        %8840 = vmatprep.mubr.bf16.mxu0 %v1878
        %8841 = vmatmul.mubr.bf16.gmra.mxu0 %v1876
        %v8842 = vpop.f32.mrf.mxu0
        %v8843 = vadd.f32 %v8802, %v8842
        %v8844 = vpop.f32.mrf.mxu0
        %v8845 = vadd.f32 %v8804, %v8844
        %v8846 = vpop.f32.mrf.mxu0
        %v8847 = vpop.f32.mrf.mxu0
        %8848 = vdwg.mxu0
        %8849 = vmatprep.subr.bf16.mxu0 %v6306
        %8850 = vmatpush1.bf16.msra.mxu0 %v6305
        %8851 = vmatprep.subr.bf16.mxu0 %v6304
        %8852 = vmatpush1.bf16.msra.mxu0 %v6303
        %8853 = vmatprep.subr.bf16.mxu0 %v6302
        %8854 = vmatpush1.bf16.msra.mxu0 %v6301
        %8855 = vmatprep.subr.bf16.mxu0 %v6300
        %8856 = vmatpush1.bf16.msra.mxu0 %v6299
        %8857 = vmatprep.subr.bf16.mxu0 %v6298
        %8858 = vmatpush1.bf16.msra.mxu0 %v6297
        %8859 = vmatprep.subr.bf16.mxu0 %v6296
        %8860 = vmatpush1.bf16.msra.mxu0 %v6295
        %8861 = vmatprep.subr.bf16.mxu0 %v6294
        %8862 = vmatpush1.bf16.msra.mxu0 %v6293
        %8863 = vmatprep.subr.bf16.mxu0 %v6292
        %8864 = vmatpush1.bf16.msra.mxu0 %v6291
        %8865 = vmatprep.subr.bf16.mxu0 %v6322
        %8866 = vmatpush2.bf16.msra.mxu0 %v6321
        %8867 = vmatprep.subr.bf16.mxu0 %v6320
        %8868 = vmatpush2.bf16.msra.mxu0 %v6319
        %8869 = vmatprep.subr.bf16.mxu0 %v6318
        %8870 = vmatpush2.bf16.msra.mxu0 %v6317
        %8871 = vmatprep.subr.bf16.mxu0 %v6316
        %8872 = vmatpush2.bf16.msra.mxu0 %v6315
        %8873 = vmatprep.subr.bf16.mxu0 %v6314
        %8874 = vmatpush2.bf16.msra.mxu0 %v6313
        %8875 = vmatprep.subr.bf16.mxu0 %v6312
        %8876 = vmatpush2.bf16.msra.mxu0 %v6311
        %8877 = vmatprep.subr.bf16.mxu0 %v6310
        %8878 = vmatpush2.bf16.msra.mxu0 %v6309
        %8879 = vmatprep.subr.bf16.mxu0 %v6308
        %8880 = vmatpush2.bf16.msra.mxu0 %v6307
        %8881 = vmatprep.mubr.bf16.mxu0 %v1875
        %8882 = vmatmul.mubr.bf16.gmra.mxu0 %v1861
        %v8883 = vpop.f32.mrf.mxu0
        %v8884 = vadd.f32 %v8843, %v8883
        %v8885 = vpop.f32.mrf.mxu0
        %v8886 = vadd.f32 %v8845, %v8885
        %v8887 = vpop.f32.mrf.mxu0
        %v8888 = vpop.f32.mrf.mxu0
        %8889 = vdwg.mxu0
        %8890 = vmatprep.subr.bf16.mxu0 %v6338
        %8891 = vmatpush1.bf16.msra.mxu0 %v6337
        %8892 = vmatprep.subr.bf16.mxu0 %v6336
        %8893 = vmatpush1.bf16.msra.mxu0 %v6335
        %8894 = vmatprep.subr.bf16.mxu0 %v6334
        %8895 = vmatpush1.bf16.msra.mxu0 %v6333
        %8896 = vmatprep.subr.bf16.mxu0 %v6332
        %8897 = vmatpush1.bf16.msra.mxu0 %v6331
        %8898 = vmatprep.subr.bf16.mxu0 %v6330
        %8899 = vmatpush1.bf16.msra.mxu0 %v6329
        %8900 = vmatprep.subr.bf16.mxu0 %v6328
        %8901 = vmatpush1.bf16.msra.mxu0 %v6327
        %8902 = vmatprep.subr.bf16.mxu0 %v6326
        %8903 = vmatpush1.bf16.msra.mxu0 %v6325
        %8904 = vmatprep.subr.bf16.mxu0 %v6324
        %8905 = vmatpush1.bf16.msra.mxu0 %v6323
        %8906 = vmatprep.subr.bf16.mxu0 %v6354
        %8907 = vmatpush2.bf16.msra.mxu0 %v6353
        %8908 = vmatprep.subr.bf16.mxu0 %v6352
        %8909 = vmatpush2.bf16.msra.mxu0 %v6351
        %8910 = vmatprep.subr.bf16.mxu0 %v6350
        %8911 = vmatpush2.bf16.msra.mxu0 %v6349
        %8912 = vmatprep.subr.bf16.mxu0 %v6348
        %8913 = vmatpush2.bf16.msra.mxu0 %v6347
        %8914 = vmatprep.subr.bf16.mxu0 %v6346
        %8915 = vmatpush2.bf16.msra.mxu0 %v6345
        %8916 = vmatprep.subr.bf16.mxu0 %v6344
        %8917 = vmatpush2.bf16.msra.mxu0 %v6343
        %8918 = vmatprep.subr.bf16.mxu0 %v6342
        %8919 = vmatpush2.bf16.msra.mxu0 %v6341
        %8920 = vmatprep.subr.bf16.mxu0 %v6340
        %8921 = vmatpush2.bf16.msra.mxu0 %v6339
        %8922 = vmatprep.mubr.bf16.mxu0 %v1879
        %8923 = vmatmul.mubr.bf16.gmra.mxu0 %v1877
        %v8924 = vpop.f32.mrf.mxu0
        %v8925 = vadd.f32 %v8884, %v8924
        %v8926 = vpop.f32.mrf.mxu0
        %v8927 = vadd.f32 %v8886, %v8926
        %v8928 = vpop.f32.mrf.mxu0
        %v8929 = vpop.f32.mrf.mxu0
        %8930 = vdwg.mxu0
        %8931 = vmatprep.subr.bf16.mxu0 %v6370
        %8932 = vmatpush1.bf16.msra.mxu0 %v6369
        %8933 = vmatprep.subr.bf16.mxu0 %v6368
        %8934 = vmatpush1.bf16.msra.mxu0 %v6367
        %8935 = vmatprep.subr.bf16.mxu0 %v6366
        %8936 = vmatpush1.bf16.msra.mxu0 %v6365
        %8937 = vmatprep.subr.bf16.mxu0 %v6364
        %8938 = vmatpush1.bf16.msra.mxu0 %v6363
        %8939 = vmatprep.subr.bf16.mxu0 %v6362
        %8940 = vmatpush1.bf16.msra.mxu0 %v6361
        %8941 = vmatprep.subr.bf16.mxu0 %v6360
        %8942 = vmatpush1.bf16.msra.mxu0 %v6359
        %8943 = vmatprep.subr.bf16.mxu0 %v6358
        %8944 = vmatpush1.bf16.msra.mxu0 %v6357
        %8945 = vmatprep.subr.bf16.mxu0 %v6356
        %8946 = vmatpush1.bf16.msra.mxu0 %v6355
        %8947 = vmatprep.subr.bf16.mxu0 %v6386
        %8948 = vmatpush2.bf16.msra.mxu0 %v6385
        %8949 = vmatprep.subr.bf16.mxu0 %v6384
        %8950 = vmatpush2.bf16.msra.mxu0 %v6383
        %8951 = vmatprep.subr.bf16.mxu0 %v6382
        %8952 = vmatpush2.bf16.msra.mxu0 %v6381
        %8953 = vmatprep.subr.bf16.mxu0 %v6380
        %8954 = vmatpush2.bf16.msra.mxu0 %v6379
        %8955 = vmatprep.subr.bf16.mxu0 %v6378
        %8956 = vmatpush2.bf16.msra.mxu0 %v6377
        %8957 = vmatprep.subr.bf16.mxu0 %v6376
        %8958 = vmatpush2.bf16.msra.mxu0 %v6375
        %8959 = vmatprep.subr.bf16.mxu0 %v6374
        %8960 = vmatpush2.bf16.msra.mxu0 %v6373
        %8961 = vmatprep.subr.bf16.mxu0 %v6372
        %8962 = vmatpush2.bf16.msra.mxu0 %v6371
        %8963 = vmatprep.mubr.bf16.mxu0 %v1917
        %8964 = vmatmul.mubr.bf16.gmra.mxu0 %v1903
        %v8965 = vpop.f32.mrf.mxu0
        %v8966 = vadd.f32 %v8925, %v8965
        %v8967 = vpop.f32.mrf.mxu0
        %v8968 = vadd.f32 %v8927, %v8967
        %v8969 = vpop.f32.mrf.mxu0
        %v8970 = vpop.f32.mrf.mxu0
        %8971 = vdwg.mxu0
        %8972 = vmatprep.subr.bf16.mxu0 %v6402
        %8973 = vmatpush1.bf16.msra.mxu0 %v6401
        %8974 = vmatprep.subr.bf16.mxu0 %v6400
        %8975 = vmatpush1.bf16.msra.mxu0 %v6399
        %8976 = vmatprep.subr.bf16.mxu0 %v6398
        %8977 = vmatpush1.bf16.msra.mxu0 %v6397
        %8978 = vmatprep.subr.bf16.mxu0 %v6396
        %8979 = vmatpush1.bf16.msra.mxu0 %v6395
        %8980 = vmatprep.subr.bf16.mxu0 %v6394
        %8981 = vmatpush1.bf16.msra.mxu0 %v6393
        %8982 = vmatprep.subr.bf16.mxu0 %v6392
        %8983 = vmatpush1.bf16.msra.mxu0 %v6391
        %8984 = vmatprep.subr.bf16.mxu0 %v6390
        %8985 = vmatpush1.bf16.msra.mxu0 %v6389
        %8986 = vmatprep.subr.bf16.mxu0 %v6388
        %8987 = vmatpush1.bf16.msra.mxu0 %v6387
        %8988 = vmatprep.subr.bf16.mxu0 %v6418
        %8989 = vmatpush2.bf16.msra.mxu0 %v6417
        %8990 = vmatprep.subr.bf16.mxu0 %v6416
        %8991 = vmatpush2.bf16.msra.mxu0 %v6415
        %8992 = vmatprep.subr.bf16.mxu0 %v6414
        %8993 = vmatpush2.bf16.msra.mxu0 %v6413
        %8994 = vmatprep.subr.bf16.mxu0 %v6412
        %8995 = vmatpush2.bf16.msra.mxu0 %v6411
        %8996 = vmatprep.subr.bf16.mxu0 %v6410
        %8997 = vmatpush2.bf16.msra.mxu0 %v6409
        %8998 = vmatprep.subr.bf16.mxu0 %v6408
        %8999 = vmatpush2.bf16.msra.mxu0 %v6407
        %9000 = vmatprep.subr.bf16.mxu0 %v6406
        %9001 = vmatpush2.bf16.msra.mxu0 %v6405
        %9002 = vmatprep.subr.bf16.mxu0 %v6404
        %9003 = vmatpush2.bf16.msra.mxu0 %v6403
        %9004 = vmatprep.mubr.bf16.mxu0 %v1927
        %9005 = vmatmul.mubr.bf16.gmra.mxu0 %v1925
        %v9006 = vpop.f32.mrf.mxu0
        %v9007 = vadd.f32 %v8966, %v9006
        %v9008 = vpop.f32.mrf.mxu0
        %v9009 = vadd.f32 %v8968, %v9008
        %v9010 = vpop.f32.mrf.mxu0
        %v9011 = vpop.f32.mrf.mxu0
        %9012 = vdwg.mxu0
        %9013 = vmatprep.subr.bf16.mxu0 %v6434
        %9014 = vmatpush1.bf16.msra.mxu0 %v6433
        %9015 = vmatprep.subr.bf16.mxu0 %v6432
        %9016 = vmatpush1.bf16.msra.mxu0 %v6431
        %9017 = vmatprep.subr.bf16.mxu0 %v6430
        %9018 = vmatpush1.bf16.msra.mxu0 %v6429
        %9019 = vmatprep.subr.bf16.mxu0 %v6428
        %9020 = vmatpush1.bf16.msra.mxu0 %v6427
        %9021 = vmatprep.subr.bf16.mxu0 %v6426
        %9022 = vmatpush1.bf16.msra.mxu0 %v6425
        %9023 = vmatprep.subr.bf16.mxu0 %v6424
        %9024 = vmatpush1.bf16.msra.mxu0 %v6423
        %9025 = vmatprep.subr.bf16.mxu0 %v6422
        %9026 = vmatpush1.bf16.msra.mxu0 %v6421
        %9027 = vmatprep.subr.bf16.mxu0 %v6420
        %9028 = vmatpush1.bf16.msra.mxu0 %v6419
        %9029 = vmatprep.subr.bf16.mxu0 %v6450
        %9030 = vmatpush2.bf16.msra.mxu0 %v6449
        %9031 = vmatprep.subr.bf16.mxu0 %v6448
        %9032 = vmatpush2.bf16.msra.mxu0 %v6447
        %9033 = vmatprep.subr.bf16.mxu0 %v6446
        %9034 = vmatpush2.bf16.msra.mxu0 %v6445
        %9035 = vmatprep.subr.bf16.mxu0 %v6444
        %9036 = vmatpush2.bf16.msra.mxu0 %v6443
        %9037 = vmatprep.subr.bf16.mxu0 %v6442
        %9038 = vmatpush2.bf16.msra.mxu0 %v6441
        %9039 = vmatprep.subr.bf16.mxu0 %v6440
        %9040 = vmatpush2.bf16.msra.mxu0 %v6439
        %9041 = vmatprep.subr.bf16.mxu0 %v6438
        %9042 = vmatpush2.bf16.msra.mxu0 %v6437
        %9043 = vmatprep.subr.bf16.mxu0 %v6436
        %9044 = vmatpush2.bf16.msra.mxu0 %v6435
        %9045 = vmatprep.mubr.bf16.mxu0 %v1924
        %9046 = vmatmul.mubr.bf16.gmra.mxu0 %v1910
        %v9047 = vpop.f32.mrf.mxu0
        %v9048 = vadd.f32 %v9007, %v9047
        %v9049 = vpop.f32.mrf.mxu0
        %v9050 = vadd.f32 %v9009, %v9049
        %v9051 = vpop.f32.mrf.mxu0
        %v9052 = vpop.f32.mrf.mxu0
        %9053 = vdwg.mxu0
        %9054 = vmatprep.subr.bf16.mxu0 %v6466
        %9055 = vmatpush1.bf16.msra.mxu0 %v6465
        %9056 = vmatprep.subr.bf16.mxu0 %v6464
        %9057 = vmatpush1.bf16.msra.mxu0 %v6463
        %9058 = vmatprep.subr.bf16.mxu0 %v6462
        %9059 = vmatpush1.bf16.msra.mxu0 %v6461
        %9060 = vmatprep.subr.bf16.mxu0 %v6460
        %9061 = vmatpush1.bf16.msra.mxu0 %v6459
        %9062 = vmatprep.subr.bf16.mxu0 %v6458
        %9063 = vmatpush1.bf16.msra.mxu0 %v6457
        %9064 = vmatprep.subr.bf16.mxu0 %v6456
        %9065 = vmatpush1.bf16.msra.mxu0 %v6455
        %9066 = vmatprep.subr.bf16.mxu0 %v6454
        %9067 = vmatpush1.bf16.msra.mxu0 %v6453
        %9068 = vmatprep.subr.bf16.mxu0 %v6452
        %9069 = vmatpush1.bf16.msra.mxu0 %v6451
        %9070 = vmatprep.subr.bf16.mxu0 %v6482
        %9071 = vmatpush2.bf16.msra.mxu0 %v6481
        %9072 = vmatprep.subr.bf16.mxu0 %v6480
        %9073 = vmatpush2.bf16.msra.mxu0 %v6479
        %9074 = vmatprep.subr.bf16.mxu0 %v6478
        %9075 = vmatpush2.bf16.msra.mxu0 %v6477
        %9076 = vmatprep.subr.bf16.mxu0 %v6476
        %9077 = vmatpush2.bf16.msra.mxu0 %v6475
        %9078 = vmatprep.subr.bf16.mxu0 %v6474
        %9079 = vmatpush2.bf16.msra.mxu0 %v6473
        %9080 = vmatprep.subr.bf16.mxu0 %v6472
        %9081 = vmatpush2.bf16.msra.mxu0 %v6471
        %9082 = vmatprep.subr.bf16.mxu0 %v6470
        %9083 = vmatpush2.bf16.msra.mxu0 %v6469
        %9084 = vmatprep.subr.bf16.mxu0 %v6468
        %9085 = vmatpush2.bf16.msra.mxu0 %v6467
        %9086 = vmatprep.mubr.bf16.mxu0 %v1928
        %9087 = vmatmul.mubr.bf16.gmra.mxu0 %v1926
        %v9088 = vpop.f32.mrf.mxu0
        %v9089 = vadd.f32 %v9048, %v9088
        %v9090 = vpop.f32.mrf.mxu0
        %v9091 = vadd.f32 %v9050, %v9090
        %v9092 = vpop.f32.mrf.mxu0
        %v9093 = vpop.f32.mrf.mxu0
        %9094 = vdwg.mxu0
        %9095 = vmatprep.subr.bf16.mxu0 %v6498
        %9096 = vmatpush1.bf16.msra.mxu0 %v6497
        %9097 = vmatprep.subr.bf16.mxu0 %v6496
        %9098 = vmatpush1.bf16.msra.mxu0 %v6495
        %9099 = vmatprep.subr.bf16.mxu0 %v6494
        %9100 = vmatpush1.bf16.msra.mxu0 %v6493
        %9101 = vmatprep.subr.bf16.mxu0 %v6492
        %9102 = vmatpush1.bf16.msra.mxu0 %v6491
        %9103 = vmatprep.subr.bf16.mxu0 %v6490
        %9104 = vmatpush1.bf16.msra.mxu0 %v6489
        %9105 = vmatprep.subr.bf16.mxu0 %v6488
        %9106 = vmatpush1.bf16.msra.mxu0 %v6487
        %9107 = vmatprep.subr.bf16.mxu0 %v6486
        %9108 = vmatpush1.bf16.msra.mxu0 %v6485
        %9109 = vmatprep.subr.bf16.mxu0 %v6484
        %9110 = vmatpush1.bf16.msra.mxu0 %v6483
        %9111 = vmatprep.subr.bf16.mxu0 %v6514
        %9112 = vmatpush2.bf16.msra.mxu0 %v6513
        %9113 = vmatprep.subr.bf16.mxu0 %v6512
        %9114 = vmatpush2.bf16.msra.mxu0 %v6511
        %9115 = vmatprep.subr.bf16.mxu0 %v6510
        %9116 = vmatpush2.bf16.msra.mxu0 %v6509
        %9117 = vmatprep.subr.bf16.mxu0 %v6508
        %9118 = vmatpush2.bf16.msra.mxu0 %v6507
        %9119 = vmatprep.subr.bf16.mxu0 %v6506
        %9120 = vmatpush2.bf16.msra.mxu0 %v6505
        %9121 = vmatprep.subr.bf16.mxu0 %v6504
        %9122 = vmatpush2.bf16.msra.mxu0 %v6503
        %9123 = vmatprep.subr.bf16.mxu0 %v6502
        %9124 = vmatpush2.bf16.msra.mxu0 %v6501
        %9125 = vmatprep.subr.bf16.mxu0 %v6500
        %9126 = vmatpush2.bf16.msra.mxu0 %v6499
        %9127 = vmatprep.mubr.bf16.mxu0 %v1966
        %9128 = vmatmul.mubr.bf16.gmra.mxu0 %v1952
        %v9129 = vpop.f32.mrf.mxu0
        %v9130 = vadd.f32 %v9089, %v9129
        %v9131 = vpop.f32.mrf.mxu0
        %v9132 = vadd.f32 %v9091, %v9131
        %v9133 = vpop.f32.mrf.mxu0
        %v9134 = vpop.f32.mrf.mxu0
        %9135 = vdwg.mxu0
        %9136 = vmatprep.subr.bf16.mxu0 %v6530
        %9137 = vmatpush1.bf16.msra.mxu0 %v6529
        %9138 = vmatprep.subr.bf16.mxu0 %v6528
        %9139 = vmatpush1.bf16.msra.mxu0 %v6527
        %9140 = vmatprep.subr.bf16.mxu0 %v6526
        %9141 = vmatpush1.bf16.msra.mxu0 %v6525
        %9142 = vmatprep.subr.bf16.mxu0 %v6524
        %9143 = vmatpush1.bf16.msra.mxu0 %v6523
        %9144 = vmatprep.subr.bf16.mxu0 %v6522
        %9145 = vmatpush1.bf16.msra.mxu0 %v6521
        %9146 = vmatprep.subr.bf16.mxu0 %v6520
        %9147 = vmatpush1.bf16.msra.mxu0 %v6519
        %9148 = vmatprep.subr.bf16.mxu0 %v6518
        %9149 = vmatpush1.bf16.msra.mxu0 %v6517
        %9150 = vmatprep.subr.bf16.mxu0 %v6516
        %9151 = vmatpush1.bf16.msra.mxu0 %v6515
        %9152 = vmatprep.subr.bf16.mxu0 %v6546
        %9153 = vmatpush2.bf16.msra.mxu0 %v6545
        %9154 = vmatprep.subr.bf16.mxu0 %v6544
        %9155 = vmatpush2.bf16.msra.mxu0 %v6543
        %9156 = vmatprep.subr.bf16.mxu0 %v6542
        %9157 = vmatpush2.bf16.msra.mxu0 %v6541
        %9158 = vmatprep.subr.bf16.mxu0 %v6540
        %9159 = vmatpush2.bf16.msra.mxu0 %v6539
        %9160 = vmatprep.subr.bf16.mxu0 %v6538
        %9161 = vmatpush2.bf16.msra.mxu0 %v6537
        %9162 = vmatprep.subr.bf16.mxu0 %v6536
        %9163 = vmatpush2.bf16.msra.mxu0 %v6535
        %9164 = vmatprep.subr.bf16.mxu0 %v6534
        %9165 = vmatpush2.bf16.msra.mxu0 %v6533
        %9166 = vmatprep.subr.bf16.mxu0 %v6532
        %9167 = vmatpush2.bf16.msra.mxu0 %v6531
        %9168 = vmatprep.mubr.bf16.mxu0 %v1976
        %9169 = vmatmul.mubr.bf16.gmra.mxu0 %v1974
        %v9170 = vpop.f32.mrf.mxu0
        %v9171 = vadd.f32 %v9130, %v9170
        %v9172 = vpop.f32.mrf.mxu0
        %v9173 = vadd.f32 %v9132, %v9172
        %v9174 = vpop.f32.mrf.mxu0
        %v9175 = vpop.f32.mrf.mxu0
        %9176 = vdwg.mxu0
        %9177 = vmatprep.subr.bf16.mxu0 %v6562
        %9178 = vmatpush1.bf16.msra.mxu0 %v6561
        %9179 = vmatprep.subr.bf16.mxu0 %v6560
        %9180 = vmatpush1.bf16.msra.mxu0 %v6559
        %9181 = vmatprep.subr.bf16.mxu0 %v6558
        %9182 = vmatpush1.bf16.msra.mxu0 %v6557
        %9183 = vmatprep.subr.bf16.mxu0 %v6556
        %9184 = vmatpush1.bf16.msra.mxu0 %v6555
        %9185 = vmatprep.subr.bf16.mxu0 %v6554
        %9186 = vmatpush1.bf16.msra.mxu0 %v6553
        %9187 = vmatprep.subr.bf16.mxu0 %v6552
        %9188 = vmatpush1.bf16.msra.mxu0 %v6551
        %9189 = vmatprep.subr.bf16.mxu0 %v6550
        %9190 = vmatpush1.bf16.msra.mxu0 %v6549
        %9191 = vmatprep.subr.bf16.mxu0 %v6548
        %9192 = vmatpush1.bf16.msra.mxu0 %v6547
        %9193 = vmatprep.subr.bf16.mxu0 %v6578
        %9194 = vmatpush2.bf16.msra.mxu0 %v6577
        %9195 = vmatprep.subr.bf16.mxu0 %v6576
        %9196 = vmatpush2.bf16.msra.mxu0 %v6575
        %9197 = vmatprep.subr.bf16.mxu0 %v6574
        %9198 = vmatpush2.bf16.msra.mxu0 %v6573
        %9199 = vmatprep.subr.bf16.mxu0 %v6572
        %9200 = vmatpush2.bf16.msra.mxu0 %v6571
        %9201 = vmatprep.subr.bf16.mxu0 %v6570
        %9202 = vmatpush2.bf16.msra.mxu0 %v6569
        %9203 = vmatprep.subr.bf16.mxu0 %v6568
        %9204 = vmatpush2.bf16.msra.mxu0 %v6567
        %9205 = vmatprep.subr.bf16.mxu0 %v6566
        %9206 = vmatpush2.bf16.msra.mxu0 %v6565
        %9207 = vmatprep.subr.bf16.mxu0 %v6564
        %9208 = vmatpush2.bf16.msra.mxu0 %v6563
        %9209 = vmatprep.mubr.bf16.mxu0 %v1973
        %9210 = vmatmul.mubr.bf16.gmra.mxu0 %v1959
        %v9211 = vpop.f32.mrf.mxu0
        %v9212 = vadd.f32 %v9171, %v9211
        %v9213 = vpop.f32.mrf.mxu0
        %v9214 = vadd.f32 %v9173, %v9213
        %v9215 = vpop.f32.mrf.mxu0
        %v9216 = vpop.f32.mrf.mxu0
        %9217 = vdwg.mxu0
        %9218 = vmatprep.subr.bf16.mxu0 %v6594
        %9219 = vmatpush1.bf16.msra.mxu0 %v6593
        %9220 = vmatprep.subr.bf16.mxu0 %v6592
        %9221 = vmatpush1.bf16.msra.mxu0 %v6591
        %9222 = vmatprep.subr.bf16.mxu0 %v6590
        %9223 = vmatpush1.bf16.msra.mxu0 %v6589
        %9224 = vmatprep.subr.bf16.mxu0 %v6588
        %9225 = vmatpush1.bf16.msra.mxu0 %v6587
        %9226 = vmatprep.subr.bf16.mxu0 %v6586
        %9227 = vmatpush1.bf16.msra.mxu0 %v6585
        %9228 = vmatprep.subr.bf16.mxu0 %v6584
        %9229 = vmatpush1.bf16.msra.mxu0 %v6583
        %9230 = vmatprep.subr.bf16.mxu0 %v6582
        %9231 = vmatpush1.bf16.msra.mxu0 %v6581
        %9232 = vmatprep.subr.bf16.mxu0 %v6580
        %9233 = vmatpush1.bf16.msra.mxu0 %v6579
        %9234 = vmatprep.subr.bf16.mxu0 %v6610
        %9235 = vmatpush2.bf16.msra.mxu0 %v6609
        %9236 = vmatprep.subr.bf16.mxu0 %v6608
        %9237 = vmatpush2.bf16.msra.mxu0 %v6607
        %9238 = vmatprep.subr.bf16.mxu0 %v6606
        %9239 = vmatpush2.bf16.msra.mxu0 %v6605
        %9240 = vmatprep.subr.bf16.mxu0 %v6604
        %9241 = vmatpush2.bf16.msra.mxu0 %v6603
        %9242 = vmatprep.subr.bf16.mxu0 %v6602
        %9243 = vmatpush2.bf16.msra.mxu0 %v6601
        %9244 = vmatprep.subr.bf16.mxu0 %v6600
        %9245 = vmatpush2.bf16.msra.mxu0 %v6599
        %9246 = vmatprep.subr.bf16.mxu0 %v6598
        %9247 = vmatpush2.bf16.msra.mxu0 %v6597
        %9248 = vmatprep.subr.bf16.mxu0 %v6596
        %9249 = vmatpush2.bf16.msra.mxu0 %v6595
        %9250 = vmatprep.mubr.bf16.mxu0 %v1977
        %9251 = vmatmul.mubr.bf16.gmra.mxu0 %v1975
        %v9252 = vpop.f32.mrf.mxu0
        %v9253 = vadd.f32 %v9212, %v9252
        %v9254 = vpop.f32.mrf.mxu0
        %v9255 = vadd.f32 %v9214, %v9254
        %v9256 = vpop.f32.mrf.mxu0
        %v9257 = vpop.f32.mrf.mxu0
        %9258 = vdwg.mxu0
        %9259 = vmatprep.subr.bf16.mxu0 %v6626
        %9260 = vmatpush1.bf16.msra.mxu0 %v6625
        %9261 = vmatprep.subr.bf16.mxu0 %v6624
        %9262 = vmatpush1.bf16.msra.mxu0 %v6623
        %9263 = vmatprep.subr.bf16.mxu0 %v6622
        %9264 = vmatpush1.bf16.msra.mxu0 %v6621
        %9265 = vmatprep.subr.bf16.mxu0 %v6620
        %9266 = vmatpush1.bf16.msra.mxu0 %v6619
        %9267 = vmatprep.subr.bf16.mxu0 %v6618
        %9268 = vmatpush1.bf16.msra.mxu0 %v6617
        %9269 = vmatprep.subr.bf16.mxu0 %v6616
        %9270 = vmatpush1.bf16.msra.mxu0 %v6615
        %9271 = vmatprep.subr.bf16.mxu0 %v6614
        %9272 = vmatpush1.bf16.msra.mxu0 %v6613
        %9273 = vmatprep.subr.bf16.mxu0 %v6612
        %9274 = vmatpush1.bf16.msra.mxu0 %v6611
        %9275 = vmatprep.subr.bf16.mxu0 %v6642
        %9276 = vmatpush2.bf16.msra.mxu0 %v6641
        %9277 = vmatprep.subr.bf16.mxu0 %v6640
        %9278 = vmatpush2.bf16.msra.mxu0 %v6639
        %9279 = vmatprep.subr.bf16.mxu0 %v6638
        %9280 = vmatpush2.bf16.msra.mxu0 %v6637
        %9281 = vmatprep.subr.bf16.mxu0 %v6636
        %9282 = vmatpush2.bf16.msra.mxu0 %v6635
        %9283 = vmatprep.subr.bf16.mxu0 %v6634
        %9284 = vmatpush2.bf16.msra.mxu0 %v6633
        %9285 = vmatprep.subr.bf16.mxu0 %v6632
        %9286 = vmatpush2.bf16.msra.mxu0 %v6631
        %9287 = vmatprep.subr.bf16.mxu0 %v6630
        %9288 = vmatpush2.bf16.msra.mxu0 %v6629
        %9289 = vmatprep.subr.bf16.mxu0 %v6628
        %9290 = vmatpush2.bf16.msra.mxu0 %v6627
        %9291 = vmatprep.mubr.bf16.mxu0 %v2015
        %9292 = vmatmul.mubr.bf16.gmra.mxu0 %v2001
        %v9293 = vpop.f32.mrf.mxu0
        %v9294 = vadd.f32 %v9253, %v9293
        %v9295 = vpop.f32.mrf.mxu0
        %v9296 = vadd.f32 %v9255, %v9295
        %v9297 = vpop.f32.mrf.mxu0
        %v9298 = vpop.f32.mrf.mxu0
        %9299 = vdwg.mxu0
        %9300 = vmatprep.subr.bf16.mxu0 %v6658
        %9301 = vmatpush1.bf16.msra.mxu0 %v6657
        %9302 = vmatprep.subr.bf16.mxu0 %v6656
        %9303 = vmatpush1.bf16.msra.mxu0 %v6655
        %9304 = vmatprep.subr.bf16.mxu0 %v6654
        %9305 = vmatpush1.bf16.msra.mxu0 %v6653
        %9306 = vmatprep.subr.bf16.mxu0 %v6652
        %9307 = vmatpush1.bf16.msra.mxu0 %v6651
        %9308 = vmatprep.subr.bf16.mxu0 %v6650
        %9309 = vmatpush1.bf16.msra.mxu0 %v6649
        %9310 = vmatprep.subr.bf16.mxu0 %v6648
        %9311 = vmatpush1.bf16.msra.mxu0 %v6647
        %9312 = vmatprep.subr.bf16.mxu0 %v6646
        %9313 = vmatpush1.bf16.msra.mxu0 %v6645
        %9314 = vmatprep.subr.bf16.mxu0 %v6644
        %9315 = vmatpush1.bf16.msra.mxu0 %v6643
        %9316 = vmatprep.subr.bf16.mxu0 %v6674
        %9317 = vmatpush2.bf16.msra.mxu0 %v6673
        %9318 = vmatprep.subr.bf16.mxu0 %v6672
        %9319 = vmatpush2.bf16.msra.mxu0 %v6671
        %9320 = vmatprep.subr.bf16.mxu0 %v6670
        %9321 = vmatpush2.bf16.msra.mxu0 %v6669
        %9322 = vmatprep.subr.bf16.mxu0 %v6668
        %9323 = vmatpush2.bf16.msra.mxu0 %v6667
        %9324 = vmatprep.subr.bf16.mxu0 %v6666
        %9325 = vmatpush2.bf16.msra.mxu0 %v6665
        %9326 = vmatprep.subr.bf16.mxu0 %v6664
        %9327 = vmatpush2.bf16.msra.mxu0 %v6663
        %9328 = vmatprep.subr.bf16.mxu0 %v6662
        %9329 = vmatpush2.bf16.msra.mxu0 %v6661
        %9330 = vmatprep.subr.bf16.mxu0 %v6660
        %9331 = vmatpush2.bf16.msra.mxu0 %v6659
        %9332 = vmatprep.mubr.bf16.mxu0 %v2025
        %9333 = vmatmul.mubr.bf16.gmra.mxu0 %v2023
        %v9334 = vpop.f32.mrf.mxu0
        %v9335 = vadd.f32 %v9294, %v9334
        %v9336 = vpop.f32.mrf.mxu0
        %v9337 = vadd.f32 %v9296, %v9336
        %v9338 = vpop.f32.mrf.mxu0
        %v9339 = vpop.f32.mrf.mxu0
        %9340 = vdwg.mxu0
        %9341 = vmatprep.subr.bf16.mxu0 %v6690
        %9342 = vmatpush1.bf16.msra.mxu0 %v6689
        %9343 = vmatprep.subr.bf16.mxu0 %v6688
        %9344 = vmatpush1.bf16.msra.mxu0 %v6687
        %9345 = vmatprep.subr.bf16.mxu0 %v6686
        %9346 = vmatpush1.bf16.msra.mxu0 %v6685
        %9347 = vmatprep.subr.bf16.mxu0 %v6684
        %9348 = vmatpush1.bf16.msra.mxu0 %v6683
        %9349 = vmatprep.subr.bf16.mxu0 %v6682
        %9350 = vmatpush1.bf16.msra.mxu0 %v6681
        %9351 = vmatprep.subr.bf16.mxu0 %v6680
        %9352 = vmatpush1.bf16.msra.mxu0 %v6679
        %9353 = vmatprep.subr.bf16.mxu0 %v6678
        %9354 = vmatpush1.bf16.msra.mxu0 %v6677
        %9355 = vmatprep.subr.bf16.mxu0 %v6676
        %9356 = vmatpush1.bf16.msra.mxu0 %v6675
        %9357 = vmatprep.subr.bf16.mxu0 %v6706
        %9358 = vmatpush2.bf16.msra.mxu0 %v6705
        %9359 = vmatprep.subr.bf16.mxu0 %v6704
        %9360 = vmatpush2.bf16.msra.mxu0 %v6703
        %9361 = vmatprep.subr.bf16.mxu0 %v6702
        %9362 = vmatpush2.bf16.msra.mxu0 %v6701
        %9363 = vmatprep.subr.bf16.mxu0 %v6700
        %9364 = vmatpush2.bf16.msra.mxu0 %v6699
        %9365 = vmatprep.subr.bf16.mxu0 %v6698
        %9366 = vmatpush2.bf16.msra.mxu0 %v6697
        %9367 = vmatprep.subr.bf16.mxu0 %v6696
        %9368 = vmatpush2.bf16.msra.mxu0 %v6695
        %9369 = vmatprep.subr.bf16.mxu0 %v6694
        %9370 = vmatpush2.bf16.msra.mxu0 %v6693
        %9371 = vmatprep.subr.bf16.mxu0 %v6692
        %9372 = vmatpush2.bf16.msra.mxu0 %v6691
        %9373 = vmatprep.mubr.bf16.mxu0 %v2022
        %9374 = vmatmul.mubr.bf16.gmra.mxu0 %v2008
        %v9375 = vpop.f32.mrf.mxu0
        %v9376 = vadd.f32 %v9335, %v9375
        %v9377 = vpop.f32.mrf.mxu0
        %v9378 = vadd.f32 %v9337, %v9377
        %v9379 = vpop.f32.mrf.mxu0
        %v9380 = vpop.f32.mrf.mxu0
        %9381 = vdwg.mxu0
        %9382 = vmatprep.subr.bf16.mxu0 %v6722
        %9383 = vmatpush1.bf16.msra.mxu0 %v6721
        %9384 = vmatprep.subr.bf16.mxu0 %v6720
        %9385 = vmatpush1.bf16.msra.mxu0 %v6719
        %9386 = vmatprep.subr.bf16.mxu0 %v6718
        %9387 = vmatpush1.bf16.msra.mxu0 %v6717
        %9388 = vmatprep.subr.bf16.mxu0 %v6716
        %9389 = vmatpush1.bf16.msra.mxu0 %v6715
        %9390 = vmatprep.subr.bf16.mxu0 %v6714
        %9391 = vmatpush1.bf16.msra.mxu0 %v6713
        %9392 = vmatprep.subr.bf16.mxu0 %v6712
        %9393 = vmatpush1.bf16.msra.mxu0 %v6711
        %9394 = vmatprep.subr.bf16.mxu0 %v6710
        %9395 = vmatpush1.bf16.msra.mxu0 %v6709
        %9396 = vmatprep.subr.bf16.mxu0 %v6708
        %9397 = vmatpush1.bf16.msra.mxu0 %v6707
        %9398 = vmatprep.subr.bf16.mxu0 %v6738
        %9399 = vmatpush2.bf16.msra.mxu0 %v6737
        %9400 = vmatprep.subr.bf16.mxu0 %v6736
        %9401 = vmatpush2.bf16.msra.mxu0 %v6735
        %9402 = vmatprep.subr.bf16.mxu0 %v6734
        %9403 = vmatpush2.bf16.msra.mxu0 %v6733
        %9404 = vmatprep.subr.bf16.mxu0 %v6732
        %9405 = vmatpush2.bf16.msra.mxu0 %v6731
        %9406 = vmatprep.subr.bf16.mxu0 %v6730
        %9407 = vmatpush2.bf16.msra.mxu0 %v6729
        %9408 = vmatprep.subr.bf16.mxu0 %v6728
        %9409 = vmatpush2.bf16.msra.mxu0 %v6727
        %9410 = vmatprep.subr.bf16.mxu0 %v6726
        %9411 = vmatpush2.bf16.msra.mxu0 %v6725
        %9412 = vmatprep.subr.bf16.mxu0 %v6724
        %9413 = vmatpush2.bf16.msra.mxu0 %v6723
        %9414 = vmatprep.mubr.bf16.mxu0 %v2026
        %9415 = vmatmul.mubr.bf16.gmra.mxu0 %v2024
        %v9416 = vpop.f32.mrf.mxu0
        %v9417 = vadd.f32 %v9376, %v9416
        %v9418 = vpop.f32.mrf.mxu0
        %v9419 = vadd.f32 %v9378, %v9418
        %v9420 = vpop.f32.mrf.mxu0
        %v9421 = vpop.f32.mrf.mxu0
        %9422 = vdwg.mxu0
        %9423 = vmatprep.subr.bf16.mxu0 %v6754
        %9424 = vmatpush1.bf16.msra.mxu0 %v6753
        %9425 = vmatprep.subr.bf16.mxu0 %v6752
        %9426 = vmatpush1.bf16.msra.mxu0 %v6751
        %9427 = vmatprep.subr.bf16.mxu0 %v6750
        %9428 = vmatpush1.bf16.msra.mxu0 %v6749
        %9429 = vmatprep.subr.bf16.mxu0 %v6748
        %9430 = vmatpush1.bf16.msra.mxu0 %v6747
        %9431 = vmatprep.subr.bf16.mxu0 %v6746
        %9432 = vmatpush1.bf16.msra.mxu0 %v6745
        %9433 = vmatprep.subr.bf16.mxu0 %v6744
        %9434 = vmatpush1.bf16.msra.mxu0 %v6743
        %9435 = vmatprep.subr.bf16.mxu0 %v6742
        %9436 = vmatpush1.bf16.msra.mxu0 %v6741
        %9437 = vmatprep.subr.bf16.mxu0 %v6740
        %9438 = vmatpush1.bf16.msra.mxu0 %v6739
        %9439 = vmatprep.subr.bf16.mxu0 %v6770
        %9440 = vmatpush2.bf16.msra.mxu0 %v6769
        %9441 = vmatprep.subr.bf16.mxu0 %v6768
        %9442 = vmatpush2.bf16.msra.mxu0 %v6767
        %9443 = vmatprep.subr.bf16.mxu0 %v6766
        %9444 = vmatpush2.bf16.msra.mxu0 %v6765
        %9445 = vmatprep.subr.bf16.mxu0 %v6764
        %9446 = vmatpush2.bf16.msra.mxu0 %v6763
        %9447 = vmatprep.subr.bf16.mxu0 %v6762
        %9448 = vmatpush2.bf16.msra.mxu0 %v6761
        %9449 = vmatprep.subr.bf16.mxu0 %v6760
        %9450 = vmatpush2.bf16.msra.mxu0 %v6759
        %9451 = vmatprep.subr.bf16.mxu0 %v6758
        %9452 = vmatpush2.bf16.msra.mxu0 %v6757
        %9453 = vmatprep.subr.bf16.mxu0 %v6756
        %9454 = vmatpush2.bf16.msra.mxu0 %v6755
        %9455 = vmatprep.mubr.bf16.mxu0 %v2064
        %9456 = vmatmul.mubr.bf16.gmra.mxu0 %v2050
        %v9457 = vpop.f32.mrf.mxu0
        %v9458 = vadd.f32 %v9417, %v9457
        %v9459 = vpop.f32.mrf.mxu0
        %v9460 = vadd.f32 %v9419, %v9459
        %v9461 = vpop.f32.mrf.mxu0
        %v9462 = vpop.f32.mrf.mxu0
        %9463 = vdwg.mxu0
        %9464 = vmatprep.subr.bf16.mxu0 %v6786
        %9465 = vmatpush1.bf16.msra.mxu0 %v6785
        %9466 = vmatprep.subr.bf16.mxu0 %v6784
        %9467 = vmatpush1.bf16.msra.mxu0 %v6783
        %9468 = vmatprep.subr.bf16.mxu0 %v6782
        %9469 = vmatpush1.bf16.msra.mxu0 %v6781
        %9470 = vmatprep.subr.bf16.mxu0 %v6780
        %9471 = vmatpush1.bf16.msra.mxu0 %v6779
        %9472 = vmatprep.subr.bf16.mxu0 %v6778
        %9473 = vmatpush1.bf16.msra.mxu0 %v6777
        %9474 = vmatprep.subr.bf16.mxu0 %v6776
        %9475 = vmatpush1.bf16.msra.mxu0 %v6775
        %9476 = vmatprep.subr.bf16.mxu0 %v6774
        %9477 = vmatpush1.bf16.msra.mxu0 %v6773
        %9478 = vmatprep.subr.bf16.mxu0 %v6772
        %9479 = vmatpush1.bf16.msra.mxu0 %v6771
        %9480 = vmatprep.subr.bf16.mxu0 %v6802
        %9481 = vmatpush2.bf16.msra.mxu0 %v6801
        %9482 = vmatprep.subr.bf16.mxu0 %v6800
        %9483 = vmatpush2.bf16.msra.mxu0 %v6799
        %9484 = vmatprep.subr.bf16.mxu0 %v6798
        %9485 = vmatpush2.bf16.msra.mxu0 %v6797
        %9486 = vmatprep.subr.bf16.mxu0 %v6796
        %9487 = vmatpush2.bf16.msra.mxu0 %v6795
        %9488 = vmatprep.subr.bf16.mxu0 %v6794
        %9489 = vmatpush2.bf16.msra.mxu0 %v6793
        %9490 = vmatprep.subr.bf16.mxu0 %v6792
        %9491 = vmatpush2.bf16.msra.mxu0 %v6791
        %9492 = vmatprep.subr.bf16.mxu0 %v6790
        %9493 = vmatpush2.bf16.msra.mxu0 %v6789
        %9494 = vmatprep.subr.bf16.mxu0 %v6788
        %9495 = vmatpush2.bf16.msra.mxu0 %v6787
        %9496 = vmatprep.mubr.bf16.mxu0 %v2074
        %9497 = vmatmul.mubr.bf16.gmra.mxu0 %v2072
        %v9498 = vpop.f32.mrf.mxu0
        %v9499 = vadd.f32 %v9458, %v9498
        %v9500 = vpop.f32.mrf.mxu0
        %v9501 = vadd.f32 %v9460, %v9500
        %v9502 = vpop.f32.mrf.mxu0
        %v9503 = vpop.f32.mrf.mxu0
        %9504 = vdwg.mxu0
        %9505 = vmatprep.subr.bf16.mxu0 %v6818
        %9506 = vmatpush1.bf16.msra.mxu0 %v6817
        %9507 = vmatprep.subr.bf16.mxu0 %v6816
        %9508 = vmatpush1.bf16.msra.mxu0 %v6815
        %9509 = vmatprep.subr.bf16.mxu0 %v6814
        %9510 = vmatpush1.bf16.msra.mxu0 %v6813
        %9511 = vmatprep.subr.bf16.mxu0 %v6812
        %9512 = vmatpush1.bf16.msra.mxu0 %v6811
        %9513 = vmatprep.subr.bf16.mxu0 %v6810
        %9514 = vmatpush1.bf16.msra.mxu0 %v6809
        %9515 = vmatprep.subr.bf16.mxu0 %v6808
        %9516 = vmatpush1.bf16.msra.mxu0 %v6807
        %9517 = vmatprep.subr.bf16.mxu0 %v6806
        %9518 = vmatpush1.bf16.msra.mxu0 %v6805
        %9519 = vmatprep.subr.bf16.mxu0 %v6804
        %9520 = vmatpush1.bf16.msra.mxu0 %v6803
        %9521 = vmatprep.subr.bf16.mxu0 %v6834
        %9522 = vmatpush2.bf16.msra.mxu0 %v6833
        %9523 = vmatprep.subr.bf16.mxu0 %v6832
        %9524 = vmatpush2.bf16.msra.mxu0 %v6831
        %9525 = vmatprep.subr.bf16.mxu0 %v6830
        %9526 = vmatpush2.bf16.msra.mxu0 %v6829
        %9527 = vmatprep.subr.bf16.mxu0 %v6828
        %9528 = vmatpush2.bf16.msra.mxu0 %v6827
        %9529 = vmatprep.subr.bf16.mxu0 %v6826
        %9530 = vmatpush2.bf16.msra.mxu0 %v6825
        %9531 = vmatprep.subr.bf16.mxu0 %v6824
        %9532 = vmatpush2.bf16.msra.mxu0 %v6823
        %9533 = vmatprep.subr.bf16.mxu0 %v6822
        %9534 = vmatpush2.bf16.msra.mxu0 %v6821
        %9535 = vmatprep.subr.bf16.mxu0 %v6820
        %9536 = vmatpush2.bf16.msra.mxu0 %v6819
        %9537 = vmatprep.mubr.bf16.mxu0 %v2071
        %9538 = vmatmul.mubr.bf16.gmra.mxu0 %v2057
        %v9539 = vpop.f32.mrf.mxu0
        %v9540 = vadd.f32 %v9499, %v9539
        %v9541 = vpop.f32.mrf.mxu0
        %v9542 = vadd.f32 %v9501, %v9541
        %v9543 = vpop.f32.mrf.mxu0
        %v9544 = vpop.f32.mrf.mxu0
        %9545 = vdwg.mxu0
        %9546 = vmatprep.subr.bf16.mxu0 %v6850
        %9547 = vmatpush1.bf16.msra.mxu0 %v6849
        %9548 = vmatprep.subr.bf16.mxu0 %v6848
        %9549 = vmatpush1.bf16.msra.mxu0 %v6847
        %9550 = vmatprep.subr.bf16.mxu0 %v6846
        %9551 = vmatpush1.bf16.msra.mxu0 %v6845
        %9552 = vmatprep.subr.bf16.mxu0 %v6844
        %9553 = vmatpush1.bf16.msra.mxu0 %v6843
        %9554 = vmatprep.subr.bf16.mxu0 %v6842
        %9555 = vmatpush1.bf16.msra.mxu0 %v6841
        %9556 = vmatprep.subr.bf16.mxu0 %v6840
        %9557 = vmatpush1.bf16.msra.mxu0 %v6839
        %9558 = vmatprep.subr.bf16.mxu0 %v6838
        %9559 = vmatpush1.bf16.msra.mxu0 %v6837
        %9560 = vmatprep.subr.bf16.mxu0 %v6836
        %9561 = vmatpush1.bf16.msra.mxu0 %v6835
        %9562 = vmatprep.subr.bf16.mxu0 %v6866
        %9563 = vmatpush2.bf16.msra.mxu0 %v6865
        %9564 = vmatprep.subr.bf16.mxu0 %v6864
        %9565 = vmatpush2.bf16.msra.mxu0 %v6863
        %9566 = vmatprep.subr.bf16.mxu0 %v6862
        %9567 = vmatpush2.bf16.msra.mxu0 %v6861
        %9568 = vmatprep.subr.bf16.mxu0 %v6860
        %9569 = vmatpush2.bf16.msra.mxu0 %v6859
        %9570 = vmatprep.subr.bf16.mxu0 %v6858
        %9571 = vmatpush2.bf16.msra.mxu0 %v6857
        %9572 = vmatprep.subr.bf16.mxu0 %v6856
        %9573 = vmatpush2.bf16.msra.mxu0 %v6855
        %9574 = vmatprep.subr.bf16.mxu0 %v6854
        %9575 = vmatpush2.bf16.msra.mxu0 %v6853
        %9576 = vmatprep.subr.bf16.mxu0 %v6852
        %9577 = vmatpush2.bf16.msra.mxu0 %v6851
        %9578 = vmatprep.mubr.bf16.mxu0 %v2075
        %9579 = vmatmul.mubr.bf16.gmra.mxu0 %v2073
        %v9580 = vpop.f32.mrf.mxu0
        %v9581 = vadd.f32 %v9540, %v9580
        %v9582 = vpop.f32.mrf.mxu0
        %v9583 = vadd.f32 %v9542, %v9582
        %v9584 = vpop.f32.mrf.mxu0
        %v9585 = vpop.f32.mrf.mxu0
        %9586 = vdwg.mxu0
        %9587 = vmatprep.subr.bf16.mxu0 %v6882
        %9588 = vmatpush1.bf16.msra.mxu0 %v6881
        %9589 = vmatprep.subr.bf16.mxu0 %v6880
        %9590 = vmatpush1.bf16.msra.mxu0 %v6879
        %9591 = vmatprep.subr.bf16.mxu0 %v6878
        %9592 = vmatpush1.bf16.msra.mxu0 %v6877
        %9593 = vmatprep.subr.bf16.mxu0 %v6876
        %9594 = vmatpush1.bf16.msra.mxu0 %v6875
        %9595 = vmatprep.subr.bf16.mxu0 %v6874
        %9596 = vmatpush1.bf16.msra.mxu0 %v6873
        %9597 = vmatprep.subr.bf16.mxu0 %v6872
        %9598 = vmatpush1.bf16.msra.mxu0 %v6871
        %9599 = vmatprep.subr.bf16.mxu0 %v6870
        %9600 = vmatpush1.bf16.msra.mxu0 %v6869
        %9601 = vmatprep.subr.bf16.mxu0 %v6868
        %9602 = vmatpush1.bf16.msra.mxu0 %v6867
        %9603 = vmatprep.subr.bf16.mxu0 %v6898
        %9604 = vmatpush2.bf16.msra.mxu0 %v6897
        %9605 = vmatprep.subr.bf16.mxu0 %v6896
        %9606 = vmatpush2.bf16.msra.mxu0 %v6895
        %9607 = vmatprep.subr.bf16.mxu0 %v6894
        %9608 = vmatpush2.bf16.msra.mxu0 %v6893
        %9609 = vmatprep.subr.bf16.mxu0 %v6892
        %9610 = vmatpush2.bf16.msra.mxu0 %v6891
        %9611 = vmatprep.subr.bf16.mxu0 %v6890
        %9612 = vmatpush2.bf16.msra.mxu0 %v6889
        %9613 = vmatprep.subr.bf16.mxu0 %v6888
        %9614 = vmatpush2.bf16.msra.mxu0 %v6887
        %9615 = vmatprep.subr.bf16.mxu0 %v6886
        %9616 = vmatpush2.bf16.msra.mxu0 %v6885
        %9617 = vmatprep.subr.bf16.mxu0 %v6884
        %9618 = vmatpush2.bf16.msra.mxu0 %v6883
        %9619 = vmatprep.mubr.bf16.mxu0 %v2113
        %9620 = vmatmul.mubr.bf16.gmra.mxu0 %v2099
        %v9621 = vpop.f32.mrf.mxu0
        %v9622 = vadd.f32 %v9581, %v9621
        %v9623 = vpop.f32.mrf.mxu0
        %v9624 = vadd.f32 %v9583, %v9623
        %v9625 = vpop.f32.mrf.mxu0
        %v9626 = vpop.f32.mrf.mxu0
        %9627 = vdwg.mxu0
        %9628 = vmatprep.subr.bf16.mxu0 %v6914
        %9629 = vmatpush1.bf16.msra.mxu0 %v6913
        %9630 = vmatprep.subr.bf16.mxu0 %v6912
        %9631 = vmatpush1.bf16.msra.mxu0 %v6911
        %9632 = vmatprep.subr.bf16.mxu0 %v6910
        %9633 = vmatpush1.bf16.msra.mxu0 %v6909
        %9634 = vmatprep.subr.bf16.mxu0 %v6908
        %9635 = vmatpush1.bf16.msra.mxu0 %v6907
        %9636 = vmatprep.subr.bf16.mxu0 %v6906
        %9637 = vmatpush1.bf16.msra.mxu0 %v6905
        %9638 = vmatprep.subr.bf16.mxu0 %v6904
        %9639 = vmatpush1.bf16.msra.mxu0 %v6903
        %9640 = vmatprep.subr.bf16.mxu0 %v6902
        %9641 = vmatpush1.bf16.msra.mxu0 %v6901
        %9642 = vmatprep.subr.bf16.mxu0 %v6900
        %9643 = vmatpush1.bf16.msra.mxu0 %v6899
        %9644 = vmatprep.subr.bf16.mxu0 %v6930
        %9645 = vmatpush2.bf16.msra.mxu0 %v6929
        %9646 = vmatprep.subr.bf16.mxu0 %v6928
        %9647 = vmatpush2.bf16.msra.mxu0 %v6927
        %9648 = vmatprep.subr.bf16.mxu0 %v6926
        %9649 = vmatpush2.bf16.msra.mxu0 %v6925
        %9650 = vmatprep.subr.bf16.mxu0 %v6924
        %9651 = vmatpush2.bf16.msra.mxu0 %v6923
        %9652 = vmatprep.subr.bf16.mxu0 %v6922
        %9653 = vmatpush2.bf16.msra.mxu0 %v6921
        %9654 = vmatprep.subr.bf16.mxu0 %v6920
        %9655 = vmatpush2.bf16.msra.mxu0 %v6919
        %9656 = vmatprep.subr.bf16.mxu0 %v6918
        %9657 = vmatpush2.bf16.msra.mxu0 %v6917
        %9658 = vmatprep.subr.bf16.mxu0 %v6916
        %9659 = vmatpush2.bf16.msra.mxu0 %v6915
        %9660 = vmatprep.mubr.bf16.mxu0 %v2123
        %9661 = vmatmul.mubr.bf16.gmra.mxu0 %v2121
        %v9662 = vpop.f32.mrf.mxu0
        %v9663 = vadd.f32 %v9622, %v9662
        %v9664 = vpop.f32.mrf.mxu0
        %v9665 = vadd.f32 %v9624, %v9664
        %v9666 = vpop.f32.mrf.mxu0
        %v9667 = vpop.f32.mrf.mxu0
        %9668 = vdwg.mxu0
        %9669 = vmatprep.subr.bf16.mxu0 %v6946
        %9670 = vmatpush1.bf16.msra.mxu0 %v6945
        %9671 = vmatprep.subr.bf16.mxu0 %v6944
        %9672 = vmatpush1.bf16.msra.mxu0 %v6943
        %9673 = vmatprep.subr.bf16.mxu0 %v6942
        %9674 = vmatpush1.bf16.msra.mxu0 %v6941
        %9675 = vmatprep.subr.bf16.mxu0 %v6940
        %9676 = vmatpush1.bf16.msra.mxu0 %v6939
        %9677 = vmatprep.subr.bf16.mxu0 %v6938
        %9678 = vmatpush1.bf16.msra.mxu0 %v6937
        %9679 = vmatprep.subr.bf16.mxu0 %v6936
        %9680 = vmatpush1.bf16.msra.mxu0 %v6935
        %9681 = vmatprep.subr.bf16.mxu0 %v6934
        %9682 = vmatpush1.bf16.msra.mxu0 %v6933
        %9683 = vmatprep.subr.bf16.mxu0 %v6932
        %9684 = vmatpush1.bf16.msra.mxu0 %v6931
        %9685 = vmatprep.subr.bf16.mxu0 %v6962
        %9686 = vmatpush2.bf16.msra.mxu0 %v6961
        %9687 = vmatprep.subr.bf16.mxu0 %v6960
        %9688 = vmatpush2.bf16.msra.mxu0 %v6959
        %9689 = vmatprep.subr.bf16.mxu0 %v6958
        %9690 = vmatpush2.bf16.msra.mxu0 %v6957
        %9691 = vmatprep.subr.bf16.mxu0 %v6956
        %9692 = vmatpush2.bf16.msra.mxu0 %v6955
        %9693 = vmatprep.subr.bf16.mxu0 %v6954
        %9694 = vmatpush2.bf16.msra.mxu0 %v6953
        %9695 = vmatprep.subr.bf16.mxu0 %v6952
        %9696 = vmatpush2.bf16.msra.mxu0 %v6951
        %9697 = vmatprep.subr.bf16.mxu0 %v6950
        %9698 = vmatpush2.bf16.msra.mxu0 %v6949
        %9699 = vmatprep.subr.bf16.mxu0 %v6948
        %9700 = vmatpush2.bf16.msra.mxu0 %v6947
        %9701 = vmatprep.mubr.bf16.mxu0 %v2120
        %9702 = vmatmul.mubr.bf16.gmra.mxu0 %v2106
        %v9703 = vpop.f32.mrf.mxu0
        %v9704 = vadd.f32 %v9663, %v9703
        %v9705 = vpop.f32.mrf.mxu0
        %v9706 = vadd.f32 %v9665, %v9705
        %v9707 = vpop.f32.mrf.mxu0
        %v9708 = vpop.f32.mrf.mxu0
        %9709 = vdwg.mxu0
        %9710 = vmatprep.subr.bf16.mxu0 %v6978
        %9711 = vmatpush1.bf16.msra.mxu0 %v6977
        %9712 = vmatprep.subr.bf16.mxu0 %v6976
        %9713 = vmatpush1.bf16.msra.mxu0 %v6975
        %9714 = vmatprep.subr.bf16.mxu0 %v6974
        %9715 = vmatpush1.bf16.msra.mxu0 %v6973
        %9716 = vmatprep.subr.bf16.mxu0 %v6972
        %9717 = vmatpush1.bf16.msra.mxu0 %v6971
        %9718 = vmatprep.subr.bf16.mxu0 %v6970
        %9719 = vmatpush1.bf16.msra.mxu0 %v6969
        %9720 = vmatprep.subr.bf16.mxu0 %v6968
        %9721 = vmatpush1.bf16.msra.mxu0 %v6967
        %9722 = vmatprep.subr.bf16.mxu0 %v6966
        %9723 = vmatpush1.bf16.msra.mxu0 %v6965
        %9724 = vmatprep.subr.bf16.mxu0 %v6964
        %9725 = vmatpush1.bf16.msra.mxu0 %v6963
        %9726 = vmatprep.subr.bf16.mxu0 %v6994
        %9727 = vmatpush2.bf16.msra.mxu0 %v6993
        %9728 = vmatprep.subr.bf16.mxu0 %v6992
        %9729 = vmatpush2.bf16.msra.mxu0 %v6991
        %9730 = vmatprep.subr.bf16.mxu0 %v6990
        %9731 = vmatpush2.bf16.msra.mxu0 %v6989
        %9732 = vmatprep.subr.bf16.mxu0 %v6988
        %9733 = vmatpush2.bf16.msra.mxu0 %v6987
        %9734 = vmatprep.subr.bf16.mxu0 %v6986
        %9735 = vmatpush2.bf16.msra.mxu0 %v6985
        %9736 = vmatprep.subr.bf16.mxu0 %v6984
        %9737 = vmatpush2.bf16.msra.mxu0 %v6983
        %9738 = vmatprep.subr.bf16.mxu0 %v6982
        %9739 = vmatpush2.bf16.msra.mxu0 %v6981
        %9740 = vmatprep.subr.bf16.mxu0 %v6980
        %9741 = vmatpush2.bf16.msra.mxu0 %v6979
        %9742 = vmatprep.mubr.bf16.mxu0 %v2124
        %9743 = vmatmul.mubr.bf16.gmra.mxu0 %v2122
        %v9744 = vpop.f32.mrf.mxu0
        %v9745 = vadd.f32 %v9704, %v9744
        %v9746 = vpop.f32.mrf.mxu0
        %v9747 = vadd.f32 %v9706, %v9746
        %v9748 = vpop.f32.mrf.mxu0
        %v9749 = vpop.f32.mrf.mxu0
        %9750 = vdwg.mxu0
        %9751 = vmatprep.subr.bf16.mxu0 %v7010
        %9752 = vmatpush1.bf16.msra.mxu0 %v7009
        %9753 = vmatprep.subr.bf16.mxu0 %v7008
        %9754 = vmatpush1.bf16.msra.mxu0 %v7007
        %9755 = vmatprep.subr.bf16.mxu0 %v7006
        %9756 = vmatpush1.bf16.msra.mxu0 %v7005
        %9757 = vmatprep.subr.bf16.mxu0 %v7004
        %9758 = vmatpush1.bf16.msra.mxu0 %v7003
        %9759 = vmatprep.subr.bf16.mxu0 %v7002
        %9760 = vmatpush1.bf16.msra.mxu0 %v7001
        %9761 = vmatprep.subr.bf16.mxu0 %v7000
        %9762 = vmatpush1.bf16.msra.mxu0 %v6999
        %9763 = vmatprep.subr.bf16.mxu0 %v6998
        %9764 = vmatpush1.bf16.msra.mxu0 %v6997
        %9765 = vmatprep.subr.bf16.mxu0 %v6996
        %9766 = vmatpush1.bf16.msra.mxu0 %v6995
        %9767 = vmatprep.subr.bf16.mxu0 %v7026
        %9768 = vmatpush2.bf16.msra.mxu0 %v7025
        %9769 = vmatprep.subr.bf16.mxu0 %v7024
        %9770 = vmatpush2.bf16.msra.mxu0 %v7023
        %9771 = vmatprep.subr.bf16.mxu0 %v7022
        %9772 = vmatpush2.bf16.msra.mxu0 %v7021
        %9773 = vmatprep.subr.bf16.mxu0 %v7020
        %9774 = vmatpush2.bf16.msra.mxu0 %v7019
        %9775 = vmatprep.subr.bf16.mxu0 %v7018
        %9776 = vmatpush2.bf16.msra.mxu0 %v7017
        %9777 = vmatprep.subr.bf16.mxu0 %v7016
        %9778 = vmatpush2.bf16.msra.mxu0 %v7015
        %9779 = vmatprep.subr.bf16.mxu0 %v7014
        %9780 = vmatpush2.bf16.msra.mxu0 %v7013
        %9781 = vmatprep.subr.bf16.mxu0 %v7012
        %9782 = vmatpush2.bf16.msra.mxu0 %v7011
        %9783 = vmatprep.mubr.bf16.mxu0 %v2162
        %9784 = vmatmul.mubr.bf16.gmra.mxu0 %v2148
        %v9785 = vpop.f32.mrf.mxu0
        %v9786 = vadd.f32 %v9745, %v9785
        %v9787 = vpop.f32.mrf.mxu0
        %v9788 = vadd.f32 %v9747, %v9787
        %v9789 = vpop.f32.mrf.mxu0
        %v9790 = vpop.f32.mrf.mxu0
        %9791 = vdwg.mxu0
        %9792 = vmatprep.subr.bf16.mxu0 %v7042
        %9793 = vmatpush1.bf16.msra.mxu0 %v7041
        %9794 = vmatprep.subr.bf16.mxu0 %v7040
        %9795 = vmatpush1.bf16.msra.mxu0 %v7039
        %9796 = vmatprep.subr.bf16.mxu0 %v7038
        %9797 = vmatpush1.bf16.msra.mxu0 %v7037
        %9798 = vmatprep.subr.bf16.mxu0 %v7036
        %9799 = vmatpush1.bf16.msra.mxu0 %v7035
        %9800 = vmatprep.subr.bf16.mxu0 %v7034
        %9801 = vmatpush1.bf16.msra.mxu0 %v7033
        %9802 = vmatprep.subr.bf16.mxu0 %v7032
        %9803 = vmatpush1.bf16.msra.mxu0 %v7031
        %9804 = vmatprep.subr.bf16.mxu0 %v7030
        %9805 = vmatpush1.bf16.msra.mxu0 %v7029
        %9806 = vmatprep.subr.bf16.mxu0 %v7028
        %9807 = vmatpush1.bf16.msra.mxu0 %v7027
        %9808 = vmatprep.subr.bf16.mxu0 %v7058
        %9809 = vmatpush2.bf16.msra.mxu0 %v7057
        %9810 = vmatprep.subr.bf16.mxu0 %v7056
        %9811 = vmatpush2.bf16.msra.mxu0 %v7055
        %9812 = vmatprep.subr.bf16.mxu0 %v7054
        %9813 = vmatpush2.bf16.msra.mxu0 %v7053
        %9814 = vmatprep.subr.bf16.mxu0 %v7052
        %9815 = vmatpush2.bf16.msra.mxu0 %v7051
        %9816 = vmatprep.subr.bf16.mxu0 %v7050
        %9817 = vmatpush2.bf16.msra.mxu0 %v7049
        %9818 = vmatprep.subr.bf16.mxu0 %v7048
        %9819 = vmatpush2.bf16.msra.mxu0 %v7047
        %9820 = vmatprep.subr.bf16.mxu0 %v7046
        %9821 = vmatpush2.bf16.msra.mxu0 %v7045
        %9822 = vmatprep.subr.bf16.mxu0 %v7044
        %9823 = vmatpush2.bf16.msra.mxu0 %v7043
        %9824 = vmatprep.mubr.bf16.mxu0 %v2172
        %9825 = vmatmul.mubr.bf16.gmra.mxu0 %v2170
        %v9826 = vpop.f32.mrf.mxu0
        %v9827 = vadd.f32 %v9786, %v9826
        %v9828 = vpop.f32.mrf.mxu0
        %v9829 = vadd.f32 %v9788, %v9828
        %v9830 = vpop.f32.mrf.mxu0
        %v9831 = vpop.f32.mrf.mxu0
        %9832 = vdwg.mxu0
        %9833 = vmatprep.subr.bf16.mxu0 %v7074
        %9834 = vmatpush1.bf16.msra.mxu0 %v7073
        %9835 = vmatprep.subr.bf16.mxu0 %v7072
        %9836 = vmatpush1.bf16.msra.mxu0 %v7071
        %9837 = vmatprep.subr.bf16.mxu0 %v7070
        %9838 = vmatpush1.bf16.msra.mxu0 %v7069
        %9839 = vmatprep.subr.bf16.mxu0 %v7068
        %9840 = vmatpush1.bf16.msra.mxu0 %v7067
        %9841 = vmatprep.subr.bf16.mxu0 %v7066
        %9842 = vmatpush1.bf16.msra.mxu0 %v7065
        %9843 = vmatprep.subr.bf16.mxu0 %v7064
        %9844 = vmatpush1.bf16.msra.mxu0 %v7063
        %9845 = vmatprep.subr.bf16.mxu0 %v7062
        %9846 = vmatpush1.bf16.msra.mxu0 %v7061
        %9847 = vmatprep.subr.bf16.mxu0 %v7060
        %9848 = vmatpush1.bf16.msra.mxu0 %v7059
        %9849 = vmatprep.subr.bf16.mxu0 %v7090
        %9850 = vmatpush2.bf16.msra.mxu0 %v7089
        %9851 = vmatprep.subr.bf16.mxu0 %v7088
        %9852 = vmatpush2.bf16.msra.mxu0 %v7087
        %9853 = vmatprep.subr.bf16.mxu0 %v7086
        %9854 = vmatpush2.bf16.msra.mxu0 %v7085
        %9855 = vmatprep.subr.bf16.mxu0 %v7084
        %9856 = vmatpush2.bf16.msra.mxu0 %v7083
        %9857 = vmatprep.subr.bf16.mxu0 %v7082
        %9858 = vmatpush2.bf16.msra.mxu0 %v7081
        %9859 = vmatprep.subr.bf16.mxu0 %v7080
        %9860 = vmatpush2.bf16.msra.mxu0 %v7079
        %9861 = vmatprep.subr.bf16.mxu0 %v7078
        %9862 = vmatpush2.bf16.msra.mxu0 %v7077
        %9863 = vmatprep.subr.bf16.mxu0 %v7076
        %9864 = vmatpush2.bf16.msra.mxu0 %v7075
        %9865 = vmatprep.mubr.bf16.mxu0 %v2169
        %9866 = vmatmul.mubr.bf16.gmra.mxu0 %v2155
        %v9867 = vpop.f32.mrf.mxu0
        %v9868 = vadd.f32 %v9827, %v9867
        %v9869 = vpop.f32.mrf.mxu0
        %v9870 = vadd.f32 %v9829, %v9869
        %v9871 = vpop.f32.mrf.mxu0
        %v9872 = vpop.f32.mrf.mxu0
        %9873 = vdwg.mxu0
        %9874 = vmatprep.subr.bf16.mxu0 %v7106
        %9875 = vmatpush1.bf16.msra.mxu0 %v7105
        %9876 = vmatprep.subr.bf16.mxu0 %v7104
        %9877 = vmatpush1.bf16.msra.mxu0 %v7103
        %9878 = vmatprep.subr.bf16.mxu0 %v7102
        %9879 = vmatpush1.bf16.msra.mxu0 %v7101
        %9880 = vmatprep.subr.bf16.mxu0 %v7100
        %9881 = vmatpush1.bf16.msra.mxu0 %v7099
        %9882 = vmatprep.subr.bf16.mxu0 %v7098
        %9883 = vmatpush1.bf16.msra.mxu0 %v7097
        %9884 = vmatprep.subr.bf16.mxu0 %v7096
        %9885 = vmatpush1.bf16.msra.mxu0 %v7095
        %9886 = vmatprep.subr.bf16.mxu0 %v7094
        %9887 = vmatpush1.bf16.msra.mxu0 %v7093
        %9888 = vmatprep.subr.bf16.mxu0 %v7092
        %9889 = vmatpush1.bf16.msra.mxu0 %v7091
        %9890 = vmatprep.subr.bf16.mxu0 %v7122
        %9891 = vmatpush2.bf16.msra.mxu0 %v7121
        %9892 = vmatprep.subr.bf16.mxu0 %v7120
        %9893 = vmatpush2.bf16.msra.mxu0 %v7119
        %9894 = vmatprep.subr.bf16.mxu0 %v7118
        %9895 = vmatpush2.bf16.msra.mxu0 %v7117
        %9896 = vmatprep.subr.bf16.mxu0 %v7116
        %9897 = vmatpush2.bf16.msra.mxu0 %v7115
        %9898 = vmatprep.subr.bf16.mxu0 %v7114
        %9899 = vmatpush2.bf16.msra.mxu0 %v7113
        %9900 = vmatprep.subr.bf16.mxu0 %v7112
        %9901 = vmatpush2.bf16.msra.mxu0 %v7111
        %9902 = vmatprep.subr.bf16.mxu0 %v7110
        %9903 = vmatpush2.bf16.msra.mxu0 %v7109
        %9904 = vmatprep.subr.bf16.mxu0 %v7108
        %9905 = vmatpush2.bf16.msra.mxu0 %v7107
        %9906 = vmatprep.mubr.bf16.mxu0 %v2173
        %9907 = vmatmul.mubr.bf16.gmra.mxu0 %v2171
        %v9908 = vpop.f32.mrf.mxu0
        %v9909 = vadd.f32 %v9868, %v9908
        %v9910 = vpop.f32.mrf.mxu0
        %v9911 = vadd.f32 %v9870, %v9910
        %v9912 = vpop.f32.mrf.mxu0
        %v9913 = vpop.f32.mrf.mxu0
        %9914 = vdwg.mxu0
        %9915 = vmatprep.subr.bf16.mxu0 %v7138
        %9916 = vmatpush1.bf16.msra.mxu0 %v7137
        %9917 = vmatprep.subr.bf16.mxu0 %v7136
        %9918 = vmatpush1.bf16.msra.mxu0 %v7135
        %9919 = vmatprep.subr.bf16.mxu0 %v7134
        %9920 = vmatpush1.bf16.msra.mxu0 %v7133
        %9921 = vmatprep.subr.bf16.mxu0 %v7132
        %9922 = vmatpush1.bf16.msra.mxu0 %v7131
        %9923 = vmatprep.subr.bf16.mxu0 %v7130
        %9924 = vmatpush1.bf16.msra.mxu0 %v7129
        %9925 = vmatprep.subr.bf16.mxu0 %v7128
        %9926 = vmatpush1.bf16.msra.mxu0 %v7127
        %9927 = vmatprep.subr.bf16.mxu0 %v7126
        %9928 = vmatpush1.bf16.msra.mxu0 %v7125
        %9929 = vmatprep.subr.bf16.mxu0 %v7124
        %9930 = vmatpush1.bf16.msra.mxu0 %v7123
        %9931 = vmatprep.subr.bf16.mxu0 %v7154
        %9932 = vmatpush2.bf16.msra.mxu0 %v7153
        %9933 = vmatprep.subr.bf16.mxu0 %v7152
        %9934 = vmatpush2.bf16.msra.mxu0 %v7151
        %9935 = vmatprep.subr.bf16.mxu0 %v7150
        %9936 = vmatpush2.bf16.msra.mxu0 %v7149
        %9937 = vmatprep.subr.bf16.mxu0 %v7148
        %9938 = vmatpush2.bf16.msra.mxu0 %v7147
        %9939 = vmatprep.subr.bf16.mxu0 %v7146
        %9940 = vmatpush2.bf16.msra.mxu0 %v7145
        %9941 = vmatprep.subr.bf16.mxu0 %v7144
        %9942 = vmatpush2.bf16.msra.mxu0 %v7143
        %9943 = vmatprep.subr.bf16.mxu0 %v7142
        %9944 = vmatpush2.bf16.msra.mxu0 %v7141
        %9945 = vmatprep.subr.bf16.mxu0 %v7140
        %9946 = vmatpush2.bf16.msra.mxu0 %v7139
        %9947 = vmatprep.mubr.bf16.mxu0 %v2211
        %9948 = vmatmul.mubr.bf16.gmra.mxu0 %v2197
        %v9949 = vpop.f32.mrf.mxu0
        %v9950 = vadd.f32 %v9909, %v9949
        %v9951 = vpop.f32.mrf.mxu0
        %v9952 = vadd.f32 %v9911, %v9951
        %v9953 = vpop.f32.mrf.mxu0
        %v9954 = vpop.f32.mrf.mxu0
        %9955 = vdwg.mxu0
        %9956 = vmatprep.subr.bf16.mxu0 %v7170
        %9957 = vmatpush1.bf16.msra.mxu0 %v7169
        %9958 = vmatprep.subr.bf16.mxu0 %v7168
        %9959 = vmatpush1.bf16.msra.mxu0 %v7167
        %9960 = vmatprep.subr.bf16.mxu0 %v7166
        %9961 = vmatpush1.bf16.msra.mxu0 %v7165
        %9962 = vmatprep.subr.bf16.mxu0 %v7164
        %9963 = vmatpush1.bf16.msra.mxu0 %v7163
        %9964 = vmatprep.subr.bf16.mxu0 %v7162
        %9965 = vmatpush1.bf16.msra.mxu0 %v7161
        %9966 = vmatprep.subr.bf16.mxu0 %v7160
        %9967 = vmatpush1.bf16.msra.mxu0 %v7159
        %9968 = vmatprep.subr.bf16.mxu0 %v7158
        %9969 = vmatpush1.bf16.msra.mxu0 %v7157
        %9970 = vmatprep.subr.bf16.mxu0 %v7156
        %9971 = vmatpush1.bf16.msra.mxu0 %v7155
        %9972 = vmatprep.subr.bf16.mxu0 %v7186
        %9973 = vmatpush2.bf16.msra.mxu0 %v7185
        %9974 = vmatprep.subr.bf16.mxu0 %v7184
        %9975 = vmatpush2.bf16.msra.mxu0 %v7183
        %9976 = vmatprep.subr.bf16.mxu0 %v7182
        %9977 = vmatpush2.bf16.msra.mxu0 %v7181
        %9978 = vmatprep.subr.bf16.mxu0 %v7180
        %9979 = vmatpush2.bf16.msra.mxu0 %v7179
        %9980 = vmatprep.subr.bf16.mxu0 %v7178
        %9981 = vmatpush2.bf16.msra.mxu0 %v7177
        %9982 = vmatprep.subr.bf16.mxu0 %v7176
        %9983 = vmatpush2.bf16.msra.mxu0 %v7175
        %9984 = vmatprep.subr.bf16.mxu0 %v7174
        %9985 = vmatpush2.bf16.msra.mxu0 %v7173
        %9986 = vmatprep.subr.bf16.mxu0 %v7172
        %9987 = vmatpush2.bf16.msra.mxu0 %v7171
        %9988 = vmatprep.mubr.bf16.mxu0 %v2221
        %9989 = vmatmul.mubr.bf16.gmra.mxu0 %v2219
        %v9990 = vpop.f32.mrf.mxu0
        %v9991 = vadd.f32 %v9950, %v9990
        %v9992 = vpop.f32.mrf.mxu0
        %v9993 = vadd.f32 %v9952, %v9992
        %v9994 = vpop.f32.mrf.mxu0
        %v9995 = vpop.f32.mrf.mxu0
        %9996 = vdwg.mxu0
        %9997 = vmatprep.subr.bf16.mxu0 %v7202
        %9998 = vmatpush1.bf16.msra.mxu0 %v7201
        %9999 = vmatprep.subr.bf16.mxu0 %v7200
        %10000 = vmatpush1.bf16.msra.mxu0 %v7199
        %10001 = vmatprep.subr.bf16.mxu0 %v7198
        %10002 = vmatpush1.bf16.msra.mxu0 %v7197
        %10003 = vmatprep.subr.bf16.mxu0 %v7196
        %10004 = vmatpush1.bf16.msra.mxu0 %v7195
        %10005 = vmatprep.subr.bf16.mxu0 %v7194
        %10006 = vmatpush1.bf16.msra.mxu0 %v7193
        %10007 = vmatprep.subr.bf16.mxu0 %v7192
        %10008 = vmatpush1.bf16.msra.mxu0 %v7191
        %10009 = vmatprep.subr.bf16.mxu0 %v7190
        %10010 = vmatpush1.bf16.msra.mxu0 %v7189
        %10011 = vmatprep.subr.bf16.mxu0 %v7188
        %10012 = vmatpush1.bf16.msra.mxu0 %v7187
        %10013 = vmatprep.subr.bf16.mxu0 %v7218
        %10014 = vmatpush2.bf16.msra.mxu0 %v7217
        %10015 = vmatprep.subr.bf16.mxu0 %v7216
        %10016 = vmatpush2.bf16.msra.mxu0 %v7215
        %10017 = vmatprep.subr.bf16.mxu0 %v7214
        %10018 = vmatpush2.bf16.msra.mxu0 %v7213
        %10019 = vmatprep.subr.bf16.mxu0 %v7212
        %10020 = vmatpush2.bf16.msra.mxu0 %v7211
        %10021 = vmatprep.subr.bf16.mxu0 %v7210
        %10022 = vmatpush2.bf16.msra.mxu0 %v7209
        %10023 = vmatprep.subr.bf16.mxu0 %v7208
        %10024 = vmatpush2.bf16.msra.mxu0 %v7207
        %10025 = vmatprep.subr.bf16.mxu0 %v7206
        %10026 = vmatpush2.bf16.msra.mxu0 %v7205
        %10027 = vmatprep.subr.bf16.mxu0 %v7204
        %10028 = vmatpush2.bf16.msra.mxu0 %v7203
        %10029 = vmatprep.mubr.bf16.mxu0 %v2218
        %10030 = vmatmul.mubr.bf16.gmra.mxu0 %v2204
        %v10031 = vpop.f32.mrf.mxu0
        %v10032 = vadd.f32 %v9991, %v10031
        %v10033 = vpop.f32.mrf.mxu0
        %v10034 = vadd.f32 %v9993, %v10033
        %v10035 = vpop.f32.mrf.mxu0
        %v10036 = vpop.f32.mrf.mxu0
        %10037 = vdwg.mxu0
        %10038 = vmatprep.subr.bf16.mxu0 %v7234
        %10039 = vmatpush1.bf16.msra.mxu0 %v7233
        %10040 = vmatprep.subr.bf16.mxu0 %v7232
        %10041 = vmatpush1.bf16.msra.mxu0 %v7231
        %10042 = vmatprep.subr.bf16.mxu0 %v7230
        %10043 = vmatpush1.bf16.msra.mxu0 %v7229
        %10044 = vmatprep.subr.bf16.mxu0 %v7228
        %10045 = vmatpush1.bf16.msra.mxu0 %v7227
        %10046 = vmatprep.subr.bf16.mxu0 %v7226
        %10047 = vmatpush1.bf16.msra.mxu0 %v7225
        %10048 = vmatprep.subr.bf16.mxu0 %v7224
        %10049 = vmatpush1.bf16.msra.mxu0 %v7223
        %10050 = vmatprep.subr.bf16.mxu0 %v7222
        %10051 = vmatpush1.bf16.msra.mxu0 %v7221
        %10052 = vmatprep.subr.bf16.mxu0 %v7220
        %10053 = vmatpush1.bf16.msra.mxu0 %v7219
        %10054 = vmatprep.subr.bf16.mxu0 %v7250
        %10055 = vmatpush2.bf16.msra.mxu0 %v7249
        %10056 = vmatprep.subr.bf16.mxu0 %v7248
        %10057 = vmatpush2.bf16.msra.mxu0 %v7247
        %10058 = vmatprep.subr.bf16.mxu0 %v7246
        %10059 = vmatpush2.bf16.msra.mxu0 %v7245
        %10060 = vmatprep.subr.bf16.mxu0 %v7244
        %10061 = vmatpush2.bf16.msra.mxu0 %v7243
        %10062 = vmatprep.subr.bf16.mxu0 %v7242
        %10063 = vmatpush2.bf16.msra.mxu0 %v7241
        %10064 = vmatprep.subr.bf16.mxu0 %v7240
        %10065 = vmatpush2.bf16.msra.mxu0 %v7239
        %10066 = vmatprep.subr.bf16.mxu0 %v7238
        %10067 = vmatpush2.bf16.msra.mxu0 %v7237
        %10068 = vmatprep.subr.bf16.mxu0 %v7236
        %10069 = vmatpush2.bf16.msra.mxu0 %v7235
        %10070 = vmatprep.mubr.bf16.mxu0 %v2222
        %10071 = vmatmul.mubr.bf16.gmra.mxu0 %v2220
        %v10072 = vpop.f32.mrf.mxu0
        %v10073 = vadd.f32 %v10032, %v10072
        %v10074 = vpop.f32.mrf.mxu0
        %v10075 = vadd.f32 %v10034, %v10074
        %v10076 = vpop.f32.mrf.mxu0
        %v10077 = vpop.f32.mrf.mxu0
        %10078 = vdwg.mxu0
        %10079 = vmatprep.subr.bf16.mxu0 %v7266
        %10080 = vmatpush1.bf16.msra.mxu0 %v7265
        %10081 = vmatprep.subr.bf16.mxu0 %v7264
        %10082 = vmatpush1.bf16.msra.mxu0 %v7263
        %10083 = vmatprep.subr.bf16.mxu0 %v7262
        %10084 = vmatpush1.bf16.msra.mxu0 %v7261
        %10085 = vmatprep.subr.bf16.mxu0 %v7260
        %10086 = vmatpush1.bf16.msra.mxu0 %v7259
        %10087 = vmatprep.subr.bf16.mxu0 %v7258
        %10088 = vmatpush1.bf16.msra.mxu0 %v7257
        %10089 = vmatprep.subr.bf16.mxu0 %v7256
        %10090 = vmatpush1.bf16.msra.mxu0 %v7255
        %10091 = vmatprep.subr.bf16.mxu0 %v7254
        %10092 = vmatpush1.bf16.msra.mxu0 %v7253
        %10093 = vmatprep.subr.bf16.mxu0 %v7252
        %10094 = vmatpush1.bf16.msra.mxu0 %v7251
        %10095 = vmatprep.subr.bf16.mxu0 %v7282
        %10096 = vmatpush2.bf16.msra.mxu0 %v7281
        %10097 = vmatprep.subr.bf16.mxu0 %v7280
        %10098 = vmatpush2.bf16.msra.mxu0 %v7279
        %10099 = vmatprep.subr.bf16.mxu0 %v7278
        %10100 = vmatpush2.bf16.msra.mxu0 %v7277
        %10101 = vmatprep.subr.bf16.mxu0 %v7276
        %10102 = vmatpush2.bf16.msra.mxu0 %v7275
        %10103 = vmatprep.subr.bf16.mxu0 %v7274
        %10104 = vmatpush2.bf16.msra.mxu0 %v7273
        %10105 = vmatprep.subr.bf16.mxu0 %v7272
        %10106 = vmatpush2.bf16.msra.mxu0 %v7271
        %10107 = vmatprep.subr.bf16.mxu0 %v7270
        %10108 = vmatpush2.bf16.msra.mxu0 %v7269
        %10109 = vmatprep.subr.bf16.mxu0 %v7268
        %10110 = vmatpush2.bf16.msra.mxu0 %v7267
        %10111 = vmatprep.mubr.bf16.mxu0 %v2260
        %10112 = vmatmul.mubr.bf16.gmra.mxu0 %v2246
        %v10113 = vpop.f32.mrf.mxu0
        %v10114 = vadd.f32 %v10073, %v10113
        %v10115 = vpop.f32.mrf.mxu0
        %v10116 = vadd.f32 %v10075, %v10115
        %v10117 = vpop.f32.mrf.mxu0
        %v10118 = vpop.f32.mrf.mxu0
        %10119 = vdwg.mxu0
        %10120 = vmatprep.subr.bf16.mxu0 %v7298
        %10121 = vmatpush1.bf16.msra.mxu0 %v7297
        %10122 = vmatprep.subr.bf16.mxu0 %v7296
        %10123 = vmatpush1.bf16.msra.mxu0 %v7295
        %10124 = vmatprep.subr.bf16.mxu0 %v7294
        %10125 = vmatpush1.bf16.msra.mxu0 %v7293
        %10126 = vmatprep.subr.bf16.mxu0 %v7292
        %10127 = vmatpush1.bf16.msra.mxu0 %v7291
        %10128 = vmatprep.subr.bf16.mxu0 %v7290
        %10129 = vmatpush1.bf16.msra.mxu0 %v7289
        %10130 = vmatprep.subr.bf16.mxu0 %v7288
        %10131 = vmatpush1.bf16.msra.mxu0 %v7287
        %10132 = vmatprep.subr.bf16.mxu0 %v7286
        %10133 = vmatpush1.bf16.msra.mxu0 %v7285
        %10134 = vmatprep.subr.bf16.mxu0 %v7284
        %10135 = vmatpush1.bf16.msra.mxu0 %v7283
        %10136 = vmatprep.subr.bf16.mxu0 %v7314
        %10137 = vmatpush2.bf16.msra.mxu0 %v7313
        %10138 = vmatprep.subr.bf16.mxu0 %v7312
        %10139 = vmatpush2.bf16.msra.mxu0 %v7311
        %10140 = vmatprep.subr.bf16.mxu0 %v7310
        %10141 = vmatpush2.bf16.msra.mxu0 %v7309
        %10142 = vmatprep.subr.bf16.mxu0 %v7308
        %10143 = vmatpush2.bf16.msra.mxu0 %v7307
        %10144 = vmatprep.subr.bf16.mxu0 %v7306
        %10145 = vmatpush2.bf16.msra.mxu0 %v7305
        %10146 = vmatprep.subr.bf16.mxu0 %v7304
        %10147 = vmatpush2.bf16.msra.mxu0 %v7303
        %10148 = vmatprep.subr.bf16.mxu0 %v7302
        %10149 = vmatpush2.bf16.msra.mxu0 %v7301
        %10150 = vmatprep.subr.bf16.mxu0 %v7300
        %10151 = vmatpush2.bf16.msra.mxu0 %v7299
        %10152 = vmatprep.mubr.bf16.mxu0 %v2270
        %10153 = vmatmul.mubr.bf16.gmra.mxu0 %v2268
        %v10154 = vpop.f32.mrf.mxu0
        %v10155 = vadd.f32 %v10114, %v10154
        %v10156 = vpop.f32.mrf.mxu0
        %v10157 = vadd.f32 %v10116, %v10156
        %v10158 = vpop.f32.mrf.mxu0
        %v10159 = vpop.f32.mrf.mxu0
        %10160 = vdwg.mxu0
        %10161 = vmatprep.subr.bf16.mxu0 %v7330
        %10162 = vmatpush1.bf16.msra.mxu0 %v7329
        %10163 = vmatprep.subr.bf16.mxu0 %v7328
        %10164 = vmatpush1.bf16.msra.mxu0 %v7327
        %10165 = vmatprep.subr.bf16.mxu0 %v7326
        %10166 = vmatpush1.bf16.msra.mxu0 %v7325
        %10167 = vmatprep.subr.bf16.mxu0 %v7324
        %10168 = vmatpush1.bf16.msra.mxu0 %v7323
        %10169 = vmatprep.subr.bf16.mxu0 %v7322
        %10170 = vmatpush1.bf16.msra.mxu0 %v7321
        %10171 = vmatprep.subr.bf16.mxu0 %v7320
        %10172 = vmatpush1.bf16.msra.mxu0 %v7319
        %10173 = vmatprep.subr.bf16.mxu0 %v7318
        %10174 = vmatpush1.bf16.msra.mxu0 %v7317
        %10175 = vmatprep.subr.bf16.mxu0 %v7316
        %10176 = vmatpush1.bf16.msra.mxu0 %v7315
        %10177 = vmatprep.subr.bf16.mxu0 %v7346
        %10178 = vmatpush2.bf16.msra.mxu0 %v7345
        %10179 = vmatprep.subr.bf16.mxu0 %v7344
        %10180 = vmatpush2.bf16.msra.mxu0 %v7343
        %10181 = vmatprep.subr.bf16.mxu0 %v7342
        %10182 = vmatpush2.bf16.msra.mxu0 %v7341
        %10183 = vmatprep.subr.bf16.mxu0 %v7340
        %10184 = vmatpush2.bf16.msra.mxu0 %v7339
        %10185 = vmatprep.subr.bf16.mxu0 %v7338
        %10186 = vmatpush2.bf16.msra.mxu0 %v7337
        %10187 = vmatprep.subr.bf16.mxu0 %v7336
        %10188 = vmatpush2.bf16.msra.mxu0 %v7335
        %10189 = vmatprep.subr.bf16.mxu0 %v7334
        %10190 = vmatpush2.bf16.msra.mxu0 %v7333
        %10191 = vmatprep.subr.bf16.mxu0 %v7332
        %10192 = vmatpush2.bf16.msra.mxu0 %v7331
        %10193 = vmatprep.mubr.bf16.mxu0 %v2267
        %10194 = vmatmul.mubr.bf16.gmra.mxu0 %v2253
        %v10195 = vpop.f32.mrf.mxu0
        %v10196 = vadd.f32 %v10155, %v10195
        %v10197 = vpop.f32.mrf.mxu0
        %v10198 = vadd.f32 %v10157, %v10197
        %v10199 = vpop.f32.mrf.mxu0
        %v10200 = vpop.f32.mrf.mxu0
        %10201 = vdwg.mxu0
        %10202 = vmatprep.subr.bf16.mxu0 0
        %10203 = vmatpush1.bf16.msra.mxu0 0
        %10204 = vmatprep.subr.bf16.mxu0 0
        %10205 = vmatpush1.bf16.msra.mxu0 0
        %10206 = vmatprep.subr.bf16.mxu0 0
        %10207 = vmatpush1.bf16.msra.mxu0 0
        %10208 = vmatprep.subr.bf16.mxu0 0
        %10209 = vmatpush1.bf16.msra.mxu0 0
        %10210 = vmatprep.subr.bf16.mxu0 0
        %10211 = vmatpush1.bf16.msra.mxu0 0
        %10212 = vmatprep.subr.bf16.mxu0 0
        %10213 = vmatpush1.bf16.msra.mxu0 0
        %10214 = vmatprep.subr.bf16.mxu0 0
        %10215 = vmatpush1.bf16.msra.mxu0 0
        %10216 = vmatprep.subr.bf16.mxu0 %v7348
        %10217 = vmatpush1.bf16.msra.mxu0 %v7347
        %10218 = vmatprep.subr.bf16.mxu0 0
        %10219 = vmatpush2.bf16.msra.mxu0 0
        %10220 = vmatprep.subr.bf16.mxu0 0
        %10221 = vmatpush2.bf16.msra.mxu0 0
        %10222 = vmatprep.subr.bf16.mxu0 0
        %10223 = vmatpush2.bf16.msra.mxu0 0
        %10224 = vmatprep.subr.bf16.mxu0 0
        %10225 = vmatpush2.bf16.msra.mxu0 0
        %10226 = vmatprep.subr.bf16.mxu0 0
        %10227 = vmatpush2.bf16.msra.mxu0 0
        %10228 = vmatprep.subr.bf16.mxu0 0
        %10229 = vmatpush2.bf16.msra.mxu0 0
        %10230 = vmatprep.subr.bf16.mxu0 0
        %10231 = vmatpush2.bf16.msra.mxu0 0
        %10232 = vmatprep.subr.bf16.mxu0 0
        %10233 = vmatpush2.bf16.msra.mxu0 0
        %10234 = vmatprep.mubr.bf16.mxu0 0
        %10235 = vmatmul.mubr.bf16.gmra.mxu0 %v8601
        %v10236 = vpop.f32.mrf.mxu0
        %v10237 = vadd.f32 %v10196, %v10236
        %v10238 = vpop.f32.mrf.mxu0
        %v10239 = vadd.f32 %v10198, %v10238
        %v10240 = vpop.f32.mrf.mxu0
        %v10241 = vpop.f32.mrf.mxu0
        %10242 = vdwg.mxu0
        %v10243 = vmax.f32 %v10237, 0.0
        %v10244 = vmax.f32 %v10239, 0.0
        %v10245 = vld [vmem:[#allocation2] sm:$0xf]
        %v10246 = vld [vmem:[%s434] sm:$0xff]
        %v10247 = vld [vmem:[%s434 + $0x8] sm:$0xff]
        %v10248 = vld [vmem:[%s434 + $0x10] sm:$0xff]
        %v10249 = vld [vmem:[%s434 + $0x18] sm:$0xff]
        %v10250 = vld [vmem:[%s434 + $0x20] sm:$0xff]
        %v10251 = vld [vmem:[%s434 + $0x28] sm:$0xff]
        %v10252 = vld [vmem:[%s434 + $0x30] sm:$0xff]
        %v10253 = vld [vmem:[%s434 + $0x38] sm:$0xff]
        %v10254 = vld [vmem:[%s434 + $0x40] sm:$0xff]
        %v10255 = vld [vmem:[%s434 + $0x48] sm:$0xff]
        %v10256 = vld [vmem:[%s434 + $0x50] sm:$0xff]
        %v10257 = vld [vmem:[%s434 + $0x58] sm:$0xff]
        %v10258 = vld [vmem:[%s434 + $0x60] sm:$0xff]
        %v10259 = vld [vmem:[%s434 + $0x68] sm:$0xff]
        %v10260 = vld [vmem:[%s434 + $0x70] sm:$0xff]
        %v10261 = vld [vmem:[%s434 + $0x78] sm:$0xff]
        %v10262 = vld [vmem:[%s434 + $0x80] sm:$0xff]
        %v10263 = vld [vmem:[%s434 + $0x88] sm:$0xff]
        %v10264 = vld [vmem:[%s434 + $0x90] sm:$0xff]
        %v10265 = vld [vmem:[%s434 + $0x98] sm:$0xff]
        %v10266 = vld [vmem:[%s434 + $0xa0] sm:$0xff]
        %v10267 = vld [vmem:[%s434 + $0xa8] sm:$0xff]
        %v10268 = vld [vmem:[%s434 + $0xb0] sm:$0xff]
        %v10269 = vld [vmem:[%s434 + $0xb8] sm:$0xff]
        %v10270 = vld [vmem:[%s434 + $0xc0] sm:$0xff]
        %v10271 = vld [vmem:[%s434 + $0xc8] sm:$0xff]
        %v10272 = vld [vmem:[%s434 + $0xd0] sm:$0xff]
        %v10273 = vld [vmem:[%s434 + $0xd8] sm:$0xff]
        %v10274 = vld [vmem:[%s434 + $0xe0] sm:$0xff]
        %v10275 = vld [vmem:[%s434 + $0xe8] sm:$0xff]
        %v10276 = vld [vmem:[%s434 + $0xf0] sm:$0xff]
        %v10277 = vld [vmem:[%s434 + $0xf8] sm:$0xff]
        %v10278 = vld [vmem:[%s434 + $0x100] sm:$0xff]
        %v10279 = vld [vmem:[%s434 + $0x108] sm:$0xff]
        %v10280 = vld [vmem:[%s434 + $0x110] sm:$0xff]
        %v10281 = vld [vmem:[%s434 + $0x118] sm:$0xff]
        %v10282 = vld [vmem:[%s434 + $0x120] sm:$0xff]
        %v10283 = vld [vmem:[%s434 + $0x128] sm:$0xff]
        %v10284 = vld [vmem:[%s434 + $0x130] sm:$0xff]
        %v10285 = vld [vmem:[%s434 + $0x138] sm:$0xff]
        %v10286 = vld [vmem:[%s434 + $0x140] sm:$0xff]
        %v10287 = vld [vmem:[%s434 + $0x148] sm:$0xff]
        %v10288 = vld [vmem:[%s434 + $0x150] sm:$0xff]
        %v10289 = vld [vmem:[%s434 + $0x158] sm:$0xff]
        %v10290 = vld [vmem:[%s434 + $0x160] sm:$0xff]
        %v10291 = vld [vmem:[%s434 + $0x168] sm:$0xff]
        %v10292 = vld [vmem:[%s434 + $0x170] sm:$0xff]
        %v10293 = vld [vmem:[%s434 + $0x178] sm:$0xff]
        %v10294 = vld [vmem:[%s434 + $0x180] sm:$0xff]
        %v10295 = vld [vmem:[%s434 + $0x188] sm:$0xff]
        %v10296 = vld [vmem:[%s434 + $0x190] sm:$0xff]
        %v10297 = vld [vmem:[%s434 + $0x198] sm:$0xff]
        %v10298 = vld [vmem:[%s434 + $0x1a0] sm:$0xff]
        %v10299 = vld [vmem:[%s434 + $0x1a8] sm:$0xff]
        %v10300 = vld [vmem:[%s434 + $0x1b0] sm:$0xff]
        %v10301 = vld [vmem:[%s434 + $0x1b8] sm:$0xff]
        %v10302 = vld [vmem:[%s434 + $0x1c0] sm:$0xff]
        %v10303 = vld [vmem:[%s434 + $0x1c8] sm:$0xff]
        %v10304 = vld [vmem:[%s434 + $0x1d0] sm:$0xff]
        %v10305 = vld [vmem:[%s434 + $0x1d8] sm:$0xff]
        %v10306 = vld [vmem:[%s434 + $0x1e0] sm:$0xff]
        %v10307 = vld [vmem:[%s434 + $0x1e8] sm:$0xff]
        %v10308 = vld [vmem:[%s434 + $0x1f0] sm:$0xff]
        %v10309 = vld [vmem:[%s434 + $0x1f8] sm:$0xff]
        %10310 = vmatprep.subr.mxu0 %v10277
        %10311 = vmatpush1.msra.mxu0 %v10276
        %10312 = vmatprep.subr.mxu0 %v10275
        %10313 = vmatpush1.msra.mxu0 %v10274
        %10314 = vmatprep.subr.mxu0 %v10273
        %10315 = vmatpush1.msra.mxu0 %v10272
        %10316 = vmatprep.subr.mxu0 %v10271
        %10317 = vmatpush1.msra.mxu0 %v10270
        %10318 = vmatprep.subr.mxu0 %v10269
        %10319 = vmatpush1.msra.mxu0 %v10268
        %10320 = vmatprep.subr.mxu0 %v10267
        %10321 = vmatpush1.msra.mxu0 %v10266
        %10322 = vmatprep.subr.mxu0 %v10265
        %10323 = vmatpush1.msra.mxu0 %v10264
        %10324 = vmatprep.subr.mxu0 %v10263
        %10325 = vmatpush1.msra.mxu0 %v10262
        %10326 = vmatprep.subr.mxu0 %v10261
        %10327 = vmatpush1.msra.mxu0 %v10260
        %10328 = vmatprep.subr.mxu0 %v10259
        %10329 = vmatpush1.msra.mxu0 %v10258
        %10330 = vmatprep.subr.mxu0 %v10257
        %10331 = vmatpush1.msra.mxu0 %v10256
        %10332 = vmatprep.subr.mxu0 %v10255
        %10333 = vmatpush1.msra.mxu0 %v10254
        %10334 = vmatprep.subr.mxu0 %v10253
        %10335 = vmatpush1.msra.mxu0 %v10252
        %10336 = vmatprep.subr.mxu0 %v10251
        %10337 = vmatpush1.msra.mxu0 %v10250
        %10338 = vmatprep.subr.mxu0 %v10249
        %10339 = vmatpush1.msra.mxu0 %v10248
        %10340 = vmatprep.subr.mxu0 %v10247
        %10341 = vmatpush1.msra.mxu0 %v10246
        %10342 = vmatprep.subr.mxu0 %v10309
        %10343 = vmatpush2.msra.mxu0 %v10308
        %10344 = vmatprep.subr.mxu0 %v10307
        %10345 = vmatpush2.msra.mxu0 %v10306
        %10346 = vmatprep.subr.mxu0 %v10305
        %10347 = vmatpush2.msra.mxu0 %v10304
        %10348 = vmatprep.subr.mxu0 %v10303
        %10349 = vmatpush2.msra.mxu0 %v10302
        %10350 = vmatprep.subr.mxu0 %v10301
        %10351 = vmatpush2.msra.mxu0 %v10300
        %10352 = vmatprep.subr.mxu0 %v10299
        %10353 = vmatpush2.msra.mxu0 %v10298
        %10354 = vmatprep.subr.mxu0 %v10297
        %10355 = vmatpush2.msra.mxu0 %v10296
        %10356 = vmatprep.subr.mxu0 %v10295
        %10357 = vmatpush2.msra.mxu0 %v10294
        %10358 = vmatprep.subr.mxu0 %v10293
        %10359 = vmatpush2.msra.mxu0 %v10292
        %10360 = vmatprep.subr.mxu0 %v10291
        %10361 = vmatpush2.msra.mxu0 %v10290
        %10362 = vmatprep.subr.mxu0 %v10289
        %10363 = vmatpush2.msra.mxu0 %v10288
        %10364 = vmatprep.subr.mxu0 %v10287
        %10365 = vmatpush2.msra.mxu0 %v10286
        %10366 = vmatprep.subr.mxu0 %v10285
        %10367 = vmatpush2.msra.mxu0 %v10284
        %10368 = vmatprep.subr.mxu0 %v10283
        %10369 = vmatpush2.msra.mxu0 %v10282
        %10370 = vmatprep.subr.mxu0 %v10281
        %10371 = vmatpush2.msra.mxu0 %v10280
        %10372 = vmatprep.subr.mxu0 %v10279
        %10373 = vmatpush2.msra.mxu0 %v10278
        %10374 = vmatprep.mubr.f32.mxu0 %v10244
        %10375 = vmatmul.mubr.f32.gmra.mxu0 %v10243
        %v10376 = vpop.f32.mrf.mxu0
        %v10377 = vadd.f32 0.0, %v10376
        %v10378 = vpop.f32.mrf.mxu0
        %v10379 = vadd.f32 0.0, %v10378
        %10380 = vdwg.mxu0
        %v10383 = vcombine.low %v10377, %v10379
        %v10385 = vunpack.c.l.s4 1983009808
        %v10386 = vunpack.c.0.s8 %v10385
        %v10387 = vlaneseq
        %v10388 = vshrl.u32 %v10387, 7
        %v10389 = vsub.s32 %v10386, %v10388
        %v10390 = vrot.slane %v10383, %v10389
        %v10392 = vadd.f32 %v10245, %v10390
        %10393 = vst [vmem:[#allocation2] sm:$0xf] %v10392
        %p10394 = scmp.eq.s32.totalorder %s30, 1
        // Predicated region
        $region93: #{encoder_z_forward.1} parent=59 // pred_check
          %p10395 = pneg %p10394
        $region94: #{encoder_z_forward.1} parent=59 // pred_check_branch
          %10397 = sbr.rel (%p10395) target = $region96
        $region95: #{encoder_z_forward.1} parent=59 // pred_region
          %v10398 = vld [vmem:[#allocation2] sm:$0xf]
          %v10399 = vld [vmem:[#allocation9] sm:$0x3]
          %v10401 = vlaneseq
          %v10402 = vshrl.u32 %v10401, 7
          %v10403 = vsub.s32 0, %v10402
          %v10404 = vrot.slane %v10399, %v10403
          %v10405 = vlaneseq
          %v10406 = vshrl.u32 %v10405, 7
          %v10407 = vsub.s32 1, %v10406
          %v10408 = vrot.slane %v10399, %v10407
          %v10409 = vcombine.low %v10404, %v10408
          %v10411 = vunpack.c.l.s4 1983009808
          %v10412 = vunpack.c.0.s8 %v10411
          %v10413 = vlaneseq
          %v10414 = vshrl.u32 %v10413, 7
          %v10415 = vsub.s32 %v10412, %v10414
          %v10416 = vrot.slane %v10409, %v10415
          %v10418 = vadd.f32 %v10398, %v10416
          %v10419 = vmax.f32 %v10418, 0.0
          %v10420 = vld [vmem:[%s5] sm:$0xff]
          %v10421 = vld [vmem:[%s5 + $0x8] sm:$0xff]
          %v10422 = vld [vmem:[%s5 + $0x10] sm:$0xff]
          %v10423 = vld [vmem:[%s5 + $0x18] sm:$0xff]
          %v10424 = vld [vmem:[%s5 + $0x20] sm:$0xff]
          %v10425 = vld [vmem:[%s5 + $0x28] sm:$0xff]
          %v10426 = vld [vmem:[%s5 + $0x30] sm:$0xff]
          %v10427 = vld [vmem:[%s5 + $0x38] sm:$0xff]
          %v10428 = vld [vmem:[%s5 + $0x40] sm:$0xff]
          %v10429 = vld [vmem:[%s5 + $0x48] sm:$0xff]
          %v10430 = vld [vmem:[%s5 + $0x50] sm:$0xff]
          %v10431 = vld [vmem:[%s5 + $0x58] sm:$0xff]
          %v10432 = vld [vmem:[%s5 + $0x60] sm:$0xff]
          %v10433 = vld [vmem:[%s5 + $0x68] sm:$0xff]
          %v10434 = vld [vmem:[%s5 + $0x70] sm:$0xff]
          %v10435 = vld [vmem:[%s5 + $0x78] sm:$0xff]
          %v10436 = vld [vmem:[%s5 + $0x80] sm:$0xff]
          %v10437 = vld [vmem:[%s5 + $0x88] sm:$0xff]
          %v10438 = vld [vmem:[%s5 + $0x90] sm:$0xff]
          %v10439 = vld [vmem:[%s5 + $0x98] sm:$0xff]
          %v10440 = vld [vmem:[%s5 + $0xa0] sm:$0xff]
          %v10441 = vld [vmem:[%s5 + $0xa8] sm:$0xff]
          %v10442 = vld [vmem:[%s5 + $0xb0] sm:$0xff]
          %v10443 = vld [vmem:[%s5 + $0xb8] sm:$0xff]
          %v10444 = vld [vmem:[%s5 + $0xc0] sm:$0xff]
          %v10445 = vld [vmem:[%s5 + $0xc8] sm:$0xff]
          %v10446 = vld [vmem:[%s5 + $0xd0] sm:$0xff]
          %v10447 = vld [vmem:[%s5 + $0xd8] sm:$0xff]
          %v10448 = vld [vmem:[%s5 + $0xe0] sm:$0xff]
          %v10449 = vld [vmem:[%s5 + $0xe8] sm:$0xff]
          %v10450 = vld [vmem:[%s5 + $0xf0] sm:$0xff]
          %v10451 = vld [vmem:[%s5 + $0xf8] sm:$0xff]
          %v10452 = vld [vmem:[#allocation11] sm:$0x1]
          %v10454 = vlaneseq
          %v10455 = vshrl.u32 %v10454, 7
          %v10456 = vsub.s32 0, %v10455
          %v10457 = vrot.slane %v10452, %v10456
          %v10461 = vunpack.c.l.s4 1983009808
          %v10462 = vunpack.c.0.s8 %v10461
          %v10463 = vlaneseq
          %v10464 = vshrl.u32 %v10463, 7
          %v10465 = vsub.s32 %v10462, %v10464
          %v10466 = vrot.slane %v10419, %v10465
          %v10467 = vcombine.high %v10466, %v10466
          %10470 = vmatprep.subr.mxu0 0.0
          %10471 = vmatpush1.msra.mxu0 %v10435
          %10472 = vmatprep.subr.mxu0 0.0
          %10473 = vmatpush1.msra.mxu0 %v10434
          %10474 = vmatprep.subr.mxu0 0.0
          %10475 = vmatpush1.msra.mxu0 %v10433
          %10476 = vmatprep.subr.mxu0 0.0
          %10477 = vmatpush1.msra.mxu0 %v10432
          %10478 = vmatprep.subr.mxu0 0.0
          %10479 = vmatpush1.msra.mxu0 %v10431
          %10480 = vmatprep.subr.mxu0 0.0
          %10481 = vmatpush1.msra.mxu0 %v10430
          %10482 = vmatprep.subr.mxu0 0.0
          %10483 = vmatpush1.msra.mxu0 %v10429
          %10484 = vmatprep.subr.mxu0 0.0
          %10485 = vmatpush1.msra.mxu0 %v10428
          %10486 = vmatprep.subr.mxu0 0.0
          %10487 = vmatpush1.msra.mxu0 %v10427
          %10488 = vmatprep.subr.mxu0 0.0
          %10489 = vmatpush1.msra.mxu0 %v10426
          %10490 = vmatprep.subr.mxu0 0.0
          %10491 = vmatpush1.msra.mxu0 %v10425
          %10492 = vmatprep.subr.mxu0 0.0
          %10493 = vmatpush1.msra.mxu0 %v10424
          %10494 = vmatprep.subr.mxu0 0.0
          %10495 = vmatpush1.msra.mxu0 %v10423
          %10496 = vmatprep.subr.mxu0 0.0
          %10497 = vmatpush1.msra.mxu0 %v10422
          %10498 = vmatprep.subr.mxu0 0.0
          %10499 = vmatpush1.msra.mxu0 %v10421
          %10500 = vmatprep.subr.mxu0 0.0
          %10501 = vmatpush1.msra.mxu0 %v10420
          %10502 = vmatprep.subr.mxu0 0.0
          %10503 = vmatpush2.msra.mxu0 %v10451
          %10504 = vmatprep.subr.mxu0 0.0
          %10505 = vmatpush2.msra.mxu0 %v10450
          %10506 = vmatprep.subr.mxu0 0.0
          %10507 = vmatpush2.msra.mxu0 %v10449
          %10508 = vmatprep.subr.mxu0 0.0
          %10509 = vmatpush2.msra.mxu0 %v10448
          %10510 = vmatprep.subr.mxu0 0.0
          %10511 = vmatpush2.msra.mxu0 %v10447
          %10512 = vmatprep.subr.mxu0 0.0
          %10513 = vmatpush2.msra.mxu0 %v10446
          %10514 = vmatprep.subr.mxu0 0.0
          %10515 = vmatpush2.msra.mxu0 %v10445
          %10516 = vmatprep.subr.mxu0 0.0
          %10517 = vmatpush2.msra.mxu0 %v10444
          %10518 = vmatprep.subr.mxu0 0.0
          %10519 = vmatpush2.msra.mxu0 %v10443
          %10520 = vmatprep.subr.mxu0 0.0
          %10521 = vmatpush2.msra.mxu0 %v10442
          %10522 = vmatprep.subr.mxu0 0.0
          %10523 = vmatpush2.msra.mxu0 %v10441
          %10524 = vmatprep.subr.mxu0 0.0
          %10525 = vmatpush2.msra.mxu0 %v10440
          %10526 = vmatprep.subr.mxu0 0.0
          %10527 = vmatpush2.msra.mxu0 %v10439
          %10528 = vmatprep.subr.mxu0 0.0
          %10529 = vmatpush2.msra.mxu0 %v10438
          %10530 = vmatprep.subr.mxu0 0.0
          %10531 = vmatpush2.msra.mxu0 %v10437
          %10532 = vmatprep.subr.mxu0 0.0
          %10533 = vmatpush2.msra.mxu0 %v10436
          %10534 = vmatprep.mubr.f32.mxu0 %v10467
          %10535 = vmatmul.mubr.f32.gmra.mxu0 %v10466
          %v10536 = vpop.f32.mrf.mxu0
          %v10537 = vadd.f32 %v10457, %v10536
          %v10538 = vpop.f32.mrf.mxu0
          %10539 = vdwg.mxu0
          %v10540 = vld [vmem:[%s7] sm:$0xff]
          %v10541 = vld [vmem:[%s7 + $0x8] sm:$0xff]
          %v10542 = vld [vmem:[%s7 + $0x10] sm:$0xff]
          %v10543 = vld [vmem:[%s7 + $0x18] sm:$0xff]
          %v10544 = vld [vmem:[%s7 + $0x20] sm:$0xff]
          %v10545 = vld [vmem:[%s7 + $0x28] sm:$0xff]
          %v10546 = vld [vmem:[%s7 + $0x30] sm:$0xff]
          %v10547 = vld [vmem:[%s7 + $0x38] sm:$0xff]
          %v10548 = vld [vmem:[%s7 + $0x40] sm:$0xff]
          %v10549 = vld [vmem:[%s7 + $0x48] sm:$0xff]
          %v10550 = vld [vmem:[%s7 + $0x50] sm:$0xff]
          %v10551 = vld [vmem:[%s7 + $0x58] sm:$0xff]
          %v10552 = vld [vmem:[%s7 + $0x60] sm:$0xff]
          %v10553 = vld [vmem:[%s7 + $0x68] sm:$0xff]
          %v10554 = vld [vmem:[%s7 + $0x70] sm:$0xff]
          %v10555 = vld [vmem:[%s7 + $0x78] sm:$0xff]
          %v10556 = vld [vmem:[%s7 + $0x80] sm:$0xff]
          %v10557 = vld [vmem:[%s7 + $0x88] sm:$0xff]
          %v10558 = vld [vmem:[%s7 + $0x90] sm:$0xff]
          %v10559 = vld [vmem:[%s7 + $0x98] sm:$0xff]
          %v10560 = vld [vmem:[%s7 + $0xa0] sm:$0xff]
          %v10561 = vld [vmem:[%s7 + $0xa8] sm:$0xff]
          %v10562 = vld [vmem:[%s7 + $0xb0] sm:$0xff]
          %v10563 = vld [vmem:[%s7 + $0xb8] sm:$0xff]
          %v10564 = vld [vmem:[%s7 + $0xc0] sm:$0xff]
          %v10565 = vld [vmem:[%s7 + $0xc8] sm:$0xff]
          %v10566 = vld [vmem:[%s7 + $0xd0] sm:$0xff]
          %v10567 = vld [vmem:[%s7 + $0xd8] sm:$0xff]
          %v10568 = vld [vmem:[%s7 + $0xe0] sm:$0xff]
          %v10569 = vld [vmem:[%s7 + $0xe8] sm:$0xff]
          %v10570 = vld [vmem:[%s7 + $0xf0] sm:$0xff]
          %v10571 = vld [vmem:[%s7 + $0xf8] sm:$0xff]
          %v10572 = vld [vmem:[#allocation12] sm:$0x1]
          %v10574 = vlaneseq
          %v10575 = vshrl.u32 %v10574, 7
          %v10576 = vsub.s32 0, %v10575
          %v10577 = vrot.slane %v10572, %v10576
          %10579 = vmatprep.subr.mxu0 0.0
          %10580 = vmatpush1.msra.mxu0 %v10555
          %10581 = vmatprep.subr.mxu0 0.0
          %10582 = vmatpush1.msra.mxu0 %v10554
          %10583 = vmatprep.subr.mxu0 0.0
          %10584 = vmatpush1.msra.mxu0 %v10553
          %10585 = vmatprep.subr.mxu0 0.0
          %10586 = vmatpush1.msra.mxu0 %v10552
          %10587 = vmatprep.subr.mxu0 0.0
          %10588 = vmatpush1.msra.mxu0 %v10551
          %10589 = vmatprep.subr.mxu0 0.0
          %10590 = vmatpush1.msra.mxu0 %v10550
          %10591 = vmatprep.subr.mxu0 0.0
          %10592 = vmatpush1.msra.mxu0 %v10549
          %10593 = vmatprep.subr.mxu0 0.0
          %10594 = vmatpush1.msra.mxu0 %v10548
          %10595 = vmatprep.subr.mxu0 0.0
          %10596 = vmatpush1.msra.mxu0 %v10547
          %10597 = vmatprep.subr.mxu0 0.0
          %10598 = vmatpush1.msra.mxu0 %v10546
          %10599 = vmatprep.subr.mxu0 0.0
          %10600 = vmatpush1.msra.mxu0 %v10545
          %10601 = vmatprep.subr.mxu0 0.0
          %10602 = vmatpush1.msra.mxu0 %v10544
          %10603 = vmatprep.subr.mxu0 0.0
          %10604 = vmatpush1.msra.mxu0 %v10543
          %10605 = vmatprep.subr.mxu0 0.0
          %10606 = vmatpush1.msra.mxu0 %v10542
          %10607 = vmatprep.subr.mxu0 0.0
          %10608 = vmatpush1.msra.mxu0 %v10541
          %10609 = vmatprep.subr.mxu0 0.0
          %10610 = vmatpush1.msra.mxu0 %v10540
          %10611 = vmatprep.subr.mxu0 0.0
          %10612 = vmatpush2.msra.mxu0 %v10571
          %10613 = vmatprep.subr.mxu0 0.0
          %10614 = vmatpush2.msra.mxu0 %v10570
          %10615 = vmatprep.subr.mxu0 0.0
          %10616 = vmatpush2.msra.mxu0 %v10569
          %10617 = vmatprep.subr.mxu0 0.0
          %10618 = vmatpush2.msra.mxu0 %v10568
          %10619 = vmatprep.subr.mxu0 0.0
          %10620 = vmatpush2.msra.mxu0 %v10567
          %10621 = vmatprep.subr.mxu0 0.0
          %10622 = vmatpush2.msra.mxu0 %v10566
          %10623 = vmatprep.subr.mxu0 0.0
          %10624 = vmatpush2.msra.mxu0 %v10565
          %10625 = vmatprep.subr.mxu0 0.0
          %10626 = vmatpush2.msra.mxu0 %v10564
          %10627 = vmatprep.subr.mxu0 0.0
          %10628 = vmatpush2.msra.mxu0 %v10563
          %10629 = vmatprep.subr.mxu0 0.0
          %10630 = vmatpush2.msra.mxu0 %v10562
          %10631 = vmatprep.subr.mxu0 0.0
          %10632 = vmatpush2.msra.mxu0 %v10561
          %10633 = vmatprep.subr.mxu0 0.0
          %10634 = vmatpush2.msra.mxu0 %v10560
          %10635 = vmatprep.subr.mxu0 0.0
          %10636 = vmatpush2.msra.mxu0 %v10559
          %10637 = vmatprep.subr.mxu0 0.0
          %10638 = vmatpush2.msra.mxu0 %v10558
          %10639 = vmatprep.subr.mxu0 0.0
          %10640 = vmatpush2.msra.mxu0 %v10557
          %10641 = vmatprep.subr.mxu0 0.0
          %10642 = vmatpush2.msra.mxu0 %v10556
          %10643 = vmatprep.mubr.f32.mxu0 %v10467
          %10644 = vmatmul.mubr.f32.gmra.mxu0 %v10466
          %v10645 = vpop.f32.mrf.mxu0
          %v10646 = vadd.f32 %v10577, %v10645
          %v10647 = vpop.f32.mrf.mxu0
          %10648 = vdwg.mxu0
          %v10649 = vld [vmem:[#allocation14] sm:$0x3]
          %v10650 = vmul.f32 %v10646, 0.5
          %v10651 = vmul.f32 %v10650, 1.442695
          %v10652 = vpow.pop %v10651
          %v10653 = vmul.f32 %v10649, %v10652
          %v10654 = vadd.f32 %v10537, %v10653
          %vm10655 = vcmask 9216
          %10656 = vst.msk [vmem:[#allocation15] sm:$0x3] %vm10655, %v10654
        $region96: #{encoder_z_forward.1} parent=59 // pred_fallthru
          _
        // Predicated region
        $region97: #{encoder_z_forward.1} parent=59 // pred_check
          %p10657 = pneg %p268
        $region98: #{encoder_z_forward.1} parent=59 // pred_check_branch
          %10659 = sbr.rel (%p10657) target = $region100
        $region99: #{encoder_z_forward.1} parent=59 // pred_region
          %s10661 = ssub.s32 32, 32
          %10662 = vsyncadd [#allocation5], %s10661
          %s10664 = sshll.u32 [#allocation15], 4
          %s10665 = int_to_ptr.vmem [resolvable:$true] %s10664
          %10667 = dma.vmem_to_hbm [thread:$0]  %s10665, 32, %s10, [#allocation5]
        $region100: #{encoder_z_forward.1} parent=59 // pred_fallthru
          _
        // Predicated region
        $region101: #{encoder_z_forward.1} parent=59 // pred_check
          %p10668 = pneg %p268
        $region102: #{encoder_z_forward.1} parent=59 // pred_check_branch
          %10670 = sbr.rel (%p10668) target = $region104
        $region103: #{encoder_z_forward.1} parent=59 // pred_region
          %10671 = dma.done [#allocation5], 32
        $region104: #{encoder_z_forward.1} parent=59 // pred_fallthru
          _
      $region60: #{encoder_z_forward.1} parent=5 // pred_fallthru
        _
      %p10672 = scmp.le.s32.totalorder 2, %s25
      // Predicated region
      $region105: #{encoder_z_forward.1} parent=5 // pred_check
        %p10673 = pneg %p10672
      $region106: #{encoder_z_forward.1} parent=5 // pred_check_branch
        %10675 = sbr.rel (%p10673) target = $region108
      $region107: #{encoder_z_forward.1} parent=5 // pred_region
        %s10676 = ssub.s32 %s25, 2
      $region108: #{encoder_z_forward.1} parent=5 // pred_fallthru
        _
    $region6: #{encoder_z_forward.1} parent=1 // loop_footer
      %s29 = sadd.s32 1, %s25
    $region7: #{encoder_z_forward.1} parent=1 // loop_footer_branch
      %24 = sbr.rel target = $region3
    $region8: #{encoder_z_forward.1} parent=1 // loop_exit
      _
    %10677 = vsyncpa [#allocation4], 1
    %s10678 = scalar_lea.sflag [#allocation4], 1
    %10679 = vsyncpa %s10678, 1
    %10680 = vsyncpa [#allocation7], 1
    %s10681 = scalar_lea.sflag [#allocation7], 1
    %10682 = vsyncpa %s10681, 1
    %10683 = vsyncpa [#allocation10], 1
    %10684 = vsyncpa [#allocation13], 1
    %10685 = vsyncpa [#allocation5], 1
    %s10686 = scalar_lea.sflag [#allocation5], 1
    %10687 = vsyncpa %s10686, 1

</llo_original>
